<compile_context>
chip_gen: v6e
topology: v6e:2x2x1
jax: 0.10.0
libtpu: 0.0.40
codegen_flags: <defaults>
</compile_context>

<pallas_src>
import itertools
import math

import numpy as np
import jax
import jax.numpy as jnp
from jax.experimental import pallas as pl
from jax.experimental.pallas import tpu as pltpu

ALGEBRA_DIM = 3                                                            # Cl(3,0): metric = [1,1,1]
SUBSPACES = tuple(math.comb(ALGEBRA_DIM, g) for g in range(ALGEBRA_DIM + 1))  # (1, 3, 3, 1)
_SUBS_NP = np.asarray(SUBSPACES, dtype=np.int32)
MV_DIM = sum(SUBSPACES)                                                    # 8 == embed_dim
LN_EPS = 1e-5                                                              # torch LayerNorm default


def _build_cayley(metric):
    """cayley[i, j, k] = coefficient of basis blade j in (e_i * e_k), blades ordered by grade."""
    n = len(metric)
    blades = [c for g in range(n + 1) for c in itertools.combinations(range(n), g)]
    index = {b: i for i, b in enumerate(blades)}
    dim = len(blades)
    cay = np.zeros((dim, dim, dim), dtype=np.float32)
    for i, a in enumerate(blades):
        for k, b in enumerate(blades):
            coeff, res = 1.0, list(a)
            for e in b:
                res.append(e)
                j = len(res) - 1
                while j > 0 and res[j - 1] > res[j]:
                    res[j - 1], res[j] = res[j], res[j - 1]
                    coeff = -coeff
                    j -= 1
                if j > 0 and res[j - 1] == res[j]:
                    coeff *= metric[e]
                    del res[j - 1:j + 1]
            cay[i, index[tuple(res)], k] += coeff
    return cay


CAYLEY = jnp.asarray(_build_cayley([1.0] * ALGEBRA_DIM))                   # (8, 8, 8)


# ----------------------------------------------------------------------------------------------
# Kernels
# ----------------------------------------------------------------------------------------------
def _layer_norm(x, gamma, beta):
    mu = jnp.mean(x, axis=-1, keepdims=True)
    xc = x - mu
    var = jnp.mean(xc * xc, axis=-1, keepdims=True)
    return xc * jax.lax.rsqrt(var + LN_EPS) * gamma + beta


def _ga_attention_kernel(x_ref, ln_g_ref, ln_b_ref,
                         qw_ref, qb_ref, kw_ref, kb_ref,
                         gp_g_ref, gp_b_ref, cay_ref,
                         w1_ref, b1_ref, w2_ref, b2_ref, w3_ref,
                         wv_ref, bv_ref, o_ref):
    """out = x + SelfAttentionGA(LayerNorm(x)) for one batch element (whole sequence in VMEM)."""
    f32 = jnp.float32
    S, MV = x_ref.shape
    H = w1_ref.shape[1]

    x = x_ref[...].astype(f32)
    xn = _layer_norm(x, ln_g_ref[...], ln_b_ref[...])                       # norm1 / norm2

    # value projection: nn.Linear(embed_dim, embed_dim)  (weight pre-transposed in wrapper)
    v = jnp.dot(xn, wv_ref[...], preferred_element_type=f32) + bv_ref[...]

    # MVLinear q/k: per-component, grade-tied mixing over the sequence axis:
    #   q_lin[n, i] = sum_m qw[n, m, i] * xn[m, i]   (+ scalar-slot bias, pre-embedded in wrapper)
    q_lin = jnp.sum(qw_ref[...] * xn[None, :, :], axis=1) + qb_ref[...]
    k_lin = jnp.sum(kw_ref[...] * xn[None, :, :], axis=1) + kb_ref[...]
    q = _layer_norm(q_lin, gp_g_ref[...], gp_b_ref[...])                    # shared gp LayerNorm
    k = _layer_norm(k_lin, gp_g_ref[...], gp_b_ref[...])

    # all-pairs geometric product, flattened to S^2 pair rows:
    #   new_mv[n*S + m, j] = sum_{i,c} q[n,i] * cayley[i,j,c] * k[m,c]
    # cay_ref is pre-transposed to (i, c, j) so each unrolled step is one (S^2,MV)@(MV,MV) matmul.
    qq = jnp.broadcast_to(q[:, None, :], (S, S, MV)).reshape(S * S, MV)
    kk = jnp.broadcast_to(k[None, :, :], (S, S, MV)).reshape(S * S, MV)
    new_mv = jnp.zeros((S * S, MV), f32)
    for i in range(MV):                                                     # static unroll (MV = 8)
        new_mv = new_mv + qq[:, i:i + 1] * jnp.dot(
            kk, cay_ref[i], preferred_element_type=f32)

    # att_prj MLP (8 -> H -> H -> 1); the final scalar bias is softmax-invariant and dropped.
    h = jnp.maximum(jnp.dot(new_mv, w1_ref[...], preferred_element_type=f32) + b1_ref[...], 0.0)
    h = jnp.maximum(jnp.dot(h, w2_ref[...], preferred_element_type=f32) + b2_ref[...], 0.0)
    scores = jnp.sum(h.reshape(S, S, H) * w3_ref[...].reshape(1, 1, H), axis=-1)   # (S, S)

    # softmax over keys, then attend over values.
    # NOTE: the reference einsum string is 'bqk,bvd->bqd' (typo that degenerates to a value-sum since
    # softmax rows sum to 1); the intended attention contraction 'bqk,bkd->bqd' is implemented.
    scores = scores - jnp.max(scores, axis=-1, keepdims=True)
    e = jnp.exp(scores)
    probs = e / jnp.sum(e, axis=-1, keepdims=True)
    attn = jnp.dot(probs, v, preferred_element_type=f32)                    # (S, MV)

    o_ref[...] = (x + attn).astype(o_ref.dtype)                             # residual (dropout = id)


def _ffn_norm_kernel(x_ref, wi_ref, bi_ref, wo_ref, bo_ref, g_ref, b_ref, o_ref):
    """out = LayerNorm3(x + fc_out(relu(fc_in(x)))) for one batch element."""
    f32 = jnp.float32
    x = x_ref[...].astype(f32)
    t = jnp.maximum(jnp.dot(x, wi_ref[...], preferred_element_type=f32) + bi_ref[...], 0.0)
    t = jnp.dot(t, wo_ref[...], preferred_element_type=f32) + bo_ref[...]
    h = x + t
    o_ref[...] = _layer_norm(h, g_ref[...], b_ref[...]).astype(o_ref.dtype)


# ----------------------------------------------------------------------------------------------
# Wrappers
# ----------------------------------------------------------------------------------------------
def _row(v):
    return jnp.asarray(v, jnp.float32).reshape(1, -1)


def _ga_attention_block(x, ln_gamma, ln_beta, p):
    """x + SelfAttentionGA(LayerNorm(x)), batched over the leading axis, as one fused pallas_call."""
    B, S, MV = x.shape
    H = p["att_w1"].shape[0]

    # ---- hoisted constant weight transforms (once per call, NOT once per grid step) ----
    qw = jnp.repeat(p["q_w"], _SUBS_NP, axis=-1, total_repeat_length=MV)     # (S, S, MV)
    kw = jnp.repeat(p["k_w"], _SUBS_NP, axis=-1, total_repeat_length=MV)
    qb = jnp.zeros((S, MV), jnp.float32).at[:, 0].set(p["q_b"][0, :, 0])     # algebra.embed(bias, (0,))
    kb = jnp.zeros((S, MV), jnp.float32).at[:, 0].set(p["k_b"][0, :, 0])
    cay_t = jnp.transpose(CAYLEY, (0, 2, 1))                                 # (i, c, j) layout
    wv_t = p["v_w"].T                                                        # (MV, MV)
    w1_t = p["att_w1"].T                                                     # (MV, H)
    w2_t = p["att_w2"].T                                                     # (H, H)
    w3 = _row(p["att_w3"])                                                   # (1, H); att_b3 dropped

    bc2 = lambda shape: pl.BlockSpec(shape, lambda b: (0, 0))
    bc3 = lambda shape: pl.BlockSpec(shape, lambda b: (0, 0, 0))
    x_spec = pl.BlockSpec((pl.Squeezed(), S, MV), lambda b: (b, 0, 0))

    return pl.pallas_call(
        _ga_attention_kernel,
        out_shape=jax.ShapeDtypeStruct((B, S, MV), x.dtype),
        grid_spec=pltpu.PrefetchScalarGridSpec(
            num_scalar_prefetch=0,
            grid=(B,),
            in_specs=[
                x_spec,
                bc2((1, MV)), bc2((1, MV)),            # pre-LayerNorm gamma / beta
                bc3((S, S, MV)), bc2((S, MV)),         # q_prj weight / embedded bias
                bc3((S, S, MV)), bc2((S, MV)),         # k_prj weight / embedded bias
                bc2((1, MV)), bc2((1, MV)),            # shared gp LayerNorm gamma / beta
                bc3((MV, MV, MV)),                     # cayley, (i, c, j) layout
                bc2((MV, H)), bc2((1, H)),             # att_prj layer 1
                bc2((H, H)), bc2((1, H)),              # att_prj layer 2
                bc2((1, H)),                           # att_prj layer 3 weight
                bc2((MV, MV)), bc2((1, MV)),           # v_proj
            ],
            out_specs=pl.BlockSpec((pl.Squeezed(), S, MV), lambda b: (b, 0, 0)),
        ),
        compiler_params=pltpu.CompilerParams(dimension_semantics=("parallel",)),
    )(x, _row(ln_gamma), _row(ln_beta), qw, qb, kw, kb,
      _row(p["gp_ln_g"]), _row(p["gp_ln_b"]), cay_t,
      w1_t, _row(p["att_b1"]), w2_t, _row(p["att_b2"]), w3,
      wv_t, _row(p["v_b"]))


def _ffn_norm_block(x, lp):
    B, S, MV = x.shape
    H = lp["fc_in_w"].shape[0]
    bc2 = lambda shape: pl.BlockSpec(shape, lambda b: (0, 0))
    return pl.pallas_call(
        _ffn_norm_kernel,
        out_shape=jax.ShapeDtypeStruct((B, S, MV), x.dtype),
        grid_spec=pltpu.PrefetchScalarGridSpec(
            num_scalar_prefetch=0,
            grid=(B,),
            in_specs=[
                pl.BlockSpec((pl.Squeezed(), S, MV), lambda b: (b, 0, 0)),
                bc2((MV, H)), bc2((1, H)),
                bc2((H, MV)), bc2((1, MV)),
                bc2((1, MV)), bc2((1, MV)),
            ],
            out_specs=pl.BlockSpec((pl.Squeezed(), S, MV), lambda b: (b, 0, 0)),
        ),
        compiler_params=pltpu.CompilerParams(dimension_semantics=("parallel",)),
    )(x, lp["fc_in_w"].T, _row(lp["fc_in_b"]),
      lp["fc_out_w"].T, _row(lp["fc_out_b"]),
      _row(lp["norm3"][0]), _row(lp["norm3"][1]))


def decoder_layer_forward(x, lp):
    h = _ga_attention_block(x, lp["norm1"][0], lp["norm1"][1], lp["self_att"])   # h = h + self_att(norm1(h))
    h = _ga_attention_block(h, lp["norm2"][0], lp["norm2"][1], lp["cross_att"])  # h = h + cross_att(norm2(h))
    return _ffn_norm_block(h, lp)                                                # norm3(h + FFN(h))


def transformer_decoder_ga_forward(tgt, memory, params):
    del memory  # see TODO(synk) at top of file
    B, S, n = tgt.shape
    x = jnp.zeros((B, S, MV_DIM), tgt.dtype).at[..., 1:1 + n].set(tgt)       # algebra.embed_grade(tgt, 1)
    # PositionalEncoding.forward is the identity in the reference module.
    for lp in params["layers"]:
        x = decoder_layer_forward(x, lp)
    return x


# ----------------------------------------------------------------------------------------------
# Pure-JAX reference (mirror of the intended PyTorch forward, eval mode) for correctness checking
# ----------------------------------------------------------------------------------------------
def _ref_layer_norm(x, gamma, beta):
    mu = jnp.mean(x, axis=-1, keepdims=True)
    var = jnp.mean((x - mu) ** 2, axis=-1, keepdims=True)
    return (x - mu) / jnp.sqrt(var + LN_EPS) * gamma + beta


def _ref_attention(xn, p):
    B, S, MV = xn.shape
    v = xn @ p["v_w"].T + p["v_b"]
    qw = jnp.repeat(p["q_w"], _SUBS_NP, axis=-1, total_repeat_length=MV)
    kw = jnp.repeat(p["k_w"], _SUBS_NP, axis=-1, total_repeat_length=MV)
    qbias = jnp.zeros((1, S, MV), jnp.float32).at[..., 0].set(p["q_b"][..., 0])
    kbias = jnp.zeros((1, S, MV), jnp.float32).at[..., 0].set(p["k_b"][..., 0])
    q = _ref_layer_norm(jnp.einsum("bmi,nmi->bni", xn, qw) + qbias, p["gp_ln_g"], p["gp_ln_b"])
    k = _ref_layer_norm(jnp.einsum("bmi,nmi->bni", xn, kw) + kbias, p["gp_ln_g"], p["gp_ln_b"])
    new_mv = jnp.einsum("bni,ijc,bmc->bnmj", q, CAYLEY, k)
    h = jax.nn.relu(new_mv @ p["att_w1"].T + p["att_b1"])
    h = jax.nn.relu(h @ p["att_w2"].T + p["att_b2"])
    scores = (h @ p["att_w3"].T + p["att_b3"])[..., 0]
    probs = jax.nn.softmax(scores, axis=-1)
    return jnp.einsum("bqk,bkd->bqd", probs, v)


def _reference_forward(tgt, memory, params):
    del memory
    B, S, n = tgt.shape
    x = jnp.zeros((B, S, MV_DIM), tgt.dtype).at[..., 1:1 + n].set(tgt)
    for lp in params["layers"]:
        x = x + _ref_attention(_ref_layer_norm(x, *lp["norm1"]), lp["self_att"])
        x = x + _ref_attention(_ref_layer_norm(x, *lp["norm2"]), lp["cross_att"])
        t = jax.nn.relu(x @ lp["fc_in_w"].T + lp["fc_in_b"]) @ lp["fc_out_w"].T + lp["fc_out_b"]
        x = _ref_layer_norm(x + t, *lp["norm3"])
    return x


# ----------------------------------------------------------------------------------------------
# Parameter construction (PyTorch layout conventions; deterministic)
# ----------------------------------------------------------------------------------------------
def init_params(key, S, MV, H, num_layers):
    n_sub = len(SUBSPACES)
    keys = iter(jax.random.split(key, 64 * num_layers + 16))

    def rnd(shape, std):
        return std * jax.random.normal(next(keys), shape, jnp.float32)

    def ln_pair():
        # default init is (ones, zeros); perturb slightly so the affine path is exercised.
        return (1.0 + 0.1 * rnd((MV,), 1.0), 0.1 * rnd((MV,), 1.0))

    def attention_params():
        return dict(
            v_w=rnd((MV, MV), 1.0 / math.sqrt(MV)), v_b=rnd((MV,), 0.1),
            q_w=rnd((S, S, n_sub), 1.0 / math.sqrt(S)), q_b=rnd((1, S, 1), 0.1),
            k_w=rnd((S, S, n_sub), 1.0 / math.sqrt(S)), k_b=rnd((1, S, 1), 0.1),
            gp_ln_g=1.0 + 0.1 * rnd((MV,), 1.0), gp_ln_b=0.1 * rnd((MV,), 1.0),
            att_w1=rnd((H, MV), 1.0 / math.sqrt(MV)), att_b1=rnd((H,), 0.1),
            att_w2=rnd((H, H), 1.0 / math.sqrt(H)), att_b2=rnd((H,), 0.1),
            att_w3=rnd((1, H), 1.0 / math.sqrt(H)), att_b3=rnd((1,), 0.1),
        )

    layers = []
    for _ in range(num_layers):
        layers.append(dict(
            norm1=ln_pair(), norm2=ln_pair(), norm3=ln_pair(),
            self_att=attention_params(), cross_att=attention_params(),
            fc_in_w=rnd((H, MV), 1.0 / math.sqrt(MV)), fc_in_b=rnd((H,), 0.1),
            fc_out_w=rnd((MV, H), 1.0 / math.sqrt(H)), fc_out_b=rnd((MV,), 0.1),
        ))
    return dict(layers=layers)


if __name__ == "__main__":
    key = jax.random.PRNGKey(0)
    k_tgt, k_mem, k_par = jax.random.split(key, 3)

    B, S = 2, 8                           # batch, sequence length (== MVLinear in/out features)
    EMBED_DIM = MV_DIM                    # 8 (Cl(3,0) multivector width)
    HIDDEN_DIM = 32
    NUM_LAYERS = 2

    tgt = jax.random.normal(k_tgt, (B, S, ALGEBRA_DIM), dtype=jnp.float32)    # grade-1 input
    memory = jax.random.normal(k_mem, (B, S, EMBED_DIM), dtype=jnp.float32)   # unused (see TODO)
    params = init_params(k_par, S, MV_DIM, HIDDEN_DIM, NUM_LAYERS)

    fwd = jax.jit(lambda t, m: transformer_decoder_ga_forward(t, m, params))
    out = jax.block_until_ready(fwd(tgt, memory))

    ref = _reference_forward(tgt, memory, params)
    assert out.shape == (B, S, EMBED_DIM) and out.dtype == jnp.float32
    max_diff = float(jnp.max(jnp.abs(out - ref)))
    assert jnp.allclose(out, ref, atol=2e-3, rtol=2e-3), f"mismatch vs reference, max|diff|={max_diff}"

    print("KERNEL_OK")
</pallas_src>

<mosaic_0001>
module attributes {stable_mosaic.version = 11 : i64} {
  func.func @_ga_attention_kernel(%arg0: i32, %arg1: memref<1x8x8xf32, #tpu.memory_space<vmem>>, %arg2: memref<1x8xf32, #tpu.memory_space<vmem>>, %arg3: memref<1x8xf32, #tpu.memory_space<vmem>>, %arg4: memref<8x8x8xf32, #tpu.memory_space<vmem>>, %arg5: memref<8x8xf32, #tpu.memory_space<vmem>>, %arg6: memref<8x8x8xf32, #tpu.memory_space<vmem>>, %arg7: memref<8x8xf32, #tpu.memory_space<vmem>>, %arg8: memref<1x8xf32, #tpu.memory_space<vmem>>, %arg9: memref<1x8xf32, #tpu.memory_space<vmem>>, %arg10: memref<8x8x8xf32, #tpu.memory_space<vmem>>, %arg11: memref<8x32xf32, #tpu.memory_space<vmem>>, %arg12: memref<1x32xf32, #tpu.memory_space<vmem>>, %arg13: memref<32x32xf32, #tpu.memory_space<vmem>>, %arg14: memref<1x32xf32, #tpu.memory_space<vmem>>, %arg15: memref<1x32xf32, #tpu.memory_space<vmem>>, %arg16: memref<8x8xf32, #tpu.memory_space<vmem>>, %arg17: memref<1x8xf32, #tpu.memory_space<vmem>>, %arg18: memref<1x8x8xf32, #tpu.memory_space<vmem>>) attributes {dimension_semantics = [#tpu.dimension_semantics<parallel>], iteration_bounds = array<i64: 2>, scalar_prefetch = 0 : i64, scratch_operands = 0 : i64, tpu.core_type = #tpu.core_type<tc>, window_params = [{transform_indices = @transform_0, window_bounds = array<i64: 1, 8, 8>}, {pipeline_mode = #tpu.pipeline_mode<synchronous>, transform_indices = @transform_1, window_bounds = array<i64: 1, 8>}, {pipeline_mode = #tpu.pipeline_mode<synchronous>, transform_indices = @transform_2, window_bounds = array<i64: 1, 8>}, {pipeline_mode = #tpu.pipeline_mode<synchronous>, transform_indices = @transform_3, window_bounds = array<i64: 8, 8, 8>}, {pipeline_mode = #tpu.pipeline_mode<synchronous>, transform_indices = @transform_4, window_bounds = array<i64: 8, 8>}, {pipeline_mode = #tpu.pipeline_mode<synchronous>, transform_indices = @transform_5, window_bounds = array<i64: 8, 8, 8>}, {pipeline_mode = #tpu.pipeline_mode<synchronous>, transform_indices = @transform_6, window_bounds = array<i64: 8, 8>}, {pipeline_mode = #tpu.pipeline_mode<synchronous>, transform_indices = @transform_7, window_bounds = array<i64: 1, 8>}, {pipeline_mode = #tpu.pipeline_mode<synchronous>, transform_indices = @transform_8, window_bounds = array<i64: 1, 8>}, {pipeline_mode = #tpu.pipeline_mode<synchronous>, transform_indices = @transform_9, window_bounds = array<i64: 8, 8, 8>}, {pipeline_mode = #tpu.pipeline_mode<synchronous>, transform_indices = @transform_10, window_bounds = array<i64: 8, 32>}, {pipeline_mode = #tpu.pipeline_mode<synchronous>, transform_indices = @transform_11, window_bounds = array<i64: 1, 32>}, {pipeline_mode = #tpu.pipeline_mode<synchronous>, transform_indices = @transform_12, window_bounds = array<i64: 32, 32>}, {pipeline_mode = #tpu.pipeline_mode<synchronous>, transform_indices = @transform_13, window_bounds = array<i64: 1, 32>}, {pipeline_mode = #tpu.pipeline_mode<synchronous>, transform_indices = @transform_14, window_bounds = array<i64: 1, 32>}, {pipeline_mode = #tpu.pipeline_mode<synchronous>, transform_indices = @transform_15, window_bounds = array<i64: 8, 8>}, {pipeline_mode = #tpu.pipeline_mode<synchronous>, transform_indices = @transform_16, window_bounds = array<i64: 1, 8>}, {transform_indices = @transform_17, window_bounds = array<i64: 1, 8, 8>}]} {
    %c0 = arith.constant 0 : index
    %c0_0 = arith.constant 0 : index
    %c0_1 = arith.constant 0 : index
    %0 = vector.load %arg1[%c0, %c0_0, %c0_1] : memref<1x8x8xf32, #tpu.memory_space<vmem>>, vector<1x8x8xf32>
    %1 = vector.shape_cast %0 : vector<1x8x8xf32> to vector<8x8xf32>
    %c0_2 = arith.constant 0 : index
    %c0_3 = arith.constant 0 : index
    %2 = vector.load %arg2[%c0_2, %c0_3] : memref<1x8xf32, #tpu.memory_space<vmem>>, vector<1x8xf32>
    %c0_4 = arith.constant 0 : index
    %c0_5 = arith.constant 0 : index
    %3 = vector.load %arg3[%c0_4, %c0_5] : memref<1x8xf32, #tpu.memory_space<vmem>>, vector<1x8xf32>
    %cst = arith.constant dense<0.000000e+00> : vector<8xf32>
    %4 = vector.multi_reduction <add>, %1, %cst [1] : vector<8x8xf32> to vector<8xf32>
    %5 = vector.shape_cast %4 : vector<8xf32> to vector<8x1xf32>
    %cst_6 = arith.constant 8.000000e+00 : f32
    %6 = vector.broadcast %cst_6 : f32 to vector<8x1xf32>
    %7 = arith.divf %5, %6 : vector<8x1xf32>
    %8 = vector.broadcast %7 : vector<8x1xf32> to vector<8x8xf32>
    %9 = arith.subf %1, %8 : vector<8x8xf32>
    %10 = arith.mulf %9, %9 : vector<8x8xf32>
    %cst_7 = arith.constant dense<0.000000e+00> : vector<8xf32>
    %11 = vector.multi_reduction <add>, %10, %cst_7 [1] : vector<8x8xf32> to vector<8xf32>
    %12 = vector.shape_cast %11 : vector<8xf32> to vector<8x1xf32>
    %cst_8 = arith.constant 8.000000e+00 : f32
    %13 = vector.broadcast %cst_8 : f32 to vector<8x1xf32>
    %14 = arith.divf %12, %13 : vector<8x1xf32>
    %cst_9 = arith.constant 9.99999974E-6 : f32
    %15 = vector.broadcast %cst_9 : f32 to vector<8x1xf32>
    %16 = arith.addf %14, %15 : vector<8x1xf32>
    %17 = math.rsqrt %16 : vector<8x1xf32>
    %18 = vector.broadcast %17 : vector<8x1xf32> to vector<8x8xf32>
    %19 = arith.mulf %9, %18 : vector<8x8xf32>
    %20 = vector.broadcast %2 : vector<1x8xf32> to vector<8x8xf32>
    %21 = arith.mulf %19, %20 : vector<8x8xf32>
    %22 = vector.broadcast %3 : vector<1x8xf32> to vector<8x8xf32>
    %23 = arith.addf %21, %22 : vector<8x8xf32>
    %c0_10 = arith.constant 0 : index
    %c0_11 = arith.constant 0 : index
    %24 = vector.load %arg16[%c0_10, %c0_11] : memref<8x8xf32, #tpu.memory_space<vmem>>, vector<8x8xf32>
    %cst_12 = arith.constant dense<0.000000e+00> : vector<8x8xf32>
    %25 = tpu.matmul %23, %24, %cst_12 {dimension_numbers = #tpu.dot_dimension_numbers<[1], [0], [0], [1], [0, 0, 1, 1], [], []>} : vector<8x8xf32>, vector<8x8xf32>, vector<8x8xf32> -> vector<8x8xf32>
    %c0_13 = arith.constant 0 : index
    %c0_14 = arith.constant 0 : index
    %26 = vector.load %arg17[%c0_13, %c0_14] : memref<1x8xf32, #tpu.memory_space<vmem>>, vector<1x8xf32>
    %27 = vector.broadcast %26 : vector<1x8xf32> to vector<8x8xf32>
    %28 = arith.addf %25, %27 : vector<8x8xf32>
    %c0_15 = arith.constant 0 : index
    %c0_16 = arith.constant 0 : index
    %c0_17 = arith.constant 0 : index
    %29 = vector.load %arg4[%c0_15, %c0_16, %c0_17] : memref<8x8x8xf32, #tpu.memory_space<vmem>>, vector<8x8x8xf32>
    %30 = vector.shape_cast %23 : vector<8x8xf32> to vector<1x8x8xf32>
    %31 = vector.broadcast %30 : vector<1x8x8xf32> to vector<8x8x8xf32>
    %32 = arith.mulf %29, %31 : vector<8x8x8xf32>
    %cst_18 = arith.constant dense<0.000000e+00> : vector<8x8xf32>
    %33 = vector.multi_reduction <add>, %32, %cst_18 [1] : vector<8x8x8xf32> to vector<8x8xf32>
    %c0_19 = arith.constant 0 : index
    %c0_20 = arith.constant 0 : index
    %34 = vector.load %arg5[%c0_19, %c0_20] : memref<8x8xf32, #tpu.memory_space<vmem>>, vector<8x8xf32>
    %35 = arith.addf %33, %34 : vector<8x8xf32>
    %c0_21 = arith.constant 0 : index
    %c0_22 = arith.constant 0 : index
    %c0_23 = arith.constant 0 : index
    %36 = vector.load %arg6[%c0_21, %c0_22, %c0_23] : memref<8x8x8xf32, #tpu.memory_space<vmem>>, vector<8x8x8xf32>
    %37 = vector.shape_cast %23 : vector<8x8xf32> to vector<1x8x8xf32>
    %38 = vector.broadcast %37 : vector<1x8x8xf32> to vector<8x8x8xf32>
    %39 = arith.mulf %36, %38 : vector<8x8x8xf32>
    %cst_24 = arith.constant dense<0.000000e+00> : vector<8x8xf32>
    %40 = vector.multi_reduction <add>, %39, %cst_24 [1] : vector<8x8x8xf32> to vector<8x8xf32>
    %c0_25 = arith.constant 0 : index
    %c0_26 = arith.constant 0 : index
    %41 = vector.load %arg7[%c0_25, %c0_26] : memref<8x8xf32, #tpu.memory_space<vmem>>, vector<8x8xf32>
    %42 = arith.addf %40, %41 : vector<8x8xf32>
    %c0_27 = arith.constant 0 : index
    %c0_28 = arith.constant 0 : index
    %43 = vector.load %arg8[%c0_27, %c0_28] : memref<1x8xf32, #tpu.memory_space<vmem>>, vector<1x8xf32>
    %c0_29 = arith.constant 0 : index
    %c0_30 = arith.constant 0 : index
    %44 = vector.load %arg9[%c0_29, %c0_30] : memref<1x8xf32, #tpu.memory_space<vmem>>, vector<1x8xf32>
    %cst_31 = arith.constant dense<0.000000e+00> : vector<8xf32>
    %45 = vector.multi_reduction <add>, %35, %cst_31 [1] : vector<8x8xf32> to vector<8xf32>
    %46 = vector.shape_cast %45 : vector<8xf32> to vector<8x1xf32>
    %cst_32 = arith.constant 8.000000e+00 : f32
    %47 = vector.broadcast %cst_32 : f32 to vector<8x1xf32>
    %48 = arith.divf %46, %47 : vector<8x1xf32>
    %49 = vector.broadcast %48 : vector<8x1xf32> to vector<8x8xf32>
    %50 = arith.subf %35, %49 : vector<8x8xf32>
    %51 = arith.mulf %50, %50 : vector<8x8xf32>
    %cst_33 = arith.constant dense<0.000000e+00> : vector<8xf32>
    %52 = vector.multi_reduction <add>, %51, %cst_33 [1] : vector<8x8xf32> to vector<8xf32>
    %53 = vector.shape_cast %52 : vector<8xf32> to vector<8x1xf32>
    %cst_34 = arith.constant 8.000000e+00 : f32
    %54 = vector.broadcast %cst_34 : f32 to vector<8x1xf32>
    %55 = arith.divf %53, %54 : vector<8x1xf32>
    %cst_35 = arith.constant 9.99999974E-6 : f32
    %56 = vector.broadcast %cst_35 : f32 to vector<8x1xf32>
    %57 = arith.addf %55, %56 : vector<8x1xf32>
    %58 = math.rsqrt %57 : vector<8x1xf32>
    %59 = vector.broadcast %58 : vector<8x1xf32> to vector<8x8xf32>
    %60 = arith.mulf %50, %59 : vector<8x8xf32>
    %61 = vector.broadcast %43 : vector<1x8xf32> to vector<8x8xf32>
    %62 = arith.mulf %60, %61 : vector<8x8xf32>
    %63 = vector.broadcast %44 : vector<1x8xf32> to vector<8x8xf32>
    %64 = arith.addf %62, %63 : vector<8x8xf32>
    %c0_36 = arith.constant 0 : index
    %c0_37 = arith.constant 0 : index
    %65 = vector.load %arg8[%c0_36, %c0_37] : memref<1x8xf32, #tpu.memory_space<vmem>>, vector<1x8xf32>
    %c0_38 = arith.constant 0 : index
    %c0_39 = arith.constant 0 : index
    %66 = vector.load %arg9[%c0_38, %c0_39] : memref<1x8xf32, #tpu.memory_space<vmem>>, vector<1x8xf32>
    %cst_40 = arith.constant dense<0.000000e+00> : vector<8xf32>
    %67 = vector.multi_reduction <add>, %42, %cst_40 [1] : vector<8x8xf32> to vector<8xf32>
    %68 = vector.shape_cast %67 : vector<8xf32> to vector<8x1xf32>
    %cst_41 = arith.constant 8.000000e+00 : f32
    %69 = vector.broadcast %cst_41 : f32 to vector<8x1xf32>
    %70 = arith.divf %68, %69 : vector<8x1xf32>
    %71 = vector.broadcast %70 : vector<8x1xf32> to vector<8x8xf32>
    %72 = arith.subf %42, %71 : vector<8x8xf32>
    %73 = arith.mulf %72, %72 : vector<8x8xf32>
    %cst_42 = arith.constant dense<0.000000e+00> : vector<8xf32>
    %74 = vector.multi_reduction <add>, %73, %cst_42 [1] : vector<8x8xf32> to vector<8xf32>
    %75 = vector.shape_cast %74 : vector<8xf32> to vector<8x1xf32>
    %cst_43 = arith.constant 8.000000e+00 : f32
    %76 = vector.broadcast %cst_43 : f32 to vector<8x1xf32>
    %77 = arith.divf %75, %76 : vector<8x1xf32>
    %cst_44 = arith.constant 9.99999974E-6 : f32
    %78 = vector.broadcast %cst_44 : f32 to vector<8x1xf32>
    %79 = arith.addf %77, %78 : vector<8x1xf32>
    %80 = math.rsqrt %79 : vector<8x1xf32>
    %81 = vector.broadcast %80 : vector<8x1xf32> to vector<8x8xf32>
    %82 = arith.mulf %72, %81 : vector<8x8xf32>
    %83 = vector.broadcast %65 : vector<1x8xf32> to vector<8x8xf32>
    %84 = arith.mulf %82, %83 : vector<8x8xf32>
    %85 = vector.broadcast %66 : vector<1x8xf32> to vector<8x8xf32>
    %86 = arith.addf %84, %85 : vector<8x8xf32>
    %87 = vector.shape_cast %64 : vector<8x8xf32> to vector<8x1x8xf32>
    %88 = vector.shape_cast %87 : vector<8x1x8xf32> to vector<8x1x8xf32>
    %89 = vector.broadcast %88 : vector<8x1x8xf32> to vector<8x8x8xf32>
    %90 = vector.shape_cast %89 : vector<8x8x8xf32> to vector<64x8xf32>
    %91 = vector.shape_cast %86 : vector<8x8xf32> to vector<1x8x8xf32>
    %92 = vector.shape_cast %91 : vector<1x8x8xf32> to vector<1x8x8xf32>
    %93 = vector.broadcast %92 : vector<1x8x8xf32> to vector<8x8x8xf32>
    %94 = vector.shape_cast %93 : vector<8x8x8xf32> to vector<64x8xf32>
    %cst_45 = arith.constant 0.000000e+00 : f32
    %95 = vector.broadcast %cst_45 : f32 to vector<64x8xf32>
    %96 = vector.extract_strided_slice %90 {offsets = [0, 0], sizes = [64, 1], strides = [1, 1]} : vector<64x8xf32> to vector<64x1xf32>
    %c0_46 = arith.constant 0 : index
    %c0_47 = arith.constant 0 : index
    %c0_48 = arith.constant 0 : index
    %97 = vector.load %arg10[%c0_46, %c0_47, %c0_48] : memref<8x8x8xf32, #tpu.memory_space<vmem>>, vector<1x8x8xf32>
    %98 = vector.shape_cast %97 : vector<1x8x8xf32> to vector<8x8xf32>
    %cst_49 = arith.constant dense<0.000000e+00> : vector<64x8xf32>
    %99 = tpu.matmul %94, %98, %cst_49 {dimension_numbers = #tpu.dot_dimension_numbers<[1], [0], [0], [1], [0, 0, 1, 1], [], []>} : vector<64x8xf32>, vector<8x8xf32>, vector<64x8xf32> -> vector<64x8xf32>
    %100 = vector.broadcast %96 : vector<64x1xf32> to vector<64x8xf32>
    %101 = arith.mulf %100, %99 : vector<64x8xf32>
    %102 = arith.addf %95, %101 : vector<64x8xf32>
    %103 = vector.extract_strided_slice %90 {offsets = [0, 1], sizes = [64, 1], strides = [1, 1]} : vector<64x8xf32> to vector<64x1xf32>
    %c1 = arith.constant 1 : index
    %c0_50 = arith.constant 0 : index
    %c0_51 = arith.constant 0 : index
    %104 = vector.load %arg10[%c1, %c0_50, %c0_51] : memref<8x8x8xf32, #tpu.memory_space<vmem>>, vector<1x8x8xf32>
    %105 = vector.shape_cast %104 : vector<1x8x8xf32> to vector<8x8xf32>
    %cst_52 = arith.constant dense<0.000000e+00> : vector<64x8xf32>
    %106 = tpu.matmul %94, %105, %cst_52 {dimension_numbers = #tpu.dot_dimension_numbers<[1], [0], [0], [1], [0, 0, 1, 1], [], []>} : vector<64x8xf32>, vector<8x8xf32>, vector<64x8xf32> -> vector<64x8xf32>
    %107 = vector.broadcast %103 : vector<64x1xf32> to vector<64x8xf32>
    %108 = arith.mulf %107, %106 : vector<64x8xf32>
    %109 = arith.addf %102, %108 : vector<64x8xf32>
    %110 = vector.extract_strided_slice %90 {offsets = [0, 2], sizes = [64, 1], strides = [1, 1]} : vector<64x8xf32> to vector<64x1xf32>
    %c2 = arith.constant 2 : index
    %c0_53 = arith.constant 0 : index
    %c0_54 = arith.constant 0 : index
    %111 = vector.load %arg10[%c2, %c0_53, %c0_54] : memref<8x8x8xf32, #tpu.memory_space<vmem>>, vector<1x8x8xf32>
    %112 = vector.shape_cast %111 : vector<1x8x8xf32> to vector<8x8xf32>
    %cst_55 = arith.constant dense<0.000000e+00> : vector<64x8xf32>
    %113 = tpu.matmul %94, %112, %cst_55 {dimension_numbers = #tpu.dot_dimension_numbers<[1], [0], [0], [1], [0, 0, 1, 1], [], []>} : vector<64x8xf32>, vector<8x8xf32>, vector<64x8xf32> -> vector<64x8xf32>
    %114 = vector.broadcast %110 : vector<64x1xf32> to vector<64x8xf32>
    %115 = arith.mulf %114, %113 : vector<64x8xf32>
    %116 = arith.addf %109, %115 : vector<64x8xf32>
    %117 = vector.extract_strided_slice %90 {offsets = [0, 3], sizes = [64, 1], strides = [1, 1]} : vector<64x8xf32> to vector<64x1xf32>
    %c3 = arith.constant 3 : index
    %c0_56 = arith.constant 0 : index
    %c0_57 = arith.constant 0 : index
    %118 = vector.load %arg10[%c3, %c0_56, %c0_57] : memref<8x8x8xf32, #tpu.memory_space<vmem>>, vector<1x8x8xf32>
    %119 = vector.shape_cast %118 : vector<1x8x8xf32> to vector<8x8xf32>
    %cst_58 = arith.constant dense<0.000000e+00> : vector<64x8xf32>
    %120 = tpu.matmul %94, %119, %cst_58 {dimension_numbers = #tpu.dot_dimension_numbers<[1], [0], [0], [1], [0, 0, 1, 1], [], []>} : vector<64x8xf32>, vector<8x8xf32>, vector<64x8xf32> -> vector<64x8xf32>
    %121 = vector.broadcast %117 : vector<64x1xf32> to vector<64x8xf32>
    %122 = arith.mulf %121, %120 : vector<64x8xf32>
    %123 = arith.addf %116, %122 : vector<64x8xf32>
    %124 = vector.extract_strided_slice %90 {offsets = [0, 4], sizes = [64, 1], strides = [1, 1]} : vector<64x8xf32> to vector<64x1xf32>
    %c4 = arith.constant 4 : index
    %c0_59 = arith.constant 0 : index
    %c0_60 = arith.constant 0 : index
    %125 = vector.load %arg10[%c4, %c0_59, %c0_60] : memref<8x8x8xf32, #tpu.memory_space<vmem>>, vector<1x8x8xf32>
    %126 = vector.shape_cast %125 : vector<1x8x8xf32> to vector<8x8xf32>
    %cst_61 = arith.constant dense<0.000000e+00> : vector<64x8xf32>
    %127 = tpu.matmul %94, %126, %cst_61 {dimension_numbers = #tpu.dot_dimension_numbers<[1], [0], [0], [1], [0, 0, 1, 1], [], []>} : vector<64x8xf32>, vector<8x8xf32>, vector<64x8xf32> -> vector<64x8xf32>
    %128 = vector.broadcast %124 : vector<64x1xf32> to vector<64x8xf32>
    %129 = arith.mulf %128, %127 : vector<64x8xf32>
    %130 = arith.addf %123, %129 : vector<64x8xf32>
    %131 = vector.extract_strided_slice %90 {offsets = [0, 5], sizes = [64, 1], strides = [1, 1]} : vector<64x8xf32> to vector<64x1xf32>
    %c5 = arith.constant 5 : index
    %c0_62 = arith.constant 0 : index
    %c0_63 = arith.constant 0 : index
    %132 = vector.load %arg10[%c5, %c0_62, %c0_63] : memref<8x8x8xf32, #tpu.memory_space<vmem>>, vector<1x8x8xf32>
    %133 = vector.shape_cast %132 : vector<1x8x8xf32> to vector<8x8xf32>
    %cst_64 = arith.constant dense<0.000000e+00> : vector<64x8xf32>
    %134 = tpu.matmul %94, %133, %cst_64 {dimension_numbers = #tpu.dot_dimension_numbers<[1], [0], [0], [1], [0, 0, 1, 1], [], []>} : vector<64x8xf32>, vector<8x8xf32>, vector<64x8xf32> -> vector<64x8xf32>
    %135 = vector.broadcast %131 : vector<64x1xf32> to vector<64x8xf32>
    %136 = arith.mulf %135, %134 : vector<64x8xf32>
    %137 = arith.addf %130, %136 : vector<64x8xf32>
    %138 = vector.extract_strided_slice %90 {offsets = [0, 6], sizes = [64, 1], strides = [1, 1]} : vector<64x8xf32> to vector<64x1xf32>
    %c6 = arith.constant 6 : index
    %c0_65 = arith.constant 0 : index
    %c0_66 = arith.constant 0 : index
    %139 = vector.load %arg10[%c6, %c0_65, %c0_66] : memref<8x8x8xf32, #tpu.memory_space<vmem>>, vector<1x8x8xf32>
    %140 = vector.shape_cast %139 : vector<1x8x8xf32> to vector<8x8xf32>
    %cst_67 = arith.constant dense<0.000000e+00> : vector<64x8xf32>
    %141 = tpu.matmul %94, %140, %cst_67 {dimension_numbers = #tpu.dot_dimension_numbers<[1], [0], [0], [1], [0, 0, 1, 1], [], []>} : vector<64x8xf32>, vector<8x8xf32>, vector<64x8xf32> -> vector<64x8xf32>
    %142 = vector.broadcast %138 : vector<64x1xf32> to vector<64x8xf32>
    %143 = arith.mulf %142, %141 : vector<64x8xf32>
    %144 = arith.addf %137, %143 : vector<64x8xf32>
    %145 = vector.extract_strided_slice %90 {offsets = [0, 7], sizes = [64, 1], strides = [1, 1]} : vector<64x8xf32> to vector<64x1xf32>
    %c7 = arith.constant 7 : index
    %c0_68 = arith.constant 0 : index
    %c0_69 = arith.constant 0 : index
    %146 = vector.load %arg10[%c7, %c0_68, %c0_69] : memref<8x8x8xf32, #tpu.memory_space<vmem>>, vector<1x8x8xf32>
    %147 = vector.shape_cast %146 : vector<1x8x8xf32> to vector<8x8xf32>
    %cst_70 = arith.constant dense<0.000000e+00> : vector<64x8xf32>
    %148 = tpu.matmul %94, %147, %cst_70 {dimension_numbers = #tpu.dot_dimension_numbers<[1], [0], [0], [1], [0, 0, 1, 1], [], []>} : vector<64x8xf32>, vector<8x8xf32>, vector<64x8xf32> -> vector<64x8xf32>
    %149 = vector.broadcast %145 : vector<64x1xf32> to vector<64x8xf32>
    %150 = arith.mulf %149, %148 : vector<64x8xf32>
    %151 = arith.addf %144, %150 : vector<64x8xf32>
    %c0_71 = arith.constant 0 : index
    %c0_72 = arith.constant 0 : index
    %152 = vector.load %arg11[%c0_71, %c0_72] : memref<8x32xf32, #tpu.memory_space<vmem>>, vector<8x32xf32>
    %cst_73 = arith.constant dense<0.000000e+00> : vector<64x32xf32>
    %153 = tpu.matmul %151, %152, %cst_73 {dimension_numbers = #tpu.dot_dimension_numbers<[1], [0], [0], [1], [0, 0, 1, 1], [], []>} : vector<64x8xf32>, vector<8x32xf32>, vector<64x32xf32> -> vector<64x32xf32>
    %c0_74 = arith.constant 0 : index
    %c0_75 = arith.constant 0 : index
    %154 = vector.load %arg12[%c0_74, %c0_75] : memref<1x32xf32, #tpu.memory_space<vmem>>, vector<1x32xf32>
    %155 = vector.broadcast %154 : vector<1x32xf32> to vector<64x32xf32>
    %156 = arith.addf %153, %155 : vector<64x32xf32>
    %cst_76 = arith.constant 0.000000e+00 : f32
    %157 = vector.broadcast %cst_76 : f32 to vector<64x32xf32>
    %158 = arith.maximumf %156, %157 : vector<64x32xf32>
    %c0_77 = arith.constant 0 : index
    %c0_78 = arith.constant 0 : index
    %159 = vector.load %arg13[%c0_77, %c0_78] : memref<32x32xf32, #tpu.memory_space<vmem>>, vector<32x32xf32>
    %cst_79 = arith.constant dense<0.000000e+00> : vector<64x32xf32>
    %160 = tpu.matmul %158, %159, %cst_79 {dimension_numbers = #tpu.dot_dimension_numbers<[1], [0], [0], [1], [0, 0, 1, 1], [], []>} : vector<64x32xf32>, vector<32x32xf32>, vector<64x32xf32> -> vector<64x32xf32>
    %c0_80 = arith.constant 0 : index
    %c0_81 = arith.constant 0 : index
    %161 = vector.load %arg14[%c0_80, %c0_81] : memref<1x32xf32, #tpu.memory_space<vmem>>, vector<1x32xf32>
    %162 = vector.broadcast %161 : vector<1x32xf32> to vector<64x32xf32>
    %163 = arith.addf %160, %162 : vector<64x32xf32>
    %cst_82 = arith.constant 0.000000e+00 : f32
    %164 = vector.broadcast %cst_82 : f32 to vector<64x32xf32>
    %165 = arith.maximumf %163, %164 : vector<64x32xf32>
    %166 = vector.shape_cast %165 : vector<64x32xf32> to vector<8x8x32xf32>
    %c0_83 = arith.constant 0 : index
    %c0_84 = arith.constant 0 : index
    %167 = vector.load %arg15[%c0_83, %c0_84] : memref<1x32xf32, #tpu.memory_space<vmem>>, vector<1x32xf32>
    %168 = vector.shape_cast %167 : vector<1x32xf32> to vector<1x1x32xf32>
    %169 = vector.broadcast %168 : vector<1x1x32xf32> to vector<8x8x32xf32>
    %170 = arith.mulf %166, %169 : vector<8x8x32xf32>
    %cst_85 = arith.constant dense<0.000000e+00> : vector<8x8xf32>
    %171 = vector.multi_reduction <add>, %170, %cst_85 [2] : vector<8x8x32xf32> to vector<8x8xf32>
    %cst_86 = arith.constant dense<0xFF800000> : vector<8xf32>
    %172 = vector.multi_reduction <maximumf>, %171, %cst_86 [1] : vector<8x8xf32> to vector<8xf32>
    %173 = vector.shape_cast %172 : vector<8xf32> to vector<8x1xf32>
    %174 = vector.broadcast %173 : vector<8x1xf32> to vector<8x8xf32>
    %175 = arith.subf %171, %174 : vector<8x8xf32>
    %176 = math.exp %175 : vector<8x8xf32>
    %cst_87 = arith.constant dense<0.000000e+00> : vector<8xf32>
    %177 = vector.multi_reduction <add>, %176, %cst_87 [1] : vector<8x8xf32> to vector<8xf32>
    %178 = vector.shape_cast %177 : vector<8xf32> to vector<8x1xf32>
    %179 = vector.broadcast %178 : vector<8x1xf32> to vector<8x8xf32>
    %180 = arith.divf %176, %179 : vector<8x8xf32>
    %cst_88 = arith.constant dense<0.000000e+00> : vector<8x8xf32>
    %181 = tpu.matmul %180, %28, %cst_88 {dimension_numbers = #tpu.dot_dimension_numbers<[1], [0], [0], [1], [0, 0, 1, 1], [], []>} : vector<8x8xf32>, vector<8x8xf32>, vector<8x8xf32> -> vector<8x8xf32>
    %182 = arith.addf %1, %181 : vector<8x8xf32>
    %c0_89 = arith.constant 0 : index
    %c0_90 = arith.constant 0 : index
    %c0_91 = arith.constant 0 : index
    %183 = vector.load %arg18[%c0_89, %c0_90, %c0_91] : memref<1x8x8xf32, #tpu.memory_space<vmem>>, vector<1x8x8xf32>
    %184 = vector.shape_cast %183 : vector<1x8x8xf32> to vector<8x8xf32>
    %185 = vector.shape_cast %182 : vector<8x8xf32> to vector<1x8x8xf32>
    tpu.vector_store %arg18[%c0_89, %c0_90, %c0_91], %185 {strides = array<i32>} : memref<1x8x8xf32, #tpu.memory_space<vmem>>, vector<1x8x8xf32>,
    return
  }
  func.func @transform_0(%arg0: i32) -> (i32, i32, i32) {
    %c0_i32 = arith.constant 0 : i32
    %c0_i32_0 = arith.constant 0 : i32
    %c0_i32_1 = arith.constant 0 : i32
    return %arg0, %c0_i32, %c0_i32_0 : i32, i32, i32
  }
  func.func @transform_1(%arg0: i32) -> (i32, i32) {
    %c0_i32 = arith.constant 0 : i32
    %c0_i32_0 = arith.constant 0 : i32
    %c0_i32_1 = arith.constant 0 : i32
    return %c0_i32, %c0_i32_0 : i32, i32
  }
  func.func @transform_2(%arg0: i32) -> (i32, i32) {
    %c0_i32 = arith.constant 0 : i32
    %c0_i32_0 = arith.constant 0 : i32
    %c0_i32_1 = arith.constant 0 : i32
    return %c0_i32, %c0_i32_0 : i32, i32
  }
  func.func @transform_3(%arg0: i32) -> (i32, i32, i32) {
    %c0_i32 = arith.constant 0 : i32
    %c0_i32_0 = arith.constant 0 : i32
    %c0_i32_1 = arith.constant 0 : i32
    %c0_i32_2 = arith.constant 0 : i32
    return %c0_i32, %c0_i32_0, %c0_i32_1 : i32, i32, i32
  }
  func.func @transform_4(%arg0: i32) -> (i32, i32) {
    %c0_i32 = arith.constant 0 : i32
    %c0_i32_0 = arith.constant 0 : i32
    %c0_i32_1 = arith.constant 0 : i32
    return %c0_i32, %c0_i32_0 : i32, i32
  }
  func.func @transform_5(%arg0: i32) -> (i32, i32, i32) {
    %c0_i32 = arith.constant 0 : i32
    %c0_i32_0 = arith.constant 0 : i32
    %c0_i32_1 = arith.constant 0 : i32
    %c0_i32_2 = arith.constant 0 : i32
    return %c0_i32, %c0_i32_0, %c0_i32_1 : i32, i32, i32
  }
  func.func @transform_6(%arg0: i32) -> (i32, i32) {
    %c0_i32 = arith.constant 0 : i32
    %c0_i32_0 = arith.constant 0 : i32
    %c0_i32_1 = arith.constant 0 : i32
    return %c0_i32, %c0_i32_0 : i32, i32
  }
  func.func @transform_7(%arg0: i32) -> (i32, i32) {
    %c0_i32 = arith.constant 0 : i32
    %c0_i32_0 = arith.constant 0 : i32
    %c0_i32_1 = arith.constant 0 : i32
    return %c0_i32, %c0_i32_0 : i32, i32
  }
  func.func @transform_8(%arg0: i32) -> (i32, i32) {
    %c0_i32 = arith.constant 0 : i32
    %c0_i32_0 = arith.constant 0 : i32
    %c0_i32_1 = arith.constant 0 : i32
    return %c0_i32, %c0_i32_0 : i32, i32
  }
  func.func @transform_9(%arg0: i32) -> (i32, i32, i32) {
    %c0_i32 = arith.constant 0 : i32
    %c0_i32_0 = arith.constant 0 : i32
    %c0_i32_1 = arith.constant 0 : i32
    %c0_i32_2 = arith.constant 0 : i32
    return %c0_i32, %c0_i32_0, %c0_i32_1 : i32, i32, i32
  }
  func.func @transform_10(%arg0: i32) -> (i32, i32) {
    %c0_i32 = arith.constant 0 : i32
    %c0_i32_0 = arith.constant 0 : i32
    %c0_i32_1 = arith.constant 0 : i32
    return %c0_i32, %c0_i32_0 : i32, i32
  }
  func.func @transform_11(%arg0: i32) -> (i32, i32) {
    %c0_i32 = arith.constant 0 : i32
    %c0_i32_0 = arith.constant 0 : i32
    %c0_i32_1 = arith.constant 0 : i32
    return %c0_i32, %c0_i32_0 : i32, i32
  }
  func.func @transform_12(%arg0: i32) -> (i32, i32) {
    %c0_i32 = arith.constant 0 : i32
    %c0_i32_0 = arith.constant 0 : i32
    %c0_i32_1 = arith.constant 0 : i32
    return %c0_i32, %c0_i32_0 : i32, i32
  }
  func.func @transform_13(%arg0: i32) -> (i32, i32) {
    %c0_i32 = arith.constant 0 : i32
    %c0_i32_0 = arith.constant 0 : i32
    %c0_i32_1 = arith.constant 0 : i32
    return %c0_i32, %c0_i32_0 : i32, i32
  }
  func.func @transform_14(%arg0: i32) -> (i32, i32) {
    %c0_i32 = arith.constant 0 : i32
    %c0_i32_0 = arith.constant 0 : i32
    %c0_i32_1 = arith.constant 0 : i32
    return %c0_i32, %c0_i32_0 : i32, i32
  }
  func.func @transform_15(%arg0: i32) -> (i32, i32) {
    %c0_i32 = arith.constant 0 : i32
    %c0_i32_0 = arith.constant 0 : i32
    %c0_i32_1 = arith.constant 0 : i32
    return %c0_i32, %c0_i32_0 : i32, i32
  }
  func.func @transform_16(%arg0: i32) -> (i32, i32) {
    %c0_i32 = arith.constant 0 : i32
    %c0_i32_0 = arith.constant 0 : i32
    %c0_i32_1 = arith.constant 0 : i32
    return %c0_i32, %c0_i32_0 : i32, i32
  }
  func.func @transform_17(%arg0: i32) -> (i32, i32, i32) {
    %c0_i32 = arith.constant 0 : i32
    %c0_i32_0 = arith.constant 0 : i32
    %c0_i32_1 = arith.constant 0 : i32
    return %arg0, %c0_i32, %c0_i32_0 : i32, i32, i32
  }
}

module attributes {stable_mosaic.version = 11 : i64} {
  func.func @_ffn_norm_kernel(%arg0: i32, %arg1: memref<1x8x8xf32, #tpu.memory_space<vmem>>, %arg2: memref<8x32xf32, #tpu.memory_space<vmem>>, %arg3: memref<1x32xf32, #tpu.memory_space<vmem>>, %arg4: memref<32x8xf32, #tpu.memory_space<vmem>>, %arg5: memref<1x8xf32, #tpu.memory_space<vmem>>, %arg6: memref<1x8xf32, #tpu.memory_space<vmem>>, %arg7: memref<1x8xf32, #tpu.memory_space<vmem>>, %arg8: memref<1x8x8xf32, #tpu.memory_space<vmem>>) attributes {dimension_semantics = [#tpu.dimension_semantics<parallel>], iteration_bounds = array<i64: 2>, scalar_prefetch = 0 : i64, scratch_operands = 0 : i64, tpu.core_type = #tpu.core_type<tc>, window_params = [{transform_indices = @transform_0, window_bounds = array<i64: 1, 8, 8>}, {pipeline_mode = #tpu.pipeline_mode<synchronous>, transform_indices = @transform_1, window_bounds = array<i64: 8, 32>}, {pipeline_mode = #tpu.pipeline_mode<synchronous>, transform_indices = @transform_2, window_bounds = array<i64: 1, 32>}, {pipeline_mode = #tpu.pipeline_mode<synchronous>, transform_indices = @transform_3, window_bounds = array<i64: 32, 8>}, {pipeline_mode = #tpu.pipeline_mode<synchronous>, transform_indices = @transform_4, window_bounds = array<i64: 1, 8>}, {pipeline_mode = #tpu.pipeline_mode<synchronous>, transform_indices = @transform_5, window_bounds = array<i64: 1, 8>}, {pipeline_mode = #tpu.pipeline_mode<synchronous>, transform_indices = @transform_6, window_bounds = array<i64: 1, 8>}, {transform_indices = @transform_7, window_bounds = array<i64: 1, 8, 8>}]} {
    %c0 = arith.constant 0 : index
    %c0_0 = arith.constant 0 : index
    %c0_1 = arith.constant 0 : index
    %0 = vector.load %arg1[%c0, %c0_0, %c0_1] : memref<1x8x8xf32, #tpu.memory_space<vmem>>, vector<1x8x8xf32>
    %1 = vector.shape_cast %0 : vector<1x8x8xf32> to vector<8x8xf32>
    %c0_2 = arith.constant 0 : index
    %c0_3 = arith.constant 0 : index
    %2 = vector.load %arg2[%c0_2, %c0_3] : memref<8x32xf32, #tpu.memory_space<vmem>>, vector<8x32xf32>
    %cst = arith.constant dense<0.000000e+00> : vector<8x32xf32>
    %3 = tpu.matmul %1, %2, %cst {dimension_numbers = #tpu.dot_dimension_numbers<[1], [0], [0], [1], [0, 0, 1, 1], [], []>} : vector<8x8xf32>, vector<8x32xf32>, vector<8x32xf32> -> vector<8x32xf32>
    %c0_4 = arith.constant 0 : index
    %c0_5 = arith.constant 0 : index
    %4 = vector.load %arg3[%c0_4, %c0_5] : memref<1x32xf32, #tpu.memory_space<vmem>>, vector<1x32xf32>
    %5 = vector.broadcast %4 : vector<1x32xf32> to vector<8x32xf32>
    %6 = arith.addf %3, %5 : vector<8x32xf32>
    %cst_6 = arith.constant 0.000000e+00 : f32
    %7 = vector.broadcast %cst_6 : f32 to vector<8x32xf32>
    %8 = arith.maximumf %6, %7 : vector<8x32xf32>
    %c0_7 = arith.constant 0 : index
    %c0_8 = arith.constant 0 : index
    %9 = vector.load %arg4[%c0_7, %c0_8] : memref<32x8xf32, #tpu.memory_space<vmem>>, vector<32x8xf32>
    %cst_9 = arith.constant dense<0.000000e+00> : vector<8x8xf32>
    %10 = tpu.matmul %8, %9, %cst_9 {dimension_numbers = #tpu.dot_dimension_numbers<[1], [0], [0], [1], [0, 0, 1, 1], [], []>} : vector<8x32xf32>, vector<32x8xf32>, vector<8x8xf32> -> vector<8x8xf32>
    %c0_10 = arith.constant 0 : index
    %c0_11 = arith.constant 0 : index
    %11 = vector.load %arg5[%c0_10, %c0_11] : memref<1x8xf32, #tpu.memory_space<vmem>>, vector<1x8xf32>
    %12 = vector.broadcast %11 : vector<1x8xf32> to vector<8x8xf32>
    %13 = arith.addf %10, %12 : vector<8x8xf32>
    %14 = arith.addf %1, %13 : vector<8x8xf32>
    %c0_12 = arith.constant 0 : index
    %c0_13 = arith.constant 0 : index
    %15 = vector.load %arg6[%c0_12, %c0_13] : memref<1x8xf32, #tpu.memory_space<vmem>>, vector<1x8xf32>
    %c0_14 = arith.constant 0 : index
    %c0_15 = arith.constant 0 : index
    %16 = vector.load %arg7[%c0_14, %c0_15] : memref<1x8xf32, #tpu.memory_space<vmem>>, vector<1x8xf32>
    %cst_16 = arith.constant dense<0.000000e+00> : vector<8xf32>
    %17 = vector.multi_reduction <add>, %14, %cst_16 [1] : vector<8x8xf32> to vector<8xf32>
    %18 = vector.shape_cast %17 : vector<8xf32> to vector<8x1xf32>
    %cst_17 = arith.constant 8.000000e+00 : f32
    %19 = vector.broadcast %cst_17 : f32 to vector<8x1xf32>
    %20 = arith.divf %18, %19 : vector<8x1xf32>
    %21 = vector.broadcast %20 : vector<8x1xf32> to vector<8x8xf32>
    %22 = arith.subf %14, %21 : vector<8x8xf32>
    %23 = arith.mulf %22, %22 : vector<8x8xf32>
    %cst_18 = arith.constant dense<0.000000e+00> : vector<8xf32>
    %24 = vector.multi_reduction <add>, %23, %cst_18 [1] : vector<8x8xf32> to vector<8xf32>
    %25 = vector.shape_cast %24 : vector<8xf32> to vector<8x1xf32>
    %cst_19 = arith.constant 8.000000e+00 : f32
    %26 = vector.broadcast %cst_19 : f32 to vector<8x1xf32>
    %27 = arith.divf %25, %26 : vector<8x1xf32>
    %cst_20 = arith.constant 9.99999974E-6 : f32
    %28 = vector.broadcast %cst_20 : f32 to vector<8x1xf32>
    %29 = arith.addf %27, %28 : vector<8x1xf32>
    %30 = math.rsqrt %29 : vector<8x1xf32>
    %31 = vector.broadcast %30 : vector<8x1xf32> to vector<8x8xf32>
    %32 = arith.mulf %22, %31 : vector<8x8xf32>
    %33 = vector.broadcast %15 : vector<1x8xf32> to vector<8x8xf32>
    %34 = arith.mulf %32, %33 : vector<8x8xf32>
    %35 = vector.broadcast %16 : vector<1x8xf32> to vector<8x8xf32>
    %36 = arith.addf %34, %35 : vector<8x8xf32>
    %c0_21 = arith.constant 0 : index
    %c0_22 = arith.constant 0 : index
    %c0_23 = arith.constant 0 : index
    %37 = vector.load %arg8[%c0_21, %c0_22, %c0_23] : memref<1x8x8xf32, #tpu.memory_space<vmem>>, vector<1x8x8xf32>
    %38 = vector.shape_cast %37 : vector<1x8x8xf32> to vector<8x8xf32>
    %39 = vector.shape_cast %36 : vector<8x8xf32> to vector<1x8x8xf32>
    tpu.vector_store %arg8[%c0_21, %c0_22, %c0_23], %39 {strides = array<i32>} : memref<1x8x8xf32, #tpu.memory_space<vmem>>, vector<1x8x8xf32>,
    return
  }
  func.func @transform_0(%arg0: i32) -> (i32, i32, i32) {
    %c0_i32 = arith.constant 0 : i32
    %c0_i32_0 = arith.constant 0 : i32
    %c0_i32_1 = arith.constant 0 : i32
    return %arg0, %c0_i32, %c0_i32_0 : i32, i32, i32
  }
  func.func @transform_1(%arg0: i32) -> (i32, i32) {
    %c0_i32 = arith.constant 0 : i32
    %c0_i32_0 = arith.constant 0 : i32
    %c0_i32_1 = arith.constant 0 : i32
    return %c0_i32, %c0_i32_0 : i32, i32
  }
  func.func @transform_2(%arg0: i32) -> (i32, i32) {
    %c0_i32 = arith.constant 0 : i32
    %c0_i32_0 = arith.constant 0 : i32
    %c0_i32_1 = arith.constant 0 : i32
    return %c0_i32, %c0_i32_0 : i32, i32
  }
  func.func @transform_3(%arg0: i32) -> (i32, i32) {
    %c0_i32 = arith.constant 0 : i32
    %c0_i32_0 = arith.constant 0 : i32
    %c0_i32_1 = arith.constant 0 : i32
    return %c0_i32, %c0_i32_0 : i32, i32
  }
  func.func @transform_4(%arg0: i32) -> (i32, i32) {
    %c0_i32 = arith.constant 0 : i32
    %c0_i32_0 = arith.constant 0 : i32
    %c0_i32_1 = arith.constant 0 : i32
    return %c0_i32, %c0_i32_0 : i32, i32
  }
  func.func @transform_5(%arg0: i32) -> (i32, i32) {
    %c0_i32 = arith.constant 0 : i32
    %c0_i32_0 = arith.constant 0 : i32
    %c0_i32_1 = arith.constant 0 : i32
    return %c0_i32, %c0_i32_0 : i32, i32
  }
  func.func @transform_6(%arg0: i32) -> (i32, i32) {
    %c0_i32 = arith.constant 0 : i32
    %c0_i32_0 = arith.constant 0 : i32
    %c0_i32_1 = arith.constant 0 : i32
    return %c0_i32, %c0_i32_0 : i32, i32
  }
  func.func @transform_7(%arg0: i32) -> (i32, i32, i32) {
    %c0_i32 = arith.constant 0 : i32
    %c0_i32_0 = arith.constant 0 : i32
    %c0_i32_1 = arith.constant 0 : i32
    return %arg0, %c0_i32, %c0_i32_0 : i32, i32, i32
  }
}

module attributes {stable_mosaic.version = 11 : i64} {
  func.func @_ga_attention_kernel(%arg0: i32, %arg1: memref<1x8x8xf32, #tpu.memory_space<vmem>>, %arg2: memref<1x8xf32, #tpu.memory_space<vmem>>, %arg3: memref<1x8xf32, #tpu.memory_space<vmem>>, %arg4: memref<8x8x8xf32, #tpu.memory_space<vmem>>, %arg5: memref<8x8xf32, #tpu.memory_space<vmem>>, %arg6: memref<8x8x8xf32, #tpu.memory_space<vmem>>, %arg7: memref<8x8xf32, #tpu.memory_space<vmem>>, %arg8: memref<1x8xf32, #tpu.memory_space<vmem>>, %arg9: memref<1x8xf32, #tpu.memory_space<vmem>>, %arg10: memref<8x8x8xf32, #tpu.memory_space<vmem>>, %arg11: memref<8x32xf32, #tpu.memory_space<vmem>>, %arg12: memref<1x32xf32, #tpu.memory_space<vmem>>, %arg13: memref<32x32xf32, #tpu.memory_space<vmem>>, %arg14: memref<1x32xf32, #tpu.memory_space<vmem>>, %arg15: memref<1x32xf32, #tpu.memory_space<vmem>>, %arg16: memref<8x8xf32, #tpu.memory_space<vmem>>, %arg17: memref<1x8xf32, #tpu.memory_space<vmem>>, %arg18: memref<1x8x8xf32, #tpu.memory_space<vmem>>) attributes {dimension_semantics = [#tpu.dimension_semantics<parallel>], iteration_bounds = array<i64: 2>, scalar_prefetch = 0 : i64, scratch_operands = 0 : i64, tpu.core_type = #tpu.core_type<tc>, window_params = [{transform_indices = @transform_0, window_bounds = array<i64: 1, 8, 8>}, {pipeline_mode = #tpu.pipeline_mode<synchronous>, transform_indices = @transform_1, window_bounds = array<i64: 1, 8>}, {pipeline_mode = #tpu.pipeline_mode<synchronous>, transform_indices = @transform_2, window_bounds = array<i64: 1, 8>}, {pipeline_mode = #tpu.pipeline_mode<synchronous>, transform_indices = @transform_3, window_bounds = array<i64: 8, 8, 8>}, {pipeline_mode = #tpu.pipeline_mode<synchronous>, transform_indices = @transform_4, window_bounds = array<i64: 8, 8>}, {pipeline_mode = #tpu.pipeline_mode<synchronous>, transform_indices = @transform_5, window_bounds = array<i64: 8, 8, 8>}, {pipeline_mode = #tpu.pipeline_mode<synchronous>, transform_indices = @transform_6, window_bounds = array<i64: 8, 8>}, {pipeline_mode = #tpu.pipeline_mode<synchronous>, transform_indices = @transform_7, window_bounds = array<i64: 1, 8>}, {pipeline_mode = #tpu.pipeline_mode<synchronous>, transform_indices = @transform_8, window_bounds = array<i64: 1, 8>}, {pipeline_mode = #tpu.pipeline_mode<synchronous>, transform_indices = @transform_9, window_bounds = array<i64: 8, 8, 8>}, {pipeline_mode = #tpu.pipeline_mode<synchronous>, transform_indices = @transform_10, window_bounds = array<i64: 8, 32>}, {pipeline_mode = #tpu.pipeline_mode<synchronous>, transform_indices = @transform_11, window_bounds = array<i64: 1, 32>}, {pipeline_mode = #tpu.pipeline_mode<synchronous>, transform_indices = @transform_12, window_bounds = array<i64: 32, 32>}, {pipeline_mode = #tpu.pipeline_mode<synchronous>, transform_indices = @transform_13, window_bounds = array<i64: 1, 32>}, {pipeline_mode = #tpu.pipeline_mode<synchronous>, transform_indices = @transform_14, window_bounds = array<i64: 1, 32>}, {pipeline_mode = #tpu.pipeline_mode<synchronous>, transform_indices = @transform_15, window_bounds = array<i64: 8, 8>}, {pipeline_mode = #tpu.pipeline_mode<synchronous>, transform_indices = @transform_16, window_bounds = array<i64: 1, 8>}, {transform_indices = @transform_17, window_bounds = array<i64: 1, 8, 8>}]} {
    %c0 = arith.constant 0 : index
    %c0_0 = arith.constant 0 : index
    %c0_1 = arith.constant 0 : index
    %0 = vector.load %arg1[%c0, %c0_0, %c0_1] : memref<1x8x8xf32, #tpu.memory_space<vmem>>, vector<1x8x8xf32>
    %1 = vector.shape_cast %0 : vector<1x8x8xf32> to vector<8x8xf32>
    %c0_2 = arith.constant 0 : index
    %c0_3 = arith.constant 0 : index
    %2 = vector.load %arg2[%c0_2, %c0_3] : memref<1x8xf32, #tpu.memory_space<vmem>>, vector<1x8xf32>
    %c0_4 = arith.constant 0 : index
    %c0_5 = arith.constant 0 : index
    %3 = vector.load %arg3[%c0_4, %c0_5] : memref<1x8xf32, #tpu.memory_space<vmem>>, vector<1x8xf32>
    %cst = arith.constant dense<0.000000e+00> : vector<8xf32>
    %4 = vector.multi_reduction <add>, %1, %cst [1] : vector<8x8xf32> to vector<8xf32>
    %5 = vector.shape_cast %4 : vector<8xf32> to vector<8x1xf32>
    %cst_6 = arith.constant 8.000000e+00 : f32
    %6 = vector.broadcast %cst_6 : f32 to vector<8x1xf32>
    %7 = arith.divf %5, %6 : vector<8x1xf32>
    %8 = vector.broadcast %7 : vector<8x1xf32> to vector<8x8xf32>
    %9 = arith.subf %1, %8 : vector<8x8xf32>
    %10 = arith.mulf %9, %9 : vector<8x8xf32>
    %cst_7 = arith.constant dense<0.000000e+00> : vector<8xf32>
    %11 = vector.multi_reduction <add>, %10, %cst_7 [1] : vector<8x8xf32> to vector<8xf32>
    %12 = vector.shape_cast %11 : vector<8xf32> to vector<8x1xf32>
    %cst_8 = arith.constant 8.000000e+00 : f32
    %13 = vector.broadcast %cst_8 : f32 to vector<8x1xf32>
    %14 = arith.divf %12, %13 : vector<8x1xf32>
    %cst_9 = arith.constant 9.99999974E-6 : f32
    %15 = vector.broadcast %cst_9 : f32 to vector<8x1xf32>
    %16 = arith.addf %14, %15 : vector<8x1xf32>
    %17 = math.rsqrt %16 : vector<8x1xf32>
    %18 = vector.broadcast %17 : vector<8x1xf32> to vector<8x8xf32>
    %19 = arith.mulf %9, %18 : vector<8x8xf32>
    %20 = vector.broadcast %2 : vector<1x8xf32> to vector<8x8xf32>
    %21 = arith.mulf %19, %20 : vector<8x8xf32>
    %22 = vector.broadcast %3 : vector<1x8xf32> to vector<8x8xf32>
    %23 = arith.addf %21, %22 : vector<8x8xf32>
    %c0_10 = arith.constant 0 : index
    %c0_11 = arith.constant 0 : index
    %24 = vector.load %arg16[%c0_10, %c0_11] : memref<8x8xf32, #tpu.memory_space<vmem>>, vector<8x8xf32>
    %cst_12 = arith.constant dense<0.000000e+00> : vector<8x8xf32>
    %25 = tpu.matmul %23, %24, %cst_12 {dimension_numbers = #tpu.dot_dimension_numbers<[1], [0], [0], [1], [0, 0, 1, 1], [], []>} : vector<8x8xf32>, vector<8x8xf32>, vector<8x8xf32> -> vector<8x8xf32>
    %c0_13 = arith.constant 0 : index
    %c0_14 = arith.constant 0 : index
    %26 = vector.load %arg17[%c0_13, %c0_14] : memref<1x8xf32, #tpu.memory_space<vmem>>, vector<1x8xf32>
    %27 = vector.broadcast %26 : vector<1x8xf32> to vector<8x8xf32>
    %28 = arith.addf %25, %27 : vector<8x8xf32>
    %c0_15 = arith.constant 0 : index
    %c0_16 = arith.constant 0 : index
    %c0_17 = arith.constant 0 : index
    %29 = vector.load %arg4[%c0_15, %c0_16, %c0_17] : memref<8x8x8xf32, #tpu.memory_space<vmem>>, vector<8x8x8xf32>
    %30 = vector.shape_cast %23 : vector<8x8xf32> to vector<1x8x8xf32>
    %31 = vector.broadcast %30 : vector<1x8x8xf32> to vector<8x8x8xf32>
    %32 = arith.mulf %29, %31 : vector<8x8x8xf32>
    %cst_18 = arith.constant dense<0.000000e+00> : vector<8x8xf32>
    %33 = vector.multi_reduction <add>, %32, %cst_18 [1] : vector<8x8x8xf32> to vector<8x8xf32>
    %c0_19 = arith.constant 0 : index
    %c0_20 = arith.constant 0 : index
    %34 = vector.load %arg5[%c0_19, %c0_20] : memref<8x8xf32, #tpu.memory_space<vmem>>, vector<8x8xf32>
    %35 = arith.addf %33, %34 : vector<8x8xf32>
    %c0_21 = arith.constant 0 : index
    %c0_22 = arith.constant 0 : index
    %c0_23 = arith.constant 0 : index
    %36 = vector.load %arg6[%c0_21, %c0_22, %c0_23] : memref<8x8x8xf32, #tpu.memory_space<vmem>>, vector<8x8x8xf32>
    %37 = vector.shape_cast %23 : vector<8x8xf32> to vector<1x8x8xf32>
    %38 = vector.broadcast %37 : vector<1x8x8xf32> to vector<8x8x8xf32>
    %39 = arith.mulf %36, %38 : vector<8x8x8xf32>
    %cst_24 = arith.constant dense<0.000000e+00> : vector<8x8xf32>
    %40 = vector.multi_reduction <add>, %39, %cst_24 [1] : vector<8x8x8xf32> to vector<8x8xf32>
    %c0_25 = arith.constant 0 : index
    %c0_26 = arith.constant 0 : index
    %41 = vector.load %arg7[%c0_25, %c0_26] : memref<8x8xf32, #tpu.memory_space<vmem>>, vector<8x8xf32>
    %42 = arith.addf %40, %41 : vector<8x8xf32>
    %c0_27 = arith.constant 0 : index
    %c0_28 = arith.constant 0 : index
    %43 = vector.load %arg8[%c0_27, %c0_28] : memref<1x8xf32, #tpu.memory_space<vmem>>, vector<1x8xf32>
    %c0_29 = arith.constant 0 : index
    %c0_30 = arith.constant 0 : index
    %44 = vector.load %arg9[%c0_29, %c0_30] : memref<1x8xf32, #tpu.memory_space<vmem>>, vector<1x8xf32>
    %cst_31 = arith.constant dense<0.000000e+00> : vector<8xf32>
    %45 = vector.multi_reduction <add>, %35, %cst_31 [1] : vector<8x8xf32> to vector<8xf32>
    %46 = vector.shape_cast %45 : vector<8xf32> to vector<8x1xf32>
    %cst_32 = arith.constant 8.000000e+00 : f32
    %47 = vector.broadcast %cst_32 : f32 to vector<8x1xf32>
    %48 = arith.divf %46, %47 : vector<8x1xf32>
    %49 = vector.broadcast %48 : vector<8x1xf32> to vector<8x8xf32>
    %50 = arith.subf %35, %49 : vector<8x8xf32>
    %51 = arith.mulf %50, %50 : vector<8x8xf32>
    %cst_33 = arith.constant dense<0.000000e+00> : vector<8xf32>
    %52 = vector.multi_reduction <add>, %51, %cst_33 [1] : vector<8x8xf32> to vector<8xf32>
    %53 = vector.shape_cast %52 : vector<8xf32> to vector<8x1xf32>
    %cst_34 = arith.constant 8.000000e+00 : f32
    %54 = vector.broadcast %cst_34 : f32 to vector<8x1xf32>
    %55 = arith.divf %53, %54 : vector<8x1xf32>
    %cst_35 = arith.constant 9.99999974E-6 : f32
    %56 = vector.broadcast %cst_35 : f32 to vector<8x1xf32>
    %57 = arith.addf %55, %56 : vector<8x1xf32>
    %58 = math.rsqrt %57 : vector<8x1xf32>
    %59 = vector.broadcast %58 : vector<8x1xf32> to vector<8x8xf32>
    %60 = arith.mulf %50, %59 : vector<8x8xf32>
    %61 = vector.broadcast %43 : vector<1x8xf32> to vector<8x8xf32>
    %62 = arith.mulf %60, %61 : vector<8x8xf32>
    %63 = vector.broadcast %44 : vector<1x8xf32> to vector<8x8xf32>
    %64 = arith.addf %62, %63 : vector<8x8xf32>
    %c0_36 = arith.constant 0 : index
    %c0_37 = arith.constant 0 : index
    %65 = vector.load %arg8[%c0_36, %c0_37] : memref<1x8xf32, #tpu.memory_space<vmem>>, vector<1x8xf32>
    %c0_38 = arith.constant 0 : index
    %c0_39 = arith.constant 0 : index
    %66 = vector.load %arg9[%c0_38, %c0_39] : memref<1x8xf32, #tpu.memory_space<vmem>>, vector<1x8xf32>
    %cst_40 = arith.constant dense<0.000000e+00> : vector<8xf32>
    %67 = vector.multi_reduction <add>, %42, %cst_40 [1] : vector<8x8xf32> to vector<8xf32>
    %68 = vector.shape_cast %67 : vector<8xf32> to vector<8x1xf32>
    %cst_41 = arith.constant 8.000000e+00 : f32
    %69 = vector.broadcast %cst_41 : f32 to vector<8x1xf32>
    %70 = arith.divf %68, %69 : vector<8x1xf32>
    %71 = vector.broadcast %70 : vector<8x1xf32> to vector<8x8xf32>
    %72 = arith.subf %42, %71 : vector<8x8xf32>
    %73 = arith.mulf %72, %72 : vector<8x8xf32>
    %cst_42 = arith.constant dense<0.000000e+00> : vector<8xf32>
    %74 = vector.multi_reduction <add>, %73, %cst_42 [1] : vector<8x8xf32> to vector<8xf32>
    %75 = vector.shape_cast %74 : vector<8xf32> to vector<8x1xf32>
    %cst_43 = arith.constant 8.000000e+00 : f32
    %76 = vector.broadcast %cst_43 : f32 to vector<8x1xf32>
    %77 = arith.divf %75, %76 : vector<8x1xf32>
    %cst_44 = arith.constant 9.99999974E-6 : f32
    %78 = vector.broadcast %cst_44 : f32 to vector<8x1xf32>
    %79 = arith.addf %77, %78 : vector<8x1xf32>
    %80 = math.rsqrt %79 : vector<8x1xf32>
    %81 = vector.broadcast %80 : vector<8x1xf32> to vector<8x8xf32>
    %82 = arith.mulf %72, %81 : vector<8x8xf32>
    %83 = vector.broadcast %65 : vector<1x8xf32> to vector<8x8xf32>
    %84 = arith.mulf %82, %83 : vector<8x8xf32>
    %85 = vector.broadcast %66 : vector<1x8xf32> to vector<8x8xf32>
    %86 = arith.addf %84, %85 : vector<8x8xf32>
    %87 = vector.shape_cast %64 : vector<8x8xf32> to vector<8x1x8xf32>
    %88 = vector.shape_cast %87 : vector<8x1x8xf32> to vector<8x1x8xf32>
    %89 = vector.broadcast %88 : vector<8x1x8xf32> to vector<8x8x8xf32>
    %90 = vector.shape_cast %89 : vector<8x8x8xf32> to vector<64x8xf32>
    %91 = vector.shape_cast %86 : vector<8x8xf32> to vector<1x8x8xf32>
    %92 = vector.shape_cast %91 : vector<1x8x8xf32> to vector<1x8x8xf32>
    %93 = vector.broadcast %92 : vector<1x8x8xf32> to vector<8x8x8xf32>
    %94 = vector.shape_cast %93 : vector<8x8x8xf32> to vector<64x8xf32>
    %cst_45 = arith.constant 0.000000e+00 : f32
    %95 = vector.broadcast %cst_45 : f32 to vector<64x8xf32>
    %96 = vector.extract_strided_slice %90 {offsets = [0, 0], sizes = [64, 1], strides = [1, 1]} : vector<64x8xf32> to vector<64x1xf32>
    %c0_46 = arith.constant 0 : index
    %c0_47 = arith.constant 0 : index
    %c0_48 = arith.constant 0 : index
    %97 = vector.load %arg10[%c0_46, %c0_47, %c0_48] : memref<8x8x8xf32, #tpu.memory_space<vmem>>, vector<1x8x8xf32>
    %98 = vector.shape_cast %97 : vector<1x8x8xf32> to vector<8x8xf32>
    %cst_49 = arith.constant dense<0.000000e+00> : vector<64x8xf32>
    %99 = tpu.matmul %94, %98, %cst_49 {dimension_numbers = #tpu.dot_dimension_numbers<[1], [0], [0], [1], [0, 0, 1, 1], [], []>} : vector<64x8xf32>, vector<8x8xf32>, vector<64x8xf32> -> vector<64x8xf32>
    %100 = vector.broadcast %96 : vector<64x1xf32> to vector<64x8xf32>
    %101 = arith.mulf %100, %99 : vector<64x8xf32>
    %102 = arith.addf %95, %101 : vector<64x8xf32>
    %103 = vector.extract_strided_slice %90 {offsets = [0, 1], sizes = [64, 1], strides = [1, 1]} : vector<64x8xf32> to vector<64x1xf32>
    %c1 = arith.constant 1 : index
    %c0_50 = arith.constant 0 : index
    %c0_51 = arith.constant 0 : index
    %104 = vector.load %arg10[%c1, %c0_50, %c0_51] : memref<8x8x8xf32, #tpu.memory_space<vmem>>, vector<1x8x8xf32>
    %105 = vector.shape_cast %104 : vector<1x8x8xf32> to vector<8x8xf32>
    %cst_52 = arith.constant dense<0.000000e+00> : vector<64x8xf32>
    %106 = tpu.matmul %94, %105, %cst_52 {dimension_numbers = #tpu.dot_dimension_numbers<[1], [0], [0], [1], [0, 0, 1, 1], [], []>} : vector<64x8xf32>, vector<8x8xf32>, vector<64x8xf32> -> vector<64x8xf32>
    %107 = vector.broadcast %103 : vector<64x1xf32> to vector<64x8xf32>
    %108 = arith.mulf %107, %106 : vector<64x8xf32>
    %109 = arith.addf %102, %108 : vector<64x8xf32>
    %110 = vector.extract_strided_slice %90 {offsets = [0, 2], sizes = [64, 1], strides = [1, 1]} : vector<64x8xf32> to vector<64x1xf32>
    %c2 = arith.constant 2 : index
    %c0_53 = arith.constant 0 : index
    %c0_54 = arith.constant 0 : index
    %111 = vector.load %arg10[%c2, %c0_53, %c0_54] : memref<8x8x8xf32, #tpu.memory_space<vmem>>, vector<1x8x8xf32>
    %112 = vector.shape_cast %111 : vector<1x8x8xf32> to vector<8x8xf32>
    %cst_55 = arith.constant dense<0.000000e+00> : vector<64x8xf32>
    %113 = tpu.matmul %94, %112, %cst_55 {dimension_numbers = #tpu.dot_dimension_numbers<[1], [0], [0], [1], [0, 0, 1, 1], [], []>} : vector<64x8xf32>, vector<8x8xf32>, vector<64x8xf32> -> vector<64x8xf32>
    %114 = vector.broadcast %110 : vector<64x1xf32> to vector<64x8xf32>
    %115 = arith.mulf %114, %113 : vector<64x8xf32>
    %116 = arith.addf %109, %115 : vector<64x8xf32>
    %117 = vector.extract_strided_slice %90 {offsets = [0, 3], sizes = [64, 1], strides = [1, 1]} : vector<64x8xf32> to vector<64x1xf32>
    %c3 = arith.constant 3 : index
    %c0_56 = arith.constant 0 : index
    %c0_57 = arith.constant 0 : index
    %118 = vector.load %arg10[%c3, %c0_56, %c0_57] : memref<8x8x8xf32, #tpu.memory_space<vmem>>, vector<1x8x8xf32>
    %119 = vector.shape_cast %118 : vector<1x8x8xf32> to vector<8x8xf32>
    %cst_58 = arith.constant dense<0.000000e+00> : vector<64x8xf32>
    %120 = tpu.matmul %94, %119, %cst_58 {dimension_numbers = #tpu.dot_dimension_numbers<[1], [0], [0], [1], [0, 0, 1, 1], [], []>} : vector<64x8xf32>, vector<8x8xf32>, vector<64x8xf32> -> vector<64x8xf32>
    %121 = vector.broadcast %117 : vector<64x1xf32> to vector<64x8xf32>
    %122 = arith.mulf %121, %120 : vector<64x8xf32>
    %123 = arith.addf %116, %122 : vector<64x8xf32>
    %124 = vector.extract_strided_slice %90 {offsets = [0, 4], sizes = [64, 1], strides = [1, 1]} : vector<64x8xf32> to vector<64x1xf32>
    %c4 = arith.constant 4 : index
    %c0_59 = arith.constant 0 : index
    %c0_60 = arith.constant 0 : index
    %125 = vector.load %arg10[%c4, %c0_59, %c0_60] : memref<8x8x8xf32, #tpu.memory_space<vmem>>, vector<1x8x8xf32>
    %126 = vector.shape_cast %125 : vector<1x8x8xf32> to vector<8x8xf32>
    %cst_61 = arith.constant dense<0.000000e+00> : vector<64x8xf32>
    %127 = tpu.matmul %94, %126, %cst_61 {dimension_numbers = #tpu.dot_dimension_numbers<[1], [0], [0], [1], [0, 0, 1, 1], [], []>} : vector<64x8xf32>, vector<8x8xf32>, vector<64x8xf32> -> vector<64x8xf32>
    %128 = vector.broadcast %124 : vector<64x1xf32> to vector<64x8xf32>
    %129 = arith.mulf %128, %127 : vector<64x8xf32>
    %130 = arith.addf %123, %129 : vector<64x8xf32>
    %131 = vector.extract_strided_slice %90 {offsets = [0, 5], sizes = [64, 1], strides = [1, 1]} : vector<64x8xf32> to vector<64x1xf32>
    %c5 = arith.constant 5 : index
    %c0_62 = arith.constant 0 : index
    %c0_63 = arith.constant 0 : index
    %132 = vector.load %arg10[%c5, %c0_62, %c0_63] : memref<8x8x8xf32, #tpu.memory_space<vmem>>, vector<1x8x8xf32>
    %133 = vector.shape_cast %132 : vector<1x8x8xf32> to vector<8x8xf32>
    %cst_64 = arith.constant dense<0.000000e+00> : vector<64x8xf32>
    %134 = tpu.matmul %94, %133, %cst_64 {dimension_numbers = #tpu.dot_dimension_numbers<[1], [0], [0], [1], [0, 0, 1, 1], [], []>} : vector<64x8xf32>, vector<8x8xf32>, vector<64x8xf32> -> vector<64x8xf32>
    %135 = vector.broadcast %131 : vector<64x1xf32> to vector<64x8xf32>
    %136 = arith.mulf %135, %134 : vector<64x8xf32>
    %137 = arith.addf %130, %136 : vector<64x8xf32>
    %138 = vector.extract_strided_slice %90 {offsets = [0, 6], sizes = [64, 1], strides = [1, 1]} : vector<64x8xf32> to vector<64x1xf32>
    %c6 = arith.constant 6 : index
    %c0_65 = arith.constant 0 : index
    %c0_66 = arith.constant 0 : index
    %139 = vector.load %arg10[%c6, %c0_65, %c0_66] : memref<8x8x8xf32, #tpu.memory_space<vmem>>, vector<1x8x8xf32>
    %140 = vector.shape_cast %139 : vector<1x8x8xf32> to vector<8x8xf32>
    %cst_67 = arith.constant dense<0.000000e+00> : vector<64x8xf32>
    %141 = tpu.matmul %94, %140, %cst_67 {dimension_numbers = #tpu.dot_dimension_numbers<[1], [0], [0], [1], [0, 0, 1, 1], [], []>} : vector<64x8xf32>, vector<8x8xf32>, vector<64x8xf32> -> vector<64x8xf32>
    %142 = vector.broadcast %138 : vector<64x1xf32> to vector<64x8xf32>
    %143 = arith.mulf %142, %141 : vector<64x8xf32>
    %144 = arith.addf %137, %143 : vector<64x8xf32>
    %145 = vector.extract_strided_slice %90 {offsets = [0, 7], sizes = [64, 1], strides = [1, 1]} : vector<64x8xf32> to vector<64x1xf32>
    %c7 = arith.constant 7 : index
    %c0_68 = arith.constant 0 : index
    %c0_69 = arith.constant 0 : index
    %146 = vector.load %arg10[%c7, %c0_68, %c0_69] : memref<8x8x8xf32, #tpu.memory_space<vmem>>, vector<1x8x8xf32>
    %147 = vector.shape_cast %146 : vector<1x8x8xf32> to vector<8x8xf32>
    %cst_70 = arith.constant dense<0.000000e+00> : vector<64x8xf32>
    %148 = tpu.matmul %94, %147, %cst_70 {dimension_numbers = #tpu.dot_dimension_numbers<[1], [0], [0], [1], [0, 0, 1, 1], [], []>} : vector<64x8xf32>, vector<8x8xf32>, vector<64x8xf32> -> vector<64x8xf32>
    %149 = vector.broadcast %145 : vector<64x1xf32> to vector<64x8xf32>
    %150 = arith.mulf %149, %148 : vector<64x8xf32>
    %151 = arith.addf %144, %150 : vector<64x8xf32>
    %c0_71 = arith.constant 0 : index
    %c0_72 = arith.constant 0 : index
    %152 = vector.load %arg11[%c0_71, %c0_72] : memref<8x32xf32, #tpu.memory_space<vmem>>, vector<8x32xf32>
    %cst_73 = arith.constant dense<0.000000e+00> : vector<64x32xf32>
    %153 = tpu.matmul %151, %152, %cst_73 {dimension_numbers = #tpu.dot_dimension_numbers<[1], [0], [0], [1], [0, 0, 1, 1], [], []>} : vector<64x8xf32>, vector<8x32xf32>, vector<64x32xf32> -> vector<64x32xf32>
    %c0_74 = arith.constant 0 : index
    %c0_75 = arith.constant 0 : index
    %154 = vector.load %arg12[%c0_74, %c0_75] : memref<1x32xf32, #tpu.memory_space<vmem>>, vector<1x32xf32>
    %155 = vector.broadcast %154 : vector<1x32xf32> to vector<64x32xf32>
    %156 = arith.addf %153, %155 : vector<64x32xf32>
    %cst_76 = arith.constant 0.000000e+00 : f32
    %157 = vector.broadcast %cst_76 : f32 to vector<64x32xf32>
    %158 = arith.maximumf %156, %157 : vector<64x32xf32>
    %c0_77 = arith.constant 0 : index
    %c0_78 = arith.constant 0 : index
    %159 = vector.load %arg13[%c0_77, %c0_78] : memref<32x32xf32, #tpu.memory_space<vmem>>, vector<32x32xf32>
    %cst_79 = arith.constant dense<0.000000e+00> : vector<64x32xf32>
    %160 = tpu.matmul %158, %159, %cst_79 {dimension_numbers = #tpu.dot_dimension_numbers<[1], [0], [0], [1], [0, 0, 1, 1], [], []>} : vector<64x32xf32>, vector<32x32xf32>, vector<64x32xf32> -> vector<64x32xf32>
    %c0_80 = arith.constant 0 : index
    %c0_81 = arith.constant 0 : index
    %161 = vector.load %arg14[%c0_80, %c0_81] : memref<1x32xf32, #tpu.memory_space<vmem>>, vector<1x32xf32>
    %162 = vector.broadcast %161 : vector<1x32xf32> to vector<64x32xf32>
    %163 = arith.addf %160, %162 : vector<64x32xf32>
    %cst_82 = arith.constant 0.000000e+00 : f32
    %164 = vector.broadcast %cst_82 : f32 to vector<64x32xf32>
    %165 = arith.maximumf %163, %164 : vector<64x32xf32>
    %166 = vector.shape_cast %165 : vector<64x32xf32> to vector<8x8x32xf32>
    %c0_83 = arith.constant 0 : index
    %c0_84 = arith.constant 0 : index
    %167 = vector.load %arg15[%c0_83, %c0_84] : memref<1x32xf32, #tpu.memory_space<vmem>>, vector<1x32xf32>
    %168 = vector.shape_cast %167 : vector<1x32xf32> to vector<1x1x32xf32>
    %169 = vector.broadcast %168 : vector<1x1x32xf32> to vector<8x8x32xf32>
    %170 = arith.mulf %166, %169 : vector<8x8x32xf32>
    %cst_85 = arith.constant dense<0.000000e+00> : vector<8x8xf32>
    %171 = vector.multi_reduction <add>, %170, %cst_85 [2] : vector<8x8x32xf32> to vector<8x8xf32>
    %cst_86 = arith.constant dense<0xFF800000> : vector<8xf32>
    %172 = vector.multi_reduction <maximumf>, %171, %cst_86 [1] : vector<8x8xf32> to vector<8xf32>
    %173 = vector.shape_cast %172 : vector<8xf32> to vector<8x1xf32>
    %174 = vector.broadcast %173 : vector<8x1xf32> to vector<8x8xf32>
    %175 = arith.subf %171, %174 : vector<8x8xf32>
    %176 = math.exp %175 : vector<8x8xf32>
    %cst_87 = arith.constant dense<0.000000e+00> : vector<8xf32>
    %177 = vector.multi_reduction <add>, %176, %cst_87 [1] : vector<8x8xf32> to vector<8xf32>
    %178 = vector.shape_cast %177 : vector<8xf32> to vector<8x1xf32>
    %179 = vector.broadcast %178 : vector<8x1xf32> to vector<8x8xf32>
    %180 = arith.divf %176, %179 : vector<8x8xf32>
    %cst_88 = arith.constant dense<0.000000e+00> : vector<8x8xf32>
    %181 = tpu.matmul %180, %28, %cst_88 {dimension_numbers = #tpu.dot_dimension_numbers<[1], [0], [0], [1], [0, 0, 1, 1], [], []>} : vector<8x8xf32>, vector<8x8xf32>, vector<8x8xf32> -> vector<8x8xf32>
    %182 = arith.addf %1, %181 : vector<8x8xf32>
    %c0_89 = arith.constant 0 : index
    %c0_90 = arith.constant 0 : index
    %c0_91 = arith.constant 0 : index
    %183 = vector.load %arg18[%c0_89, %c0_90, %c0_91] : memref<1x8x8xf32, #tpu.memory_space<vmem>>, vector<1x8x8xf32>
    %184 = vector.shape_cast %183 : vector<1x8x8xf32> to vector<8x8xf32>
    %185 = vector.shape_cast %182 : vector<8x8xf32> to vector<1x8x8xf32>
    tpu.vector_store %arg18[%c0_89, %c0_90, %c0_91], %185 {strides = array<i32>} : memref<1x8x8xf32, #tpu.memory_space<vmem>>, vector<1x8x8xf32>,
    return
  }
  func.func @transform_0(%arg0: i32) -> (i32, i32, i32) {
    %c0_i32 = arith.constant 0 : i32
    %c0_i32_0 = arith.constant 0 : i32
    %c0_i32_1 = arith.constant 0 : i32
    return %arg0, %c0_i32, %c0_i32_0 : i32, i32, i32
  }
  func.func @transform_1(%arg0: i32) -> (i32, i32) {
    %c0_i32 = arith.constant 0 : i32
    %c0_i32_0 = arith.constant 0 : i32
    %c0_i32_1 = arith.constant 0 : i32
    return %c0_i32, %c0_i32_0 : i32, i32
  }
  func.func @transform_2(%arg0: i32) -> (i32, i32) {
    %c0_i32 = arith.constant 0 : i32
    %c0_i32_0 = arith.constant 0 : i32
    %c0_i32_1 = arith.constant 0 : i32
    return %c0_i32, %c0_i32_0 : i32, i32
  }
  func.func @transform_3(%arg0: i32) -> (i32, i32, i32) {
    %c0_i32 = arith.constant 0 : i32
    %c0_i32_0 = arith.constant 0 : i32
    %c0_i32_1 = arith.constant 0 : i32
    %c0_i32_2 = arith.constant 0 : i32
    return %c0_i32, %c0_i32_0, %c0_i32_1 : i32, i32, i32
  }
  func.func @transform_4(%arg0: i32) -> (i32, i32) {
    %c0_i32 = arith.constant 0 : i32
    %c0_i32_0 = arith.constant 0 : i32
    %c0_i32_1 = arith.constant 0 : i32
    return %c0_i32, %c0_i32_0 : i32, i32
  }
  func.func @transform_5(%arg0: i32) -> (i32, i32, i32) {
    %c0_i32 = arith.constant 0 : i32
    %c0_i32_0 = arith.constant 0 : i32
    %c0_i32_1 = arith.constant 0 : i32
    %c0_i32_2 = arith.constant 0 : i32
    return %c0_i32, %c0_i32_0, %c0_i32_1 : i32, i32, i32
  }
  func.func @transform_6(%arg0: i32) -> (i32, i32) {
    %c0_i32 = arith.constant 0 : i32
    %c0_i32_0 = arith.constant 0 : i32
    %c0_i32_1 = arith.constant 0 : i32
    return %c0_i32, %c0_i32_0 : i32, i32
  }
  func.func @transform_7(%arg0: i32) -> (i32, i32) {
    %c0_i32 = arith.constant 0 : i32
    %c0_i32_0 = arith.constant 0 : i32
    %c0_i32_1 = arith.constant 0 : i32
    return %c0_i32, %c0_i32_0 : i32, i32
  }
  func.func @transform_8(%arg0: i32) -> (i32, i32) {
    %c0_i32 = arith.constant 0 : i32
    %c0_i32_0 = arith.constant 0 : i32
    %c0_i32_1 = arith.constant 0 : i32
    return %c0_i32, %c0_i32_0 : i32, i32
  }
  func.func @transform_9(%arg0: i32) -> (i32, i32, i32) {
    %c0_i32 = arith.constant 0 : i32
    %c0_i32_0 = arith.constant 0 : i32
    %c0_i32_1 = arith.constant 0 : i32
    %c0_i32_2 = arith.constant 0 : i32
    return %c0_i32, %c0_i32_0, %c0_i32_1 : i32, i32, i32
  }
  func.func @transform_10(%arg0: i32) -> (i32, i32) {
    %c0_i32 = arith.constant 0 : i32
    %c0_i32_0 = arith.constant 0 : i32
    %c0_i32_1 = arith.constant 0 : i32
    return %c0_i32, %c0_i32_0 : i32, i32
  }
  func.func @transform_11(%arg0: i32) -> (i32, i32) {
    %c0_i32 = arith.constant 0 : i32
    %c0_i32_0 = arith.constant 0 : i32
    %c0_i32_1 = arith.constant 0 : i32
    return %c0_i32, %c0_i32_0 : i32, i32
  }
  func.func @transform_12(%arg0: i32) -> (i32, i32) {
    %c0_i32 = arith.constant 0 : i32
    %c0_i32_0 = arith.constant 0 : i32
    %c0_i32_1 = arith.constant 0 : i32
    return %c0_i32, %c0_i32_0 : i32, i32
  }
  func.func @transform_13(%arg0: i32) -> (i32, i32) {
    %c0_i32 = arith.constant 0 : i32
    %c0_i32_0 = arith.constant 0 : i32
    %c0_i32_1 = arith.constant 0 : i32
    return %c0_i32, %c0_i32_0 : i32, i32
  }
  func.func @transform_14(%arg0: i32) -> (i32, i32) {
    %c0_i32 = arith.constant 0 : i32
    %c0_i32_0 = arith.constant 0 : i32
    %c0_i32_1 = arith.constant 0 : i32
    return %c0_i32, %c0_i32_0 : i32, i32
  }
  func.func @transform_15(%arg0: i32) -> (i32, i32) {
    %c0_i32 = arith.constant 0 : i32
    %c0_i32_0 = arith.constant 0 : i32
    %c0_i32_1 = arith.constant 0 : i32
    return %c0_i32, %c0_i32_0 : i32, i32
  }
  func.func @transform_16(%arg0: i32) -> (i32, i32) {
    %c0_i32 = arith.constant 0 : i32
    %c0_i32_0 = arith.constant 0 : i32
    %c0_i32_1 = arith.constant 0 : i32
    return %c0_i32, %c0_i32_0 : i32, i32
  }
  func.func @transform_17(%arg0: i32) -> (i32, i32, i32) {
    %c0_i32 = arith.constant 0 : i32
    %c0_i32_0 = arith.constant 0 : i32
    %c0_i32_1 = arith.constant 0 : i32
    return %arg0, %c0_i32, %c0_i32_0 : i32, i32, i32
  }
}

module attributes {stable_mosaic.version = 11 : i64} {
  func.func @_ffn_norm_kernel(%arg0: i32, %arg1: memref<1x8x8xf32, #tpu.memory_space<vmem>>, %arg2: memref<8x32xf32, #tpu.memory_space<vmem>>, %arg3: memref<1x32xf32, #tpu.memory_space<vmem>>, %arg4: memref<32x8xf32, #tpu.memory_space<vmem>>, %arg5: memref<1x8xf32, #tpu.memory_space<vmem>>, %arg6: memref<1x8xf32, #tpu.memory_space<vmem>>, %arg7: memref<1x8xf32, #tpu.memory_space<vmem>>, %arg8: memref<1x8x8xf32, #tpu.memory_space<vmem>>) attributes {dimension_semantics = [#tpu.dimension_semantics<parallel>], iteration_bounds = array<i64: 2>, scalar_prefetch = 0 : i64, scratch_operands = 0 : i64, tpu.core_type = #tpu.core_type<tc>, window_params = [{transform_indices = @transform_0, window_bounds = array<i64: 1, 8, 8>}, {pipeline_mode = #tpu.pipeline_mode<synchronous>, transform_indices = @transform_1, window_bounds = array<i64: 8, 32>}, {pipeline_mode = #tpu.pipeline_mode<synchronous>, transform_indices = @transform_2, window_bounds = array<i64: 1, 32>}, {pipeline_mode = #tpu.pipeline_mode<synchronous>, transform_indices = @transform_3, window_bounds = array<i64: 32, 8>}, {pipeline_mode = #tpu.pipeline_mode<synchronous>, transform_indices = @transform_4, window_bounds = array<i64: 1, 8>}, {pipeline_mode = #tpu.pipeline_mode<synchronous>, transform_indices = @transform_5, window_bounds = array<i64: 1, 8>}, {pipeline_mode = #tpu.pipeline_mode<synchronous>, transform_indices = @transform_6, window_bounds = array<i64: 1, 8>}, {transform_indices = @transform_7, window_bounds = array<i64: 1, 8, 8>}]} {
    %c0 = arith.constant 0 : index
    %c0_0 = arith.constant 0 : index
    %c0_1 = arith.constant 0 : index
    %0 = vector.load %arg1[%c0, %c0_0, %c0_1] : memref<1x8x8xf32, #tpu.memory_space<vmem>>, vector<1x8x8xf32>
    %1 = vector.shape_cast %0 : vector<1x8x8xf32> to vector<8x8xf32>
    %c0_2 = arith.constant 0 : index
    %c0_3 = arith.constant 0 : index
    %2 = vector.load %arg2[%c0_2, %c0_3] : memref<8x32xf32, #tpu.memory_space<vmem>>, vector<8x32xf32>
    %cst = arith.constant dense<0.000000e+00> : vector<8x32xf32>
    %3 = tpu.matmul %1, %2, %cst {dimension_numbers = #tpu.dot_dimension_numbers<[1], [0], [0], [1], [0, 0, 1, 1], [], []>} : vector<8x8xf32>, vector<8x32xf32>, vector<8x32xf32> -> vector<8x32xf32>
    %c0_4 = arith.constant 0 : index
    %c0_5 = arith.constant 0 : index
    %4 = vector.load %arg3[%c0_4, %c0_5] : memref<1x32xf32, #tpu.memory_space<vmem>>, vector<1x32xf32>
    %5 = vector.broadcast %4 : vector<1x32xf32> to vector<8x32xf32>
    %6 = arith.addf %3, %5 : vector<8x32xf32>
    %cst_6 = arith.constant 0.000000e+00 : f32
    %7 = vector.broadcast %cst_6 : f32 to vector<8x32xf32>
    %8 = arith.maximumf %6, %7 : vector<8x32xf32>
    %c0_7 = arith.constant 0 : index
    %c0_8 = arith.constant 0 : index
    %9 = vector.load %arg4[%c0_7, %c0_8] : memref<32x8xf32, #tpu.memory_space<vmem>>, vector<32x8xf32>
    %cst_9 = arith.constant dense<0.000000e+00> : vector<8x8xf32>
    %10 = tpu.matmul %8, %9, %cst_9 {dimension_numbers = #tpu.dot_dimension_numbers<[1], [0], [0], [1], [0, 0, 1, 1], [], []>} : vector<8x32xf32>, vector<32x8xf32>, vector<8x8xf32> -> vector<8x8xf32>
    %c0_10 = arith.constant 0 : index
    %c0_11 = arith.constant 0 : index
    %11 = vector.load %arg5[%c0_10, %c0_11] : memref<1x8xf32, #tpu.memory_space<vmem>>, vector<1x8xf32>
    %12 = vector.broadcast %11 : vector<1x8xf32> to vector<8x8xf32>
    %13 = arith.addf %10, %12 : vector<8x8xf32>
    %14 = arith.addf %1, %13 : vector<8x8xf32>
    %c0_12 = arith.constant 0 : index
    %c0_13 = arith.constant 0 : index
    %15 = vector.load %arg6[%c0_12, %c0_13] : memref<1x8xf32, #tpu.memory_space<vmem>>, vector<1x8xf32>
    %c0_14 = arith.constant 0 : index
    %c0_15 = arith.constant 0 : index
    %16 = vector.load %arg7[%c0_14, %c0_15] : memref<1x8xf32, #tpu.memory_space<vmem>>, vector<1x8xf32>
    %cst_16 = arith.constant dense<0.000000e+00> : vector<8xf32>
    %17 = vector.multi_reduction <add>, %14, %cst_16 [1] : vector<8x8xf32> to vector<8xf32>
    %18 = vector.shape_cast %17 : vector<8xf32> to vector<8x1xf32>
    %cst_17 = arith.constant 8.000000e+00 : f32
    %19 = vector.broadcast %cst_17 : f32 to vector<8x1xf32>
    %20 = arith.divf %18, %19 : vector<8x1xf32>
    %21 = vector.broadcast %20 : vector<8x1xf32> to vector<8x8xf32>
    %22 = arith.subf %14, %21 : vector<8x8xf32>
    %23 = arith.mulf %22, %22 : vector<8x8xf32>
    %cst_18 = arith.constant dense<0.000000e+00> : vector<8xf32>
    %24 = vector.multi_reduction <add>, %23, %cst_18 [1] : vector<8x8xf32> to vector<8xf32>
    %25 = vector.shape_cast %24 : vector<8xf32> to vector<8x1xf32>
    %cst_19 = arith.constant 8.000000e+00 : f32
    %26 = vector.broadcast %cst_19 : f32 to vector<8x1xf32>
    %27 = arith.divf %25, %26 : vector<8x1xf32>
    %cst_20 = arith.constant 9.99999974E-6 : f32
    %28 = vector.broadcast %cst_20 : f32 to vector<8x1xf32>
    %29 = arith.addf %27, %28 : vector<8x1xf32>
    %30 = math.rsqrt %29 : vector<8x1xf32>
    %31 = vector.broadcast %30 : vector<8x1xf32> to vector<8x8xf32>
    %32 = arith.mulf %22, %31 : vector<8x8xf32>
    %33 = vector.broadcast %15 : vector<1x8xf32> to vector<8x8xf32>
    %34 = arith.mulf %32, %33 : vector<8x8xf32>
    %35 = vector.broadcast %16 : vector<1x8xf32> to vector<8x8xf32>
    %36 = arith.addf %34, %35 : vector<8x8xf32>
    %c0_21 = arith.constant 0 : index
    %c0_22 = arith.constant 0 : index
    %c0_23 = arith.constant 0 : index
    %37 = vector.load %arg8[%c0_21, %c0_22, %c0_23] : memref<1x8x8xf32, #tpu.memory_space<vmem>>, vector<1x8x8xf32>
    %38 = vector.shape_cast %37 : vector<1x8x8xf32> to vector<8x8xf32>
    %39 = vector.shape_cast %36 : vector<8x8xf32> to vector<1x8x8xf32>
    tpu.vector_store %arg8[%c0_21, %c0_22, %c0_23], %39 {strides = array<i32>} : memref<1x8x8xf32, #tpu.memory_space<vmem>>, vector<1x8x8xf32>,
    return
  }
  func.func @transform_0(%arg0: i32) -> (i32, i32, i32) {
    %c0_i32 = arith.constant 0 : i32
    %c0_i32_0 = arith.constant 0 : i32
    %c0_i32_1 = arith.constant 0 : i32
    return %arg0, %c0_i32, %c0_i32_0 : i32, i32, i32
  }
  func.func @transform_1(%arg0: i32) -> (i32, i32) {
    %c0_i32 = arith.constant 0 : i32
    %c0_i32_0 = arith.constant 0 : i32
    %c0_i32_1 = arith.constant 0 : i32
    return %c0_i32, %c0_i32_0 : i32, i32
  }
  func.func @transform_2(%arg0: i32) -> (i32, i32) {
    %c0_i32 = arith.constant 0 : i32
    %c0_i32_0 = arith.constant 0 : i32
    %c0_i32_1 = arith.constant 0 : i32
    return %c0_i32, %c0_i32_0 : i32, i32
  }
  func.func @transform_3(%arg0: i32) -> (i32, i32) {
    %c0_i32 = arith.constant 0 : i32
    %c0_i32_0 = arith.constant 0 : i32
    %c0_i32_1 = arith.constant 0 : i32
    return %c0_i32, %c0_i32_0 : i32, i32
  }
  func.func @transform_4(%arg0: i32) -> (i32, i32) {
    %c0_i32 = arith.constant 0 : i32
    %c0_i32_0 = arith.constant 0 : i32
    %c0_i32_1 = arith.constant 0 : i32
    return %c0_i32, %c0_i32_0 : i32, i32
  }
  func.func @transform_5(%arg0: i32) -> (i32, i32) {
    %c0_i32 = arith.constant 0 : i32
    %c0_i32_0 = arith.constant 0 : i32
    %c0_i32_1 = arith.constant 0 : i32
    return %c0_i32, %c0_i32_0 : i32, i32
  }
  func.func @transform_6(%arg0: i32) -> (i32, i32) {
    %c0_i32 = arith.constant 0 : i32
    %c0_i32_0 = arith.constant 0 : i32
    %c0_i32_1 = arith.constant 0 : i32
    return %c0_i32, %c0_i32_0 : i32, i32
  }
  func.func @transform_7(%arg0: i32) -> (i32, i32, i32) {
    %c0_i32 = arith.constant 0 : i32
    %c0_i32_0 = arith.constant 0 : i32
    %c0_i32_1 = arith.constant 0 : i32
    return %arg0, %c0_i32, %c0_i32_0 : i32, i32, i32
  }
}

</mosaic_0001>

<llo_original>
// kernel: _lambda_.11
$region0: #{_lambda_.11}
  #allocation0 [shape = 'u32[]', space=smem, size = 0x4, offset = 0x4, fixed_abs, tag = 'smem constant byte address 0x4 - core index']
  #allocation1 [shape = 'u32[144,128]{1,0:T(1,128)}', space=vmem, size = 0x12000, scoped, tag = 'internal scratch']
  %s0 = inlined_call_operand.vmem [shape: f32[2,8,8], index: 0, kind: input, shape index: {}]
  %s1 = inlined_call_operand.vmem [shape: f32[8,32], index: 1, kind: input, shape index: {}]
  %s2 = inlined_call_operand.vmem [shape: f32[1,32], index: 2, kind: input, shape index: {}]
  %s3 = inlined_call_operand.vmem [shape: f32[32,8], index: 3, kind: input, shape index: {}]
  %s4 = inlined_call_operand.vmem [shape: f32[1,8], index: 4, kind: input, shape index: {}]
  %s5 = inlined_call_operand.vmem [shape: f32[1,8], index: 5, kind: input, shape index: {}]
  %s6 = inlined_call_operand.vmem [shape: f32[1,8], index: 6, kind: input, shape index: {}]
  %s7 = inlined_call_operand.hbm [shape: f32[2,8,8], index: 7, kind: output, shape index: {}]
  %s8 = sld [smem:[#allocation0]]
  $region61: #{_lambda_.11} parent=0
    _
  %s10 = ssub.s32 1, %s8
  %s11 = scalar_select 0, %s10, %s8
  $region1: #{_lambda_.11} parent=0
    #allocation2 [shape = 'u8[8192]{0}', space=vmem, size = 0x2000, scoped, tag = 'output window, operand 0']
    #allocation3 [shape = 's32[2]{0}', space=sflag, size = 0x8, scoped, tag = 'scoped memory for _lambda_.11']
    %12 = vsyncpa [#allocation3], 0
    %s13 = scalar_lea.sflag [#allocation3], 1
    %14 = vsyncpa %s13, 0
    loop: start=0, step=1, limit=4
    $region2: #{_lambda_.11} parent=1 // loop_pre_header
      _
    $region3: #{_lambda_.11} parent=1 // loop_header
      %s16 = sphi 0, %s20
      %p17 = scmp.ge.s32.totalorder %s16, 4
      %s26 = sphi 0, %s28
      %s29 = sphi 0, %s26
      %s30 = sphi 0, %s29
      %s46 = sphi 0, %s30
      %s50 = sphi 0, %s50
      %s52 = sphi 0, %s50
      %s53 = sphi 0, %s52
      %s67 = sphi 0, %s53
      %s71 = sphi 0, %s71
      %s73 = sphi 0, %s71
      %s74 = sphi 0, %s73
      %s88 = sphi 0, %s74
      %s92 = sphi 0, %s92
      %s94 = sphi 0, %s92
      %s95 = sphi 0, %s94
      %s109 = sphi 0, %s95
      %s113 = sphi 0, %s113
      %s115 = sphi 0, %s113
      %s116 = sphi 0, %s115
      %s130 = sphi 0, %s116
      %s134 = sphi 0, %s134
      %s136 = sphi 0, %s134
      %s137 = sphi 0, %s136
      %s151 = sphi 0, %s137
      %s155 = sphi 0, %s155
      %s157 = sphi 0, %s155
      %s158 = sphi 0, %s157
      %s172 = sphi 0, %s158
      %s178 = sphi 0, %s180
      %s181 = sphi 0, %s178
      %s182 = sphi 0, %s181
      %s198 = sphi 0, %s182
    $region4: #{_lambda_.11} parent=1 // loop_header_branch
      %19 = sbr.rel (%p17) target = $region8
    $region5: #{_lambda_.11} parent=1 // loop_body
      %s21 = ssub.s32 %s16, 1
      %s22 = ssub.s32 %s16, 2
      %s23 = sadd.s32 %s16, 1
      %s24 = ssub.s32 %s16, %s23
      %p25 = scmp.eq.s32.totalorder %s24, 0
      %s27 = sadd.s32 %s26, 1
      %s28 = scalar_select %p25, %s26, %s27
      %p31 = pneg %p25
      %p32 = scmp.eq.s32.totalorder %s16, 1
      %p33 = por %p31, %p32
      %p34 = scmp.ne.s32.totalorder %s26, %s29
      %p35 = scmp.eq.s32.totalorder %s16, 0
      %p36 = por %p34, %p35
      %p37 = scmp.ne.s32.totalorder %s26, %s29
      %p38 = scmp.eq.s32.totalorder %s21, 1
      %p39 = por %p37, %p38
      %p40 = scmp.ne.s32.totalorder %s29, %s30
      %p41 = scmp.eq.s32.totalorder %s21, 0
      %p42 = por %p40, %p41
      %p43 = scmp.ne.s32.totalorder %s29, %s30
      %p44 = scmp.eq.s32.totalorder %s22, 1
      %p45 = por %p43, %p44
      %p47 = scmp.ne.s32.totalorder %s30, %s46
      %p48 = scmp.eq.s32.totalorder %s22, 0
      %p49 = por %p47, %p48
      %s51 = sadd.s32 %s50, 1
      %p54 = scmp.eq.s32.totalorder %s16, 1
      %p55 = scmp.ne.s32.totalorder %s50, %s52
      %p56 = scmp.eq.s32.totalorder %s16, 0
      %p57 = por %p55, %p56
      %p58 = scmp.ne.s32.totalorder %s50, %s52
      %p59 = scmp.eq.s32.totalorder %s21, 1
      %p60 = por %p58, %p59
      %p61 = scmp.ne.s32.totalorder %s52, %s53
      %p62 = scmp.eq.s32.totalorder %s21, 0
      %p63 = por %p61, %p62
      %p64 = scmp.ne.s32.totalorder %s52, %s53
      %p65 = scmp.eq.s32.totalorder %s22, 1
      %p66 = por %p64, %p65
      %p68 = scmp.ne.s32.totalorder %s53, %s67
      %p69 = scmp.eq.s32.totalorder %s22, 0
      %p70 = por %p68, %p69
      %s72 = sadd.s32 %s71, 1
      %p75 = scmp.eq.s32.totalorder %s16, 1
      %p76 = scmp.ne.s32.totalorder %s71, %s73
      %p77 = scmp.eq.s32.totalorder %s16, 0
      %p78 = por %p76, %p77
      %p79 = scmp.ne.s32.totalorder %s71, %s73
      %p80 = scmp.eq.s32.totalorder %s21, 1
      %p81 = por %p79, %p80
      %p82 = scmp.ne.s32.totalorder %s73, %s74
      %p83 = scmp.eq.s32.totalorder %s21, 0
      %p84 = por %p82, %p83
      %p85 = scmp.ne.s32.totalorder %s73, %s74
      %p86 = scmp.eq.s32.totalorder %s22, 1
      %p87 = por %p85, %p86
      %p89 = scmp.ne.s32.totalorder %s74, %s88
      %p90 = scmp.eq.s32.totalorder %s22, 0
      %p91 = por %p89, %p90
      %s93 = sadd.s32 %s92, 1
      %p96 = scmp.eq.s32.totalorder %s16, 1
      %p97 = scmp.ne.s32.totalorder %s92, %s94
      %p98 = scmp.eq.s32.totalorder %s16, 0
      %p99 = por %p97, %p98
      %p100 = scmp.ne.s32.totalorder %s92, %s94
      %p101 = scmp.eq.s32.totalorder %s21, 1
      %p102 = por %p100, %p101
      %p103 = scmp.ne.s32.totalorder %s94, %s95
      %p104 = scmp.eq.s32.totalorder %s21, 0
      %p105 = por %p103, %p104
      %p106 = scmp.ne.s32.totalorder %s94, %s95
      %p107 = scmp.eq.s32.totalorder %s22, 1
      %p108 = por %p106, %p107
      %p110 = scmp.ne.s32.totalorder %s95, %s109
      %p111 = scmp.eq.s32.totalorder %s22, 0
      %p112 = por %p110, %p111
      %s114 = sadd.s32 %s113, 1
      %p117 = scmp.eq.s32.totalorder %s16, 1
      %p118 = scmp.ne.s32.totalorder %s113, %s115
      %p119 = scmp.eq.s32.totalorder %s16, 0
      %p120 = por %p118, %p119
      %p121 = scmp.ne.s32.totalorder %s113, %s115
      %p122 = scmp.eq.s32.totalorder %s21, 1
      %p123 = por %p121, %p122
      %p124 = scmp.ne.s32.totalorder %s115, %s116
      %p125 = scmp.eq.s32.totalorder %s21, 0
      %p126 = por %p124, %p125
      %p127 = scmp.ne.s32.totalorder %s115, %s116
      %p128 = scmp.eq.s32.totalorder %s22, 1
      %p129 = por %p127, %p128
      %p131 = scmp.ne.s32.totalorder %s116, %s130
      %p132 = scmp.eq.s32.totalorder %s22, 0
      %p133 = por %p131, %p132
      %s135 = sadd.s32 %s134, 1
      %p138 = scmp.eq.s32.totalorder %s16, 1
      %p139 = scmp.ne.s32.totalorder %s134, %s136
      %p140 = scmp.eq.s32.totalorder %s16, 0
      %p141 = por %p139, %p140
      %p142 = scmp.ne.s32.totalorder %s134, %s136
      %p143 = scmp.eq.s32.totalorder %s21, 1
      %p144 = por %p142, %p143
      %p145 = scmp.ne.s32.totalorder %s136, %s137
      %p146 = scmp.eq.s32.totalorder %s21, 0
      %p147 = por %p145, %p146
      %p148 = scmp.ne.s32.totalorder %s136, %s137
      %p149 = scmp.eq.s32.totalorder %s22, 1
      %p150 = por %p148, %p149
      %p152 = scmp.ne.s32.totalorder %s137, %s151
      %p153 = scmp.eq.s32.totalorder %s22, 0
      %p154 = por %p152, %p153
      %s156 = sadd.s32 %s155, 1
      %p159 = scmp.eq.s32.totalorder %s16, 1
      %p160 = scmp.ne.s32.totalorder %s155, %s157
      %p161 = scmp.eq.s32.totalorder %s16, 0
      %p162 = por %p160, %p161
      %p163 = scmp.ne.s32.totalorder %s155, %s157
      %p164 = scmp.eq.s32.totalorder %s21, 1
      %p165 = por %p163, %p164
      %p166 = scmp.ne.s32.totalorder %s157, %s158
      %p167 = scmp.eq.s32.totalorder %s21, 0
      %p168 = por %p166, %p167
      %p169 = scmp.ne.s32.totalorder %s157, %s158
      %p170 = scmp.eq.s32.totalorder %s22, 1
      %p171 = por %p169, %p170
      %p173 = scmp.ne.s32.totalorder %s158, %s172
      %p174 = scmp.eq.s32.totalorder %s22, 0
      %p175 = por %p173, %p174
      %s176 = ssub.s32 %s16, %s23
      %p177 = scmp.eq.s32.totalorder %s176, 0
      %s179 = sadd.s32 %s178, 1
      %s180 = scalar_select %p177, %s178, %s179
      %p183 = pneg %p177
      %p184 = scmp.eq.s32.totalorder %s16, 1
      %p185 = por %p183, %p184
      %p186 = scmp.ne.s32.totalorder %s178, %s181
      %p187 = scmp.eq.s32.totalorder %s16, 0
      %p188 = por %p186, %p187
      %p189 = scmp.ne.s32.totalorder %s178, %s181
      %p190 = scmp.eq.s32.totalorder %s21, 1
      %p191 = por %p189, %p190
      %p192 = scmp.ne.s32.totalorder %s181, %s182
      %p193 = scmp.eq.s32.totalorder %s21, 0
      %p194 = por %p192, %p193
      %p195 = scmp.ne.s32.totalorder %s181, %s182
      %p196 = scmp.eq.s32.totalorder %s22, 1
      %p197 = por %p195, %p196
      %p199 = scmp.ne.s32.totalorder %s182, %s198
      %p200 = scmp.eq.s32.totalorder %s22, 0
      %p201 = por %p199, %p200
      %p202 = scmp.le.s32.totalorder 1, %s16
      %p203 = scmp.lt.s32.totalorder %s16, 3
      %p204 = pnand %p202, %p203
      %p205 = pneg %p204
      // Predicated region
      $region9: #{_lambda_.11} parent=5 // pred_check
        _
      $region10: #{_lambda_.11} parent=5 // pred_check_branch
        %207 = sbr.rel (%p204) target = $region12
      $region11: #{_lambda_.11} parent=5 // pred_region
        %s208 = ssub.s32 %s16, 1
        // Predicated region
        $region13: #{_lambda_.11} parent=11 // pred_check
          %p209 = pneg %p63
        $region14: #{_lambda_.11} parent=11 // pred_check_branch
          %211 = sbr.rel (%p209) target = $region16
        $region15: #{_lambda_.11} parent=11 // pred_region
          _
        $region16: #{_lambda_.11} parent=11 // pred_fallthru
          _
        // Predicated region
        $region17: #{_lambda_.11} parent=11 // pred_check
          %p212 = pneg %p84
        $region18: #{_lambda_.11} parent=11 // pred_check_branch
          %214 = sbr.rel (%p212) target = $region20
        $region19: #{_lambda_.11} parent=11 // pred_region
          _
        $region20: #{_lambda_.11} parent=11 // pred_fallthru
          _
        // Predicated region
        $region21: #{_lambda_.11} parent=11 // pred_check
          %p215 = pneg %p105
        $region22: #{_lambda_.11} parent=11 // pred_check_branch
          %217 = sbr.rel (%p215) target = $region24
        $region23: #{_lambda_.11} parent=11 // pred_region
          _
        $region24: #{_lambda_.11} parent=11 // pred_fallthru
          _
        // Predicated region
        $region25: #{_lambda_.11} parent=11 // pred_check
          %p218 = pneg %p126
        $region26: #{_lambda_.11} parent=11 // pred_check_branch
          %220 = sbr.rel (%p218) target = $region28
        $region27: #{_lambda_.11} parent=11 // pred_region
          _
        $region28: #{_lambda_.11} parent=11 // pred_fallthru
          _
        // Predicated region
        $region29: #{_lambda_.11} parent=11 // pred_check
          %p221 = pneg %p147
        $region30: #{_lambda_.11} parent=11 // pred_check_branch
          %223 = sbr.rel (%p221) target = $region32
        $region31: #{_lambda_.11} parent=11 // pred_region
          _
        $region32: #{_lambda_.11} parent=11 // pred_fallthru
          _
        // Predicated region
        $region33: #{_lambda_.11} parent=11 // pred_check
          %p224 = pneg %p168
        $region34: #{_lambda_.11} parent=11 // pred_check_branch
          %226 = sbr.rel (%p224) target = $region36
        $region35: #{_lambda_.11} parent=11 // pred_region
          _
        $region36: #{_lambda_.11} parent=11 // pred_fallthru
          _
      $region12: #{_lambda_.11} parent=5 // pred_fallthru
        _
      %p227 = scmp.lt.s32.totalorder %s16, 2
      // Predicated region
      $region37: #{_lambda_.11} parent=5 // pred_check
        %p228 = pneg %p227
      $region38: #{_lambda_.11} parent=5 // pred_check_branch
        %230 = sbr.rel (%p228) target = $region40
      $region39: #{_lambda_.11} parent=5 // pred_region
        // Predicated region
        $region41: #{_lambda_.11} parent=39 // pred_check
          %p231 = pneg %p36
        $region42: #{_lambda_.11} parent=39 // pred_check_branch
          %233 = sbr.rel (%p231) target = $region44
        $region43: #{_lambda_.11} parent=39 // pred_region
          %p234 = scmp.lt.s32.totalorder %s16, 1
          %s235 = scalar_select %p234, %s16, 1
          %s236 = smul.addr %s235, 8
          %s237 = scalar_lea.vmem %s0, %s236
        $region44: #{_lambda_.11} parent=39 // pred_fallthru
          _
      $region40: #{_lambda_.11} parent=5 // pred_fallthru
        _
      %p238 = scmp.le.s32.totalorder 1, %s16
      %p239 = scmp.lt.s32.totalorder %s16, 3
      %p240 = pnand %p238, %p239
      %p241 = pneg %p240
      // Predicated region
      $region45: #{_lambda_.11} parent=5 // pred_check
        _
      $region46: #{_lambda_.11} parent=5 // pred_check_branch
        %243 = sbr.rel (%p240) target = $region48
      $region47: #{_lambda_.11} parent=5 // pred_region
        %s244 = ssub.s32 %s16, 1
        %p245 = scmp.lt.s32.totalorder %s21, 1
        %s246 = scalar_select %p245, %s21, 1
        %s247 = smul.addr %s246, 8
        %s248 = scalar_lea.vmem %s0, %s247
        %p249 = pneg %p42
        %p250 = pneg %p39
        %p251 = pneg %p63
        %p252 = pneg %p60
        %p253 = pneg %p84
        %p254 = pneg %p81
        %p255 = pneg %p105
        %p256 = pneg %p102
        %p257 = pneg %p126
        %p258 = pneg %p123
        %p259 = pneg %p147
        %p260 = pneg %p144
        %p261 = pneg %p168
        %p262 = pneg %p165
        %p263 = pneg %p194
        %p264 = pneg %p191
        %s265 = sand.u32 %s181, 1
        %s266 = scalar_lea.sflag [#allocation3], %s265
        %s267 = sand.u32 %s181, 1
        %s268 = smul.addr %s267, 8
        %s269 = scalar_lea.vmem [#allocation2], %s268
        %p270 = scmp.lt.s32.totalorder %s21, 1
        %s271 = scalar_select %p270, %s21, 1
        %s272 = smul.addr %s271, 8
        %s273 = scalar_lea.vmem %s0, %s272
        %v274 = vld [vmem:[%s273] sm:$0xff]
        %v275 = vld [vmem:[%s1] sm:$0xff]
        %v276 = vld [vmem:[%s2] sm:$0x1]
        %v278 = vlaneseq
        %v279 = vshrl.u32 %v278, 7
        %v280 = vsub.s32 0, %v279
        %v281 = vrot.slane %v276, %v280
        %vm283 = vcmask 64512
        %v285 = vsel %vm283, %v274, 0
        %287 = vmatprep.subr.mxu0 0.0
        %288 = vmatpush1.msra.mxu0 0.0
        %289 = vmatprep.subr.mxu0 0.0
        %290 = vmatpush1.msra.mxu0 0.0
        %291 = vmatprep.subr.mxu0 0.0
        %292 = vmatpush1.msra.mxu0 0.0
        %293 = vmatprep.subr.mxu0 0.0
        %294 = vmatpush1.msra.mxu0 0.0
        %295 = vmatprep.subr.mxu0 0.0
        %296 = vmatpush1.msra.mxu0 0.0
        %297 = vmatprep.subr.mxu0 0.0
        %298 = vmatpush1.msra.mxu0 0.0
        %299 = vmatprep.subr.mxu0 0.0
        %300 = vmatpush1.msra.mxu0 0.0
        %301 = vmatprep.subr.mxu0 0.0
        %302 = vmatpush1.msra.mxu0 0.0
        %303 = vmatprep.subr.mxu0 0.0
        %304 = vmatpush1.msra.mxu0 0.0
        %305 = vmatprep.subr.mxu0 0.0
        %306 = vmatpush1.msra.mxu0 0.0
        %307 = vmatprep.subr.mxu0 0.0
        %308 = vmatpush1.msra.mxu0 0.0
        %309 = vmatprep.subr.mxu0 0.0
        %310 = vmatpush1.msra.mxu0 0.0
        %311 = vmatprep.subr.mxu0 0.0
        %312 = vmatpush1.msra.mxu0 0.0
        %313 = vmatprep.subr.mxu0 0.0
        %314 = vmatpush1.msra.mxu0 0.0
        %315 = vmatprep.subr.mxu0 0.0
        %316 = vmatpush1.msra.mxu0 0.0
        %317 = vmatprep.subr.mxu0 0.0
        %318 = vmatpush1.msra.mxu0 %v275
        %319 = vmatprep.subr.mxu0 0.0
        %320 = vmatpush2.msra.mxu0 0.0
        %321 = vmatprep.subr.mxu0 0.0
        %322 = vmatpush2.msra.mxu0 0.0
        %323 = vmatprep.subr.mxu0 0.0
        %324 = vmatpush2.msra.mxu0 0.0
        %325 = vmatprep.subr.mxu0 0.0
        %326 = vmatpush2.msra.mxu0 0.0
        %327 = vmatprep.subr.mxu0 0.0
        %328 = vmatpush2.msra.mxu0 0.0
        %329 = vmatprep.subr.mxu0 0.0
        %330 = vmatpush2.msra.mxu0 0.0
        %331 = vmatprep.subr.mxu0 0.0
        %332 = vmatpush2.msra.mxu0 0.0
        %333 = vmatprep.subr.mxu0 0.0
        %334 = vmatpush2.msra.mxu0 0.0
        %335 = vmatprep.subr.mxu0 0.0
        %336 = vmatpush2.msra.mxu0 0.0
        %337 = vmatprep.subr.mxu0 0.0
        %338 = vmatpush2.msra.mxu0 0.0
        %339 = vmatprep.subr.mxu0 0.0
        %340 = vmatpush2.msra.mxu0 0.0
        %341 = vmatprep.subr.mxu0 0.0
        %342 = vmatpush2.msra.mxu0 0.0
        %343 = vmatprep.subr.mxu0 0.0
        %344 = vmatpush2.msra.mxu0 0.0
        %345 = vmatprep.subr.mxu0 0.0
        %346 = vmatpush2.msra.mxu0 0.0
        %347 = vmatprep.subr.mxu0 0.0
        %348 = vmatpush2.msra.mxu0 0.0
        %349 = vmatprep.subr.mxu0 0.0
        %350 = vmatpush2.msra.mxu0 0.0
        %351 = vmatprep.mubr.f32.mxu0 0.0
        %352 = vmatmul.mubr.f32.gmra.mxu0 %v285
        %v353 = vpop.f32.mrf.mxu0
        %v354 = vadd.f32 %v281, %v353
        %v355 = vpop.f32.mrf.mxu0
        %356 = vdwg.mxu0
        %v357 = vmax.f32 %v354, 0.0
        %v358 = vld [vmem:[%s3] sm:$0xff]
        %v359 = vld [vmem:[%s3 + $0x8] sm:$0xff]
        %v360 = vld [vmem:[%s3 + $0x10] sm:$0xff]
        %v361 = vld [vmem:[%s3 + $0x18] sm:$0xff]
        %v362 = vld [vmem:[%s4] sm:$0x1]
        %v364 = vlaneseq
        %v365 = vshrl.u32 %v364, 7
        %v366 = vsub.s32 0, %v365
        %v367 = vrot.slane %v362, %v366
        %vm369 = vcmask 261120
        %v371 = vsel %vm369, %v357, 0
        %373 = vmatprep.subr.mxu0 0.0
        %374 = vmatpush1.msra.mxu0 0.0
        %375 = vmatprep.subr.mxu0 0.0
        %376 = vmatpush1.msra.mxu0 0.0
        %377 = vmatprep.subr.mxu0 0.0
        %378 = vmatpush1.msra.mxu0 0.0
        %379 = vmatprep.subr.mxu0 0.0
        %380 = vmatpush1.msra.mxu0 0.0
        %381 = vmatprep.subr.mxu0 0.0
        %382 = vmatpush1.msra.mxu0 0.0
        %383 = vmatprep.subr.mxu0 0.0
        %384 = vmatpush1.msra.mxu0 0.0
        %385 = vmatprep.subr.mxu0 0.0
        %386 = vmatpush1.msra.mxu0 0.0
        %387 = vmatprep.subr.mxu0 0.0
        %388 = vmatpush1.msra.mxu0 0.0
        %389 = vmatprep.subr.mxu0 0.0
        %390 = vmatpush1.msra.mxu0 0.0
        %391 = vmatprep.subr.mxu0 0.0
        %392 = vmatpush1.msra.mxu0 0.0
        %393 = vmatprep.subr.mxu0 0.0
        %394 = vmatpush1.msra.mxu0 0.0
        %395 = vmatprep.subr.mxu0 0.0
        %396 = vmatpush1.msra.mxu0 0.0
        %397 = vmatprep.subr.mxu0 0.0
        %398 = vmatpush1.msra.mxu0 %v361
        %399 = vmatprep.subr.mxu0 0.0
        %400 = vmatpush1.msra.mxu0 %v360
        %401 = vmatprep.subr.mxu0 0.0
        %402 = vmatpush1.msra.mxu0 %v359
        %403 = vmatprep.subr.mxu0 0.0
        %404 = vmatpush1.msra.mxu0 %v358
        %405 = vmatprep.subr.mxu0 0.0
        %406 = vmatpush2.msra.mxu0 0.0
        %407 = vmatprep.subr.mxu0 0.0
        %408 = vmatpush2.msra.mxu0 0.0
        %409 = vmatprep.subr.mxu0 0.0
        %410 = vmatpush2.msra.mxu0 0.0
        %411 = vmatprep.subr.mxu0 0.0
        %412 = vmatpush2.msra.mxu0 0.0
        %413 = vmatprep.subr.mxu0 0.0
        %414 = vmatpush2.msra.mxu0 0.0
        %415 = vmatprep.subr.mxu0 0.0
        %416 = vmatpush2.msra.mxu0 0.0
        %417 = vmatprep.subr.mxu0 0.0
        %418 = vmatpush2.msra.mxu0 0.0
        %419 = vmatprep.subr.mxu0 0.0
        %420 = vmatpush2.msra.mxu0 0.0
        %421 = vmatprep.subr.mxu0 0.0
        %422 = vmatpush2.msra.mxu0 0.0
        %423 = vmatprep.subr.mxu0 0.0
        %424 = vmatpush2.msra.mxu0 0.0
        %425 = vmatprep.subr.mxu0 0.0
        %426 = vmatpush2.msra.mxu0 0.0
        %427 = vmatprep.subr.mxu0 0.0
        %428 = vmatpush2.msra.mxu0 0.0
        %429 = vmatprep.subr.mxu0 0.0
        %430 = vmatpush2.msra.mxu0 0.0
        %431 = vmatprep.subr.mxu0 0.0
        %432 = vmatpush2.msra.mxu0 0.0
        %433 = vmatprep.subr.mxu0 0.0
        %434 = vmatpush2.msra.mxu0 0.0
        %435 = vmatprep.subr.mxu0 0.0
        %436 = vmatpush2.msra.mxu0 0.0
        %437 = vmatprep.mubr.f32.mxu0 0.0
        %438 = vmatmul.mubr.f32.gmra.mxu0 %v371
        %v439 = vpop.f32.mrf.mxu0
        %v440 = vadd.f32 %v367, %v439
        %v441 = vpop.f32.mrf.mxu0
        %442 = vdwg.mxu0
        %v443 = vadd.f32 %v274, %v440
        %v444 = vld [vmem:[%s5] sm:$0x1]
        %v445 = vld [vmem:[%s6] sm:$0x1]
        %v446 = vsel %vm283, %v443, 0.0
        %447 = vadd.xlane.f32.xlu0 %v446
        %v448 = vpop.xlane.xlu0 %447
        %v449 = vrcp.pop 8.0
        %v450 = vmul.f32 %v448, %v449
        %v451 = vsub.f32 %v443, %v450
        %v452 = vmul.f32 %v451, %v451
        %v453 = vsel %vm283, %v452, 0.0
        %454 = vadd.xlane.f32.xlu0 %v453
        %v455 = vpop.xlane.xlu0 %454
        %v456 = vmul.f32 %v455, %v449
        %v457 = vadd.f32 %v456, 1e-05
        %v458 = vrsqrt.pop %v457
        %v459 = vmul.f32 %v451, %v458
        %v461 = vlaneseq
        %v462 = vshrl.u32 %v461, 7
        %v463 = vsub.s32 0, %v462
        %v464 = vrot.slane %v444, %v463
        %v466 = vmul.f32 %v459, %v464
        %v468 = vlaneseq
        %v469 = vshrl.u32 %v468, 7
        %v470 = vsub.s32 0, %v469
        %v471 = vrot.slane %v445, %v470
        %v473 = vadd.f32 %v466, %v471
        %474 = vst.msk [vmem:[%s269] sm:$0xff] %vm283, %v473
        %s475 = sand.u32 %s181, 1
        %s476 = scalar_lea.sflag [#allocation3], %s475
        %s477 = sand.u32 %s181, 1
        %s478 = smul.addr %s477, 8
        %s479 = scalar_lea.vmem [#allocation2], %s478
        // Predicated region
        $region49: #{_lambda_.11} parent=47 // pred_check
          %p480 = pneg %p191
        $region50: #{_lambda_.11} parent=47 // pred_check_branch
          %482 = sbr.rel (%p480) target = $region52
        $region51: #{_lambda_.11} parent=47 // pred_region
          %s484 = ssub.s32 128, 128
          %485 = vsyncadd %s476, %s484
          %s486 = smul.addr %s21, 128
          %s487 = scalar_lea.hbm %s7, %s486
          %s489 = sshll.u32 %s479, 4
          %s490 = int_to_ptr.vmem [resolvable:$true] %s489
          %492 = dma.vmem_to_hbm [thread:$0]  %s490, 128, %s487, %s476
        $region52: #{_lambda_.11} parent=47 // pred_fallthru
          _
      $region48: #{_lambda_.11} parent=5 // pred_fallthru
        _
      %p493 = scmp.le.s32.totalorder 2, %s16
      // Predicated region
      $region53: #{_lambda_.11} parent=5 // pred_check
        %p494 = pneg %p493
      $region54: #{_lambda_.11} parent=5 // pred_check_branch
        %496 = sbr.rel (%p494) target = $region56
      $region55: #{_lambda_.11} parent=5 // pred_region
        %s497 = ssub.s32 %s16, 2
        // Predicated region
        $region57: #{_lambda_.11} parent=55 // pred_check
          %p498 = pneg %p197
        $region58: #{_lambda_.11} parent=55 // pred_check_branch
          %500 = sbr.rel (%p498) target = $region60
        $region59: #{_lambda_.11} parent=55 // pred_region
          %s501 = sand.u32 %s182, 1
          %s502 = scalar_lea.sflag [#allocation3], %s501
          %s503 = sand.u32 %s182, 1
          %s504 = smul.addr %s503, 8
          %s505 = scalar_lea.vmem [#allocation2], %s504
          %506 = dma.done %s502, 128
        $region60: #{_lambda_.11} parent=55 // pred_fallthru
          _
      $region56: #{_lambda_.11} parent=5 // pred_fallthru
        _
    $region6: #{_lambda_.11} parent=1 // loop_footer
      %s20 = sadd.s32 1, %s16
    $region7: #{_lambda_.11} parent=1 // loop_footer_branch
      %15 = sbr.rel target = $region3
    $region8: #{_lambda_.11} parent=1 // loop_exit
      _
    %507 = vsyncpa [#allocation3], 1
    %s508 = scalar_lea.sflag [#allocation3], 1
    %509 = vsyncpa %s508, 1

// kernel: _lambda_.8
$region0: #{_lambda_.8}
  #allocation0 [shape = 'u32[]', space=smem, size = 0x4, offset = 0x4, fixed_abs, tag = 'smem constant byte address 0x4 - core index']
  #allocation1 [shape = 'u32[144,128]{1,0:T(1,128)}', space=vmem, size = 0x12000, scoped, tag = 'internal scratch']
  %s0 = inlined_call_operand.vmem [shape: f32[2,8,8], index: 0, kind: input, shape index: {}]
  %s1 = inlined_call_operand.vmem [shape: f32[8,32], index: 1, kind: input, shape index: {}]
  %s2 = inlined_call_operand.vmem [shape: f32[1,32], index: 2, kind: input, shape index: {}]
  %s3 = inlined_call_operand.vmem [shape: f32[32,8], index: 3, kind: input, shape index: {}]
  %s4 = inlined_call_operand.vmem [shape: f32[1,8], index: 4, kind: input, shape index: {}]
  %s5 = inlined_call_operand.vmem [shape: f32[1,8], index: 5, kind: input, shape index: {}]
  %s6 = inlined_call_operand.vmem [shape: f32[1,8], index: 6, kind: input, shape index: {}]
  %s7 = inlined_call_operand.vmem [shape: f32[2,8,8], index: 7, kind: output, shape index: {}]
  %s8 = sld [smem:[#allocation0]]
  $region61: #{_lambda_.8} parent=0
    _
  %s10 = ssub.s32 1, %s8
  %s11 = scalar_select 0, %s10, %s8
  loop: start=0, step=1, limit=4
  $region2: #{_lambda_.8} parent=0 // loop_pre_header
    _
  $region3: #{_lambda_.8} parent=0 // loop_header
    %s13 = sphi 0, %s17
    %p14 = scmp.ge.s32.totalorder %s13, 4
    %s23 = sphi 0, %s25
    %s26 = sphi 0, %s23
    %s27 = sphi 0, %s26
    %s43 = sphi 0, %s27
    %s47 = sphi 0, %s47
    %s49 = sphi 0, %s47
    %s50 = sphi 0, %s49
    %s64 = sphi 0, %s50
    %s68 = sphi 0, %s68
    %s70 = sphi 0, %s68
    %s71 = sphi 0, %s70
    %s85 = sphi 0, %s71
    %s89 = sphi 0, %s89
    %s91 = sphi 0, %s89
    %s92 = sphi 0, %s91
    %s106 = sphi 0, %s92
    %s110 = sphi 0, %s110
    %s112 = sphi 0, %s110
    %s113 = sphi 0, %s112
    %s127 = sphi 0, %s113
    %s131 = sphi 0, %s131
    %s133 = sphi 0, %s131
    %s134 = sphi 0, %s133
    %s148 = sphi 0, %s134
    %s152 = sphi 0, %s152
    %s154 = sphi 0, %s152
    %s155 = sphi 0, %s154
    %s169 = sphi 0, %s155
    %s175 = sphi 0, %s177
    %s178 = sphi 0, %s175
    %s179 = sphi 0, %s178
    %s195 = sphi 0, %s179
  $region4: #{_lambda_.8} parent=0 // loop_header_branch
    %16 = sbr.rel (%p14) target = $region8
  $region5: #{_lambda_.8} parent=0 // loop_body
    %s18 = ssub.s32 %s13, 1
    %s19 = ssub.s32 %s13, 2
    %s20 = sadd.s32 %s13, 1
    %s21 = ssub.s32 %s13, %s20
    %p22 = scmp.eq.s32.totalorder %s21, 0
    %s24 = sadd.s32 %s23, 1
    %s25 = scalar_select %p22, %s23, %s24
    %p28 = pneg %p22
    %p29 = scmp.eq.s32.totalorder %s13, 1
    %p30 = por %p28, %p29
    %p31 = scmp.ne.s32.totalorder %s23, %s26
    %p32 = scmp.eq.s32.totalorder %s13, 0
    %p33 = por %p31, %p32
    %p34 = scmp.ne.s32.totalorder %s23, %s26
    %p35 = scmp.eq.s32.totalorder %s18, 1
    %p36 = por %p34, %p35
    %p37 = scmp.ne.s32.totalorder %s26, %s27
    %p38 = scmp.eq.s32.totalorder %s18, 0
    %p39 = por %p37, %p38
    %p40 = scmp.ne.s32.totalorder %s26, %s27
    %p41 = scmp.eq.s32.totalorder %s19, 1
    %p42 = por %p40, %p41
    %p44 = scmp.ne.s32.totalorder %s27, %s43
    %p45 = scmp.eq.s32.totalorder %s19, 0
    %p46 = por %p44, %p45
    %s48 = sadd.s32 %s47, 1
    %p51 = scmp.eq.s32.totalorder %s13, 1
    %p52 = scmp.ne.s32.totalorder %s47, %s49
    %p53 = scmp.eq.s32.totalorder %s13, 0
    %p54 = por %p52, %p53
    %p55 = scmp.ne.s32.totalorder %s47, %s49
    %p56 = scmp.eq.s32.totalorder %s18, 1
    %p57 = por %p55, %p56
    %p58 = scmp.ne.s32.totalorder %s49, %s50
    %p59 = scmp.eq.s32.totalorder %s18, 0
    %p60 = por %p58, %p59
    %p61 = scmp.ne.s32.totalorder %s49, %s50
    %p62 = scmp.eq.s32.totalorder %s19, 1
    %p63 = por %p61, %p62
    %p65 = scmp.ne.s32.totalorder %s50, %s64
    %p66 = scmp.eq.s32.totalorder %s19, 0
    %p67 = por %p65, %p66
    %s69 = sadd.s32 %s68, 1
    %p72 = scmp.eq.s32.totalorder %s13, 1
    %p73 = scmp.ne.s32.totalorder %s68, %s70
    %p74 = scmp.eq.s32.totalorder %s13, 0
    %p75 = por %p73, %p74
    %p76 = scmp.ne.s32.totalorder %s68, %s70
    %p77 = scmp.eq.s32.totalorder %s18, 1
    %p78 = por %p76, %p77
    %p79 = scmp.ne.s32.totalorder %s70, %s71
    %p80 = scmp.eq.s32.totalorder %s18, 0
    %p81 = por %p79, %p80
    %p82 = scmp.ne.s32.totalorder %s70, %s71
    %p83 = scmp.eq.s32.totalorder %s19, 1
    %p84 = por %p82, %p83
    %p86 = scmp.ne.s32.totalorder %s71, %s85
    %p87 = scmp.eq.s32.totalorder %s19, 0
    %p88 = por %p86, %p87
    %s90 = sadd.s32 %s89, 1
    %p93 = scmp.eq.s32.totalorder %s13, 1
    %p94 = scmp.ne.s32.totalorder %s89, %s91
    %p95 = scmp.eq.s32.totalorder %s13, 0
    %p96 = por %p94, %p95
    %p97 = scmp.ne.s32.totalorder %s89, %s91
    %p98 = scmp.eq.s32.totalorder %s18, 1
    %p99 = por %p97, %p98
    %p100 = scmp.ne.s32.totalorder %s91, %s92
    %p101 = scmp.eq.s32.totalorder %s18, 0
    %p102 = por %p100, %p101
    %p103 = scmp.ne.s32.totalorder %s91, %s92
    %p104 = scmp.eq.s32.totalorder %s19, 1
    %p105 = por %p103, %p104
    %p107 = scmp.ne.s32.totalorder %s92, %s106
    %p108 = scmp.eq.s32.totalorder %s19, 0
    %p109 = por %p107, %p108
    %s111 = sadd.s32 %s110, 1
    %p114 = scmp.eq.s32.totalorder %s13, 1
    %p115 = scmp.ne.s32.totalorder %s110, %s112
    %p116 = scmp.eq.s32.totalorder %s13, 0
    %p117 = por %p115, %p116
    %p118 = scmp.ne.s32.totalorder %s110, %s112
    %p119 = scmp.eq.s32.totalorder %s18, 1
    %p120 = por %p118, %p119
    %p121 = scmp.ne.s32.totalorder %s112, %s113
    %p122 = scmp.eq.s32.totalorder %s18, 0
    %p123 = por %p121, %p122
    %p124 = scmp.ne.s32.totalorder %s112, %s113
    %p125 = scmp.eq.s32.totalorder %s19, 1
    %p126 = por %p124, %p125
    %p128 = scmp.ne.s32.totalorder %s113, %s127
    %p129 = scmp.eq.s32.totalorder %s19, 0
    %p130 = por %p128, %p129
    %s132 = sadd.s32 %s131, 1
    %p135 = scmp.eq.s32.totalorder %s13, 1
    %p136 = scmp.ne.s32.totalorder %s131, %s133
    %p137 = scmp.eq.s32.totalorder %s13, 0
    %p138 = por %p136, %p137
    %p139 = scmp.ne.s32.totalorder %s131, %s133
    %p140 = scmp.eq.s32.totalorder %s18, 1
    %p141 = por %p139, %p140
    %p142 = scmp.ne.s32.totalorder %s133, %s134
    %p143 = scmp.eq.s32.totalorder %s18, 0
    %p144 = por %p142, %p143
    %p145 = scmp.ne.s32.totalorder %s133, %s134
    %p146 = scmp.eq.s32.totalorder %s19, 1
    %p147 = por %p145, %p146
    %p149 = scmp.ne.s32.totalorder %s134, %s148
    %p150 = scmp.eq.s32.totalorder %s19, 0
    %p151 = por %p149, %p150
    %s153 = sadd.s32 %s152, 1
    %p156 = scmp.eq.s32.totalorder %s13, 1
    %p157 = scmp.ne.s32.totalorder %s152, %s154
    %p158 = scmp.eq.s32.totalorder %s13, 0
    %p159 = por %p157, %p158
    %p160 = scmp.ne.s32.totalorder %s152, %s154
    %p161 = scmp.eq.s32.totalorder %s18, 1
    %p162 = por %p160, %p161
    %p163 = scmp.ne.s32.totalorder %s154, %s155
    %p164 = scmp.eq.s32.totalorder %s18, 0
    %p165 = por %p163, %p164
    %p166 = scmp.ne.s32.totalorder %s154, %s155
    %p167 = scmp.eq.s32.totalorder %s19, 1
    %p168 = por %p166, %p167
    %p170 = scmp.ne.s32.totalorder %s155, %s169
    %p171 = scmp.eq.s32.totalorder %s19, 0
    %p172 = por %p170, %p171
    %s173 = ssub.s32 %s13, %s20
    %p174 = scmp.eq.s32.totalorder %s173, 0
    %s176 = sadd.s32 %s175, 1
    %s177 = scalar_select %p174, %s175, %s176
    %p180 = pneg %p174
    %p181 = scmp.eq.s32.totalorder %s13, 1
    %p182 = por %p180, %p181
    %p183 = scmp.ne.s32.totalorder %s175, %s178
    %p184 = scmp.eq.s32.totalorder %s13, 0
    %p185 = por %p183, %p184
    %p186 = scmp.ne.s32.totalorder %s175, %s178
    %p187 = scmp.eq.s32.totalorder %s18, 1
    %p188 = por %p186, %p187
    %p189 = scmp.ne.s32.totalorder %s178, %s179
    %p190 = scmp.eq.s32.totalorder %s18, 0
    %p191 = por %p189, %p190
    %p192 = scmp.ne.s32.totalorder %s178, %s179
    %p193 = scmp.eq.s32.totalorder %s19, 1
    %p194 = por %p192, %p193
    %p196 = scmp.ne.s32.totalorder %s179, %s195
    %p197 = scmp.eq.s32.totalorder %s19, 0
    %p198 = por %p196, %p197
    %p199 = scmp.le.s32.totalorder 1, %s13
    %p200 = scmp.lt.s32.totalorder %s13, 3
    %p201 = pnand %p199, %p200
    %p202 = pneg %p201
    // Predicated region
    $region9: #{_lambda_.8} parent=5 // pred_check
      _
    $region10: #{_lambda_.8} parent=5 // pred_check_branch
      %204 = sbr.rel (%p201) target = $region12
    $region11: #{_lambda_.8} parent=5 // pred_region
      %s205 = ssub.s32 %s13, 1
      // Predicated region
      $region13: #{_lambda_.8} parent=11 // pred_check
        %p206 = pneg %p60
      $region14: #{_lambda_.8} parent=11 // pred_check_branch
        %208 = sbr.rel (%p206) target = $region16
      $region15: #{_lambda_.8} parent=11 // pred_region
        _
      $region16: #{_lambda_.8} parent=11 // pred_fallthru
        _
      // Predicated region
      $region17: #{_lambda_.8} parent=11 // pred_check
        %p209 = pneg %p81
      $region18: #{_lambda_.8} parent=11 // pred_check_branch
        %211 = sbr.rel (%p209) target = $region20
      $region19: #{_lambda_.8} parent=11 // pred_region
        _
      $region20: #{_lambda_.8} parent=11 // pred_fallthru
        _
      // Predicated region
      $region21: #{_lambda_.8} parent=11 // pred_check
        %p212 = pneg %p102
      $region22: #{_lambda_.8} parent=11 // pred_check_branch
        %214 = sbr.rel (%p212) target = $region24
      $region23: #{_lambda_.8} parent=11 // pred_region
        _
      $region24: #{_lambda_.8} parent=11 // pred_fallthru
        _
      // Predicated region
      $region25: #{_lambda_.8} parent=11 // pred_check
        %p215 = pneg %p123
      $region26: #{_lambda_.8} parent=11 // pred_check_branch
        %217 = sbr.rel (%p215) target = $region28
      $region27: #{_lambda_.8} parent=11 // pred_region
        _
      $region28: #{_lambda_.8} parent=11 // pred_fallthru
        _
      // Predicated region
      $region29: #{_lambda_.8} parent=11 // pred_check
        %p218 = pneg %p144
      $region30: #{_lambda_.8} parent=11 // pred_check_branch
        %220 = sbr.rel (%p218) target = $region32
      $region31: #{_lambda_.8} parent=11 // pred_region
        _
      $region32: #{_lambda_.8} parent=11 // pred_fallthru
        _
      // Predicated region
      $region33: #{_lambda_.8} parent=11 // pred_check
        %p221 = pneg %p165
      $region34: #{_lambda_.8} parent=11 // pred_check_branch
        %223 = sbr.rel (%p221) target = $region36
      $region35: #{_lambda_.8} parent=11 // pred_region
        _
      $region36: #{_lambda_.8} parent=11 // pred_fallthru
        _
    $region12: #{_lambda_.8} parent=5 // pred_fallthru
      _
    %p224 = scmp.lt.s32.totalorder %s13, 2
    // Predicated region
    $region37: #{_lambda_.8} parent=5 // pred_check
      %p225 = pneg %p224
    $region38: #{_lambda_.8} parent=5 // pred_check_branch
      %227 = sbr.rel (%p225) target = $region40
    $region39: #{_lambda_.8} parent=5 // pred_region
      // Predicated region
      $region41: #{_lambda_.8} parent=39 // pred_check
        %p228 = pneg %p33
      $region42: #{_lambda_.8} parent=39 // pred_check_branch
        %230 = sbr.rel (%p228) target = $region44
      $region43: #{_lambda_.8} parent=39 // pred_region
        %p231 = scmp.lt.s32.totalorder %s13, 1
        %s232 = scalar_select %p231, %s13, 1
        %s233 = smul.addr %s232, 8
        %s234 = scalar_lea.vmem %s0, %s233
      $region44: #{_lambda_.8} parent=39 // pred_fallthru
        _
    $region40: #{_lambda_.8} parent=5 // pred_fallthru
      _
    %p235 = scmp.le.s32.totalorder 1, %s13
    %p236 = scmp.lt.s32.totalorder %s13, 3
    %p237 = pnand %p235, %p236
    %p238 = pneg %p237
    // Predicated region
    $region45: #{_lambda_.8} parent=5 // pred_check
      _
    $region46: #{_lambda_.8} parent=5 // pred_check_branch
      %240 = sbr.rel (%p237) target = $region48
    $region47: #{_lambda_.8} parent=5 // pred_region
      %s241 = ssub.s32 %s13, 1
      %p242 = scmp.lt.s32.totalorder %s18, 1
      %s243 = scalar_select %p242, %s18, 1
      %s244 = smul.addr %s243, 8
      %s245 = scalar_lea.vmem %s0, %s244
      %p246 = pneg %p39
      %p247 = pneg %p36
      %p248 = pneg %p60
      %p249 = pneg %p57
      %p250 = pneg %p81
      %p251 = pneg %p78
      %p252 = pneg %p102
      %p253 = pneg %p99
      %p254 = pneg %p123
      %p255 = pneg %p120
      %p256 = pneg %p144
      %p257 = pneg %p141
      %p258 = pneg %p165
      %p259 = pneg %p162
      %p260 = pneg %p191
      %p261 = pneg %p188
      %p262 = scmp.lt.s32.totalorder %s18, 1
      %s263 = scalar_select %p262, %s18, 1
      %s264 = smul.addr %s263, 8
      %s265 = scalar_lea.vmem %s7, %s264
      %p266 = scmp.lt.s32.totalorder %s18, 1
      %s267 = scalar_select %p266, %s18, 1
      %s268 = smul.addr %s267, 8
      %s269 = scalar_lea.vmem %s0, %s268
      %p270 = scmp.lt.s32.totalorder %s18, 1
      %s271 = scalar_select %p270, %s18, 1
      %s272 = smul.addr %s271, 8
      %s273 = scalar_lea.vmem %s7, %s272
      %v274 = vld [vmem:[%s269] sm:$0xff]
      %v275 = vld [vmem:[%s1] sm:$0xff]
      %v276 = vld [vmem:[%s2] sm:$0x1]
      %v278 = vlaneseq
      %v279 = vshrl.u32 %v278, 7
      %v280 = vsub.s32 0, %v279
      %v281 = vrot.slane %v276, %v280
      %vm283 = vcmask 64512
      %v285 = vsel %vm283, %v274, 0
      %287 = vmatprep.subr.mxu0 0.0
      %288 = vmatpush1.msra.mxu0 0.0
      %289 = vmatprep.subr.mxu0 0.0
      %290 = vmatpush1.msra.mxu0 0.0
      %291 = vmatprep.subr.mxu0 0.0
      %292 = vmatpush1.msra.mxu0 0.0
      %293 = vmatprep.subr.mxu0 0.0
      %294 = vmatpush1.msra.mxu0 0.0
      %295 = vmatprep.subr.mxu0 0.0
      %296 = vmatpush1.msra.mxu0 0.0
      %297 = vmatprep.subr.mxu0 0.0
      %298 = vmatpush1.msra.mxu0 0.0
      %299 = vmatprep.subr.mxu0 0.0
      %300 = vmatpush1.msra.mxu0 0.0
      %301 = vmatprep.subr.mxu0 0.0
      %302 = vmatpush1.msra.mxu0 0.0
      %303 = vmatprep.subr.mxu0 0.0
      %304 = vmatpush1.msra.mxu0 0.0
      %305 = vmatprep.subr.mxu0 0.0
      %306 = vmatpush1.msra.mxu0 0.0
      %307 = vmatprep.subr.mxu0 0.0
      %308 = vmatpush1.msra.mxu0 0.0
      %309 = vmatprep.subr.mxu0 0.0
      %310 = vmatpush1.msra.mxu0 0.0
      %311 = vmatprep.subr.mxu0 0.0
      %312 = vmatpush1.msra.mxu0 0.0
      %313 = vmatprep.subr.mxu0 0.0
      %314 = vmatpush1.msra.mxu0 0.0
      %315 = vmatprep.subr.mxu0 0.0
      %316 = vmatpush1.msra.mxu0 0.0
      %317 = vmatprep.subr.mxu0 0.0
      %318 = vmatpush1.msra.mxu0 %v275
      %319 = vmatprep.subr.mxu0 0.0
      %320 = vmatpush2.msra.mxu0 0.0
      %321 = vmatprep.subr.mxu0 0.0
      %322 = vmatpush2.msra.mxu0 0.0
      %323 = vmatprep.subr.mxu0 0.0
      %324 = vmatpush2.msra.mxu0 0.0
      %325 = vmatprep.subr.mxu0 0.0
      %326 = vmatpush2.msra.mxu0 0.0
      %327 = vmatprep.subr.mxu0 0.0
      %328 = vmatpush2.msra.mxu0 0.0
      %329 = vmatprep.subr.mxu0 0.0
      %330 = vmatpush2.msra.mxu0 0.0
      %331 = vmatprep.subr.mxu0 0.0
      %332 = vmatpush2.msra.mxu0 0.0
      %333 = vmatprep.subr.mxu0 0.0
      %334 = vmatpush2.msra.mxu0 0.0
      %335 = vmatprep.subr.mxu0 0.0
      %336 = vmatpush2.msra.mxu0 0.0
      %337 = vmatprep.subr.mxu0 0.0
      %338 = vmatpush2.msra.mxu0 0.0
      %339 = vmatprep.subr.mxu0 0.0
      %340 = vmatpush2.msra.mxu0 0.0
      %341 = vmatprep.subr.mxu0 0.0
      %342 = vmatpush2.msra.mxu0 0.0
      %343 = vmatprep.subr.mxu0 0.0
      %344 = vmatpush2.msra.mxu0 0.0
      %345 = vmatprep.subr.mxu0 0.0
      %346 = vmatpush2.msra.mxu0 0.0
      %347 = vmatprep.subr.mxu0 0.0
      %348 = vmatpush2.msra.mxu0 0.0
      %349 = vmatprep.subr.mxu0 0.0
      %350 = vmatpush2.msra.mxu0 0.0
      %351 = vmatprep.mubr.f32.mxu0 0.0
      %352 = vmatmul.mubr.f32.gmra.mxu0 %v285
      %v353 = vpop.f32.mrf.mxu0
      %v354 = vadd.f32 %v281, %v353
      %v355 = vpop.f32.mrf.mxu0
      %356 = vdwg.mxu0
      %v357 = vmax.f32 %v354, 0.0
      %v358 = vld [vmem:[%s3] sm:$0xff]
      %v359 = vld [vmem:[%s3 + $0x8] sm:$0xff]
      %v360 = vld [vmem:[%s3 + $0x10] sm:$0xff]
      %v361 = vld [vmem:[%s3 + $0x18] sm:$0xff]
      %v362 = vld [vmem:[%s4] sm:$0x1]
      %v364 = vlaneseq
      %v365 = vshrl.u32 %v364, 7
      %v366 = vsub.s32 0, %v365
      %v367 = vrot.slane %v362, %v366
      %vm369 = vcmask 261120
      %v371 = vsel %vm369, %v357, 0
      %373 = vmatprep.subr.mxu0 0.0
      %374 = vmatpush1.msra.mxu0 0.0
      %375 = vmatprep.subr.mxu0 0.0
      %376 = vmatpush1.msra.mxu0 0.0
      %377 = vmatprep.subr.mxu0 0.0
      %378 = vmatpush1.msra.mxu0 0.0
      %379 = vmatprep.subr.mxu0 0.0
      %380 = vmatpush1.msra.mxu0 0.0
      %381 = vmatprep.subr.mxu0 0.0
      %382 = vmatpush1.msra.mxu0 0.0
      %383 = vmatprep.subr.mxu0 0.0
      %384 = vmatpush1.msra.mxu0 0.0
      %385 = vmatprep.subr.mxu0 0.0
      %386 = vmatpush1.msra.mxu0 0.0
      %387 = vmatprep.subr.mxu0 0.0
      %388 = vmatpush1.msra.mxu0 0.0
      %389 = vmatprep.subr.mxu0 0.0
      %390 = vmatpush1.msra.mxu0 0.0
      %391 = vmatprep.subr.mxu0 0.0
      %392 = vmatpush1.msra.mxu0 0.0
      %393 = vmatprep.subr.mxu0 0.0
      %394 = vmatpush1.msra.mxu0 0.0
      %395 = vmatprep.subr.mxu0 0.0
      %396 = vmatpush1.msra.mxu0 0.0
      %397 = vmatprep.subr.mxu0 0.0
      %398 = vmatpush1.msra.mxu0 %v361
      %399 = vmatprep.subr.mxu0 0.0
      %400 = vmatpush1.msra.mxu0 %v360
      %401 = vmatprep.subr.mxu0 0.0
      %402 = vmatpush1.msra.mxu0 %v359
      %403 = vmatprep.subr.mxu0 0.0
      %404 = vmatpush1.msra.mxu0 %v358
      %405 = vmatprep.subr.mxu0 0.0
      %406 = vmatpush2.msra.mxu0 0.0
      %407 = vmatprep.subr.mxu0 0.0
      %408 = vmatpush2.msra.mxu0 0.0
      %409 = vmatprep.subr.mxu0 0.0
      %410 = vmatpush2.msra.mxu0 0.0
      %411 = vmatprep.subr.mxu0 0.0
      %412 = vmatpush2.msra.mxu0 0.0
      %413 = vmatprep.subr.mxu0 0.0
      %414 = vmatpush2.msra.mxu0 0.0
      %415 = vmatprep.subr.mxu0 0.0
      %416 = vmatpush2.msra.mxu0 0.0
      %417 = vmatprep.subr.mxu0 0.0
      %418 = vmatpush2.msra.mxu0 0.0
      %419 = vmatprep.subr.mxu0 0.0
      %420 = vmatpush2.msra.mxu0 0.0
      %421 = vmatprep.subr.mxu0 0.0
      %422 = vmatpush2.msra.mxu0 0.0
      %423 = vmatprep.subr.mxu0 0.0
      %424 = vmatpush2.msra.mxu0 0.0
      %425 = vmatprep.subr.mxu0 0.0
      %426 = vmatpush2.msra.mxu0 0.0
      %427 = vmatprep.subr.mxu0 0.0
      %428 = vmatpush2.msra.mxu0 0.0
      %429 = vmatprep.subr.mxu0 0.0
      %430 = vmatpush2.msra.mxu0 0.0
      %431 = vmatprep.subr.mxu0 0.0
      %432 = vmatpush2.msra.mxu0 0.0
      %433 = vmatprep.subr.mxu0 0.0
      %434 = vmatpush2.msra.mxu0 0.0
      %435 = vmatprep.subr.mxu0 0.0
      %436 = vmatpush2.msra.mxu0 0.0
      %437 = vmatprep.mubr.f32.mxu0 0.0
      %438 = vmatmul.mubr.f32.gmra.mxu0 %v371
      %v439 = vpop.f32.mrf.mxu0
      %v440 = vadd.f32 %v367, %v439
      %v441 = vpop.f32.mrf.mxu0
      %442 = vdwg.mxu0
      %v443 = vadd.f32 %v274, %v440
      %v444 = vld [vmem:[%s5] sm:$0x1]
      %v445 = vld [vmem:[%s6] sm:$0x1]
      %v446 = vsel %vm283, %v443, 0.0
      %447 = vadd.xlane.f32.xlu0 %v446
      %v448 = vpop.xlane.xlu0 %447
      %v449 = vrcp.pop 8.0
      %v450 = vmul.f32 %v448, %v449
      %v451 = vsub.f32 %v443, %v450
      %v452 = vmul.f32 %v451, %v451
      %v453 = vsel %vm283, %v452, 0.0
      %454 = vadd.xlane.f32.xlu0 %v453
      %v455 = vpop.xlane.xlu0 %454
      %v456 = vmul.f32 %v455, %v449
      %v457 = vadd.f32 %v456, 1e-05
      %v458 = vrsqrt.pop %v457
      %v459 = vmul.f32 %v451, %v458
      %v461 = vlaneseq
      %v462 = vshrl.u32 %v461, 7
      %v463 = vsub.s32 0, %v462
      %v464 = vrot.slane %v444, %v463
      %v466 = vmul.f32 %v459, %v464
      %v468 = vlaneseq
      %v469 = vshrl.u32 %v468, 7
      %v470 = vsub.s32 0, %v469
      %v471 = vrot.slane %v445, %v470
      %v473 = vadd.f32 %v466, %v471
      %474 = vst.msk [vmem:[%s273] sm:$0xff] %vm283, %v473
      %p475 = scmp.lt.s32.totalorder %s18, 1
      %s476 = scalar_select %p475, %s18, 1
      %s477 = smul.addr %s476, 8
      %s478 = scalar_lea.vmem %s7, %s477
      // Predicated region
      $region49: #{_lambda_.8} parent=47 // pred_check
        %p479 = pneg %p188
      $region50: #{_lambda_.8} parent=47 // pred_check_branch
        %481 = sbr.rel (%p479) target = $region52
      $region51: #{_lambda_.8} parent=47 // pred_region
        _
      $region52: #{_lambda_.8} parent=47 // pred_fallthru
        _
    $region48: #{_lambda_.8} parent=5 // pred_fallthru
      _
    %p482 = scmp.le.s32.totalorder 2, %s13
    // Predicated region
    $region53: #{_lambda_.8} parent=5 // pred_check
      %p483 = pneg %p482
    $region54: #{_lambda_.8} parent=5 // pred_check_branch
      %485 = sbr.rel (%p483) target = $region56
    $region55: #{_lambda_.8} parent=5 // pred_region
      %s486 = ssub.s32 %s13, 2
      // Predicated region
      $region57: #{_lambda_.8} parent=55 // pred_check
        %p487 = pneg %p194
      $region58: #{_lambda_.8} parent=55 // pred_check_branch
        %489 = sbr.rel (%p487) target = $region60
      $region59: #{_lambda_.8} parent=55 // pred_region
        %p490 = scmp.lt.s32.totalorder %s19, 1
        %s491 = scalar_select %p490, %s19, 1
        %s492 = smul.addr %s491, 8
        %s493 = scalar_lea.vmem %s7, %s492
      $region60: #{_lambda_.8} parent=55 // pred_fallthru
        _
    $region56: #{_lambda_.8} parent=5 // pred_fallthru
      _
  $region6: #{_lambda_.8} parent=0 // loop_footer
    %s17 = sadd.s32 1, %s13
  $region7: #{_lambda_.8} parent=0 // loop_footer_branch
    %12 = sbr.rel target = $region3
  $region8: #{_lambda_.8} parent=0 // loop_exit
    _

// kernel: _lambda_.7
$region0: #{_lambda_.7}
  #allocation0 [shape = 'u32[]', space=smem, size = 0x4, offset = 0x4, fixed_abs, tag = 'smem constant byte address 0x4 - core index']
  #allocation1 [shape = 'u32[144,128]{1,0:T(1,128)}', space=vmem, size = 0x12000, scoped, tag = 'internal scratch']
  %s0 = inlined_call_operand.vmem [shape: f32[2,8,8], index: 0, kind: input, shape index: {}]
  %s1 = inlined_call_operand.vmem [shape: f32[1,8], index: 1, kind: input, shape index: {}]
  %s2 = inlined_call_operand.vmem [shape: f32[1,8], index: 2, kind: input, shape index: {}]
  %s3 = inlined_call_operand.vmem [shape: f32[8,8,8], index: 3, kind: input, shape index: {}]
  %s4 = inlined_call_operand.vmem [shape: f32[8,8], index: 4, kind: input, shape index: {}]
  %s5 = inlined_call_operand.vmem [shape: f32[8,8,8], index: 5, kind: input, shape index: {}]
  %s6 = inlined_call_operand.vmem [shape: f32[8,8], index: 6, kind: input, shape index: {}]
  %s7 = inlined_call_operand.vmem [shape: f32[1,8], index: 7, kind: input, shape index: {}]
  %s8 = inlined_call_operand.vmem [shape: f32[1,8], index: 8, kind: input, shape index: {}]
  %s9 = inlined_call_operand.vmem [shape: f32[8,8,8], index: 9, kind: input, shape index: {}]
  %s10 = inlined_call_operand.vmem [shape: f32[8,32], index: 10, kind: input, shape index: {}]
  %s11 = inlined_call_operand.vmem [shape: f32[1,32], index: 11, kind: input, shape index: {}]
  %s12 = inlined_call_operand.vmem [shape: f32[32,32], index: 12, kind: input, shape index: {}]
  %s13 = inlined_call_operand.vmem [shape: f32[1,32], index: 13, kind: input, shape index: {}]
  %s14 = inlined_call_operand.vmem [shape: f32[1,32], index: 14, kind: input, shape index: {}]
  %s15 = inlined_call_operand.vmem [shape: f32[8,8], index: 15, kind: input, shape index: {}]
  %s16 = inlined_call_operand.vmem [shape: f32[1,8], index: 16, kind: input, shape index: {}]
  %s17 = inlined_call_operand.vmem [shape: f32[2,8,8], index: 17, kind: output, shape index: {}]
  %s18 = sld [smem:[#allocation0]]
  $region101: #{_lambda_.7} parent=0
    _
  %s20 = ssub.s32 1, %s18
  %s21 = scalar_select 0, %s20, %s18
  loop: start=0, step=1, limit=4
  $region2: #{_lambda_.7} parent=0 // loop_pre_header
    _
  $region3: #{_lambda_.7} parent=0 // loop_header
    %s23 = sphi 0, %s27
    %p24 = scmp.ge.s32.totalorder %s23, 4
    %s33 = sphi 0, %s35
    %s36 = sphi 0, %s33
    %s37 = sphi 0, %s36
    %s53 = sphi 0, %s37
    %s57 = sphi 0, %s57
    %s59 = sphi 0, %s57
    %s60 = sphi 0, %s59
    %s74 = sphi 0, %s60
    %s78 = sphi 0, %s78
    %s80 = sphi 0, %s78
    %s81 = sphi 0, %s80
    %s95 = sphi 0, %s81
    %s99 = sphi 0, %s99
    %s101 = sphi 0, %s99
    %s102 = sphi 0, %s101
    %s116 = sphi 0, %s102
    %s120 = sphi 0, %s120
    %s122 = sphi 0, %s120
    %s123 = sphi 0, %s122
    %s137 = sphi 0, %s123
    %s141 = sphi 0, %s141
    %s143 = sphi 0, %s141
    %s144 = sphi 0, %s143
    %s158 = sphi 0, %s144
    %s162 = sphi 0, %s162
    %s164 = sphi 0, %s162
    %s165 = sphi 0, %s164
    %s179 = sphi 0, %s165
    %s183 = sphi 0, %s183
    %s185 = sphi 0, %s183
    %s186 = sphi 0, %s185
    %s200 = sphi 0, %s186
    %s204 = sphi 0, %s204
    %s206 = sphi 0, %s204
    %s207 = sphi 0, %s206
    %s221 = sphi 0, %s207
    %s225 = sphi 0, %s225
    %s227 = sphi 0, %s225
    %s228 = sphi 0, %s227
    %s242 = sphi 0, %s228
    %s246 = sphi 0, %s246
    %s248 = sphi 0, %s246
    %s249 = sphi 0, %s248
    %s263 = sphi 0, %s249
    %s267 = sphi 0, %s267
    %s269 = sphi 0, %s267
    %s270 = sphi 0, %s269
    %s284 = sphi 0, %s270
    %s288 = sphi 0, %s288
    %s290 = sphi 0, %s288
    %s291 = sphi 0, %s290
    %s305 = sphi 0, %s291
    %s309 = sphi 0, %s309
    %s311 = sphi 0, %s309
    %s312 = sphi 0, %s311
    %s326 = sphi 0, %s312
    %s330 = sphi 0, %s330
    %s332 = sphi 0, %s330
    %s333 = sphi 0, %s332
    %s347 = sphi 0, %s333
    %s351 = sphi 0, %s351
    %s353 = sphi 0, %s351
    %s354 = sphi 0, %s353
    %s368 = sphi 0, %s354
    %s372 = sphi 0, %s372
    %s374 = sphi 0, %s372
    %s375 = sphi 0, %s374
    %s389 = sphi 0, %s375
    %s395 = sphi 0, %s397
    %s398 = sphi 0, %s395
    %s399 = sphi 0, %s398
    %s415 = sphi 0, %s399
  $region4: #{_lambda_.7} parent=0 // loop_header_branch
    %26 = sbr.rel (%p24) target = $region8
  $region5: #{_lambda_.7} parent=0 // loop_body
    %s28 = ssub.s32 %s23, 1
    %s29 = ssub.s32 %s23, 2
    %s30 = sadd.s32 %s23, 1
    %s31 = ssub.s32 %s23, %s30
    %p32 = scmp.eq.s32.totalorder %s31, 0
    %s34 = sadd.s32 %s33, 1
    %s35 = scalar_select %p32, %s33, %s34
    %p38 = pneg %p32
    %p39 = scmp.eq.s32.totalorder %s23, 1
    %p40 = por %p38, %p39
    %p41 = scmp.ne.s32.totalorder %s33, %s36
    %p42 = scmp.eq.s32.totalorder %s23, 0
    %p43 = por %p41, %p42
    %p44 = scmp.ne.s32.totalorder %s33, %s36
    %p45 = scmp.eq.s32.totalorder %s28, 1
    %p46 = por %p44, %p45
    %p47 = scmp.ne.s32.totalorder %s36, %s37
    %p48 = scmp.eq.s32.totalorder %s28, 0
    %p49 = por %p47, %p48
    %p50 = scmp.ne.s32.totalorder %s36, %s37
    %p51 = scmp.eq.s32.totalorder %s29, 1
    %p52 = por %p50, %p51
    %p54 = scmp.ne.s32.totalorder %s37, %s53
    %p55 = scmp.eq.s32.totalorder %s29, 0
    %p56 = por %p54, %p55
    %s58 = sadd.s32 %s57, 1
    %p61 = scmp.eq.s32.totalorder %s23, 1
    %p62 = scmp.ne.s32.totalorder %s57, %s59
    %p63 = scmp.eq.s32.totalorder %s23, 0
    %p64 = por %p62, %p63
    %p65 = scmp.ne.s32.totalorder %s57, %s59
    %p66 = scmp.eq.s32.totalorder %s28, 1
    %p67 = por %p65, %p66
    %p68 = scmp.ne.s32.totalorder %s59, %s60
    %p69 = scmp.eq.s32.totalorder %s28, 0
    %p70 = por %p68, %p69
    %p71 = scmp.ne.s32.totalorder %s59, %s60
    %p72 = scmp.eq.s32.totalorder %s29, 1
    %p73 = por %p71, %p72
    %p75 = scmp.ne.s32.totalorder %s60, %s74
    %p76 = scmp.eq.s32.totalorder %s29, 0
    %p77 = por %p75, %p76
    %s79 = sadd.s32 %s78, 1
    %p82 = scmp.eq.s32.totalorder %s23, 1
    %p83 = scmp.ne.s32.totalorder %s78, %s80
    %p84 = scmp.eq.s32.totalorder %s23, 0
    %p85 = por %p83, %p84
    %p86 = scmp.ne.s32.totalorder %s78, %s80
    %p87 = scmp.eq.s32.totalorder %s28, 1
    %p88 = por %p86, %p87
    %p89 = scmp.ne.s32.totalorder %s80, %s81
    %p90 = scmp.eq.s32.totalorder %s28, 0
    %p91 = por %p89, %p90
    %p92 = scmp.ne.s32.totalorder %s80, %s81
    %p93 = scmp.eq.s32.totalorder %s29, 1
    %p94 = por %p92, %p93
    %p96 = scmp.ne.s32.totalorder %s81, %s95
    %p97 = scmp.eq.s32.totalorder %s29, 0
    %p98 = por %p96, %p97
    %s100 = sadd.s32 %s99, 1
    %p103 = scmp.eq.s32.totalorder %s23, 1
    %p104 = scmp.ne.s32.totalorder %s99, %s101
    %p105 = scmp.eq.s32.totalorder %s23, 0
    %p106 = por %p104, %p105
    %p107 = scmp.ne.s32.totalorder %s99, %s101
    %p108 = scmp.eq.s32.totalorder %s28, 1
    %p109 = por %p107, %p108
    %p110 = scmp.ne.s32.totalorder %s101, %s102
    %p111 = scmp.eq.s32.totalorder %s28, 0
    %p112 = por %p110, %p111
    %p113 = scmp.ne.s32.totalorder %s101, %s102
    %p114 = scmp.eq.s32.totalorder %s29, 1
    %p115 = por %p113, %p114
    %p117 = scmp.ne.s32.totalorder %s102, %s116
    %p118 = scmp.eq.s32.totalorder %s29, 0
    %p119 = por %p117, %p118
    %s121 = sadd.s32 %s120, 1
    %p124 = scmp.eq.s32.totalorder %s23, 1
    %p125 = scmp.ne.s32.totalorder %s120, %s122
    %p126 = scmp.eq.s32.totalorder %s23, 0
    %p127 = por %p125, %p126
    %p128 = scmp.ne.s32.totalorder %s120, %s122
    %p129 = scmp.eq.s32.totalorder %s28, 1
    %p130 = por %p128, %p129
    %p131 = scmp.ne.s32.totalorder %s122, %s123
    %p132 = scmp.eq.s32.totalorder %s28, 0
    %p133 = por %p131, %p132
    %p134 = scmp.ne.s32.totalorder %s122, %s123
    %p135 = scmp.eq.s32.totalorder %s29, 1
    %p136 = por %p134, %p135
    %p138 = scmp.ne.s32.totalorder %s123, %s137
    %p139 = scmp.eq.s32.totalorder %s29, 0
    %p140 = por %p138, %p139
    %s142 = sadd.s32 %s141, 1
    %p145 = scmp.eq.s32.totalorder %s23, 1
    %p146 = scmp.ne.s32.totalorder %s141, %s143
    %p147 = scmp.eq.s32.totalorder %s23, 0
    %p148 = por %p146, %p147
    %p149 = scmp.ne.s32.totalorder %s141, %s143
    %p150 = scmp.eq.s32.totalorder %s28, 1
    %p151 = por %p149, %p150
    %p152 = scmp.ne.s32.totalorder %s143, %s144
    %p153 = scmp.eq.s32.totalorder %s28, 0
    %p154 = por %p152, %p153
    %p155 = scmp.ne.s32.totalorder %s143, %s144
    %p156 = scmp.eq.s32.totalorder %s29, 1
    %p157 = por %p155, %p156
    %p159 = scmp.ne.s32.totalorder %s144, %s158
    %p160 = scmp.eq.s32.totalorder %s29, 0
    %p161 = por %p159, %p160
    %s163 = sadd.s32 %s162, 1
    %p166 = scmp.eq.s32.totalorder %s23, 1
    %p167 = scmp.ne.s32.totalorder %s162, %s164
    %p168 = scmp.eq.s32.totalorder %s23, 0
    %p169 = por %p167, %p168
    %p170 = scmp.ne.s32.totalorder %s162, %s164
    %p171 = scmp.eq.s32.totalorder %s28, 1
    %p172 = por %p170, %p171
    %p173 = scmp.ne.s32.totalorder %s164, %s165
    %p174 = scmp.eq.s32.totalorder %s28, 0
    %p175 = por %p173, %p174
    %p176 = scmp.ne.s32.totalorder %s164, %s165
    %p177 = scmp.eq.s32.totalorder %s29, 1
    %p178 = por %p176, %p177
    %p180 = scmp.ne.s32.totalorder %s165, %s179
    %p181 = scmp.eq.s32.totalorder %s29, 0
    %p182 = por %p180, %p181
    %s184 = sadd.s32 %s183, 1
    %p187 = scmp.eq.s32.totalorder %s23, 1
    %p188 = scmp.ne.s32.totalorder %s183, %s185
    %p189 = scmp.eq.s32.totalorder %s23, 0
    %p190 = por %p188, %p189
    %p191 = scmp.ne.s32.totalorder %s183, %s185
    %p192 = scmp.eq.s32.totalorder %s28, 1
    %p193 = por %p191, %p192
    %p194 = scmp.ne.s32.totalorder %s185, %s186
    %p195 = scmp.eq.s32.totalorder %s28, 0
    %p196 = por %p194, %p195
    %p197 = scmp.ne.s32.totalorder %s185, %s186
    %p198 = scmp.eq.s32.totalorder %s29, 1
    %p199 = por %p197, %p198
    %p201 = scmp.ne.s32.totalorder %s186, %s200
    %p202 = scmp.eq.s32.totalorder %s29, 0
    %p203 = por %p201, %p202
    %s205 = sadd.s32 %s204, 1
    %p208 = scmp.eq.s32.totalorder %s23, 1
    %p209 = scmp.ne.s32.totalorder %s204, %s206
    %p210 = scmp.eq.s32.totalorder %s23, 0
    %p211 = por %p209, %p210
    %p212 = scmp.ne.s32.totalorder %s204, %s206
    %p213 = scmp.eq.s32.totalorder %s28, 1
    %p214 = por %p212, %p213
    %p215 = scmp.ne.s32.totalorder %s206, %s207
    %p216 = scmp.eq.s32.totalorder %s28, 0
    %p217 = por %p215, %p216
    %p218 = scmp.ne.s32.totalorder %s206, %s207
    %p219 = scmp.eq.s32.totalorder %s29, 1
    %p220 = por %p218, %p219
    %p222 = scmp.ne.s32.totalorder %s207, %s221
    %p223 = scmp.eq.s32.totalorder %s29, 0
    %p224 = por %p222, %p223
    %s226 = sadd.s32 %s225, 1
    %p229 = scmp.eq.s32.totalorder %s23, 1
    %p230 = scmp.ne.s32.totalorder %s225, %s227
    %p231 = scmp.eq.s32.totalorder %s23, 0
    %p232 = por %p230, %p231
    %p233 = scmp.ne.s32.totalorder %s225, %s227
    %p234 = scmp.eq.s32.totalorder %s28, 1
    %p235 = por %p233, %p234
    %p236 = scmp.ne.s32.totalorder %s227, %s228
    %p237 = scmp.eq.s32.totalorder %s28, 0
    %p238 = por %p236, %p237
    %p239 = scmp.ne.s32.totalorder %s227, %s228
    %p240 = scmp.eq.s32.totalorder %s29, 1
    %p241 = por %p239, %p240
    %p243 = scmp.ne.s32.totalorder %s228, %s242
    %p244 = scmp.eq.s32.totalorder %s29, 0
    %p245 = por %p243, %p244
    %s247 = sadd.s32 %s246, 1
    %p250 = scmp.eq.s32.totalorder %s23, 1
    %p251 = scmp.ne.s32.totalorder %s246, %s248
    %p252 = scmp.eq.s32.totalorder %s23, 0
    %p253 = por %p251, %p252
    %p254 = scmp.ne.s32.totalorder %s246, %s248
    %p255 = scmp.eq.s32.totalorder %s28, 1
    %p256 = por %p254, %p255
    %p257 = scmp.ne.s32.totalorder %s248, %s249
    %p258 = scmp.eq.s32.totalorder %s28, 0
    %p259 = por %p257, %p258
    %p260 = scmp.ne.s32.totalorder %s248, %s249
    %p261 = scmp.eq.s32.totalorder %s29, 1
    %p262 = por %p260, %p261
    %p264 = scmp.ne.s32.totalorder %s249, %s263
    %p265 = scmp.eq.s32.totalorder %s29, 0
    %p266 = por %p264, %p265
    %s268 = sadd.s32 %s267, 1
    %p271 = scmp.eq.s32.totalorder %s23, 1
    %p272 = scmp.ne.s32.totalorder %s267, %s269
    %p273 = scmp.eq.s32.totalorder %s23, 0
    %p274 = por %p272, %p273
    %p275 = scmp.ne.s32.totalorder %s267, %s269
    %p276 = scmp.eq.s32.totalorder %s28, 1
    %p277 = por %p275, %p276
    %p278 = scmp.ne.s32.totalorder %s269, %s270
    %p279 = scmp.eq.s32.totalorder %s28, 0
    %p280 = por %p278, %p279
    %p281 = scmp.ne.s32.totalorder %s269, %s270
    %p282 = scmp.eq.s32.totalorder %s29, 1
    %p283 = por %p281, %p282
    %p285 = scmp.ne.s32.totalorder %s270, %s284
    %p286 = scmp.eq.s32.totalorder %s29, 0
    %p287 = por %p285, %p286
    %s289 = sadd.s32 %s288, 1
    %p292 = scmp.eq.s32.totalorder %s23, 1
    %p293 = scmp.ne.s32.totalorder %s288, %s290
    %p294 = scmp.eq.s32.totalorder %s23, 0
    %p295 = por %p293, %p294
    %p296 = scmp.ne.s32.totalorder %s288, %s290
    %p297 = scmp.eq.s32.totalorder %s28, 1
    %p298 = por %p296, %p297
    %p299 = scmp.ne.s32.totalorder %s290, %s291
    %p300 = scmp.eq.s32.totalorder %s28, 0
    %p301 = por %p299, %p300
    %p302 = scmp.ne.s32.totalorder %s290, %s291
    %p303 = scmp.eq.s32.totalorder %s29, 1
    %p304 = por %p302, %p303
    %p306 = scmp.ne.s32.totalorder %s291, %s305
    %p307 = scmp.eq.s32.totalorder %s29, 0
    %p308 = por %p306, %p307
    %s310 = sadd.s32 %s309, 1
    %p313 = scmp.eq.s32.totalorder %s23, 1
    %p314 = scmp.ne.s32.totalorder %s309, %s311
    %p315 = scmp.eq.s32.totalorder %s23, 0
    %p316 = por %p314, %p315
    %p317 = scmp.ne.s32.totalorder %s309, %s311
    %p318 = scmp.eq.s32.totalorder %s28, 1
    %p319 = por %p317, %p318
    %p320 = scmp.ne.s32.totalorder %s311, %s312
    %p321 = scmp.eq.s32.totalorder %s28, 0
    %p322 = por %p320, %p321
    %p323 = scmp.ne.s32.totalorder %s311, %s312
    %p324 = scmp.eq.s32.totalorder %s29, 1
    %p325 = por %p323, %p324
    %p327 = scmp.ne.s32.totalorder %s312, %s326
    %p328 = scmp.eq.s32.totalorder %s29, 0
    %p329 = por %p327, %p328
    %s331 = sadd.s32 %s330, 1
    %p334 = scmp.eq.s32.totalorder %s23, 1
    %p335 = scmp.ne.s32.totalorder %s330, %s332
    %p336 = scmp.eq.s32.totalorder %s23, 0
    %p337 = por %p335, %p336
    %p338 = scmp.ne.s32.totalorder %s330, %s332
    %p339 = scmp.eq.s32.totalorder %s28, 1
    %p340 = por %p338, %p339
    %p341 = scmp.ne.s32.totalorder %s332, %s333
    %p342 = scmp.eq.s32.totalorder %s28, 0
    %p343 = por %p341, %p342
    %p344 = scmp.ne.s32.totalorder %s332, %s333
    %p345 = scmp.eq.s32.totalorder %s29, 1
    %p346 = por %p344, %p345
    %p348 = scmp.ne.s32.totalorder %s333, %s347
    %p349 = scmp.eq.s32.totalorder %s29, 0
    %p350 = por %p348, %p349
    %s352 = sadd.s32 %s351, 1
    %p355 = scmp.eq.s32.totalorder %s23, 1
    %p356 = scmp.ne.s32.totalorder %s351, %s353
    %p357 = scmp.eq.s32.totalorder %s23, 0
    %p358 = por %p356, %p357
    %p359 = scmp.ne.s32.totalorder %s351, %s353
    %p360 = scmp.eq.s32.totalorder %s28, 1
    %p361 = por %p359, %p360
    %p362 = scmp.ne.s32.totalorder %s353, %s354
    %p363 = scmp.eq.s32.totalorder %s28, 0
    %p364 = por %p362, %p363
    %p365 = scmp.ne.s32.totalorder %s353, %s354
    %p366 = scmp.eq.s32.totalorder %s29, 1
    %p367 = por %p365, %p366
    %p369 = scmp.ne.s32.totalorder %s354, %s368
    %p370 = scmp.eq.s32.totalorder %s29, 0
    %p371 = por %p369, %p370
    %s373 = sadd.s32 %s372, 1
    %p376 = scmp.eq.s32.totalorder %s23, 1
    %p377 = scmp.ne.s32.totalorder %s372, %s374
    %p378 = scmp.eq.s32.totalorder %s23, 0
    %p379 = por %p377, %p378
    %p380 = scmp.ne.s32.totalorder %s372, %s374
    %p381 = scmp.eq.s32.totalorder %s28, 1
    %p382 = por %p380, %p381
    %p383 = scmp.ne.s32.totalorder %s374, %s375
    %p384 = scmp.eq.s32.totalorder %s28, 0
    %p385 = por %p383, %p384
    %p386 = scmp.ne.s32.totalorder %s374, %s375
    %p387 = scmp.eq.s32.totalorder %s29, 1
    %p388 = por %p386, %p387
    %p390 = scmp.ne.s32.totalorder %s375, %s389
    %p391 = scmp.eq.s32.totalorder %s29, 0
    %p392 = por %p390, %p391
    %s393 = ssub.s32 %s23, %s30
    %p394 = scmp.eq.s32.totalorder %s393, 0
    %s396 = sadd.s32 %s395, 1
    %s397 = scalar_select %p394, %s395, %s396
    %p400 = pneg %p394
    %p401 = scmp.eq.s32.totalorder %s23, 1
    %p402 = por %p400, %p401
    %p403 = scmp.ne.s32.totalorder %s395, %s398
    %p404 = scmp.eq.s32.totalorder %s23, 0
    %p405 = por %p403, %p404
    %p406 = scmp.ne.s32.totalorder %s395, %s398
    %p407 = scmp.eq.s32.totalorder %s28, 1
    %p408 = por %p406, %p407
    %p409 = scmp.ne.s32.totalorder %s398, %s399
    %p410 = scmp.eq.s32.totalorder %s28, 0
    %p411 = por %p409, %p410
    %p412 = scmp.ne.s32.totalorder %s398, %s399
    %p413 = scmp.eq.s32.totalorder %s29, 1
    %p414 = por %p412, %p413
    %p416 = scmp.ne.s32.totalorder %s399, %s415
    %p417 = scmp.eq.s32.totalorder %s29, 0
    %p418 = por %p416, %p417
    %p419 = scmp.le.s32.totalorder 1, %s23
    %p420 = scmp.lt.s32.totalorder %s23, 3
    %p421 = pnand %p419, %p420
    %p422 = pneg %p421
    // Predicated region
    $region9: #{_lambda_.7} parent=5 // pred_check
      _
    $region10: #{_lambda_.7} parent=5 // pred_check_branch
      %424 = sbr.rel (%p421) target = $region12
    $region11: #{_lambda_.7} parent=5 // pred_region
      %s425 = ssub.s32 %s23, 1
      // Predicated region
      $region13: #{_lambda_.7} parent=11 // pred_check
        %p426 = pneg %p70
      $region14: #{_lambda_.7} parent=11 // pred_check_branch
        %428 = sbr.rel (%p426) target = $region16
      $region15: #{_lambda_.7} parent=11 // pred_region
        _
      $region16: #{_lambda_.7} parent=11 // pred_fallthru
        _
      // Predicated region
      $region17: #{_lambda_.7} parent=11 // pred_check
        %p429 = pneg %p91
      $region18: #{_lambda_.7} parent=11 // pred_check_branch
        %431 = sbr.rel (%p429) target = $region20
      $region19: #{_lambda_.7} parent=11 // pred_region
        _
      $region20: #{_lambda_.7} parent=11 // pred_fallthru
        _
      // Predicated region
      $region21: #{_lambda_.7} parent=11 // pred_check
        %p432 = pneg %p112
      $region22: #{_lambda_.7} parent=11 // pred_check_branch
        %434 = sbr.rel (%p432) target = $region24
      $region23: #{_lambda_.7} parent=11 // pred_region
        _
      $region24: #{_lambda_.7} parent=11 // pred_fallthru
        _
      // Predicated region
      $region25: #{_lambda_.7} parent=11 // pred_check
        %p435 = pneg %p133
      $region26: #{_lambda_.7} parent=11 // pred_check_branch
        %437 = sbr.rel (%p435) target = $region28
      $region27: #{_lambda_.7} parent=11 // pred_region
        _
      $region28: #{_lambda_.7} parent=11 // pred_fallthru
        _
      // Predicated region
      $region29: #{_lambda_.7} parent=11 // pred_check
        %p438 = pneg %p154
      $region30: #{_lambda_.7} parent=11 // pred_check_branch
        %440 = sbr.rel (%p438) target = $region32
      $region31: #{_lambda_.7} parent=11 // pred_region
        _
      $region32: #{_lambda_.7} parent=11 // pred_fallthru
        _
      // Predicated region
      $region33: #{_lambda_.7} parent=11 // pred_check
        %p441 = pneg %p175
      $region34: #{_lambda_.7} parent=11 // pred_check_branch
        %443 = sbr.rel (%p441) target = $region36
      $region35: #{_lambda_.7} parent=11 // pred_region
        _
      $region36: #{_lambda_.7} parent=11 // pred_fallthru
        _
      // Predicated region
      $region37: #{_lambda_.7} parent=11 // pred_check
        %p444 = pneg %p196
      $region38: #{_lambda_.7} parent=11 // pred_check_branch
        %446 = sbr.rel (%p444) target = $region40
      $region39: #{_lambda_.7} parent=11 // pred_region
        _
      $region40: #{_lambda_.7} parent=11 // pred_fallthru
        _
      // Predicated region
      $region41: #{_lambda_.7} parent=11 // pred_check
        %p447 = pneg %p217
      $region42: #{_lambda_.7} parent=11 // pred_check_branch
        %449 = sbr.rel (%p447) target = $region44
      $region43: #{_lambda_.7} parent=11 // pred_region
        _
      $region44: #{_lambda_.7} parent=11 // pred_fallthru
        _
      // Predicated region
      $region45: #{_lambda_.7} parent=11 // pred_check
        %p450 = pneg %p238
      $region46: #{_lambda_.7} parent=11 // pred_check_branch
        %452 = sbr.rel (%p450) target = $region48
      $region47: #{_lambda_.7} parent=11 // pred_region
        _
      $region48: #{_lambda_.7} parent=11 // pred_fallthru
        _
      // Predicated region
      $region49: #{_lambda_.7} parent=11 // pred_check
        %p453 = pneg %p259
      $region50: #{_lambda_.7} parent=11 // pred_check_branch
        %455 = sbr.rel (%p453) target = $region52
      $region51: #{_lambda_.7} parent=11 // pred_region
        _
      $region52: #{_lambda_.7} parent=11 // pred_fallthru
        _
      // Predicated region
      $region53: #{_lambda_.7} parent=11 // pred_check
        %p456 = pneg %p280
      $region54: #{_lambda_.7} parent=11 // pred_check_branch
        %458 = sbr.rel (%p456) target = $region56
      $region55: #{_lambda_.7} parent=11 // pred_region
        _
      $region56: #{_lambda_.7} parent=11 // pred_fallthru
        _
      // Predicated region
      $region57: #{_lambda_.7} parent=11 // pred_check
        %p459 = pneg %p301
      $region58: #{_lambda_.7} parent=11 // pred_check_branch
        %461 = sbr.rel (%p459) target = $region60
      $region59: #{_lambda_.7} parent=11 // pred_region
        _
      $region60: #{_lambda_.7} parent=11 // pred_fallthru
        _
      // Predicated region
      $region61: #{_lambda_.7} parent=11 // pred_check
        %p462 = pneg %p322
      $region62: #{_lambda_.7} parent=11 // pred_check_branch
        %464 = sbr.rel (%p462) target = $region64
      $region63: #{_lambda_.7} parent=11 // pred_region
        _
      $region64: #{_lambda_.7} parent=11 // pred_fallthru
        _
      // Predicated region
      $region65: #{_lambda_.7} parent=11 // pred_check
        %p465 = pneg %p343
      $region66: #{_lambda_.7} parent=11 // pred_check_branch
        %467 = sbr.rel (%p465) target = $region68
      $region67: #{_lambda_.7} parent=11 // pred_region
        _
      $region68: #{_lambda_.7} parent=11 // pred_fallthru
        _
      // Predicated region
      $region69: #{_lambda_.7} parent=11 // pred_check
        %p468 = pneg %p364
      $region70: #{_lambda_.7} parent=11 // pred_check_branch
        %470 = sbr.rel (%p468) target = $region72
      $region71: #{_lambda_.7} parent=11 // pred_region
        _
      $region72: #{_lambda_.7} parent=11 // pred_fallthru
        _
      // Predicated region
      $region73: #{_lambda_.7} parent=11 // pred_check
        %p471 = pneg %p385
      $region74: #{_lambda_.7} parent=11 // pred_check_branch
        %473 = sbr.rel (%p471) target = $region76
      $region75: #{_lambda_.7} parent=11 // pred_region
        _
      $region76: #{_lambda_.7} parent=11 // pred_fallthru
        _
    $region12: #{_lambda_.7} parent=5 // pred_fallthru
      _
    %p474 = scmp.lt.s32.totalorder %s23, 2
    // Predicated region
    $region77: #{_lambda_.7} parent=5 // pred_check
      %p475 = pneg %p474
    $region78: #{_lambda_.7} parent=5 // pred_check_branch
      %477 = sbr.rel (%p475) target = $region80
    $region79: #{_lambda_.7} parent=5 // pred_region
      // Predicated region
      $region81: #{_lambda_.7} parent=79 // pred_check
        %p478 = pneg %p43
      $region82: #{_lambda_.7} parent=79 // pred_check_branch
        %480 = sbr.rel (%p478) target = $region84
      $region83: #{_lambda_.7} parent=79 // pred_region
        %p481 = scmp.lt.s32.totalorder %s23, 1
        %s482 = scalar_select %p481, %s23, 1
        %s483 = smul.addr %s482, 8
        %s484 = scalar_lea.vmem %s0, %s483
      $region84: #{_lambda_.7} parent=79 // pred_fallthru
        _
    $region80: #{_lambda_.7} parent=5 // pred_fallthru
      _
    %p485 = scmp.le.s32.totalorder 1, %s23
    %p486 = scmp.lt.s32.totalorder %s23, 3
    %p487 = pnand %p485, %p486
    %p488 = pneg %p487
    // Predicated region
    $region85: #{_lambda_.7} parent=5 // pred_check
      _
    $region86: #{_lambda_.7} parent=5 // pred_check_branch
      %490 = sbr.rel (%p487) target = $region88
    $region87: #{_lambda_.7} parent=5 // pred_region
      %s491 = ssub.s32 %s23, 1
      %p492 = scmp.lt.s32.totalorder %s28, 1
      %s493 = scalar_select %p492, %s28, 1
      %s494 = smul.addr %s493, 8
      %s495 = scalar_lea.vmem %s0, %s494
      %p496 = pneg %p49
      %p497 = pneg %p46
      %p498 = pneg %p70
      %p499 = pneg %p67
      %p500 = pneg %p91
      %p501 = pneg %p88
      %p502 = pneg %p112
      %p503 = pneg %p109
      %p504 = pneg %p133
      %p505 = pneg %p130
      %p506 = pneg %p154
      %p507 = pneg %p151
      %p508 = pneg %p175
      %p509 = pneg %p172
      %p510 = pneg %p196
      %p511 = pneg %p193
      %p512 = pneg %p217
      %p513 = pneg %p214
      %p514 = pneg %p238
      %p515 = pneg %p235
      %p516 = pneg %p259
      %p517 = pneg %p256
      %p518 = pneg %p280
      %p519 = pneg %p277
      %p520 = pneg %p301
      %p521 = pneg %p298
      %p522 = pneg %p322
      %p523 = pneg %p319
      %p524 = pneg %p343
      %p525 = pneg %p340
      %p526 = pneg %p364
      %p527 = pneg %p361
      %p528 = pneg %p385
      %p529 = pneg %p382
      %p530 = pneg %p411
      %p531 = pneg %p408
      %p532 = scmp.lt.s32.totalorder %s28, 1
      %s533 = scalar_select %p532, %s28, 1
      %s534 = smul.addr %s533, 8
      %s535 = scalar_lea.vmem %s17, %s534
      %p536 = scmp.lt.s32.totalorder %s28, 1
      %s537 = scalar_select %p536, %s28, 1
      %s538 = smul.addr %s537, 8
      %s539 = scalar_lea.vmem %s0, %s538
      %p540 = scmp.lt.s32.totalorder %s28, 1
      %s541 = scalar_select %p540, %s28, 1
      %s542 = smul.addr %s541, 8
      %s543 = scalar_lea.vmem %s17, %s542
      %v544 = vld [vmem:[%s539] sm:$0xff]
      %v545 = vld [vmem:[%s1] sm:$0x1]
      %v546 = vld [vmem:[%s2] sm:$0x1]
      %vm547 = vcmask 64512
      %v548 = vsel %vm547, %v544, 0.0
      %549 = vadd.xlane.f32.xlu0 %v548
      %v550 = vpop.xlane.xlu0 %549
      %v551 = vrcp.pop 8.0
      %v552 = vmul.f32 %v550, %v551
      %v553 = vsub.f32 %v544, %v552
      %v554 = vmul.f32 %v553, %v553
      %v555 = vsel %vm547, %v554, 0.0
      %556 = vadd.xlane.f32.xlu0 %v555
      %v557 = vpop.xlane.xlu0 %556
      %v558 = vmul.f32 %v557, %v551
      %v559 = vadd.f32 %v558, 1e-05
      %v560 = vrsqrt.pop %v559
      %v561 = vmul.f32 %v553, %v560
      %v563 = vlaneseq
      %v564 = vshrl.u32 %v563, 7
      %v565 = vsub.s32 0, %v564
      %v566 = vrot.slane %v545, %v565
      %v568 = vmul.f32 %v561, %v566
      %v570 = vlaneseq
      %v571 = vshrl.u32 %v570, 7
      %v572 = vsub.s32 0, %v571
      %v573 = vrot.slane %v546, %v572
      %v575 = vadd.f32 %v568, %v573
      %v576 = vld [vmem:[%s15] sm:$0xff]
      %v577 = vld [vmem:[%s16] sm:$0x1]
      %v579 = vlaneseq
      %v580 = vshrl.u32 %v579, 7
      %v581 = vsub.s32 0, %v580
      %v582 = vrot.slane %v577, %v581
      %v585 = vsel %vm547, %v575, 0
      %587 = vmatprep.subr.mxu0 0.0
      %588 = vmatpush1.msra.mxu0 0.0
      %589 = vmatprep.subr.mxu0 0.0
      %590 = vmatpush1.msra.mxu0 0.0
      %591 = vmatprep.subr.mxu0 0.0
      %592 = vmatpush1.msra.mxu0 0.0
      %593 = vmatprep.subr.mxu0 0.0
      %594 = vmatpush1.msra.mxu0 0.0
      %595 = vmatprep.subr.mxu0 0.0
      %596 = vmatpush1.msra.mxu0 0.0
      %597 = vmatprep.subr.mxu0 0.0
      %598 = vmatpush1.msra.mxu0 0.0
      %599 = vmatprep.subr.mxu0 0.0
      %600 = vmatpush1.msra.mxu0 0.0
      %601 = vmatprep.subr.mxu0 0.0
      %602 = vmatpush1.msra.mxu0 0.0
      %603 = vmatprep.subr.mxu0 0.0
      %604 = vmatpush1.msra.mxu0 0.0
      %605 = vmatprep.subr.mxu0 0.0
      %606 = vmatpush1.msra.mxu0 0.0
      %607 = vmatprep.subr.mxu0 0.0
      %608 = vmatpush1.msra.mxu0 0.0
      %609 = vmatprep.subr.mxu0 0.0
      %610 = vmatpush1.msra.mxu0 0.0
      %611 = vmatprep.subr.mxu0 0.0
      %612 = vmatpush1.msra.mxu0 0.0
      %613 = vmatprep.subr.mxu0 0.0
      %614 = vmatpush1.msra.mxu0 0.0
      %615 = vmatprep.subr.mxu0 0.0
      %616 = vmatpush1.msra.mxu0 0.0
      %617 = vmatprep.subr.mxu0 0.0
      %618 = vmatpush1.msra.mxu0 %v576
      %619 = vmatprep.subr.mxu0 0.0
      %620 = vmatpush2.msra.mxu0 0.0
      %621 = vmatprep.subr.mxu0 0.0
      %622 = vmatpush2.msra.mxu0 0.0
      %623 = vmatprep.subr.mxu0 0.0
      %624 = vmatpush2.msra.mxu0 0.0
      %625 = vmatprep.subr.mxu0 0.0
      %626 = vmatpush2.msra.mxu0 0.0
      %627 = vmatprep.subr.mxu0 0.0
      %628 = vmatpush2.msra.mxu0 0.0
      %629 = vmatprep.subr.mxu0 0.0
      %630 = vmatpush2.msra.mxu0 0.0
      %631 = vmatprep.subr.mxu0 0.0
      %632 = vmatpush2.msra.mxu0 0.0
      %633 = vmatprep.subr.mxu0 0.0
      %634 = vmatpush2.msra.mxu0 0.0
      %635 = vmatprep.subr.mxu0 0.0
      %636 = vmatpush2.msra.mxu0 0.0
      %637 = vmatprep.subr.mxu0 0.0
      %638 = vmatpush2.msra.mxu0 0.0
      %639 = vmatprep.subr.mxu0 0.0
      %640 = vmatpush2.msra.mxu0 0.0
      %641 = vmatprep.subr.mxu0 0.0
      %642 = vmatpush2.msra.mxu0 0.0
      %643 = vmatprep.subr.mxu0 0.0
      %644 = vmatpush2.msra.mxu0 0.0
      %645 = vmatprep.subr.mxu0 0.0
      %646 = vmatpush2.msra.mxu0 0.0
      %647 = vmatprep.subr.mxu0 0.0
      %648 = vmatpush2.msra.mxu0 0.0
      %649 = vmatprep.subr.mxu0 0.0
      %650 = vmatpush2.msra.mxu0 0.0
      %651 = vmatprep.mubr.f32.mxu0 0.0
      %652 = vmatmul.mubr.f32.gmra.mxu0 %v585
      %v653 = vpop.f32.mrf.mxu0
      %v654 = vadd.f32 %v582, %v653
      %v655 = vpop.f32.mrf.mxu0
      %656 = vdwg.mxu0
      %v657 = vld [vmem:[%s3] sm:$0xff]
      %v658 = vld [vmem:[%s3 + $0x8] sm:$0xff]
      %v659 = vld [vmem:[%s3 + $0x10] sm:$0xff]
      %v660 = vld [vmem:[%s3 + $0x18] sm:$0xff]
      %v661 = vld [vmem:[%s3 + $0x20] sm:$0xff]
      %v662 = vld [vmem:[%s3 + $0x28] sm:$0xff]
      %v663 = vld [vmem:[%s3 + $0x30] sm:$0xff]
      %v664 = vld [vmem:[%s3 + $0x38] sm:$0xff]
      %v665 = vmul.f32 %v657, %v575
      %v666 = vmul.f32 %v658, %v575
      %v667 = vmul.f32 %v659, %v575
      %v668 = vmul.f32 %v660, %v575
      %v669 = vmul.f32 %v661, %v575
      %v670 = vmul.f32 %v662, %v575
      %v671 = vmul.f32 %v663, %v575
      %v672 = vmul.f32 %v664, %v575
      %v673 = vsel %vm547, %v665, 0.0
      %v674 = vrot.slane %v673, 4
      %v675 = vadd.f32 %v673, %v674
      %v676 = vrot.slane %v675, 2
      %v677 = vadd.f32 %v675, %v676
      %v678 = vrot.slane %v677, 1
      %v679 = vadd.f32 %v677, %v678
      %v680 = vsel %vm547, %v666, 0.0
      %v681 = vrot.slane %v680, 4
      %v682 = vadd.f32 %v680, %v681
      %v683 = vrot.slane %v682, 2
      %v684 = vadd.f32 %v682, %v683
      %v685 = vrot.slane %v684, 1
      %v686 = vadd.f32 %v684, %v685
      %v687 = vsel %vm547, %v667, 0.0
      %v688 = vrot.slane %v687, 4
      %v689 = vadd.f32 %v687, %v688
      %v690 = vrot.slane %v689, 2
      %v691 = vadd.f32 %v689, %v690
      %v692 = vrot.slane %v691, 1
      %v693 = vadd.f32 %v691, %v692
      %v694 = vsel %vm547, %v668, 0.0
      %v695 = vrot.slane %v694, 4
      %v696 = vadd.f32 %v694, %v695
      %v697 = vrot.slane %v696, 2
      %v698 = vadd.f32 %v696, %v697
      %v699 = vrot.slane %v698, 1
      %v700 = vadd.f32 %v698, %v699
      %v701 = vsel %vm547, %v669, 0.0
      %v702 = vrot.slane %v701, 4
      %v703 = vadd.f32 %v701, %v702
      %v704 = vrot.slane %v703, 2
      %v705 = vadd.f32 %v703, %v704
      %v706 = vrot.slane %v705, 1
      %v707 = vadd.f32 %v705, %v706
      %v708 = vsel %vm547, %v670, 0.0
      %v709 = vrot.slane %v708, 4
      %v710 = vadd.f32 %v708, %v709
      %v711 = vrot.slane %v710, 2
      %v712 = vadd.f32 %v710, %v711
      %v713 = vrot.slane %v712, 1
      %v714 = vadd.f32 %v712, %v713
      %v715 = vsel %vm547, %v671, 0.0
      %v716 = vrot.slane %v715, 4
      %v717 = vadd.f32 %v715, %v716
      %v718 = vrot.slane %v717, 2
      %v719 = vadd.f32 %v717, %v718
      %v720 = vrot.slane %v719, 1
      %v721 = vadd.f32 %v719, %v720
      %v722 = vsel %vm547, %v672, 0.0
      %v723 = vrot.slane %v722, 4
      %v724 = vadd.f32 %v722, %v723
      %v725 = vrot.slane %v724, 2
      %v726 = vadd.f32 %v724, %v725
      %v727 = vrot.slane %v726, 1
      %v728 = vadd.f32 %v726, %v727
      %v729 = vld [vmem:[%s4] sm:$0xff]
      %v731 = vrot.slane %v729, 1
      %v732 = vrot.slane %v729, 2
      %v733 = vrot.slane %v729, 3
      %v734 = vrot.slane %v729, 4
      %v735 = vrot.slane %v729, 5
      %v736 = vrot.slane %v729, 6
      %v737 = vrot.slane %v729, 7
      %v746 = vadd.f32 %v679, %v729
      %v747 = vadd.f32 %v686, %v731
      %v748 = vadd.f32 %v693, %v732
      %v749 = vadd.f32 %v700, %v733
      %v750 = vadd.f32 %v707, %v734
      %v751 = vadd.f32 %v714, %v735
      %v752 = vadd.f32 %v721, %v736
      %v753 = vadd.f32 %v728, %v737
      %v754 = vld [vmem:[%s5] sm:$0xff]
      %v755 = vld [vmem:[%s5 + $0x8] sm:$0xff]
      %v756 = vld [vmem:[%s5 + $0x10] sm:$0xff]
      %v757 = vld [vmem:[%s5 + $0x18] sm:$0xff]
      %v758 = vld [vmem:[%s5 + $0x20] sm:$0xff]
      %v759 = vld [vmem:[%s5 + $0x28] sm:$0xff]
      %v760 = vld [vmem:[%s5 + $0x30] sm:$0xff]
      %v761 = vld [vmem:[%s5 + $0x38] sm:$0xff]
      %v762 = vmul.f32 %v754, %v575
      %v763 = vmul.f32 %v755, %v575
      %v764 = vmul.f32 %v756, %v575
      %v765 = vmul.f32 %v757, %v575
      %v766 = vmul.f32 %v758, %v575
      %v767 = vmul.f32 %v759, %v575
      %v768 = vmul.f32 %v760, %v575
      %v769 = vmul.f32 %v761, %v575
      %v770 = vsel %vm547, %v762, 0.0
      %v771 = vrot.slane %v770, 4
      %v772 = vadd.f32 %v770, %v771
      %v773 = vrot.slane %v772, 2
      %v774 = vadd.f32 %v772, %v773
      %v775 = vrot.slane %v774, 1
      %v776 = vadd.f32 %v774, %v775
      %v777 = vsel %vm547, %v763, 0.0
      %v778 = vrot.slane %v777, 4
      %v779 = vadd.f32 %v777, %v778
      %v780 = vrot.slane %v779, 2
      %v781 = vadd.f32 %v779, %v780
      %v782 = vrot.slane %v781, 1
      %v783 = vadd.f32 %v781, %v782
      %v784 = vsel %vm547, %v764, 0.0
      %v785 = vrot.slane %v784, 4
      %v786 = vadd.f32 %v784, %v785
      %v787 = vrot.slane %v786, 2
      %v788 = vadd.f32 %v786, %v787
      %v789 = vrot.slane %v788, 1
      %v790 = vadd.f32 %v788, %v789
      %v791 = vsel %vm547, %v765, 0.0
      %v792 = vrot.slane %v791, 4
      %v793 = vadd.f32 %v791, %v792
      %v794 = vrot.slane %v793, 2
      %v795 = vadd.f32 %v793, %v794
      %v796 = vrot.slane %v795, 1
      %v797 = vadd.f32 %v795, %v796
      %v798 = vsel %vm547, %v766, 0.0
      %v799 = vrot.slane %v798, 4
      %v800 = vadd.f32 %v798, %v799
      %v801 = vrot.slane %v800, 2
      %v802 = vadd.f32 %v800, %v801
      %v803 = vrot.slane %v802, 1
      %v804 = vadd.f32 %v802, %v803
      %v805 = vsel %vm547, %v767, 0.0
      %v806 = vrot.slane %v805, 4
      %v807 = vadd.f32 %v805, %v806
      %v808 = vrot.slane %v807, 2
      %v809 = vadd.f32 %v807, %v808
      %v810 = vrot.slane %v809, 1
      %v811 = vadd.f32 %v809, %v810
      %v812 = vsel %vm547, %v768, 0.0
      %v813 = vrot.slane %v812, 4
      %v814 = vadd.f32 %v812, %v813
      %v815 = vrot.slane %v814, 2
      %v816 = vadd.f32 %v814, %v815
      %v817 = vrot.slane %v816, 1
      %v818 = vadd.f32 %v816, %v817
      %v819 = vsel %vm547, %v769, 0.0
      %v820 = vrot.slane %v819, 4
      %v821 = vadd.f32 %v819, %v820
      %v822 = vrot.slane %v821, 2
      %v823 = vadd.f32 %v821, %v822
      %v824 = vrot.slane %v823, 1
      %v825 = vadd.f32 %v823, %v824
      %v826 = vld [vmem:[%s6] sm:$0xff]
      %v828 = vrot.slane %v826, 1
      %v829 = vrot.slane %v826, 2
      %v830 = vrot.slane %v826, 3
      %v831 = vrot.slane %v826, 4
      %v832 = vrot.slane %v826, 5
      %v833 = vrot.slane %v826, 6
      %v834 = vrot.slane %v826, 7
      %v843 = vadd.f32 %v776, %v826
      %v844 = vadd.f32 %v783, %v828
      %v845 = vadd.f32 %v790, %v829
      %v846 = vadd.f32 %v797, %v830
      %v847 = vadd.f32 %v804, %v831
      %v848 = vadd.f32 %v811, %v832
      %v849 = vadd.f32 %v818, %v833
      %v850 = vadd.f32 %v825, %v834
      %v851 = vld [vmem:[%s7] sm:$0x1]
      %v852 = vld [vmem:[%s8] sm:$0x1]
      %v861 = vrot.slane %v747, 7
      %vm862 = vcmask 1041409
      %v863 = vsel %vm862, %v861, %v746
      %v864 = vrot.slane %v748, 6
      %vm865 = vcmask 1042434
      %v866 = vsel %vm865, %v864, %v863
      %v867 = vrot.slane %v749, 5
      %vm868 = vcmask 1043459
      %v869 = vsel %vm868, %v867, %v866
      %v870 = vrot.slane %v750, 4
      %vm871 = vcmask 1044484
      %v872 = vsel %vm871, %v870, %v869
      %v873 = vrot.slane %v751, 3
      %vm874 = vcmask 1045509
      %v875 = vsel %vm874, %v873, %v872
      %v876 = vrot.slane %v752, 2
      %vm877 = vcmask 1046534
      %v878 = vsel %vm877, %v876, %v875
      %v879 = vrot.slane %v753, 1
      %vm880 = vcmask 1047559
      %v881 = vsel %vm880, %v879, %v878
      %v883 = vsel %vm547, %v881, 0.0
      %884 = vadd.xlane.f32.xlu0 %v883
      %v885 = vpop.xlane.xlu0 %884
      %v886 = vmul.f32 %v885, %v551
      %v888 = vrot.slane %v886, 1
      %v889 = vrot.slane %v886, 2
      %v890 = vrot.slane %v886, 3
      %v891 = vrot.slane %v886, 4
      %v892 = vrot.slane %v886, 5
      %v893 = vrot.slane %v886, 6
      %v894 = vrot.slane %v886, 7
      %v903 = vsub.f32 %v746, %v886
      %v904 = vsub.f32 %v747, %v888
      %v905 = vsub.f32 %v748, %v889
      %v906 = vsub.f32 %v749, %v890
      %v907 = vsub.f32 %v750, %v891
      %v908 = vsub.f32 %v751, %v892
      %v909 = vsub.f32 %v752, %v893
      %v910 = vsub.f32 %v753, %v894
      %v911 = vmul.f32 %v903, %v903
      %v912 = vmul.f32 %v904, %v904
      %v913 = vmul.f32 %v905, %v905
      %v914 = vmul.f32 %v906, %v906
      %v915 = vmul.f32 %v907, %v907
      %v916 = vmul.f32 %v908, %v908
      %v917 = vmul.f32 %v909, %v909
      %v918 = vmul.f32 %v910, %v910
      %v927 = vrot.slane %v912, 7
      %v928 = vsel %vm862, %v927, %v911
      %v929 = vrot.slane %v913, 6
      %v930 = vsel %vm865, %v929, %v928
      %v931 = vrot.slane %v914, 5
      %v932 = vsel %vm868, %v931, %v930
      %v933 = vrot.slane %v915, 4
      %v934 = vsel %vm871, %v933, %v932
      %v935 = vrot.slane %v916, 3
      %v936 = vsel %vm874, %v935, %v934
      %v937 = vrot.slane %v917, 2
      %v938 = vsel %vm877, %v937, %v936
      %v939 = vrot.slane %v918, 1
      %v940 = vsel %vm880, %v939, %v938
      %v942 = vsel %vm547, %v940, 0.0
      %943 = vadd.xlane.f32.xlu0 %v942
      %v944 = vpop.xlane.xlu0 %943
      %v945 = vmul.f32 %v944, %v551
      %v946 = vadd.f32 %v945, 1e-05
      %v947 = vrsqrt.pop %v946
      %v949 = vrot.slane %v947, 1
      %v950 = vrot.slane %v947, 2
      %v951 = vrot.slane %v947, 3
      %v952 = vrot.slane %v947, 4
      %v953 = vrot.slane %v947, 5
      %v954 = vrot.slane %v947, 6
      %v955 = vrot.slane %v947, 7
      %v964 = vmul.f32 %v903, %v947
      %v965 = vmul.f32 %v904, %v949
      %v966 = vmul.f32 %v905, %v950
      %v967 = vmul.f32 %v906, %v951
      %v968 = vmul.f32 %v907, %v952
      %v969 = vmul.f32 %v908, %v953
      %v970 = vmul.f32 %v909, %v954
      %v971 = vmul.f32 %v910, %v955
      %v973 = vlaneseq
      %v974 = vshrl.u32 %v973, 7
      %v975 = vsub.s32 0, %v974
      %v976 = vrot.slane %v851, %v975
      %v978 = vmul.f32 %v964, %v976
      %v979 = vmul.f32 %v965, %v976
      %v980 = vmul.f32 %v966, %v976
      %v981 = vmul.f32 %v967, %v976
      %v982 = vmul.f32 %v968, %v976
      %v983 = vmul.f32 %v969, %v976
      %v984 = vmul.f32 %v970, %v976
      %v985 = vmul.f32 %v971, %v976
      %v987 = vlaneseq
      %v988 = vshrl.u32 %v987, 7
      %v989 = vsub.s32 0, %v988
      %v990 = vrot.slane %v852, %v989
      %v992 = vadd.f32 %v978, %v990
      %v993 = vadd.f32 %v979, %v990
      %v994 = vadd.f32 %v980, %v990
      %v995 = vadd.f32 %v981, %v990
      %v996 = vadd.f32 %v982, %v990
      %v997 = vadd.f32 %v983, %v990
      %v998 = vadd.f32 %v984, %v990
      %v999 = vadd.f32 %v985, %v990
      %v1008 = vrot.slane %v844, 7
      %v1009 = vsel %vm862, %v1008, %v843
      %v1010 = vrot.slane %v845, 6
      %v1011 = vsel %vm865, %v1010, %v1009
      %v1012 = vrot.slane %v846, 5
      %v1013 = vsel %vm868, %v1012, %v1011
      %v1014 = vrot.slane %v847, 4
      %v1015 = vsel %vm871, %v1014, %v1013
      %v1016 = vrot.slane %v848, 3
      %v1017 = vsel %vm874, %v1016, %v1015
      %v1018 = vrot.slane %v849, 2
      %v1019 = vsel %vm877, %v1018, %v1017
      %v1020 = vrot.slane %v850, 1
      %v1021 = vsel %vm880, %v1020, %v1019
      %v1023 = vsel %vm547, %v1021, 0.0
      %1024 = vadd.xlane.f32.xlu0 %v1023
      %v1025 = vpop.xlane.xlu0 %1024
      %v1026 = vmul.f32 %v1025, %v551
      %v1028 = vrot.slane %v1026, 1
      %v1029 = vrot.slane %v1026, 2
      %v1030 = vrot.slane %v1026, 3
      %v1031 = vrot.slane %v1026, 4
      %v1032 = vrot.slane %v1026, 5
      %v1033 = vrot.slane %v1026, 6
      %v1034 = vrot.slane %v1026, 7
      %v1043 = vsub.f32 %v843, %v1026
      %v1044 = vsub.f32 %v844, %v1028
      %v1045 = vsub.f32 %v845, %v1029
      %v1046 = vsub.f32 %v846, %v1030
      %v1047 = vsub.f32 %v847, %v1031
      %v1048 = vsub.f32 %v848, %v1032
      %v1049 = vsub.f32 %v849, %v1033
      %v1050 = vsub.f32 %v850, %v1034
      %v1051 = vmul.f32 %v1043, %v1043
      %v1052 = vmul.f32 %v1044, %v1044
      %v1053 = vmul.f32 %v1045, %v1045
      %v1054 = vmul.f32 %v1046, %v1046
      %v1055 = vmul.f32 %v1047, %v1047
      %v1056 = vmul.f32 %v1048, %v1048
      %v1057 = vmul.f32 %v1049, %v1049
      %v1058 = vmul.f32 %v1050, %v1050
      %v1067 = vrot.slane %v1052, 7
      %v1068 = vsel %vm862, %v1067, %v1051
      %v1069 = vrot.slane %v1053, 6
      %v1070 = vsel %vm865, %v1069, %v1068
      %v1071 = vrot.slane %v1054, 5
      %v1072 = vsel %vm868, %v1071, %v1070
      %v1073 = vrot.slane %v1055, 4
      %v1074 = vsel %vm871, %v1073, %v1072
      %v1075 = vrot.slane %v1056, 3
      %v1076 = vsel %vm874, %v1075, %v1074
      %v1077 = vrot.slane %v1057, 2
      %v1078 = vsel %vm877, %v1077, %v1076
      %v1079 = vrot.slane %v1058, 1
      %v1080 = vsel %vm880, %v1079, %v1078
      %v1082 = vsel %vm547, %v1080, 0.0
      %1083 = vadd.xlane.f32.xlu0 %v1082
      %v1084 = vpop.xlane.xlu0 %1083
      %v1085 = vmul.f32 %v1084, %v551
      %v1086 = vadd.f32 %v1085, 1e-05
      %v1087 = vrsqrt.pop %v1086
      %v1089 = vrot.slane %v1087, 1
      %v1090 = vrot.slane %v1087, 2
      %v1091 = vrot.slane %v1087, 3
      %v1092 = vrot.slane %v1087, 4
      %v1093 = vrot.slane %v1087, 5
      %v1094 = vrot.slane %v1087, 6
      %v1095 = vrot.slane %v1087, 7
      %v1104 = vmul.f32 %v1043, %v1087
      %v1105 = vmul.f32 %v1044, %v1089
      %v1106 = vmul.f32 %v1045, %v1090
      %v1107 = vmul.f32 %v1046, %v1091
      %v1108 = vmul.f32 %v1047, %v1092
      %v1109 = vmul.f32 %v1048, %v1093
      %v1110 = vmul.f32 %v1049, %v1094
      %v1111 = vmul.f32 %v1050, %v1095
      %v1112 = vmul.f32 %v1104, %v976
      %v1113 = vmul.f32 %v1105, %v976
      %v1114 = vmul.f32 %v1106, %v976
      %v1115 = vmul.f32 %v1107, %v976
      %v1116 = vmul.f32 %v1108, %v976
      %v1117 = vmul.f32 %v1109, %v976
      %v1118 = vmul.f32 %v1110, %v976
      %v1119 = vmul.f32 %v1111, %v976
      %v1120 = vadd.f32 %v1112, %v990
      %v1121 = vadd.f32 %v1113, %v990
      %v1122 = vadd.f32 %v1114, %v990
      %v1123 = vadd.f32 %v1115, %v990
      %v1124 = vadd.f32 %v1116, %v990
      %v1125 = vadd.f32 %v1117, %v990
      %v1126 = vadd.f32 %v1118, %v990
      %v1127 = vadd.f32 %v1119, %v990
      %v1128 = vlaneseq
      %v1129 = vshrl.u32 %v1128, 7
      %v1130 = vsub.s32 0, %v1129
      %v1131 = vrot.slane %v992, %v1130
      %v1132 = vlaneseq
      %v1133 = vshrl.u32 %v1132, 7
      %v1134 = vsub.s32 0, %v1133
      %v1135 = vrot.slane %v993, %v1134
      %v1136 = vlaneseq
      %v1137 = vshrl.u32 %v1136, 7
      %v1138 = vsub.s32 0, %v1137
      %v1139 = vrot.slane %v994, %v1138
      %v1140 = vlaneseq
      %v1141 = vshrl.u32 %v1140, 7
      %v1142 = vsub.s32 0, %v1141
      %v1143 = vrot.slane %v995, %v1142
      %v1144 = vlaneseq
      %v1145 = vshrl.u32 %v1144, 7
      %v1146 = vsub.s32 0, %v1145
      %v1147 = vrot.slane %v996, %v1146
      %v1148 = vlaneseq
      %v1149 = vshrl.u32 %v1148, 7
      %v1150 = vsub.s32 0, %v1149
      %v1151 = vrot.slane %v997, %v1150
      %v1152 = vlaneseq
      %v1153 = vshrl.u32 %v1152, 7
      %v1154 = vsub.s32 0, %v1153
      %v1155 = vrot.slane %v998, %v1154
      %v1156 = vlaneseq
      %v1157 = vshrl.u32 %v1156, 7
      %v1158 = vsub.s32 0, %v1157
      %v1159 = vrot.slane %v999, %v1158
      %v1160 = vld [vmem:[%s9] sm:$0xff]
      %v1169 = vrot.slane %v1121, 7
      %v1170 = vsel %vm862, %v1169, %v1120
      %v1171 = vrot.slane %v1122, 6
      %v1172 = vsel %vm865, %v1171, %v1170
      %v1173 = vrot.slane %v1123, 5
      %v1174 = vsel %vm868, %v1173, %v1172
      %v1175 = vrot.slane %v1124, 4
      %v1176 = vsel %vm871, %v1175, %v1174
      %v1177 = vrot.slane %v1125, 3
      %v1178 = vsel %vm874, %v1177, %v1176
      %v1179 = vrot.slane %v1126, 2
      %v1180 = vsel %vm877, %v1179, %v1178
      %v1181 = vrot.slane %v1127, 1
      %v1182 = vsel %vm880, %v1181, %v1180
      %v1183 = vsel %vm547, %v1182, 0
      %1185 = vmatprep.subr.mxu0 0.0
      %1186 = vmatpush1.msra.mxu0 0.0
      %1187 = vmatprep.subr.mxu0 0.0
      %1188 = vmatpush1.msra.mxu0 0.0
      %1189 = vmatprep.subr.mxu0 0.0
      %1190 = vmatpush1.msra.mxu0 0.0
      %1191 = vmatprep.subr.mxu0 0.0
      %1192 = vmatpush1.msra.mxu0 0.0
      %1193 = vmatprep.subr.mxu0 0.0
      %1194 = vmatpush1.msra.mxu0 0.0
      %1195 = vmatprep.subr.mxu0 0.0
      %1196 = vmatpush1.msra.mxu0 0.0
      %1197 = vmatprep.subr.mxu0 0.0
      %1198 = vmatpush1.msra.mxu0 0.0
      %1199 = vmatprep.subr.mxu0 0.0
      %1200 = vmatpush1.msra.mxu0 0.0
      %1201 = vmatprep.subr.mxu0 0.0
      %1202 = vmatpush1.msra.mxu0 0.0
      %1203 = vmatprep.subr.mxu0 0.0
      %1204 = vmatpush1.msra.mxu0 0.0
      %1205 = vmatprep.subr.mxu0 0.0
      %1206 = vmatpush1.msra.mxu0 0.0
      %1207 = vmatprep.subr.mxu0 0.0
      %1208 = vmatpush1.msra.mxu0 0.0
      %1209 = vmatprep.subr.mxu0 0.0
      %1210 = vmatpush1.msra.mxu0 0.0
      %1211 = vmatprep.subr.mxu0 0.0
      %1212 = vmatpush1.msra.mxu0 0.0
      %1213 = vmatprep.subr.mxu0 0.0
      %1214 = vmatpush1.msra.mxu0 0.0
      %1215 = vmatprep.subr.mxu0 0.0
      %1216 = vmatpush1.msra.mxu0 %v1160
      %1217 = vmatprep.subr.mxu0 0.0
      %1218 = vmatpush2.msra.mxu0 0.0
      %1219 = vmatprep.subr.mxu0 0.0
      %1220 = vmatpush2.msra.mxu0 0.0
      %1221 = vmatprep.subr.mxu0 0.0
      %1222 = vmatpush2.msra.mxu0 0.0
      %1223 = vmatprep.subr.mxu0 0.0
      %1224 = vmatpush2.msra.mxu0 0.0
      %1225 = vmatprep.subr.mxu0 0.0
      %1226 = vmatpush2.msra.mxu0 0.0
      %1227 = vmatprep.subr.mxu0 0.0
      %1228 = vmatpush2.msra.mxu0 0.0
      %1229 = vmatprep.subr.mxu0 0.0
      %1230 = vmatpush2.msra.mxu0 0.0
      %1231 = vmatprep.subr.mxu0 0.0
      %1232 = vmatpush2.msra.mxu0 0.0
      %1233 = vmatprep.subr.mxu0 0.0
      %1234 = vmatpush2.msra.mxu0 0.0
      %1235 = vmatprep.subr.mxu0 0.0
      %1236 = vmatpush2.msra.mxu0 0.0
      %1237 = vmatprep.subr.mxu0 0.0
      %1238 = vmatpush2.msra.mxu0 0.0
      %1239 = vmatprep.subr.mxu0 0.0
      %1240 = vmatpush2.msra.mxu0 0.0
      %1241 = vmatprep.subr.mxu0 0.0
      %1242 = vmatpush2.msra.mxu0 0.0
      %1243 = vmatprep.subr.mxu0 0.0
      %1244 = vmatpush2.msra.mxu0 0.0
      %1245 = vmatprep.subr.mxu0 0.0
      %1246 = vmatpush2.msra.mxu0 0.0
      %1247 = vmatprep.subr.mxu0 0.0
      %1248 = vmatpush2.msra.mxu0 0.0
      %1249 = vmatprep.mubr.f32.mxu0 0.0
      %1250 = vmatmul.mubr.f32.gmra.mxu0 %v1183
      %v1251 = vpop.f32.mrf.mxu0
      %v1252 = vadd.f32 0.0, %v1251
      %v1253 = vpop.f32.mrf.mxu0
      %1254 = vmatprep.mubr.f32.mxu0 0.0
      %1255 = vmatmul.mubr.f32.gmra.mxu0 %v1183
      %v1256 = vpop.f32.mrf.mxu0
      %v1257 = vadd.f32 0.0, %v1256
      %v1258 = vpop.f32.mrf.mxu0
      %1259 = vmatprep.mubr.f32.mxu0 0.0
      %1260 = vmatmul.mubr.f32.gmra.mxu0 %v1183
      %v1261 = vpop.f32.mrf.mxu0
      %v1262 = vadd.f32 0.0, %v1261
      %v1263 = vpop.f32.mrf.mxu0
      %1264 = vmatprep.mubr.f32.mxu0 0.0
      %1265 = vmatmul.mubr.f32.gmra.mxu0 %v1183
      %v1266 = vpop.f32.mrf.mxu0
      %v1267 = vadd.f32 0.0, %v1266
      %v1268 = vpop.f32.mrf.mxu0
      %1269 = vmatprep.mubr.f32.mxu0 0.0
      %1270 = vmatmul.mubr.f32.gmra.mxu0 %v1183
      %v1271 = vpop.f32.mrf.mxu0
      %v1272 = vadd.f32 0.0, %v1271
      %v1273 = vpop.f32.mrf.mxu0
      %1274 = vmatprep.mubr.f32.mxu0 0.0
      %1275 = vmatmul.mubr.f32.gmra.mxu0 %v1183
      %v1276 = vpop.f32.mrf.mxu0
      %v1277 = vadd.f32 0.0, %v1276
      %v1278 = vpop.f32.mrf.mxu0
      %1279 = vmatprep.mubr.f32.mxu0 0.0
      %1280 = vmatmul.mubr.f32.gmra.mxu0 %v1183
      %v1281 = vpop.f32.mrf.mxu0
      %v1282 = vadd.f32 0.0, %v1281
      %v1283 = vpop.f32.mrf.mxu0
      %1284 = vmatprep.mubr.f32.mxu0 0.0
      %1285 = vmatmul.mubr.f32.gmra.mxu0 %v1183
      %v1286 = vpop.f32.mrf.mxu0
      %v1287 = vadd.f32 0.0, %v1286
      %v1288 = vpop.f32.mrf.mxu0
      %1289 = vdwg.mxu0
      %1291 = vset.pattern.permute.xlu0 0
      %1292 = vperm.xlu0 %1291, %v1131
      %v1293 = vpop.permute.xlu0 %1292
      %1296 = vset.pattern.permute.xlu0 0
      %1297 = vperm.xlu0 %1296, %v1135
      %v1298 = vpop.permute.xlu0 %1297
      %1301 = vset.pattern.permute.xlu0 0
      %1302 = vperm.xlu0 %1301, %v1139
      %v1303 = vpop.permute.xlu0 %1302
      %1306 = vset.pattern.permute.xlu0 0
      %1307 = vperm.xlu0 %1306, %v1143
      %v1308 = vpop.permute.xlu0 %1307
      %1311 = vset.pattern.permute.xlu0 0
      %1312 = vperm.xlu0 %1311, %v1147
      %v1313 = vpop.permute.xlu0 %1312
      %1316 = vset.pattern.permute.xlu0 0
      %1317 = vperm.xlu0 %1316, %v1151
      %v1318 = vpop.permute.xlu0 %1317
      %1321 = vset.pattern.permute.xlu0 0
      %1322 = vperm.xlu0 %1321, %v1155
      %v1323 = vpop.permute.xlu0 %1322
      %1326 = vset.pattern.permute.xlu0 0
      %1327 = vperm.xlu0 %1326, %v1159
      %v1328 = vpop.permute.xlu0 %1327
      %v1330 = vmul.f32 %v1293, %v1252
      %v1331 = vmul.f32 %v1298, %v1257
      %v1332 = vmul.f32 %v1303, %v1262
      %v1333 = vmul.f32 %v1308, %v1267
      %v1334 = vmul.f32 %v1313, %v1272
      %v1335 = vmul.f32 %v1318, %v1277
      %v1336 = vmul.f32 %v1323, %v1282
      %v1337 = vmul.f32 %v1328, %v1287
      %v1338 = vadd.f32 %v1330, 0.0
      %v1339 = vadd.f32 %v1331, 0.0
      %v1340 = vadd.f32 %v1332, 0.0
      %v1341 = vadd.f32 %v1333, 0.0
      %v1342 = vadd.f32 %v1334, 0.0
      %v1343 = vadd.f32 %v1335, 0.0
      %v1344 = vadd.f32 %v1336, 0.0
      %v1345 = vadd.f32 %v1337, 0.0
      %s1346 = scalar_lea.vmem %s9, 8
      %v1347 = vld [vmem:[%s1346] sm:$0xff]
      %1348 = vmatprep.subr.mxu0 0.0
      %1349 = vmatpush1.msra.mxu0 0.0
      %1350 = vmatprep.subr.mxu0 0.0
      %1351 = vmatpush1.msra.mxu0 0.0
      %1352 = vmatprep.subr.mxu0 0.0
      %1353 = vmatpush1.msra.mxu0 0.0
      %1354 = vmatprep.subr.mxu0 0.0
      %1355 = vmatpush1.msra.mxu0 0.0
      %1356 = vmatprep.subr.mxu0 0.0
      %1357 = vmatpush1.msra.mxu0 0.0
      %1358 = vmatprep.subr.mxu0 0.0
      %1359 = vmatpush1.msra.mxu0 0.0
      %1360 = vmatprep.subr.mxu0 0.0
      %1361 = vmatpush1.msra.mxu0 0.0
      %1362 = vmatprep.subr.mxu0 0.0
      %1363 = vmatpush1.msra.mxu0 0.0
      %1364 = vmatprep.subr.mxu0 0.0
      %1365 = vmatpush1.msra.mxu0 0.0
      %1366 = vmatprep.subr.mxu0 0.0
      %1367 = vmatpush1.msra.mxu0 0.0
      %1368 = vmatprep.subr.mxu0 0.0
      %1369 = vmatpush1.msra.mxu0 0.0
      %1370 = vmatprep.subr.mxu0 0.0
      %1371 = vmatpush1.msra.mxu0 0.0
      %1372 = vmatprep.subr.mxu0 0.0
      %1373 = vmatpush1.msra.mxu0 0.0
      %1374 = vmatprep.subr.mxu0 0.0
      %1375 = vmatpush1.msra.mxu0 0.0
      %1376 = vmatprep.subr.mxu0 0.0
      %1377 = vmatpush1.msra.mxu0 0.0
      %1378 = vmatprep.subr.mxu0 0.0
      %1379 = vmatpush1.msra.mxu0 %v1347
      %1380 = vmatprep.subr.mxu0 0.0
      %1381 = vmatpush2.msra.mxu0 0.0
      %1382 = vmatprep.subr.mxu0 0.0
      %1383 = vmatpush2.msra.mxu0 0.0
      %1384 = vmatprep.subr.mxu0 0.0
      %1385 = vmatpush2.msra.mxu0 0.0
      %1386 = vmatprep.subr.mxu0 0.0
      %1387 = vmatpush2.msra.mxu0 0.0
      %1388 = vmatprep.subr.mxu0 0.0
      %1389 = vmatpush2.msra.mxu0 0.0
      %1390 = vmatprep.subr.mxu0 0.0
      %1391 = vmatpush2.msra.mxu0 0.0
      %1392 = vmatprep.subr.mxu0 0.0
      %1393 = vmatpush2.msra.mxu0 0.0
      %1394 = vmatprep.subr.mxu0 0.0
      %1395 = vmatpush2.msra.mxu0 0.0
      %1396 = vmatprep.subr.mxu0 0.0
      %1397 = vmatpush2.msra.mxu0 0.0
      %1398 = vmatprep.subr.mxu0 0.0
      %1399 = vmatpush2.msra.mxu0 0.0
      %1400 = vmatprep.subr.mxu0 0.0
      %1401 = vmatpush2.msra.mxu0 0.0
      %1402 = vmatprep.subr.mxu0 0.0
      %1403 = vmatpush2.msra.mxu0 0.0
      %1404 = vmatprep.subr.mxu0 0.0
      %1405 = vmatpush2.msra.mxu0 0.0
      %1406 = vmatprep.subr.mxu0 0.0
      %1407 = vmatpush2.msra.mxu0 0.0
      %1408 = vmatprep.subr.mxu0 0.0
      %1409 = vmatpush2.msra.mxu0 0.0
      %1410 = vmatprep.subr.mxu0 0.0
      %1411 = vmatpush2.msra.mxu0 0.0
      %1412 = vmatprep.mubr.f32.mxu0 0.0
      %1413 = vmatmul.mubr.f32.gmra.mxu0 %v1183
      %v1414 = vpop.f32.mrf.mxu0
      %v1415 = vadd.f32 0.0, %v1414
      %v1416 = vpop.f32.mrf.mxu0
      %1417 = vmatprep.mubr.f32.mxu0 0.0
      %1418 = vmatmul.mubr.f32.gmra.mxu0 %v1183
      %v1419 = vpop.f32.mrf.mxu0
      %v1420 = vadd.f32 0.0, %v1419
      %v1421 = vpop.f32.mrf.mxu0
      %1422 = vmatprep.mubr.f32.mxu0 0.0
      %1423 = vmatmul.mubr.f32.gmra.mxu0 %v1183
      %v1424 = vpop.f32.mrf.mxu0
      %v1425 = vadd.f32 0.0, %v1424
      %v1426 = vpop.f32.mrf.mxu0
      %1427 = vmatprep.mubr.f32.mxu0 0.0
      %1428 = vmatmul.mubr.f32.gmra.mxu0 %v1183
      %v1429 = vpop.f32.mrf.mxu0
      %v1430 = vadd.f32 0.0, %v1429
      %v1431 = vpop.f32.mrf.mxu0
      %1432 = vmatprep.mubr.f32.mxu0 0.0
      %1433 = vmatmul.mubr.f32.gmra.mxu0 %v1183
      %v1434 = vpop.f32.mrf.mxu0
      %v1435 = vadd.f32 0.0, %v1434
      %v1436 = vpop.f32.mrf.mxu0
      %1437 = vmatprep.mubr.f32.mxu0 0.0
      %1438 = vmatmul.mubr.f32.gmra.mxu0 %v1183
      %v1439 = vpop.f32.mrf.mxu0
      %v1440 = vadd.f32 0.0, %v1439
      %v1441 = vpop.f32.mrf.mxu0
      %1442 = vmatprep.mubr.f32.mxu0 0.0
      %1443 = vmatmul.mubr.f32.gmra.mxu0 %v1183
      %v1444 = vpop.f32.mrf.mxu0
      %v1445 = vadd.f32 0.0, %v1444
      %v1446 = vpop.f32.mrf.mxu0
      %1447 = vmatprep.mubr.f32.mxu0 0.0
      %1448 = vmatmul.mubr.f32.gmra.mxu0 %v1183
      %v1449 = vpop.f32.mrf.mxu0
      %v1450 = vadd.f32 0.0, %v1449
      %v1451 = vpop.f32.mrf.mxu0
      %1452 = vdwg.mxu0
      %1453 = vset.pattern.permute.xlu0 1
      %1454 = vperm.xlu0 %1453, %v1131
      %v1455 = vpop.permute.xlu0 %1454
      %1457 = vset.pattern.permute.xlu0 1
      %1458 = vperm.xlu0 %1457, %v1135
      %v1459 = vpop.permute.xlu0 %1458
      %1461 = vset.pattern.permute.xlu0 1
      %1462 = vperm.xlu0 %1461, %v1139
      %v1463 = vpop.permute.xlu0 %1462
      %1465 = vset.pattern.permute.xlu0 1
      %1466 = vperm.xlu0 %1465, %v1143
      %v1467 = vpop.permute.xlu0 %1466
      %1469 = vset.pattern.permute.xlu0 1
      %1470 = vperm.xlu0 %1469, %v1147
      %v1471 = vpop.permute.xlu0 %1470
      %1473 = vset.pattern.permute.xlu0 1
      %1474 = vperm.xlu0 %1473, %v1151
      %v1475 = vpop.permute.xlu0 %1474
      %1477 = vset.pattern.permute.xlu0 1
      %1478 = vperm.xlu0 %1477, %v1155
      %v1479 = vpop.permute.xlu0 %1478
      %1481 = vset.pattern.permute.xlu0 1
      %1482 = vperm.xlu0 %1481, %v1159
      %v1483 = vpop.permute.xlu0 %1482
      %v1485 = vmul.f32 %v1455, %v1415
      %v1486 = vmul.f32 %v1459, %v1420
      %v1487 = vmul.f32 %v1463, %v1425
      %v1488 = vmul.f32 %v1467, %v1430
      %v1489 = vmul.f32 %v1471, %v1435
      %v1490 = vmul.f32 %v1475, %v1440
      %v1491 = vmul.f32 %v1479, %v1445
      %v1492 = vmul.f32 %v1483, %v1450
      %v1493 = vadd.f32 %v1338, %v1485
      %v1494 = vadd.f32 %v1339, %v1486
      %v1495 = vadd.f32 %v1340, %v1487
      %v1496 = vadd.f32 %v1341, %v1488
      %v1497 = vadd.f32 %v1342, %v1489
      %v1498 = vadd.f32 %v1343, %v1490
      %v1499 = vadd.f32 %v1344, %v1491
      %v1500 = vadd.f32 %v1345, %v1492
      %s1501 = scalar_lea.vmem %s9, 16
      %v1502 = vld [vmem:[%s1501] sm:$0xff]
      %1503 = vmatprep.subr.mxu0 0.0
      %1504 = vmatpush1.msra.mxu0 0.0
      %1505 = vmatprep.subr.mxu0 0.0
      %1506 = vmatpush1.msra.mxu0 0.0
      %1507 = vmatprep.subr.mxu0 0.0
      %1508 = vmatpush1.msra.mxu0 0.0
      %1509 = vmatprep.subr.mxu0 0.0
      %1510 = vmatpush1.msra.mxu0 0.0
      %1511 = vmatprep.subr.mxu0 0.0
      %1512 = vmatpush1.msra.mxu0 0.0
      %1513 = vmatprep.subr.mxu0 0.0
      %1514 = vmatpush1.msra.mxu0 0.0
      %1515 = vmatprep.subr.mxu0 0.0
      %1516 = vmatpush1.msra.mxu0 0.0
      %1517 = vmatprep.subr.mxu0 0.0
      %1518 = vmatpush1.msra.mxu0 0.0
      %1519 = vmatprep.subr.mxu0 0.0
      %1520 = vmatpush1.msra.mxu0 0.0
      %1521 = vmatprep.subr.mxu0 0.0
      %1522 = vmatpush1.msra.mxu0 0.0
      %1523 = vmatprep.subr.mxu0 0.0
      %1524 = vmatpush1.msra.mxu0 0.0
      %1525 = vmatprep.subr.mxu0 0.0
      %1526 = vmatpush1.msra.mxu0 0.0
      %1527 = vmatprep.subr.mxu0 0.0
      %1528 = vmatpush1.msra.mxu0 0.0
      %1529 = vmatprep.subr.mxu0 0.0
      %1530 = vmatpush1.msra.mxu0 0.0
      %1531 = vmatprep.subr.mxu0 0.0
      %1532 = vmatpush1.msra.mxu0 0.0
      %1533 = vmatprep.subr.mxu0 0.0
      %1534 = vmatpush1.msra.mxu0 %v1502
      %1535 = vmatprep.subr.mxu0 0.0
      %1536 = vmatpush2.msra.mxu0 0.0
      %1537 = vmatprep.subr.mxu0 0.0
      %1538 = vmatpush2.msra.mxu0 0.0
      %1539 = vmatprep.subr.mxu0 0.0
      %1540 = vmatpush2.msra.mxu0 0.0
      %1541 = vmatprep.subr.mxu0 0.0
      %1542 = vmatpush2.msra.mxu0 0.0
      %1543 = vmatprep.subr.mxu0 0.0
      %1544 = vmatpush2.msra.mxu0 0.0
      %1545 = vmatprep.subr.mxu0 0.0
      %1546 = vmatpush2.msra.mxu0 0.0
      %1547 = vmatprep.subr.mxu0 0.0
      %1548 = vmatpush2.msra.mxu0 0.0
      %1549 = vmatprep.subr.mxu0 0.0
      %1550 = vmatpush2.msra.mxu0 0.0
      %1551 = vmatprep.subr.mxu0 0.0
      %1552 = vmatpush2.msra.mxu0 0.0
      %1553 = vmatprep.subr.mxu0 0.0
      %1554 = vmatpush2.msra.mxu0 0.0
      %1555 = vmatprep.subr.mxu0 0.0
      %1556 = vmatpush2.msra.mxu0 0.0
      %1557 = vmatprep.subr.mxu0 0.0
      %1558 = vmatpush2.msra.mxu0 0.0
      %1559 = vmatprep.subr.mxu0 0.0
      %1560 = vmatpush2.msra.mxu0 0.0
      %1561 = vmatprep.subr.mxu0 0.0
      %1562 = vmatpush2.msra.mxu0 0.0
      %1563 = vmatprep.subr.mxu0 0.0
      %1564 = vmatpush2.msra.mxu0 0.0
      %1565 = vmatprep.subr.mxu0 0.0
      %1566 = vmatpush2.msra.mxu0 0.0
      %1567 = vmatprep.mubr.f32.mxu0 0.0
      %1568 = vmatmul.mubr.f32.gmra.mxu0 %v1183
      %v1569 = vpop.f32.mrf.mxu0
      %v1570 = vadd.f32 0.0, %v1569
      %v1571 = vpop.f32.mrf.mxu0
      %1572 = vmatprep.mubr.f32.mxu0 0.0
      %1573 = vmatmul.mubr.f32.gmra.mxu0 %v1183
      %v1574 = vpop.f32.mrf.mxu0
      %v1575 = vadd.f32 0.0, %v1574
      %v1576 = vpop.f32.mrf.mxu0
      %1577 = vmatprep.mubr.f32.mxu0 0.0
      %1578 = vmatmul.mubr.f32.gmra.mxu0 %v1183
      %v1579 = vpop.f32.mrf.mxu0
      %v1580 = vadd.f32 0.0, %v1579
      %v1581 = vpop.f32.mrf.mxu0
      %1582 = vmatprep.mubr.f32.mxu0 0.0
      %1583 = vmatmul.mubr.f32.gmra.mxu0 %v1183
      %v1584 = vpop.f32.mrf.mxu0
      %v1585 = vadd.f32 0.0, %v1584
      %v1586 = vpop.f32.mrf.mxu0
      %1587 = vmatprep.mubr.f32.mxu0 0.0
      %1588 = vmatmul.mubr.f32.gmra.mxu0 %v1183
      %v1589 = vpop.f32.mrf.mxu0
      %v1590 = vadd.f32 0.0, %v1589
      %v1591 = vpop.f32.mrf.mxu0
      %1592 = vmatprep.mubr.f32.mxu0 0.0
      %1593 = vmatmul.mubr.f32.gmra.mxu0 %v1183
      %v1594 = vpop.f32.mrf.mxu0
      %v1595 = vadd.f32 0.0, %v1594
      %v1596 = vpop.f32.mrf.mxu0
      %1597 = vmatprep.mubr.f32.mxu0 0.0
      %1598 = vmatmul.mubr.f32.gmra.mxu0 %v1183
      %v1599 = vpop.f32.mrf.mxu0
      %v1600 = vadd.f32 0.0, %v1599
      %v1601 = vpop.f32.mrf.mxu0
      %1602 = vmatprep.mubr.f32.mxu0 0.0
      %1603 = vmatmul.mubr.f32.gmra.mxu0 %v1183
      %v1604 = vpop.f32.mrf.mxu0
      %v1605 = vadd.f32 0.0, %v1604
      %v1606 = vpop.f32.mrf.mxu0
      %1607 = vdwg.mxu0
      %1608 = vset.pattern.permute.xlu0 2
      %1609 = vperm.xlu0 %1608, %v1131
      %v1610 = vpop.permute.xlu0 %1609
      %1612 = vset.pattern.permute.xlu0 2
      %1613 = vperm.xlu0 %1612, %v1135
      %v1614 = vpop.permute.xlu0 %1613
      %1616 = vset.pattern.permute.xlu0 2
      %1617 = vperm.xlu0 %1616, %v1139
      %v1618 = vpop.permute.xlu0 %1617
      %1620 = vset.pattern.permute.xlu0 2
      %1621 = vperm.xlu0 %1620, %v1143
      %v1622 = vpop.permute.xlu0 %1621
      %1624 = vset.pattern.permute.xlu0 2
      %1625 = vperm.xlu0 %1624, %v1147
      %v1626 = vpop.permute.xlu0 %1625
      %1628 = vset.pattern.permute.xlu0 2
      %1629 = vperm.xlu0 %1628, %v1151
      %v1630 = vpop.permute.xlu0 %1629
      %1632 = vset.pattern.permute.xlu0 2
      %1633 = vperm.xlu0 %1632, %v1155
      %v1634 = vpop.permute.xlu0 %1633
      %1636 = vset.pattern.permute.xlu0 2
      %1637 = vperm.xlu0 %1636, %v1159
      %v1638 = vpop.permute.xlu0 %1637
      %v1640 = vmul.f32 %v1610, %v1570
      %v1641 = vmul.f32 %v1614, %v1575
      %v1642 = vmul.f32 %v1618, %v1580
      %v1643 = vmul.f32 %v1622, %v1585
      %v1644 = vmul.f32 %v1626, %v1590
      %v1645 = vmul.f32 %v1630, %v1595
      %v1646 = vmul.f32 %v1634, %v1600
      %v1647 = vmul.f32 %v1638, %v1605
      %v1648 = vadd.f32 %v1493, %v1640
      %v1649 = vadd.f32 %v1494, %v1641
      %v1650 = vadd.f32 %v1495, %v1642
      %v1651 = vadd.f32 %v1496, %v1643
      %v1652 = vadd.f32 %v1497, %v1644
      %v1653 = vadd.f32 %v1498, %v1645
      %v1654 = vadd.f32 %v1499, %v1646
      %v1655 = vadd.f32 %v1500, %v1647
      %s1656 = scalar_lea.vmem %s9, 24
      %v1657 = vld [vmem:[%s1656] sm:$0xff]
      %1658 = vmatprep.subr.mxu0 0.0
      %1659 = vmatpush1.msra.mxu0 0.0
      %1660 = vmatprep.subr.mxu0 0.0
      %1661 = vmatpush1.msra.mxu0 0.0
      %1662 = vmatprep.subr.mxu0 0.0
      %1663 = vmatpush1.msra.mxu0 0.0
      %1664 = vmatprep.subr.mxu0 0.0
      %1665 = vmatpush1.msra.mxu0 0.0
      %1666 = vmatprep.subr.mxu0 0.0
      %1667 = vmatpush1.msra.mxu0 0.0
      %1668 = vmatprep.subr.mxu0 0.0
      %1669 = vmatpush1.msra.mxu0 0.0
      %1670 = vmatprep.subr.mxu0 0.0
      %1671 = vmatpush1.msra.mxu0 0.0
      %1672 = vmatprep.subr.mxu0 0.0
      %1673 = vmatpush1.msra.mxu0 0.0
      %1674 = vmatprep.subr.mxu0 0.0
      %1675 = vmatpush1.msra.mxu0 0.0
      %1676 = vmatprep.subr.mxu0 0.0
      %1677 = vmatpush1.msra.mxu0 0.0
      %1678 = vmatprep.subr.mxu0 0.0
      %1679 = vmatpush1.msra.mxu0 0.0
      %1680 = vmatprep.subr.mxu0 0.0
      %1681 = vmatpush1.msra.mxu0 0.0
      %1682 = vmatprep.subr.mxu0 0.0
      %1683 = vmatpush1.msra.mxu0 0.0
      %1684 = vmatprep.subr.mxu0 0.0
      %1685 = vmatpush1.msra.mxu0 0.0
      %1686 = vmatprep.subr.mxu0 0.0
      %1687 = vmatpush1.msra.mxu0 0.0
      %1688 = vmatprep.subr.mxu0 0.0
      %1689 = vmatpush1.msra.mxu0 %v1657
      %1690 = vmatprep.subr.mxu0 0.0
      %1691 = vmatpush2.msra.mxu0 0.0
      %1692 = vmatprep.subr.mxu0 0.0
      %1693 = vmatpush2.msra.mxu0 0.0
      %1694 = vmatprep.subr.mxu0 0.0
      %1695 = vmatpush2.msra.mxu0 0.0
      %1696 = vmatprep.subr.mxu0 0.0
      %1697 = vmatpush2.msra.mxu0 0.0
      %1698 = vmatprep.subr.mxu0 0.0
      %1699 = vmatpush2.msra.mxu0 0.0
      %1700 = vmatprep.subr.mxu0 0.0
      %1701 = vmatpush2.msra.mxu0 0.0
      %1702 = vmatprep.subr.mxu0 0.0
      %1703 = vmatpush2.msra.mxu0 0.0
      %1704 = vmatprep.subr.mxu0 0.0
      %1705 = vmatpush2.msra.mxu0 0.0
      %1706 = vmatprep.subr.mxu0 0.0
      %1707 = vmatpush2.msra.mxu0 0.0
      %1708 = vmatprep.subr.mxu0 0.0
      %1709 = vmatpush2.msra.mxu0 0.0
      %1710 = vmatprep.subr.mxu0 0.0
      %1711 = vmatpush2.msra.mxu0 0.0
      %1712 = vmatprep.subr.mxu0 0.0
      %1713 = vmatpush2.msra.mxu0 0.0
      %1714 = vmatprep.subr.mxu0 0.0
      %1715 = vmatpush2.msra.mxu0 0.0
      %1716 = vmatprep.subr.mxu0 0.0
      %1717 = vmatpush2.msra.mxu0 0.0
      %1718 = vmatprep.subr.mxu0 0.0
      %1719 = vmatpush2.msra.mxu0 0.0
      %1720 = vmatprep.subr.mxu0 0.0
      %1721 = vmatpush2.msra.mxu0 0.0
      %1722 = vmatprep.mubr.f32.mxu0 0.0
      %1723 = vmatmul.mubr.f32.gmra.mxu0 %v1183
      %v1724 = vpop.f32.mrf.mxu0
      %v1725 = vadd.f32 0.0, %v1724
      %v1726 = vpop.f32.mrf.mxu0
      %1727 = vmatprep.mubr.f32.mxu0 0.0
      %1728 = vmatmul.mubr.f32.gmra.mxu0 %v1183
      %v1729 = vpop.f32.mrf.mxu0
      %v1730 = vadd.f32 0.0, %v1729
      %v1731 = vpop.f32.mrf.mxu0
      %1732 = vmatprep.mubr.f32.mxu0 0.0
      %1733 = vmatmul.mubr.f32.gmra.mxu0 %v1183
      %v1734 = vpop.f32.mrf.mxu0
      %v1735 = vadd.f32 0.0, %v1734
      %v1736 = vpop.f32.mrf.mxu0
      %1737 = vmatprep.mubr.f32.mxu0 0.0
      %1738 = vmatmul.mubr.f32.gmra.mxu0 %v1183
      %v1739 = vpop.f32.mrf.mxu0
      %v1740 = vadd.f32 0.0, %v1739
      %v1741 = vpop.f32.mrf.mxu0
      %1742 = vmatprep.mubr.f32.mxu0 0.0
      %1743 = vmatmul.mubr.f32.gmra.mxu0 %v1183
      %v1744 = vpop.f32.mrf.mxu0
      %v1745 = vadd.f32 0.0, %v1744
      %v1746 = vpop.f32.mrf.mxu0
      %1747 = vmatprep.mubr.f32.mxu0 0.0
      %1748 = vmatmul.mubr.f32.gmra.mxu0 %v1183
      %v1749 = vpop.f32.mrf.mxu0
      %v1750 = vadd.f32 0.0, %v1749
      %v1751 = vpop.f32.mrf.mxu0
      %1752 = vmatprep.mubr.f32.mxu0 0.0
      %1753 = vmatmul.mubr.f32.gmra.mxu0 %v1183
      %v1754 = vpop.f32.mrf.mxu0
      %v1755 = vadd.f32 0.0, %v1754
      %v1756 = vpop.f32.mrf.mxu0
      %1757 = vmatprep.mubr.f32.mxu0 0.0
      %1758 = vmatmul.mubr.f32.gmra.mxu0 %v1183
      %v1759 = vpop.f32.mrf.mxu0
      %v1760 = vadd.f32 0.0, %v1759
      %v1761 = vpop.f32.mrf.mxu0
      %1762 = vdwg.mxu0
      %1763 = vset.pattern.permute.xlu0 3
      %1764 = vperm.xlu0 %1763, %v1131
      %v1765 = vpop.permute.xlu0 %1764
      %1767 = vset.pattern.permute.xlu0 3
      %1768 = vperm.xlu0 %1767, %v1135
      %v1769 = vpop.permute.xlu0 %1768
      %1771 = vset.pattern.permute.xlu0 3
      %1772 = vperm.xlu0 %1771, %v1139
      %v1773 = vpop.permute.xlu0 %1772
      %1775 = vset.pattern.permute.xlu0 3
      %1776 = vperm.xlu0 %1775, %v1143
      %v1777 = vpop.permute.xlu0 %1776
      %1779 = vset.pattern.permute.xlu0 3
      %1780 = vperm.xlu0 %1779, %v1147
      %v1781 = vpop.permute.xlu0 %1780
      %1783 = vset.pattern.permute.xlu0 3
      %1784 = vperm.xlu0 %1783, %v1151
      %v1785 = vpop.permute.xlu0 %1784
      %1787 = vset.pattern.permute.xlu0 3
      %1788 = vperm.xlu0 %1787, %v1155
      %v1789 = vpop.permute.xlu0 %1788
      %1791 = vset.pattern.permute.xlu0 3
      %1792 = vperm.xlu0 %1791, %v1159
      %v1793 = vpop.permute.xlu0 %1792
      %v1795 = vmul.f32 %v1765, %v1725
      %v1796 = vmul.f32 %v1769, %v1730
      %v1797 = vmul.f32 %v1773, %v1735
      %v1798 = vmul.f32 %v1777, %v1740
      %v1799 = vmul.f32 %v1781, %v1745
      %v1800 = vmul.f32 %v1785, %v1750
      %v1801 = vmul.f32 %v1789, %v1755
      %v1802 = vmul.f32 %v1793, %v1760
      %v1803 = vadd.f32 %v1648, %v1795
      %v1804 = vadd.f32 %v1649, %v1796
      %v1805 = vadd.f32 %v1650, %v1797
      %v1806 = vadd.f32 %v1651, %v1798
      %v1807 = vadd.f32 %v1652, %v1799
      %v1808 = vadd.f32 %v1653, %v1800
      %v1809 = vadd.f32 %v1654, %v1801
      %v1810 = vadd.f32 %v1655, %v1802
      %s1811 = scalar_lea.vmem %s9, 32
      %v1812 = vld [vmem:[%s1811] sm:$0xff]
      %1813 = vmatprep.subr.mxu0 0.0
      %1814 = vmatpush1.msra.mxu0 0.0
      %1815 = vmatprep.subr.mxu0 0.0
      %1816 = vmatpush1.msra.mxu0 0.0
      %1817 = vmatprep.subr.mxu0 0.0
      %1818 = vmatpush1.msra.mxu0 0.0
      %1819 = vmatprep.subr.mxu0 0.0
      %1820 = vmatpush1.msra.mxu0 0.0
      %1821 = vmatprep.subr.mxu0 0.0
      %1822 = vmatpush1.msra.mxu0 0.0
      %1823 = vmatprep.subr.mxu0 0.0
      %1824 = vmatpush1.msra.mxu0 0.0
      %1825 = vmatprep.subr.mxu0 0.0
      %1826 = vmatpush1.msra.mxu0 0.0
      %1827 = vmatprep.subr.mxu0 0.0
      %1828 = vmatpush1.msra.mxu0 0.0
      %1829 = vmatprep.subr.mxu0 0.0
      %1830 = vmatpush1.msra.mxu0 0.0
      %1831 = vmatprep.subr.mxu0 0.0
      %1832 = vmatpush1.msra.mxu0 0.0
      %1833 = vmatprep.subr.mxu0 0.0
      %1834 = vmatpush1.msra.mxu0 0.0
      %1835 = vmatprep.subr.mxu0 0.0
      %1836 = vmatpush1.msra.mxu0 0.0
      %1837 = vmatprep.subr.mxu0 0.0
      %1838 = vmatpush1.msra.mxu0 0.0
      %1839 = vmatprep.subr.mxu0 0.0
      %1840 = vmatpush1.msra.mxu0 0.0
      %1841 = vmatprep.subr.mxu0 0.0
      %1842 = vmatpush1.msra.mxu0 0.0
      %1843 = vmatprep.subr.mxu0 0.0
      %1844 = vmatpush1.msra.mxu0 %v1812
      %1845 = vmatprep.subr.mxu0 0.0
      %1846 = vmatpush2.msra.mxu0 0.0
      %1847 = vmatprep.subr.mxu0 0.0
      %1848 = vmatpush2.msra.mxu0 0.0
      %1849 = vmatprep.subr.mxu0 0.0
      %1850 = vmatpush2.msra.mxu0 0.0
      %1851 = vmatprep.subr.mxu0 0.0
      %1852 = vmatpush2.msra.mxu0 0.0
      %1853 = vmatprep.subr.mxu0 0.0
      %1854 = vmatpush2.msra.mxu0 0.0
      %1855 = vmatprep.subr.mxu0 0.0
      %1856 = vmatpush2.msra.mxu0 0.0
      %1857 = vmatprep.subr.mxu0 0.0
      %1858 = vmatpush2.msra.mxu0 0.0
      %1859 = vmatprep.subr.mxu0 0.0
      %1860 = vmatpush2.msra.mxu0 0.0
      %1861 = vmatprep.subr.mxu0 0.0
      %1862 = vmatpush2.msra.mxu0 0.0
      %1863 = vmatprep.subr.mxu0 0.0
      %1864 = vmatpush2.msra.mxu0 0.0
      %1865 = vmatprep.subr.mxu0 0.0
      %1866 = vmatpush2.msra.mxu0 0.0
      %1867 = vmatprep.subr.mxu0 0.0
      %1868 = vmatpush2.msra.mxu0 0.0
      %1869 = vmatprep.subr.mxu0 0.0
      %1870 = vmatpush2.msra.mxu0 0.0
      %1871 = vmatprep.subr.mxu0 0.0
      %1872 = vmatpush2.msra.mxu0 0.0
      %1873 = vmatprep.subr.mxu0 0.0
      %1874 = vmatpush2.msra.mxu0 0.0
      %1875 = vmatprep.subr.mxu0 0.0
      %1876 = vmatpush2.msra.mxu0 0.0
      %1877 = vmatprep.mubr.f32.mxu0 0.0
      %1878 = vmatmul.mubr.f32.gmra.mxu0 %v1183
      %v1879 = vpop.f32.mrf.mxu0
      %v1880 = vadd.f32 0.0, %v1879
      %v1881 = vpop.f32.mrf.mxu0
      %1882 = vmatprep.mubr.f32.mxu0 0.0
      %1883 = vmatmul.mubr.f32.gmra.mxu0 %v1183
      %v1884 = vpop.f32.mrf.mxu0
      %v1885 = vadd.f32 0.0, %v1884
      %v1886 = vpop.f32.mrf.mxu0
      %1887 = vmatprep.mubr.f32.mxu0 0.0
      %1888 = vmatmul.mubr.f32.gmra.mxu0 %v1183
      %v1889 = vpop.f32.mrf.mxu0
      %v1890 = vadd.f32 0.0, %v1889
      %v1891 = vpop.f32.mrf.mxu0
      %1892 = vmatprep.mubr.f32.mxu0 0.0
      %1893 = vmatmul.mubr.f32.gmra.mxu0 %v1183
      %v1894 = vpop.f32.mrf.mxu0
      %v1895 = vadd.f32 0.0, %v1894
      %v1896 = vpop.f32.mrf.mxu0
      %1897 = vmatprep.mubr.f32.mxu0 0.0
      %1898 = vmatmul.mubr.f32.gmra.mxu0 %v1183
      %v1899 = vpop.f32.mrf.mxu0
      %v1900 = vadd.f32 0.0, %v1899
      %v1901 = vpop.f32.mrf.mxu0
      %1902 = vmatprep.mubr.f32.mxu0 0.0
      %1903 = vmatmul.mubr.f32.gmra.mxu0 %v1183
      %v1904 = vpop.f32.mrf.mxu0
      %v1905 = vadd.f32 0.0, %v1904
      %v1906 = vpop.f32.mrf.mxu0
      %1907 = vmatprep.mubr.f32.mxu0 0.0
      %1908 = vmatmul.mubr.f32.gmra.mxu0 %v1183
      %v1909 = vpop.f32.mrf.mxu0
      %v1910 = vadd.f32 0.0, %v1909
      %v1911 = vpop.f32.mrf.mxu0
      %1912 = vmatprep.mubr.f32.mxu0 0.0
      %1913 = vmatmul.mubr.f32.gmra.mxu0 %v1183
      %v1914 = vpop.f32.mrf.mxu0
      %v1915 = vadd.f32 0.0, %v1914
      %v1916 = vpop.f32.mrf.mxu0
      %1917 = vdwg.mxu0
      %1918 = vset.pattern.permute.xlu0 4
      %1919 = vperm.xlu0 %1918, %v1131
      %v1920 = vpop.permute.xlu0 %1919
      %1922 = vset.pattern.permute.xlu0 4
      %1923 = vperm.xlu0 %1922, %v1135
      %v1924 = vpop.permute.xlu0 %1923
      %1926 = vset.pattern.permute.xlu0 4
      %1927 = vperm.xlu0 %1926, %v1139
      %v1928 = vpop.permute.xlu0 %1927
      %1930 = vset.pattern.permute.xlu0 4
      %1931 = vperm.xlu0 %1930, %v1143
      %v1932 = vpop.permute.xlu0 %1931
      %1934 = vset.pattern.permute.xlu0 4
      %1935 = vperm.xlu0 %1934, %v1147
      %v1936 = vpop.permute.xlu0 %1935
      %1938 = vset.pattern.permute.xlu0 4
      %1939 = vperm.xlu0 %1938, %v1151
      %v1940 = vpop.permute.xlu0 %1939
      %1942 = vset.pattern.permute.xlu0 4
      %1943 = vperm.xlu0 %1942, %v1155
      %v1944 = vpop.permute.xlu0 %1943
      %1946 = vset.pattern.permute.xlu0 4
      %1947 = vperm.xlu0 %1946, %v1159
      %v1948 = vpop.permute.xlu0 %1947
      %v1950 = vmul.f32 %v1920, %v1880
      %v1951 = vmul.f32 %v1924, %v1885
      %v1952 = vmul.f32 %v1928, %v1890
      %v1953 = vmul.f32 %v1932, %v1895
      %v1954 = vmul.f32 %v1936, %v1900
      %v1955 = vmul.f32 %v1940, %v1905
      %v1956 = vmul.f32 %v1944, %v1910
      %v1957 = vmul.f32 %v1948, %v1915
      %v1958 = vadd.f32 %v1803, %v1950
      %v1959 = vadd.f32 %v1804, %v1951
      %v1960 = vadd.f32 %v1805, %v1952
      %v1961 = vadd.f32 %v1806, %v1953
      %v1962 = vadd.f32 %v1807, %v1954
      %v1963 = vadd.f32 %v1808, %v1955
      %v1964 = vadd.f32 %v1809, %v1956
      %v1965 = vadd.f32 %v1810, %v1957
      %s1966 = scalar_lea.vmem %s9, 40
      %v1967 = vld [vmem:[%s1966] sm:$0xff]
      %1968 = vmatprep.subr.mxu0 0.0
      %1969 = vmatpush1.msra.mxu0 0.0
      %1970 = vmatprep.subr.mxu0 0.0
      %1971 = vmatpush1.msra.mxu0 0.0
      %1972 = vmatprep.subr.mxu0 0.0
      %1973 = vmatpush1.msra.mxu0 0.0
      %1974 = vmatprep.subr.mxu0 0.0
      %1975 = vmatpush1.msra.mxu0 0.0
      %1976 = vmatprep.subr.mxu0 0.0
      %1977 = vmatpush1.msra.mxu0 0.0
      %1978 = vmatprep.subr.mxu0 0.0
      %1979 = vmatpush1.msra.mxu0 0.0
      %1980 = vmatprep.subr.mxu0 0.0
      %1981 = vmatpush1.msra.mxu0 0.0
      %1982 = vmatprep.subr.mxu0 0.0
      %1983 = vmatpush1.msra.mxu0 0.0
      %1984 = vmatprep.subr.mxu0 0.0
      %1985 = vmatpush1.msra.mxu0 0.0
      %1986 = vmatprep.subr.mxu0 0.0
      %1987 = vmatpush1.msra.mxu0 0.0
      %1988 = vmatprep.subr.mxu0 0.0
      %1989 = vmatpush1.msra.mxu0 0.0
      %1990 = vmatprep.subr.mxu0 0.0
      %1991 = vmatpush1.msra.mxu0 0.0
      %1992 = vmatprep.subr.mxu0 0.0
      %1993 = vmatpush1.msra.mxu0 0.0
      %1994 = vmatprep.subr.mxu0 0.0
      %1995 = vmatpush1.msra.mxu0 0.0
      %1996 = vmatprep.subr.mxu0 0.0
      %1997 = vmatpush1.msra.mxu0 0.0
      %1998 = vmatprep.subr.mxu0 0.0
      %1999 = vmatpush1.msra.mxu0 %v1967
      %2000 = vmatprep.subr.mxu0 0.0
      %2001 = vmatpush2.msra.mxu0 0.0
      %2002 = vmatprep.subr.mxu0 0.0
      %2003 = vmatpush2.msra.mxu0 0.0
      %2004 = vmatprep.subr.mxu0 0.0
      %2005 = vmatpush2.msra.mxu0 0.0
      %2006 = vmatprep.subr.mxu0 0.0
      %2007 = vmatpush2.msra.mxu0 0.0
      %2008 = vmatprep.subr.mxu0 0.0
      %2009 = vmatpush2.msra.mxu0 0.0
      %2010 = vmatprep.subr.mxu0 0.0
      %2011 = vmatpush2.msra.mxu0 0.0
      %2012 = vmatprep.subr.mxu0 0.0
      %2013 = vmatpush2.msra.mxu0 0.0
      %2014 = vmatprep.subr.mxu0 0.0
      %2015 = vmatpush2.msra.mxu0 0.0
      %2016 = vmatprep.subr.mxu0 0.0
      %2017 = vmatpush2.msra.mxu0 0.0
      %2018 = vmatprep.subr.mxu0 0.0
      %2019 = vmatpush2.msra.mxu0 0.0
      %2020 = vmatprep.subr.mxu0 0.0
      %2021 = vmatpush2.msra.mxu0 0.0
      %2022 = vmatprep.subr.mxu0 0.0
      %2023 = vmatpush2.msra.mxu0 0.0
      %2024 = vmatprep.subr.mxu0 0.0
      %2025 = vmatpush2.msra.mxu0 0.0
      %2026 = vmatprep.subr.mxu0 0.0
      %2027 = vmatpush2.msra.mxu0 0.0
      %2028 = vmatprep.subr.mxu0 0.0
      %2029 = vmatpush2.msra.mxu0 0.0
      %2030 = vmatprep.subr.mxu0 0.0
      %2031 = vmatpush2.msra.mxu0 0.0
      %2032 = vmatprep.mubr.f32.mxu0 0.0
      %2033 = vmatmul.mubr.f32.gmra.mxu0 %v1183
      %v2034 = vpop.f32.mrf.mxu0
      %v2035 = vadd.f32 0.0, %v2034
      %v2036 = vpop.f32.mrf.mxu0
      %2037 = vmatprep.mubr.f32.mxu0 0.0
      %2038 = vmatmul.mubr.f32.gmra.mxu0 %v1183
      %v2039 = vpop.f32.mrf.mxu0
      %v2040 = vadd.f32 0.0, %v2039
      %v2041 = vpop.f32.mrf.mxu0
      %2042 = vmatprep.mubr.f32.mxu0 0.0
      %2043 = vmatmul.mubr.f32.gmra.mxu0 %v1183
      %v2044 = vpop.f32.mrf.mxu0
      %v2045 = vadd.f32 0.0, %v2044
      %v2046 = vpop.f32.mrf.mxu0
      %2047 = vmatprep.mubr.f32.mxu0 0.0
      %2048 = vmatmul.mubr.f32.gmra.mxu0 %v1183
      %v2049 = vpop.f32.mrf.mxu0
      %v2050 = vadd.f32 0.0, %v2049
      %v2051 = vpop.f32.mrf.mxu0
      %2052 = vmatprep.mubr.f32.mxu0 0.0
      %2053 = vmatmul.mubr.f32.gmra.mxu0 %v1183
      %v2054 = vpop.f32.mrf.mxu0
      %v2055 = vadd.f32 0.0, %v2054
      %v2056 = vpop.f32.mrf.mxu0
      %2057 = vmatprep.mubr.f32.mxu0 0.0
      %2058 = vmatmul.mubr.f32.gmra.mxu0 %v1183
      %v2059 = vpop.f32.mrf.mxu0
      %v2060 = vadd.f32 0.0, %v2059
      %v2061 = vpop.f32.mrf.mxu0
      %2062 = vmatprep.mubr.f32.mxu0 0.0
      %2063 = vmatmul.mubr.f32.gmra.mxu0 %v1183
      %v2064 = vpop.f32.mrf.mxu0
      %v2065 = vadd.f32 0.0, %v2064
      %v2066 = vpop.f32.mrf.mxu0
      %2067 = vmatprep.mubr.f32.mxu0 0.0
      %2068 = vmatmul.mubr.f32.gmra.mxu0 %v1183
      %v2069 = vpop.f32.mrf.mxu0
      %v2070 = vadd.f32 0.0, %v2069
      %v2071 = vpop.f32.mrf.mxu0
      %2072 = vdwg.mxu0
      %2073 = vset.pattern.permute.xlu0 5
      %2074 = vperm.xlu0 %2073, %v1131
      %v2075 = vpop.permute.xlu0 %2074
      %2077 = vset.pattern.permute.xlu0 5
      %2078 = vperm.xlu0 %2077, %v1135
      %v2079 = vpop.permute.xlu0 %2078
      %2081 = vset.pattern.permute.xlu0 5
      %2082 = vperm.xlu0 %2081, %v1139
      %v2083 = vpop.permute.xlu0 %2082
      %2085 = vset.pattern.permute.xlu0 5
      %2086 = vperm.xlu0 %2085, %v1143
      %v2087 = vpop.permute.xlu0 %2086
      %2089 = vset.pattern.permute.xlu0 5
      %2090 = vperm.xlu0 %2089, %v1147
      %v2091 = vpop.permute.xlu0 %2090
      %2093 = vset.pattern.permute.xlu0 5
      %2094 = vperm.xlu0 %2093, %v1151
      %v2095 = vpop.permute.xlu0 %2094
      %2097 = vset.pattern.permute.xlu0 5
      %2098 = vperm.xlu0 %2097, %v1155
      %v2099 = vpop.permute.xlu0 %2098
      %2101 = vset.pattern.permute.xlu0 5
      %2102 = vperm.xlu0 %2101, %v1159
      %v2103 = vpop.permute.xlu0 %2102
      %v2105 = vmul.f32 %v2075, %v2035
      %v2106 = vmul.f32 %v2079, %v2040
      %v2107 = vmul.f32 %v2083, %v2045
      %v2108 = vmul.f32 %v2087, %v2050
      %v2109 = vmul.f32 %v2091, %v2055
      %v2110 = vmul.f32 %v2095, %v2060
      %v2111 = vmul.f32 %v2099, %v2065
      %v2112 = vmul.f32 %v2103, %v2070
      %v2113 = vadd.f32 %v1958, %v2105
      %v2114 = vadd.f32 %v1959, %v2106
      %v2115 = vadd.f32 %v1960, %v2107
      %v2116 = vadd.f32 %v1961, %v2108
      %v2117 = vadd.f32 %v1962, %v2109
      %v2118 = vadd.f32 %v1963, %v2110
      %v2119 = vadd.f32 %v1964, %v2111
      %v2120 = vadd.f32 %v1965, %v2112
      %s2121 = scalar_lea.vmem %s9, 48
      %v2122 = vld [vmem:[%s2121] sm:$0xff]
      %2123 = vmatprep.subr.mxu0 0.0
      %2124 = vmatpush1.msra.mxu0 0.0
      %2125 = vmatprep.subr.mxu0 0.0
      %2126 = vmatpush1.msra.mxu0 0.0
      %2127 = vmatprep.subr.mxu0 0.0
      %2128 = vmatpush1.msra.mxu0 0.0
      %2129 = vmatprep.subr.mxu0 0.0
      %2130 = vmatpush1.msra.mxu0 0.0
      %2131 = vmatprep.subr.mxu0 0.0
      %2132 = vmatpush1.msra.mxu0 0.0
      %2133 = vmatprep.subr.mxu0 0.0
      %2134 = vmatpush1.msra.mxu0 0.0
      %2135 = vmatprep.subr.mxu0 0.0
      %2136 = vmatpush1.msra.mxu0 0.0
      %2137 = vmatprep.subr.mxu0 0.0
      %2138 = vmatpush1.msra.mxu0 0.0
      %2139 = vmatprep.subr.mxu0 0.0
      %2140 = vmatpush1.msra.mxu0 0.0
      %2141 = vmatprep.subr.mxu0 0.0
      %2142 = vmatpush1.msra.mxu0 0.0
      %2143 = vmatprep.subr.mxu0 0.0
      %2144 = vmatpush1.msra.mxu0 0.0
      %2145 = vmatprep.subr.mxu0 0.0
      %2146 = vmatpush1.msra.mxu0 0.0
      %2147 = vmatprep.subr.mxu0 0.0
      %2148 = vmatpush1.msra.mxu0 0.0
      %2149 = vmatprep.subr.mxu0 0.0
      %2150 = vmatpush1.msra.mxu0 0.0
      %2151 = vmatprep.subr.mxu0 0.0
      %2152 = vmatpush1.msra.mxu0 0.0
      %2153 = vmatprep.subr.mxu0 0.0
      %2154 = vmatpush1.msra.mxu0 %v2122
      %2155 = vmatprep.subr.mxu0 0.0
      %2156 = vmatpush2.msra.mxu0 0.0
      %2157 = vmatprep.subr.mxu0 0.0
      %2158 = vmatpush2.msra.mxu0 0.0
      %2159 = vmatprep.subr.mxu0 0.0
      %2160 = vmatpush2.msra.mxu0 0.0
      %2161 = vmatprep.subr.mxu0 0.0
      %2162 = vmatpush2.msra.mxu0 0.0
      %2163 = vmatprep.subr.mxu0 0.0
      %2164 = vmatpush2.msra.mxu0 0.0
      %2165 = vmatprep.subr.mxu0 0.0
      %2166 = vmatpush2.msra.mxu0 0.0
      %2167 = vmatprep.subr.mxu0 0.0
      %2168 = vmatpush2.msra.mxu0 0.0
      %2169 = vmatprep.subr.mxu0 0.0
      %2170 = vmatpush2.msra.mxu0 0.0
      %2171 = vmatprep.subr.mxu0 0.0
      %2172 = vmatpush2.msra.mxu0 0.0
      %2173 = vmatprep.subr.mxu0 0.0
      %2174 = vmatpush2.msra.mxu0 0.0
      %2175 = vmatprep.subr.mxu0 0.0
      %2176 = vmatpush2.msra.mxu0 0.0
      %2177 = vmatprep.subr.mxu0 0.0
      %2178 = vmatpush2.msra.mxu0 0.0
      %2179 = vmatprep.subr.mxu0 0.0
      %2180 = vmatpush2.msra.mxu0 0.0
      %2181 = vmatprep.subr.mxu0 0.0
      %2182 = vmatpush2.msra.mxu0 0.0
      %2183 = vmatprep.subr.mxu0 0.0
      %2184 = vmatpush2.msra.mxu0 0.0
      %2185 = vmatprep.subr.mxu0 0.0
      %2186 = vmatpush2.msra.mxu0 0.0
      %2187 = vmatprep.mubr.f32.mxu0 0.0
      %2188 = vmatmul.mubr.f32.gmra.mxu0 %v1183
      %v2189 = vpop.f32.mrf.mxu0
      %v2190 = vadd.f32 0.0, %v2189
      %v2191 = vpop.f32.mrf.mxu0
      %2192 = vmatprep.mubr.f32.mxu0 0.0
      %2193 = vmatmul.mubr.f32.gmra.mxu0 %v1183
      %v2194 = vpop.f32.mrf.mxu0
      %v2195 = vadd.f32 0.0, %v2194
      %v2196 = vpop.f32.mrf.mxu0
      %2197 = vmatprep.mubr.f32.mxu0 0.0
      %2198 = vmatmul.mubr.f32.gmra.mxu0 %v1183
      %v2199 = vpop.f32.mrf.mxu0
      %v2200 = vadd.f32 0.0, %v2199
      %v2201 = vpop.f32.mrf.mxu0
      %2202 = vmatprep.mubr.f32.mxu0 0.0
      %2203 = vmatmul.mubr.f32.gmra.mxu0 %v1183
      %v2204 = vpop.f32.mrf.mxu0
      %v2205 = vadd.f32 0.0, %v2204
      %v2206 = vpop.f32.mrf.mxu0
      %2207 = vmatprep.mubr.f32.mxu0 0.0
      %2208 = vmatmul.mubr.f32.gmra.mxu0 %v1183
      %v2209 = vpop.f32.mrf.mxu0
      %v2210 = vadd.f32 0.0, %v2209
      %v2211 = vpop.f32.mrf.mxu0
      %2212 = vmatprep.mubr.f32.mxu0 0.0
      %2213 = vmatmul.mubr.f32.gmra.mxu0 %v1183
      %v2214 = vpop.f32.mrf.mxu0
      %v2215 = vadd.f32 0.0, %v2214
      %v2216 = vpop.f32.mrf.mxu0
      %2217 = vmatprep.mubr.f32.mxu0 0.0
      %2218 = vmatmul.mubr.f32.gmra.mxu0 %v1183
      %v2219 = vpop.f32.mrf.mxu0
      %v2220 = vadd.f32 0.0, %v2219
      %v2221 = vpop.f32.mrf.mxu0
      %2222 = vmatprep.mubr.f32.mxu0 0.0
      %2223 = vmatmul.mubr.f32.gmra.mxu0 %v1183
      %v2224 = vpop.f32.mrf.mxu0
      %v2225 = vadd.f32 0.0, %v2224
      %v2226 = vpop.f32.mrf.mxu0
      %2227 = vdwg.mxu0
      %2228 = vset.pattern.permute.xlu0 6
      %2229 = vperm.xlu0 %2228, %v1131
      %v2230 = vpop.permute.xlu0 %2229
      %2232 = vset.pattern.permute.xlu0 6
      %2233 = vperm.xlu0 %2232, %v1135
      %v2234 = vpop.permute.xlu0 %2233
      %2236 = vset.pattern.permute.xlu0 6
      %2237 = vperm.xlu0 %2236, %v1139
      %v2238 = vpop.permute.xlu0 %2237
      %2240 = vset.pattern.permute.xlu0 6
      %2241 = vperm.xlu0 %2240, %v1143
      %v2242 = vpop.permute.xlu0 %2241
      %2244 = vset.pattern.permute.xlu0 6
      %2245 = vperm.xlu0 %2244, %v1147
      %v2246 = vpop.permute.xlu0 %2245
      %2248 = vset.pattern.permute.xlu0 6
      %2249 = vperm.xlu0 %2248, %v1151
      %v2250 = vpop.permute.xlu0 %2249
      %2252 = vset.pattern.permute.xlu0 6
      %2253 = vperm.xlu0 %2252, %v1155
      %v2254 = vpop.permute.xlu0 %2253
      %2256 = vset.pattern.permute.xlu0 6
      %2257 = vperm.xlu0 %2256, %v1159
      %v2258 = vpop.permute.xlu0 %2257
      %v2260 = vmul.f32 %v2230, %v2190
      %v2261 = vmul.f32 %v2234, %v2195
      %v2262 = vmul.f32 %v2238, %v2200
      %v2263 = vmul.f32 %v2242, %v2205
      %v2264 = vmul.f32 %v2246, %v2210
      %v2265 = vmul.f32 %v2250, %v2215
      %v2266 = vmul.f32 %v2254, %v2220
      %v2267 = vmul.f32 %v2258, %v2225
      %v2268 = vadd.f32 %v2113, %v2260
      %v2269 = vadd.f32 %v2114, %v2261
      %v2270 = vadd.f32 %v2115, %v2262
      %v2271 = vadd.f32 %v2116, %v2263
      %v2272 = vadd.f32 %v2117, %v2264
      %v2273 = vadd.f32 %v2118, %v2265
      %v2274 = vadd.f32 %v2119, %v2266
      %v2275 = vadd.f32 %v2120, %v2267
      %s2276 = scalar_lea.vmem %s9, 56
      %v2277 = vld [vmem:[%s2276] sm:$0xff]
      %2278 = vmatprep.subr.mxu0 0.0
      %2279 = vmatpush1.msra.mxu0 0.0
      %2280 = vmatprep.subr.mxu0 0.0
      %2281 = vmatpush1.msra.mxu0 0.0
      %2282 = vmatprep.subr.mxu0 0.0
      %2283 = vmatpush1.msra.mxu0 0.0
      %2284 = vmatprep.subr.mxu0 0.0
      %2285 = vmatpush1.msra.mxu0 0.0
      %2286 = vmatprep.subr.mxu0 0.0
      %2287 = vmatpush1.msra.mxu0 0.0
      %2288 = vmatprep.subr.mxu0 0.0
      %2289 = vmatpush1.msra.mxu0 0.0
      %2290 = vmatprep.subr.mxu0 0.0
      %2291 = vmatpush1.msra.mxu0 0.0
      %2292 = vmatprep.subr.mxu0 0.0
      %2293 = vmatpush1.msra.mxu0 0.0
      %2294 = vmatprep.subr.mxu0 0.0
      %2295 = vmatpush1.msra.mxu0 0.0
      %2296 = vmatprep.subr.mxu0 0.0
      %2297 = vmatpush1.msra.mxu0 0.0
      %2298 = vmatprep.subr.mxu0 0.0
      %2299 = vmatpush1.msra.mxu0 0.0
      %2300 = vmatprep.subr.mxu0 0.0
      %2301 = vmatpush1.msra.mxu0 0.0
      %2302 = vmatprep.subr.mxu0 0.0
      %2303 = vmatpush1.msra.mxu0 0.0
      %2304 = vmatprep.subr.mxu0 0.0
      %2305 = vmatpush1.msra.mxu0 0.0
      %2306 = vmatprep.subr.mxu0 0.0
      %2307 = vmatpush1.msra.mxu0 0.0
      %2308 = vmatprep.subr.mxu0 0.0
      %2309 = vmatpush1.msra.mxu0 %v2277
      %2310 = vmatprep.subr.mxu0 0.0
      %2311 = vmatpush2.msra.mxu0 0.0
      %2312 = vmatprep.subr.mxu0 0.0
      %2313 = vmatpush2.msra.mxu0 0.0
      %2314 = vmatprep.subr.mxu0 0.0
      %2315 = vmatpush2.msra.mxu0 0.0
      %2316 = vmatprep.subr.mxu0 0.0
      %2317 = vmatpush2.msra.mxu0 0.0
      %2318 = vmatprep.subr.mxu0 0.0
      %2319 = vmatpush2.msra.mxu0 0.0
      %2320 = vmatprep.subr.mxu0 0.0
      %2321 = vmatpush2.msra.mxu0 0.0
      %2322 = vmatprep.subr.mxu0 0.0
      %2323 = vmatpush2.msra.mxu0 0.0
      %2324 = vmatprep.subr.mxu0 0.0
      %2325 = vmatpush2.msra.mxu0 0.0
      %2326 = vmatprep.subr.mxu0 0.0
      %2327 = vmatpush2.msra.mxu0 0.0
      %2328 = vmatprep.subr.mxu0 0.0
      %2329 = vmatpush2.msra.mxu0 0.0
      %2330 = vmatprep.subr.mxu0 0.0
      %2331 = vmatpush2.msra.mxu0 0.0
      %2332 = vmatprep.subr.mxu0 0.0
      %2333 = vmatpush2.msra.mxu0 0.0
      %2334 = vmatprep.subr.mxu0 0.0
      %2335 = vmatpush2.msra.mxu0 0.0
      %2336 = vmatprep.subr.mxu0 0.0
      %2337 = vmatpush2.msra.mxu0 0.0
      %2338 = vmatprep.subr.mxu0 0.0
      %2339 = vmatpush2.msra.mxu0 0.0
      %2340 = vmatprep.subr.mxu0 0.0
      %2341 = vmatpush2.msra.mxu0 0.0
      %2342 = vmatprep.mubr.f32.mxu0 0.0
      %2343 = vmatmul.mubr.f32.gmra.mxu0 %v1183
      %v2344 = vpop.f32.mrf.mxu0
      %v2345 = vadd.f32 0.0, %v2344
      %v2346 = vpop.f32.mrf.mxu0
      %2347 = vmatprep.mubr.f32.mxu0 0.0
      %2348 = vmatmul.mubr.f32.gmra.mxu0 %v1183
      %v2349 = vpop.f32.mrf.mxu0
      %v2350 = vadd.f32 0.0, %v2349
      %v2351 = vpop.f32.mrf.mxu0
      %2352 = vmatprep.mubr.f32.mxu0 0.0
      %2353 = vmatmul.mubr.f32.gmra.mxu0 %v1183
      %v2354 = vpop.f32.mrf.mxu0
      %v2355 = vadd.f32 0.0, %v2354
      %v2356 = vpop.f32.mrf.mxu0
      %2357 = vmatprep.mubr.f32.mxu0 0.0
      %2358 = vmatmul.mubr.f32.gmra.mxu0 %v1183
      %v2359 = vpop.f32.mrf.mxu0
      %v2360 = vadd.f32 0.0, %v2359
      %v2361 = vpop.f32.mrf.mxu0
      %2362 = vmatprep.mubr.f32.mxu0 0.0
      %2363 = vmatmul.mubr.f32.gmra.mxu0 %v1183
      %v2364 = vpop.f32.mrf.mxu0
      %v2365 = vadd.f32 0.0, %v2364
      %v2366 = vpop.f32.mrf.mxu0
      %2367 = vmatprep.mubr.f32.mxu0 0.0
      %2368 = vmatmul.mubr.f32.gmra.mxu0 %v1183
      %v2369 = vpop.f32.mrf.mxu0
      %v2370 = vadd.f32 0.0, %v2369
      %v2371 = vpop.f32.mrf.mxu0
      %2372 = vmatprep.mubr.f32.mxu0 0.0
      %2373 = vmatmul.mubr.f32.gmra.mxu0 %v1183
      %v2374 = vpop.f32.mrf.mxu0
      %v2375 = vadd.f32 0.0, %v2374
      %v2376 = vpop.f32.mrf.mxu0
      %2377 = vmatprep.mubr.f32.mxu0 0.0
      %2378 = vmatmul.mubr.f32.gmra.mxu0 %v1183
      %v2379 = vpop.f32.mrf.mxu0
      %v2380 = vadd.f32 0.0, %v2379
      %v2381 = vpop.f32.mrf.mxu0
      %2382 = vdwg.mxu0
      %2383 = vset.pattern.permute.xlu0 7
      %2384 = vperm.xlu0 %2383, %v1131
      %v2385 = vpop.permute.xlu0 %2384
      %2387 = vset.pattern.permute.xlu0 7
      %2388 = vperm.xlu0 %2387, %v1135
      %v2389 = vpop.permute.xlu0 %2388
      %2391 = vset.pattern.permute.xlu0 7
      %2392 = vperm.xlu0 %2391, %v1139
      %v2393 = vpop.permute.xlu0 %2392
      %2395 = vset.pattern.permute.xlu0 7
      %2396 = vperm.xlu0 %2395, %v1143
      %v2397 = vpop.permute.xlu0 %2396
      %2399 = vset.pattern.permute.xlu0 7
      %2400 = vperm.xlu0 %2399, %v1147
      %v2401 = vpop.permute.xlu0 %2400
      %2403 = vset.pattern.permute.xlu0 7
      %2404 = vperm.xlu0 %2403, %v1151
      %v2405 = vpop.permute.xlu0 %2404
      %2407 = vset.pattern.permute.xlu0 7
      %2408 = vperm.xlu0 %2407, %v1155
      %v2409 = vpop.permute.xlu0 %2408
      %2411 = vset.pattern.permute.xlu0 7
      %2412 = vperm.xlu0 %2411, %v1159
      %v2413 = vpop.permute.xlu0 %2412
      %v2415 = vmul.f32 %v2385, %v2345
      %v2416 = vmul.f32 %v2389, %v2350
      %v2417 = vmul.f32 %v2393, %v2355
      %v2418 = vmul.f32 %v2397, %v2360
      %v2419 = vmul.f32 %v2401, %v2365
      %v2420 = vmul.f32 %v2405, %v2370
      %v2421 = vmul.f32 %v2409, %v2375
      %v2422 = vmul.f32 %v2413, %v2380
      %v2423 = vadd.f32 %v2268, %v2415
      %v2424 = vadd.f32 %v2269, %v2416
      %v2425 = vadd.f32 %v2270, %v2417
      %v2426 = vadd.f32 %v2271, %v2418
      %v2427 = vadd.f32 %v2272, %v2419
      %v2428 = vadd.f32 %v2273, %v2420
      %v2429 = vadd.f32 %v2274, %v2421
      %v2430 = vadd.f32 %v2275, %v2422
      %v2431 = vld [vmem:[%s10] sm:$0xff]
      %v2432 = vld [vmem:[%s11] sm:$0x1]
      %v2434 = vlaneseq
      %v2435 = vshrl.u32 %v2434, 7
      %v2436 = vsub.s32 0, %v2435
      %v2437 = vrot.slane %v2432, %v2436
      %v2440 = vsel %vm547, %v2423, 0
      %v2443 = vsel %vm547, %v2424, 0
      %v2446 = vsel %vm547, %v2425, 0
      %v2449 = vsel %vm547, %v2426, 0
      %v2452 = vsel %vm547, %v2427, 0
      %v2455 = vsel %vm547, %v2428, 0
      %v2458 = vsel %vm547, %v2429, 0
      %v2461 = vsel %vm547, %v2430, 0
      %2463 = vmatprep.subr.mxu0 0.0
      %2464 = vmatpush1.msra.mxu0 0.0
      %2465 = vmatprep.subr.mxu0 0.0
      %2466 = vmatpush1.msra.mxu0 0.0
      %2467 = vmatprep.subr.mxu0 0.0
      %2468 = vmatpush1.msra.mxu0 0.0
      %2469 = vmatprep.subr.mxu0 0.0
      %2470 = vmatpush1.msra.mxu0 0.0
      %2471 = vmatprep.subr.mxu0 0.0
      %2472 = vmatpush1.msra.mxu0 0.0
      %2473 = vmatprep.subr.mxu0 0.0
      %2474 = vmatpush1.msra.mxu0 0.0
      %2475 = vmatprep.subr.mxu0 0.0
      %2476 = vmatpush1.msra.mxu0 0.0
      %2477 = vmatprep.subr.mxu0 0.0
      %2478 = vmatpush1.msra.mxu0 0.0
      %2479 = vmatprep.subr.mxu0 0.0
      %2480 = vmatpush1.msra.mxu0 0.0
      %2481 = vmatprep.subr.mxu0 0.0
      %2482 = vmatpush1.msra.mxu0 0.0
      %2483 = vmatprep.subr.mxu0 0.0
      %2484 = vmatpush1.msra.mxu0 0.0
      %2485 = vmatprep.subr.mxu0 0.0
      %2486 = vmatpush1.msra.mxu0 0.0
      %2487 = vmatprep.subr.mxu0 0.0
      %2488 = vmatpush1.msra.mxu0 0.0
      %2489 = vmatprep.subr.mxu0 0.0
      %2490 = vmatpush1.msra.mxu0 0.0
      %2491 = vmatprep.subr.mxu0 0.0
      %2492 = vmatpush1.msra.mxu0 0.0
      %2493 = vmatprep.subr.mxu0 0.0
      %2494 = vmatpush1.msra.mxu0 %v2431
      %2495 = vmatprep.subr.mxu0 0.0
      %2496 = vmatpush2.msra.mxu0 0.0
      %2497 = vmatprep.subr.mxu0 0.0
      %2498 = vmatpush2.msra.mxu0 0.0
      %2499 = vmatprep.subr.mxu0 0.0
      %2500 = vmatpush2.msra.mxu0 0.0
      %2501 = vmatprep.subr.mxu0 0.0
      %2502 = vmatpush2.msra.mxu0 0.0
      %2503 = vmatprep.subr.mxu0 0.0
      %2504 = vmatpush2.msra.mxu0 0.0
      %2505 = vmatprep.subr.mxu0 0.0
      %2506 = vmatpush2.msra.mxu0 0.0
      %2507 = vmatprep.subr.mxu0 0.0
      %2508 = vmatpush2.msra.mxu0 0.0
      %2509 = vmatprep.subr.mxu0 0.0
      %2510 = vmatpush2.msra.mxu0 0.0
      %2511 = vmatprep.subr.mxu0 0.0
      %2512 = vmatpush2.msra.mxu0 0.0
      %2513 = vmatprep.subr.mxu0 0.0
      %2514 = vmatpush2.msra.mxu0 0.0
      %2515 = vmatprep.subr.mxu0 0.0
      %2516 = vmatpush2.msra.mxu0 0.0
      %2517 = vmatprep.subr.mxu0 0.0
      %2518 = vmatpush2.msra.mxu0 0.0
      %2519 = vmatprep.subr.mxu0 0.0
      %2520 = vmatpush2.msra.mxu0 0.0
      %2521 = vmatprep.subr.mxu0 0.0
      %2522 = vmatpush2.msra.mxu0 0.0
      %2523 = vmatprep.subr.mxu0 0.0
      %2524 = vmatpush2.msra.mxu0 0.0
      %2525 = vmatprep.subr.mxu0 0.0
      %2526 = vmatpush2.msra.mxu0 0.0
      %2527 = vmatprep.mubr.f32.mxu0 0.0
      %2528 = vmatmul.mubr.f32.gmra.mxu0 %v2440
      %v2529 = vpop.f32.mrf.mxu0
      %v2530 = vadd.f32 %v2437, %v2529
      %v2531 = vpop.f32.mrf.mxu0
      %2532 = vmatprep.mubr.f32.mxu0 0.0
      %2533 = vmatmul.mubr.f32.gmra.mxu0 %v2443
      %v2534 = vpop.f32.mrf.mxu0
      %v2535 = vadd.f32 %v2437, %v2534
      %v2536 = vpop.f32.mrf.mxu0
      %2537 = vmatprep.mubr.f32.mxu0 0.0
      %2538 = vmatmul.mubr.f32.gmra.mxu0 %v2446
      %v2539 = vpop.f32.mrf.mxu0
      %v2540 = vadd.f32 %v2437, %v2539
      %v2541 = vpop.f32.mrf.mxu0
      %2542 = vmatprep.mubr.f32.mxu0 0.0
      %2543 = vmatmul.mubr.f32.gmra.mxu0 %v2449
      %v2544 = vpop.f32.mrf.mxu0
      %v2545 = vadd.f32 %v2437, %v2544
      %v2546 = vpop.f32.mrf.mxu0
      %2547 = vmatprep.mubr.f32.mxu0 0.0
      %2548 = vmatmul.mubr.f32.gmra.mxu0 %v2452
      %v2549 = vpop.f32.mrf.mxu0
      %v2550 = vadd.f32 %v2437, %v2549
      %v2551 = vpop.f32.mrf.mxu0
      %2552 = vmatprep.mubr.f32.mxu0 0.0
      %2553 = vmatmul.mubr.f32.gmra.mxu0 %v2455
      %v2554 = vpop.f32.mrf.mxu0
      %v2555 = vadd.f32 %v2437, %v2554
      %v2556 = vpop.f32.mrf.mxu0
      %2557 = vmatprep.mubr.f32.mxu0 0.0
      %2558 = vmatmul.mubr.f32.gmra.mxu0 %v2458
      %v2559 = vpop.f32.mrf.mxu0
      %v2560 = vadd.f32 %v2437, %v2559
      %v2561 = vpop.f32.mrf.mxu0
      %2562 = vmatprep.mubr.f32.mxu0 0.0
      %2563 = vmatmul.mubr.f32.gmra.mxu0 %v2461
      %v2564 = vpop.f32.mrf.mxu0
      %v2565 = vadd.f32 %v2437, %v2564
      %v2566 = vpop.f32.mrf.mxu0
      %2567 = vdwg.mxu0
      %v2568 = vmax.f32 %v2530, 0.0
      %v2569 = vmax.f32 %v2535, 0.0
      %v2570 = vmax.f32 %v2540, 0.0
      %v2571 = vmax.f32 %v2545, 0.0
      %v2572 = vmax.f32 %v2550, 0.0
      %v2573 = vmax.f32 %v2555, 0.0
      %v2574 = vmax.f32 %v2560, 0.0
      %v2575 = vmax.f32 %v2565, 0.0
      %v2576 = vld [vmem:[%s12] sm:$0xff]
      %v2577 = vld [vmem:[%s12 + $0x8] sm:$0xff]
      %v2578 = vld [vmem:[%s12 + $0x10] sm:$0xff]
      %v2579 = vld [vmem:[%s12 + $0x18] sm:$0xff]
      %v2580 = vld [vmem:[%s13] sm:$0x1]
      %v2582 = vlaneseq
      %v2583 = vshrl.u32 %v2582, 7
      %v2584 = vsub.s32 0, %v2583
      %v2585 = vrot.slane %v2580, %v2584
      %vm2587 = vcmask 261120
      %v2589 = vsel %vm2587, %v2568, 0
      %v2592 = vsel %vm2587, %v2569, 0
      %v2595 = vsel %vm2587, %v2570, 0
      %v2598 = vsel %vm2587, %v2571, 0
      %v2601 = vsel %vm2587, %v2572, 0
      %v2604 = vsel %vm2587, %v2573, 0
      %v2607 = vsel %vm2587, %v2574, 0
      %v2610 = vsel %vm2587, %v2575, 0
      %2612 = vmatprep.subr.mxu0 0.0
      %2613 = vmatpush1.msra.mxu0 0.0
      %2614 = vmatprep.subr.mxu0 0.0
      %2615 = vmatpush1.msra.mxu0 0.0
      %2616 = vmatprep.subr.mxu0 0.0
      %2617 = vmatpush1.msra.mxu0 0.0
      %2618 = vmatprep.subr.mxu0 0.0
      %2619 = vmatpush1.msra.mxu0 0.0
      %2620 = vmatprep.subr.mxu0 0.0
      %2621 = vmatpush1.msra.mxu0 0.0
      %2622 = vmatprep.subr.mxu0 0.0
      %2623 = vmatpush1.msra.mxu0 0.0
      %2624 = vmatprep.subr.mxu0 0.0
      %2625 = vmatpush1.msra.mxu0 0.0
      %2626 = vmatprep.subr.mxu0 0.0
      %2627 = vmatpush1.msra.mxu0 0.0
      %2628 = vmatprep.subr.mxu0 0.0
      %2629 = vmatpush1.msra.mxu0 0.0
      %2630 = vmatprep.subr.mxu0 0.0
      %2631 = vmatpush1.msra.mxu0 0.0
      %2632 = vmatprep.subr.mxu0 0.0
      %2633 = vmatpush1.msra.mxu0 0.0
      %2634 = vmatprep.subr.mxu0 0.0
      %2635 = vmatpush1.msra.mxu0 0.0
      %2636 = vmatprep.subr.mxu0 0.0
      %2637 = vmatpush1.msra.mxu0 %v2579
      %2638 = vmatprep.subr.mxu0 0.0
      %2639 = vmatpush1.msra.mxu0 %v2578
      %2640 = vmatprep.subr.mxu0 0.0
      %2641 = vmatpush1.msra.mxu0 %v2577
      %2642 = vmatprep.subr.mxu0 0.0
      %2643 = vmatpush1.msra.mxu0 %v2576
      %2644 = vmatprep.subr.mxu0 0.0
      %2645 = vmatpush2.msra.mxu0 0.0
      %2646 = vmatprep.subr.mxu0 0.0
      %2647 = vmatpush2.msra.mxu0 0.0
      %2648 = vmatprep.subr.mxu0 0.0
      %2649 = vmatpush2.msra.mxu0 0.0
      %2650 = vmatprep.subr.mxu0 0.0
      %2651 = vmatpush2.msra.mxu0 0.0
      %2652 = vmatprep.subr.mxu0 0.0
      %2653 = vmatpush2.msra.mxu0 0.0
      %2654 = vmatprep.subr.mxu0 0.0
      %2655 = vmatpush2.msra.mxu0 0.0
      %2656 = vmatprep.subr.mxu0 0.0
      %2657 = vmatpush2.msra.mxu0 0.0
      %2658 = vmatprep.subr.mxu0 0.0
      %2659 = vmatpush2.msra.mxu0 0.0
      %2660 = vmatprep.subr.mxu0 0.0
      %2661 = vmatpush2.msra.mxu0 0.0
      %2662 = vmatprep.subr.mxu0 0.0
      %2663 = vmatpush2.msra.mxu0 0.0
      %2664 = vmatprep.subr.mxu0 0.0
      %2665 = vmatpush2.msra.mxu0 0.0
      %2666 = vmatprep.subr.mxu0 0.0
      %2667 = vmatpush2.msra.mxu0 0.0
      %2668 = vmatprep.subr.mxu0 0.0
      %2669 = vmatpush2.msra.mxu0 0.0
      %2670 = vmatprep.subr.mxu0 0.0
      %2671 = vmatpush2.msra.mxu0 0.0
      %2672 = vmatprep.subr.mxu0 0.0
      %2673 = vmatpush2.msra.mxu0 0.0
      %2674 = vmatprep.subr.mxu0 0.0
      %2675 = vmatpush2.msra.mxu0 0.0
      %2676 = vmatprep.mubr.f32.mxu0 0.0
      %2677 = vmatmul.mubr.f32.gmra.mxu0 %v2589
      %v2678 = vpop.f32.mrf.mxu0
      %v2679 = vadd.f32 %v2585, %v2678
      %v2680 = vpop.f32.mrf.mxu0
      %2681 = vmatprep.mubr.f32.mxu0 0.0
      %2682 = vmatmul.mubr.f32.gmra.mxu0 %v2592
      %v2683 = vpop.f32.mrf.mxu0
      %v2684 = vadd.f32 %v2585, %v2683
      %v2685 = vpop.f32.mrf.mxu0
      %2686 = vmatprep.mubr.f32.mxu0 0.0
      %2687 = vmatmul.mubr.f32.gmra.mxu0 %v2595
      %v2688 = vpop.f32.mrf.mxu0
      %v2689 = vadd.f32 %v2585, %v2688
      %v2690 = vpop.f32.mrf.mxu0
      %2691 = vmatprep.mubr.f32.mxu0 0.0
      %2692 = vmatmul.mubr.f32.gmra.mxu0 %v2598
      %v2693 = vpop.f32.mrf.mxu0
      %v2694 = vadd.f32 %v2585, %v2693
      %v2695 = vpop.f32.mrf.mxu0
      %2696 = vmatprep.mubr.f32.mxu0 0.0
      %2697 = vmatmul.mubr.f32.gmra.mxu0 %v2601
      %v2698 = vpop.f32.mrf.mxu0
      %v2699 = vadd.f32 %v2585, %v2698
      %v2700 = vpop.f32.mrf.mxu0
      %2701 = vmatprep.mubr.f32.mxu0 0.0
      %2702 = vmatmul.mubr.f32.gmra.mxu0 %v2604
      %v2703 = vpop.f32.mrf.mxu0
      %v2704 = vadd.f32 %v2585, %v2703
      %v2705 = vpop.f32.mrf.mxu0
      %2706 = vmatprep.mubr.f32.mxu0 0.0
      %2707 = vmatmul.mubr.f32.gmra.mxu0 %v2607
      %v2708 = vpop.f32.mrf.mxu0
      %v2709 = vadd.f32 %v2585, %v2708
      %v2710 = vpop.f32.mrf.mxu0
      %2711 = vmatprep.mubr.f32.mxu0 0.0
      %2712 = vmatmul.mubr.f32.gmra.mxu0 %v2610
      %v2713 = vpop.f32.mrf.mxu0
      %v2714 = vadd.f32 %v2585, %v2713
      %v2715 = vpop.f32.mrf.mxu0
      %2716 = vdwg.mxu0
      %v2717 = vmax.f32 %v2679, 0.0
      %v2718 = vmax.f32 %v2684, 0.0
      %v2719 = vmax.f32 %v2689, 0.0
      %v2720 = vmax.f32 %v2694, 0.0
      %v2721 = vmax.f32 %v2699, 0.0
      %v2722 = vmax.f32 %v2704, 0.0
      %v2723 = vmax.f32 %v2709, 0.0
      %v2724 = vmax.f32 %v2714, 0.0
      %v2725 = vld [vmem:[%s14] sm:$0x1]
      %v2727 = vlaneseq
      %v2728 = vshrl.u32 %v2727, 7
      %v2729 = vsub.s32 0, %v2728
      %v2730 = vrot.slane %v2725, %v2729
      %v2732 = vmul.f32 %v2717, %v2730
      %v2733 = vmul.f32 %v2718, %v2730
      %v2734 = vmul.f32 %v2719, %v2730
      %v2735 = vmul.f32 %v2720, %v2730
      %v2736 = vmul.f32 %v2721, %v2730
      %v2737 = vmul.f32 %v2722, %v2730
      %v2738 = vmul.f32 %v2723, %v2730
      %v2739 = vmul.f32 %v2724, %v2730
      %v2740 = vsel %vm2587, %v2732, 0.0
      %2741 = vadd.xlane.f32.xlu0 %v2740
      %v2742 = vpop.xlane.xlu0 %2741
      %v2743 = vsel %vm2587, %v2733, 0.0
      %2744 = vadd.xlane.f32.xlu0 %v2743
      %v2745 = vpop.xlane.xlu0 %2744
      %v2746 = vsel %vm2587, %v2734, 0.0
      %2747 = vadd.xlane.f32.xlu0 %v2746
      %v2748 = vpop.xlane.xlu0 %2747
      %v2749 = vsel %vm2587, %v2735, 0.0
      %2750 = vadd.xlane.f32.xlu0 %v2749
      %v2751 = vpop.xlane.xlu0 %2750
      %v2752 = vsel %vm2587, %v2736, 0.0
      %2753 = vadd.xlane.f32.xlu0 %v2752
      %v2754 = vpop.xlane.xlu0 %2753
      %v2755 = vsel %vm2587, %v2737, 0.0
      %2756 = vadd.xlane.f32.xlu0 %v2755
      %v2757 = vpop.xlane.xlu0 %2756
      %v2758 = vsel %vm2587, %v2738, 0.0
      %2759 = vadd.xlane.f32.xlu0 %v2758
      %v2760 = vpop.xlane.xlu0 %2759
      %v2761 = vsel %vm2587, %v2739, 0.0
      %2762 = vadd.xlane.f32.xlu0 %v2761
      %v2763 = vpop.xlane.xlu0 %2762
      %v2772 = vlaneseq
      %v2773 = vand.u32 %v2772, 127
      %v2774 = vlaneseq
      %v2775 = vshrl.u32 %v2774, 7
      %v2776 = vsub.s32 %v2773, %v2775
      %v2777 = vrot.slane %v2742, %v2776
      %v2778 = vlaneseq
      %v2779 = vshrl.u32 %v2778, 7
      %v2780 = vsub.s32 %v2773, %v2779
      %v2781 = vrot.slane %v2745, %v2780
      %v2782 = vlaneseq
      %v2783 = vshrl.u32 %v2782, 7
      %v2784 = vsub.s32 %v2773, %v2783
      %v2785 = vrot.slane %v2748, %v2784
      %v2786 = vlaneseq
      %v2787 = vshrl.u32 %v2786, 7
      %v2788 = vsub.s32 %v2773, %v2787
      %v2789 = vrot.slane %v2751, %v2788
      %v2790 = vlaneseq
      %v2791 = vshrl.u32 %v2790, 7
      %v2792 = vsub.s32 %v2773, %v2791
      %v2793 = vrot.slane %v2754, %v2792
      %v2794 = vlaneseq
      %v2795 = vshrl.u32 %v2794, 7
      %v2796 = vsub.s32 %v2773, %v2795
      %v2797 = vrot.slane %v2757, %v2796
      %v2798 = vlaneseq
      %v2799 = vshrl.u32 %v2798, 7
      %v2800 = vsub.s32 %v2773, %v2799
      %v2801 = vrot.slane %v2760, %v2800
      %v2802 = vlaneseq
      %v2803 = vshrl.u32 %v2802, 7
      %v2804 = vsub.s32 %v2773, %v2803
      %v2805 = vrot.slane %v2763, %v2804
      %v2806 = vsel %vm862, %v2781, %v2777
      %v2807 = vsel %vm865, %v2785, %v2806
      %v2808 = vsel %vm868, %v2789, %v2807
      %v2809 = vsel %vm871, %v2793, %v2808
      %v2810 = vsel %vm874, %v2797, %v2809
      %v2811 = vsel %vm877, %v2801, %v2810
      %v2812 = vsel %vm880, %v2805, %v2811
      %v2814 = vsel %vm547, %v2812, -inf
      %2815 = vmax.xlane.f32.xlu0 %v2814
      %v2816 = vpop.xlane.xlu0 %2815
      %v2818 = vlaneseq
      %v2819 = vshrl.u32 %v2818, 7
      %v2820 = vsub.s32 0, %v2819
      %v2821 = vrot.slane %v2816, %v2820
      %v2822 = vlaneseq
      %v2823 = vshrl.u32 %v2822, 7
      %v2824 = vsub.s32 1, %v2823
      %v2825 = vrot.slane %v2816, %v2824
      %v2826 = vlaneseq
      %v2827 = vshrl.u32 %v2826, 7
      %v2828 = vsub.s32 2, %v2827
      %v2829 = vrot.slane %v2816, %v2828
      %v2830 = vlaneseq
      %v2831 = vshrl.u32 %v2830, 7
      %v2832 = vsub.s32 3, %v2831
      %v2833 = vrot.slane %v2816, %v2832
      %v2834 = vlaneseq
      %v2835 = vshrl.u32 %v2834, 7
      %v2836 = vsub.s32 4, %v2835
      %v2837 = vrot.slane %v2816, %v2836
      %v2838 = vlaneseq
      %v2839 = vshrl.u32 %v2838, 7
      %v2840 = vsub.s32 5, %v2839
      %v2841 = vrot.slane %v2816, %v2840
      %v2842 = vlaneseq
      %v2843 = vshrl.u32 %v2842, 7
      %v2844 = vsub.s32 6, %v2843
      %v2845 = vrot.slane %v2816, %v2844
      %v2846 = vlaneseq
      %v2847 = vshrl.u32 %v2846, 7
      %v2848 = vsub.s32 7, %v2847
      %v2849 = vrot.slane %v2816, %v2848
      %v2858 = vsub.f32 %v2742, %v2821
      %v2859 = vsub.f32 %v2745, %v2825
      %v2860 = vsub.f32 %v2748, %v2829
      %v2861 = vsub.f32 %v2751, %v2833
      %v2862 = vsub.f32 %v2754, %v2837
      %v2863 = vsub.f32 %v2757, %v2841
      %v2864 = vsub.f32 %v2760, %v2845
      %v2865 = vsub.f32 %v2763, %v2849
      %v2866 = vmul.f32 %v2858, 1.442695
      %v2867 = vpow.pop %v2866
      %v2868 = vmul.f32 %v2859, 1.442695
      %v2869 = vpow.pop %v2868
      %v2870 = vmul.f32 %v2860, 1.442695
      %v2871 = vpow.pop %v2870
      %v2872 = vmul.f32 %v2861, 1.442695
      %v2873 = vpow.pop %v2872
      %v2874 = vmul.f32 %v2862, 1.442695
      %v2875 = vpow.pop %v2874
      %v2876 = vmul.f32 %v2863, 1.442695
      %v2877 = vpow.pop %v2876
      %v2878 = vmul.f32 %v2864, 1.442695
      %v2879 = vpow.pop %v2878
      %v2880 = vmul.f32 %v2865, 1.442695
      %v2881 = vpow.pop %v2880
      %2890 = vset.pattern.permute.xlu0 0
      %2891 = vperm.xlu0 %2890, %v2867
      %v2892 = vpop.permute.xlu0 %2891
      %2893 = vset.pattern.permute.xlu0 0
      %2894 = vperm.xlu0 %2893, %v2869
      %v2895 = vpop.permute.xlu0 %2894
      %2896 = vset.pattern.permute.xlu0 0
      %2897 = vperm.xlu0 %2896, %v2871
      %v2898 = vpop.permute.xlu0 %2897
      %2899 = vset.pattern.permute.xlu0 0
      %2900 = vperm.xlu0 %2899, %v2873
      %v2901 = vpop.permute.xlu0 %2900
      %2902 = vset.pattern.permute.xlu0 0
      %2903 = vperm.xlu0 %2902, %v2875
      %v2904 = vpop.permute.xlu0 %2903
      %2905 = vset.pattern.permute.xlu0 0
      %2906 = vperm.xlu0 %2905, %v2877
      %v2907 = vpop.permute.xlu0 %2906
      %2908 = vset.pattern.permute.xlu0 0
      %2909 = vperm.xlu0 %2908, %v2879
      %v2910 = vpop.permute.xlu0 %2909
      %2911 = vset.pattern.permute.xlu0 0
      %2912 = vperm.xlu0 %2911, %v2881
      %v2913 = vpop.permute.xlu0 %2912
      %v2914 = vlaneseq
      %v2915 = vshrl.u32 %v2914, 7
      %v2916 = vsub.s32 %v2773, %v2915
      %v2917 = vrot.slane %v2892, %v2916
      %v2918 = vlaneseq
      %v2919 = vshrl.u32 %v2918, 7
      %v2920 = vsub.s32 %v2773, %v2919
      %v2921 = vrot.slane %v2895, %v2920
      %v2922 = vlaneseq
      %v2923 = vshrl.u32 %v2922, 7
      %v2924 = vsub.s32 %v2773, %v2923
      %v2925 = vrot.slane %v2898, %v2924
      %v2926 = vlaneseq
      %v2927 = vshrl.u32 %v2926, 7
      %v2928 = vsub.s32 %v2773, %v2927
      %v2929 = vrot.slane %v2901, %v2928
      %v2930 = vlaneseq
      %v2931 = vshrl.u32 %v2930, 7
      %v2932 = vsub.s32 %v2773, %v2931
      %v2933 = vrot.slane %v2904, %v2932
      %v2934 = vlaneseq
      %v2935 = vshrl.u32 %v2934, 7
      %v2936 = vsub.s32 %v2773, %v2935
      %v2937 = vrot.slane %v2907, %v2936
      %v2938 = vlaneseq
      %v2939 = vshrl.u32 %v2938, 7
      %v2940 = vsub.s32 %v2773, %v2939
      %v2941 = vrot.slane %v2910, %v2940
      %v2942 = vlaneseq
      %v2943 = vshrl.u32 %v2942, 7
      %v2944 = vsub.s32 %v2773, %v2943
      %v2945 = vrot.slane %v2913, %v2944
      %v2946 = vsel %vm862, %v2921, %v2917
      %v2947 = vsel %vm865, %v2925, %v2946
      %v2948 = vsel %vm868, %v2929, %v2947
      %v2949 = vsel %vm871, %v2933, %v2948
      %v2950 = vsel %vm874, %v2937, %v2949
      %v2951 = vsel %vm877, %v2941, %v2950
      %v2952 = vsel %vm880, %v2945, %v2951
      %v2954 = vsel %vm547, %v2952, 0.0
      %2955 = vadd.xlane.f32.xlu0 %v2954
      %v2956 = vpop.xlane.xlu0 %2955
      %v2958 = vlaneseq
      %v2959 = vshrl.u32 %v2958, 7
      %v2960 = vsub.s32 0, %v2959
      %v2961 = vrot.slane %v2956, %v2960
      %v2962 = vlaneseq
      %v2963 = vshrl.u32 %v2962, 7
      %v2964 = vsub.s32 1, %v2963
      %v2965 = vrot.slane %v2956, %v2964
      %v2966 = vlaneseq
      %v2967 = vshrl.u32 %v2966, 7
      %v2968 = vsub.s32 2, %v2967
      %v2969 = vrot.slane %v2956, %v2968
      %v2970 = vlaneseq
      %v2971 = vshrl.u32 %v2970, 7
      %v2972 = vsub.s32 3, %v2971
      %v2973 = vrot.slane %v2956, %v2972
      %v2974 = vlaneseq
      %v2975 = vshrl.u32 %v2974, 7
      %v2976 = vsub.s32 4, %v2975
      %v2977 = vrot.slane %v2956, %v2976
      %v2978 = vlaneseq
      %v2979 = vshrl.u32 %v2978, 7
      %v2980 = vsub.s32 5, %v2979
      %v2981 = vrot.slane %v2956, %v2980
      %v2982 = vlaneseq
      %v2983 = vshrl.u32 %v2982, 7
      %v2984 = vsub.s32 6, %v2983
      %v2985 = vrot.slane %v2956, %v2984
      %v2986 = vlaneseq
      %v2987 = vshrl.u32 %v2986, 7
      %v2988 = vsub.s32 7, %v2987
      %v2989 = vrot.slane %v2956, %v2988
      %v2998 = vrcp.pop %v2961
      %v2999 = vmul.f32 %v2867, %v2998
      %v3000 = vrcp.pop %v2965
      %v3001 = vmul.f32 %v2869, %v3000
      %v3002 = vrcp.pop %v2969
      %v3003 = vmul.f32 %v2871, %v3002
      %v3004 = vrcp.pop %v2973
      %v3005 = vmul.f32 %v2873, %v3004
      %v3006 = vrcp.pop %v2977
      %v3007 = vmul.f32 %v2875, %v3006
      %v3008 = vrcp.pop %v2981
      %v3009 = vmul.f32 %v2877, %v3008
      %v3010 = vrcp.pop %v2985
      %v3011 = vmul.f32 %v2879, %v3010
      %v3012 = vrcp.pop %v2989
      %v3013 = vmul.f32 %v2881, %v3012
      %3022 = vset.pattern.permute.xlu0 0
      %3023 = vperm.xlu0 %3022, %v2999
      %v3024 = vpop.permute.xlu0 %3023
      %3025 = vset.pattern.permute.xlu0 0
      %3026 = vperm.xlu0 %3025, %v3001
      %v3027 = vpop.permute.xlu0 %3026
      %3028 = vset.pattern.permute.xlu0 0
      %3029 = vperm.xlu0 %3028, %v3003
      %v3030 = vpop.permute.xlu0 %3029
      %3031 = vset.pattern.permute.xlu0 0
      %3032 = vperm.xlu0 %3031, %v3005
      %v3033 = vpop.permute.xlu0 %3032
      %3034 = vset.pattern.permute.xlu0 0
      %3035 = vperm.xlu0 %3034, %v3007
      %v3036 = vpop.permute.xlu0 %3035
      %3037 = vset.pattern.permute.xlu0 0
      %3038 = vperm.xlu0 %3037, %v3009
      %v3039 = vpop.permute.xlu0 %3038
      %3040 = vset.pattern.permute.xlu0 0
      %3041 = vperm.xlu0 %3040, %v3011
      %v3042 = vpop.permute.xlu0 %3041
      %3043 = vset.pattern.permute.xlu0 0
      %3044 = vperm.xlu0 %3043, %v3013
      %v3045 = vpop.permute.xlu0 %3044
      %v3046 = vlaneseq
      %v3047 = vshrl.u32 %v3046, 7
      %v3048 = vsub.s32 %v2773, %v3047
      %v3049 = vrot.slane %v3024, %v3048
      %v3050 = vlaneseq
      %v3051 = vshrl.u32 %v3050, 7
      %v3052 = vsub.s32 %v2773, %v3051
      %v3053 = vrot.slane %v3027, %v3052
      %v3054 = vlaneseq
      %v3055 = vshrl.u32 %v3054, 7
      %v3056 = vsub.s32 %v2773, %v3055
      %v3057 = vrot.slane %v3030, %v3056
      %v3058 = vlaneseq
      %v3059 = vshrl.u32 %v3058, 7
      %v3060 = vsub.s32 %v2773, %v3059
      %v3061 = vrot.slane %v3033, %v3060
      %v3062 = vlaneseq
      %v3063 = vshrl.u32 %v3062, 7
      %v3064 = vsub.s32 %v2773, %v3063
      %v3065 = vrot.slane %v3036, %v3064
      %v3066 = vlaneseq
      %v3067 = vshrl.u32 %v3066, 7
      %v3068 = vsub.s32 %v2773, %v3067
      %v3069 = vrot.slane %v3039, %v3068
      %v3070 = vlaneseq
      %v3071 = vshrl.u32 %v3070, 7
      %v3072 = vsub.s32 %v2773, %v3071
      %v3073 = vrot.slane %v3042, %v3072
      %v3074 = vlaneseq
      %v3075 = vshrl.u32 %v3074, 7
      %v3076 = vsub.s32 %v2773, %v3075
      %v3077 = vrot.slane %v3045, %v3076
      %v3078 = vsel %vm862, %v3053, %v3049
      %v3079 = vsel %vm865, %v3057, %v3078
      %v3080 = vsel %vm868, %v3061, %v3079
      %v3081 = vsel %vm871, %v3065, %v3080
      %v3082 = vsel %vm874, %v3069, %v3081
      %v3083 = vsel %vm877, %v3073, %v3082
      %v3084 = vsel %vm880, %v3077, %v3083
      %v3085 = vsel %vm547, %v3084, 0
      %3087 = vmatprep.subr.mxu0 0.0
      %3088 = vmatpush1.msra.mxu0 0.0
      %3089 = vmatprep.subr.mxu0 0.0
      %3090 = vmatpush1.msra.mxu0 0.0
      %3091 = vmatprep.subr.mxu0 0.0
      %3092 = vmatpush1.msra.mxu0 0.0
      %3093 = vmatprep.subr.mxu0 0.0
      %3094 = vmatpush1.msra.mxu0 0.0
      %3095 = vmatprep.subr.mxu0 0.0
      %3096 = vmatpush1.msra.mxu0 0.0
      %3097 = vmatprep.subr.mxu0 0.0
      %3098 = vmatpush1.msra.mxu0 0.0
      %3099 = vmatprep.subr.mxu0 0.0
      %3100 = vmatpush1.msra.mxu0 0.0
      %3101 = vmatprep.subr.mxu0 0.0
      %3102 = vmatpush1.msra.mxu0 0.0
      %3103 = vmatprep.subr.mxu0 0.0
      %3104 = vmatpush1.msra.mxu0 0.0
      %3105 = vmatprep.subr.mxu0 0.0
      %3106 = vmatpush1.msra.mxu0 0.0
      %3107 = vmatprep.subr.mxu0 0.0
      %3108 = vmatpush1.msra.mxu0 0.0
      %3109 = vmatprep.subr.mxu0 0.0
      %3110 = vmatpush1.msra.mxu0 0.0
      %3111 = vmatprep.subr.mxu0 0.0
      %3112 = vmatpush1.msra.mxu0 0.0
      %3113 = vmatprep.subr.mxu0 0.0
      %3114 = vmatpush1.msra.mxu0 0.0
      %3115 = vmatprep.subr.mxu0 0.0
      %3116 = vmatpush1.msra.mxu0 0.0
      %3117 = vmatprep.subr.mxu0 0.0
      %3118 = vmatpush1.msra.mxu0 %v654
      %3119 = vmatprep.subr.mxu0 0.0
      %3120 = vmatpush2.msra.mxu0 0.0
      %3121 = vmatprep.subr.mxu0 0.0
      %3122 = vmatpush2.msra.mxu0 0.0
      %3123 = vmatprep.subr.mxu0 0.0
      %3124 = vmatpush2.msra.mxu0 0.0
      %3125 = vmatprep.subr.mxu0 0.0
      %3126 = vmatpush2.msra.mxu0 0.0
      %3127 = vmatprep.subr.mxu0 0.0
      %3128 = vmatpush2.msra.mxu0 0.0
      %3129 = vmatprep.subr.mxu0 0.0
      %3130 = vmatpush2.msra.mxu0 0.0
      %3131 = vmatprep.subr.mxu0 0.0
      %3132 = vmatpush2.msra.mxu0 0.0
      %3133 = vmatprep.subr.mxu0 0.0
      %3134 = vmatpush2.msra.mxu0 0.0
      %3135 = vmatprep.subr.mxu0 0.0
      %3136 = vmatpush2.msra.mxu0 0.0
      %3137 = vmatprep.subr.mxu0 0.0
      %3138 = vmatpush2.msra.mxu0 0.0
      %3139 = vmatprep.subr.mxu0 0.0
      %3140 = vmatpush2.msra.mxu0 0.0
      %3141 = vmatprep.subr.mxu0 0.0
      %3142 = vmatpush2.msra.mxu0 0.0
      %3143 = vmatprep.subr.mxu0 0.0
      %3144 = vmatpush2.msra.mxu0 0.0
      %3145 = vmatprep.subr.mxu0 0.0
      %3146 = vmatpush2.msra.mxu0 0.0
      %3147 = vmatprep.subr.mxu0 0.0
      %3148 = vmatpush2.msra.mxu0 0.0
      %3149 = vmatprep.subr.mxu0 0.0
      %3150 = vmatpush2.msra.mxu0 0.0
      %3151 = vmatprep.mubr.f32.mxu0 0.0
      %3152 = vmatmul.mubr.f32.gmra.mxu0 %v3085
      %v3153 = vpop.f32.mrf.mxu0
      %v3154 = vadd.f32 0.0, %v3153
      %v3155 = vpop.f32.mrf.mxu0
      %3156 = vdwg.mxu0
      %v3157 = vadd.f32 %v544, %v3154
      %3158 = vst.msk [vmem:[%s543] sm:$0xff] %vm547, %v3157
      %p3159 = scmp.lt.s32.totalorder %s28, 1
      %s3160 = scalar_select %p3159, %s28, 1
      %s3161 = smul.addr %s3160, 8
      %s3162 = scalar_lea.vmem %s17, %s3161
      // Predicated region
      $region89: #{_lambda_.7} parent=87 // pred_check
        %p3163 = pneg %p408
      $region90: #{_lambda_.7} parent=87 // pred_check_branch
        %3165 = sbr.rel (%p3163) target = $region92
      $region91: #{_lambda_.7} parent=87 // pred_region
        _
      $region92: #{_lambda_.7} parent=87 // pred_fallthru
        _
    $region88: #{_lambda_.7} parent=5 // pred_fallthru
      _
    %p3166 = scmp.le.s32.totalorder 2, %s23
    // Predicated region
    $region93: #{_lambda_.7} parent=5 // pred_check
      %p3167 = pneg %p3166
    $region94: #{_lambda_.7} parent=5 // pred_check_branch
      %3169 = sbr.rel (%p3167) target = $region96
    $region95: #{_lambda_.7} parent=5 // pred_region
      %s3170 = ssub.s32 %s23, 2
      // Predicated region
      $region97: #{_lambda_.7} parent=95 // pred_check
        %p3171 = pneg %p414
      $region98: #{_lambda_.7} parent=95 // pred_check_branch
        %3173 = sbr.rel (%p3171) target = $region100
      $region99: #{_lambda_.7} parent=95 // pred_region
        %p3174 = scmp.lt.s32.totalorder %s29, 1
        %s3175 = scalar_select %p3174, %s29, 1
        %s3176 = smul.addr %s3175, 8
        %s3177 = scalar_lea.vmem %s17, %s3176
      $region100: #{_lambda_.7} parent=95 // pred_fallthru
        _
    $region96: #{_lambda_.7} parent=5 // pred_fallthru
      _
  $region6: #{_lambda_.7} parent=0 // loop_footer
    %s27 = sadd.s32 1, %s23
  $region7: #{_lambda_.7} parent=0 // loop_footer_branch
    %22 = sbr.rel target = $region3
  $region8: #{_lambda_.7} parent=0 // loop_exit
    _

// kernel: _lambda_.6
$region0: #{_lambda_.6}
  #allocation0 [shape = 'u32[]', space=smem, size = 0x4, offset = 0x4, fixed_abs, tag = 'smem constant byte address 0x4 - core index']
  #allocation1 [shape = 'u32[144,128]{1,0:T(1,128)}', space=vmem, size = 0x12000, scoped, tag = 'internal scratch']
  %s0 = inlined_call_operand.vmem [shape: f32[2,8,8], index: 0, kind: input, shape index: {}]
  %s1 = inlined_call_operand.hbm [shape: f32[1,8], index: 1, kind: input, shape index: {}]
  %s2 = inlined_call_operand.hbm [shape: f32[1,8], index: 2, kind: input, shape index: {}]
  %s3 = inlined_call_operand.vmem [shape: f32[8,8,8], index: 3, kind: input, shape index: {}]
  %s4 = inlined_call_operand.vmem [shape: f32[8,8], index: 4, kind: input, shape index: {}]
  %s5 = inlined_call_operand.vmem [shape: f32[8,8,8], index: 5, kind: input, shape index: {}]
  %s6 = inlined_call_operand.vmem [shape: f32[8,8], index: 6, kind: input, shape index: {}]
  %s7 = inlined_call_operand.hbm [shape: f32[1,8], index: 7, kind: input, shape index: {}]
  %s8 = inlined_call_operand.hbm [shape: f32[1,8], index: 8, kind: input, shape index: {}]
  %s9 = inlined_call_operand.vmem [shape: f32[8,8,8], index: 9, kind: input, shape index: {}]
  %s10 = inlined_call_operand.hbm [shape: f32[8,32], index: 10, kind: input, shape index: {}]
  %s11 = inlined_call_operand.hbm [shape: f32[1,32], index: 11, kind: input, shape index: {}]
  %s12 = inlined_call_operand.vmem [shape: f32[32,32], index: 12, kind: input, shape index: {}]
  %s13 = inlined_call_operand.hbm [shape: f32[1,32], index: 13, kind: input, shape index: {}]
  %s14 = inlined_call_operand.vmem [shape: f32[1,32], index: 14, kind: input, shape index: {}]
  %s15 = inlined_call_operand.vmem [shape: f32[8,8], index: 15, kind: input, shape index: {}]
  %s16 = inlined_call_operand.hbm [shape: f32[1,8], index: 16, kind: input, shape index: {}]
  %s17 = inlined_call_operand.vmem [shape: f32[2,8,8], index: 17, kind: output, shape index: {}]
  %s18 = sld [smem:[#allocation0]]
  $region133: #{_lambda_.6} parent=0
    _
  %s20 = ssub.s32 1, %s18
  %s21 = scalar_select 0, %s20, %s18
  $region1: #{_lambda_.6} parent=0
    #allocation2 [shape = 'u8[512]{0}', space=vmem, size = 0x400, scoped, tag = 'input window, operand 1, single buffered']
    #allocation3 [shape = 's32[2]{0}', space=sflag, size = 0x8, scoped, tag = 'scoped memory for _lambda_.6']
    #allocation4 [shape = 'u8[512]{0}', space=vmem, size = 0x400, scoped, tag = 'input window, operand 2, single buffered']
    #allocation5 [shape = 's32[1]{0}', space=sflag, size = 0x4, scoped, tag = 'scoped memory for _lambda_.6']
    #allocation6 [shape = 'u8[512]{0}', space=vmem, size = 0x400, scoped, tag = 'input window, operand 7, single buffered']
    #allocation7 [shape = 'u8[512]{0}', space=vmem, size = 0x400, scoped, tag = 'input window, operand 8, single buffered']
    #allocation8 [shape = 's32[1]{0}', space=sflag, size = 0x4, scoped, tag = 'scoped memory for _lambda_.6']
    #allocation9 [shape = 'u8[4096]{0}', space=vmem, size = 0x1000, scoped, tag = 'input window, operand 10, single buffered']
    #allocation10 [shape = 'u8[512]{0}', space=vmem, size = 0x400, scoped, tag = 'input window, operand 11, single buffered']
    #allocation11 [shape = 's32[1]{0}', space=sflag, size = 0x4, scoped, tag = 'scoped memory for _lambda_.6']
    #allocation12 [shape = 'u8[512]{0}', space=vmem, size = 0x400, scoped, tag = 'input window, operand 13, single buffered']
    #allocation13 [shape = 'u8[512]{0}', space=vmem, size = 0x400, scoped, tag = 'input window, operand 16, single buffered']
    #allocation14 [shape = 's32[1]{0}', space=sflag, size = 0x4, scoped, tag = 'scoped memory for _lambda_.6']
    %22 = vsyncpa [#allocation3], 0
    %23 = vsyncpa [#allocation5], 0
    %24 = vsyncpa [#allocation8], 0
    %25 = vsyncpa [#allocation11], 0
    %26 = vsyncpa [#allocation14], 0
    loop: start=0, step=1, limit=4
    $region2: #{_lambda_.6} parent=1 // loop_pre_header
      _
    $region3: #{_lambda_.6} parent=1 // loop_header
      %s28 = sphi 0, %s32
      %p29 = scmp.ge.s32.totalorder %s28, 4
      %s38 = sphi 0, %s40
      %s41 = sphi 0, %s38
      %s42 = sphi 0, %s41
      %s58 = sphi 0, %s42
      %s62 = sphi 0, %s62
      %s64 = sphi 0, %s62
      %s65 = sphi 0, %s64
      %s79 = sphi 0, %s65
      %s83 = sphi 0, %s83
      %s85 = sphi 0, %s83
      %s86 = sphi 0, %s85
      %s100 = sphi 0, %s86
      %s104 = sphi 0, %s104
      %s106 = sphi 0, %s104
      %s107 = sphi 0, %s106
      %s121 = sphi 0, %s107
      %s125 = sphi 0, %s125
      %s127 = sphi 0, %s125
      %s128 = sphi 0, %s127
      %s142 = sphi 0, %s128
      %s146 = sphi 0, %s146
      %s148 = sphi 0, %s146
      %s149 = sphi 0, %s148
      %s163 = sphi 0, %s149
      %s167 = sphi 0, %s167
      %s169 = sphi 0, %s167
      %s170 = sphi 0, %s169
      %s184 = sphi 0, %s170
      %s188 = sphi 0, %s188
      %s190 = sphi 0, %s188
      %s191 = sphi 0, %s190
      %s205 = sphi 0, %s191
      %s209 = sphi 0, %s209
      %s211 = sphi 0, %s209
      %s212 = sphi 0, %s211
      %s226 = sphi 0, %s212
      %s230 = sphi 0, %s230
      %s232 = sphi 0, %s230
      %s233 = sphi 0, %s232
      %s247 = sphi 0, %s233
      %s251 = sphi 0, %s251
      %s253 = sphi 0, %s251
      %s254 = sphi 0, %s253
      %s268 = sphi 0, %s254
      %s272 = sphi 0, %s272
      %s274 = sphi 0, %s272
      %s275 = sphi 0, %s274
      %s289 = sphi 0, %s275
      %s293 = sphi 0, %s293
      %s295 = sphi 0, %s293
      %s296 = sphi 0, %s295
      %s310 = sphi 0, %s296
      %s314 = sphi 0, %s314
      %s316 = sphi 0, %s314
      %s317 = sphi 0, %s316
      %s331 = sphi 0, %s317
      %s335 = sphi 0, %s335
      %s337 = sphi 0, %s335
      %s338 = sphi 0, %s337
      %s352 = sphi 0, %s338
      %s356 = sphi 0, %s356
      %s358 = sphi 0, %s356
      %s359 = sphi 0, %s358
      %s373 = sphi 0, %s359
      %s377 = sphi 0, %s377
      %s379 = sphi 0, %s377
      %s380 = sphi 0, %s379
      %s394 = sphi 0, %s380
      %s400 = sphi 0, %s402
      %s403 = sphi 0, %s400
      %s404 = sphi 0, %s403
      %s420 = sphi 0, %s404
    $region4: #{_lambda_.6} parent=1 // loop_header_branch
      %31 = sbr.rel (%p29) target = $region8
    $region5: #{_lambda_.6} parent=1 // loop_body
      %s33 = ssub.s32 %s28, 1
      %s34 = ssub.s32 %s28, 2
      %s35 = sadd.s32 %s28, 1
      %s36 = ssub.s32 %s28, %s35
      %p37 = scmp.eq.s32.totalorder %s36, 0
      %s39 = sadd.s32 %s38, 1
      %s40 = scalar_select %p37, %s38, %s39
      %p43 = pneg %p37
      %p44 = scmp.eq.s32.totalorder %s28, 1
      %p45 = por %p43, %p44
      %p46 = scmp.ne.s32.totalorder %s38, %s41
      %p47 = scmp.eq.s32.totalorder %s28, 0
      %p48 = por %p46, %p47
      %p49 = scmp.ne.s32.totalorder %s38, %s41
      %p50 = scmp.eq.s32.totalorder %s33, 1
      %p51 = por %p49, %p50
      %p52 = scmp.ne.s32.totalorder %s41, %s42
      %p53 = scmp.eq.s32.totalorder %s33, 0
      %p54 = por %p52, %p53
      %p55 = scmp.ne.s32.totalorder %s41, %s42
      %p56 = scmp.eq.s32.totalorder %s34, 1
      %p57 = por %p55, %p56
      %p59 = scmp.ne.s32.totalorder %s42, %s58
      %p60 = scmp.eq.s32.totalorder %s34, 0
      %p61 = por %p59, %p60
      %s63 = sadd.s32 %s62, 1
      %p66 = scmp.eq.s32.totalorder %s28, 1
      %p67 = scmp.ne.s32.totalorder %s62, %s64
      %p68 = scmp.eq.s32.totalorder %s28, 0
      %p69 = por %p67, %p68
      %p70 = scmp.ne.s32.totalorder %s62, %s64
      %p71 = scmp.eq.s32.totalorder %s33, 1
      %p72 = por %p70, %p71
      %p73 = scmp.ne.s32.totalorder %s64, %s65
      %p74 = scmp.eq.s32.totalorder %s33, 0
      %p75 = por %p73, %p74
      %p76 = scmp.ne.s32.totalorder %s64, %s65
      %p77 = scmp.eq.s32.totalorder %s34, 1
      %p78 = por %p76, %p77
      %p80 = scmp.ne.s32.totalorder %s65, %s79
      %p81 = scmp.eq.s32.totalorder %s34, 0
      %p82 = por %p80, %p81
      %s84 = sadd.s32 %s83, 1
      %p87 = scmp.eq.s32.totalorder %s28, 1
      %p88 = scmp.ne.s32.totalorder %s83, %s85
      %p89 = scmp.eq.s32.totalorder %s28, 0
      %p90 = por %p88, %p89
      %p91 = scmp.ne.s32.totalorder %s83, %s85
      %p92 = scmp.eq.s32.totalorder %s33, 1
      %p93 = por %p91, %p92
      %p94 = scmp.ne.s32.totalorder %s85, %s86
      %p95 = scmp.eq.s32.totalorder %s33, 0
      %p96 = por %p94, %p95
      %p97 = scmp.ne.s32.totalorder %s85, %s86
      %p98 = scmp.eq.s32.totalorder %s34, 1
      %p99 = por %p97, %p98
      %p101 = scmp.ne.s32.totalorder %s86, %s100
      %p102 = scmp.eq.s32.totalorder %s34, 0
      %p103 = por %p101, %p102
      %s105 = sadd.s32 %s104, 1
      %p108 = scmp.eq.s32.totalorder %s28, 1
      %p109 = scmp.ne.s32.totalorder %s104, %s106
      %p110 = scmp.eq.s32.totalorder %s28, 0
      %p111 = por %p109, %p110
      %p112 = scmp.ne.s32.totalorder %s104, %s106
      %p113 = scmp.eq.s32.totalorder %s33, 1
      %p114 = por %p112, %p113
      %p115 = scmp.ne.s32.totalorder %s106, %s107
      %p116 = scmp.eq.s32.totalorder %s33, 0
      %p117 = por %p115, %p116
      %p118 = scmp.ne.s32.totalorder %s106, %s107
      %p119 = scmp.eq.s32.totalorder %s34, 1
      %p120 = por %p118, %p119
      %p122 = scmp.ne.s32.totalorder %s107, %s121
      %p123 = scmp.eq.s32.totalorder %s34, 0
      %p124 = por %p122, %p123
      %s126 = sadd.s32 %s125, 1
      %p129 = scmp.eq.s32.totalorder %s28, 1
      %p130 = scmp.ne.s32.totalorder %s125, %s127
      %p131 = scmp.eq.s32.totalorder %s28, 0
      %p132 = por %p130, %p131
      %p133 = scmp.ne.s32.totalorder %s125, %s127
      %p134 = scmp.eq.s32.totalorder %s33, 1
      %p135 = por %p133, %p134
      %p136 = scmp.ne.s32.totalorder %s127, %s128
      %p137 = scmp.eq.s32.totalorder %s33, 0
      %p138 = por %p136, %p137
      %p139 = scmp.ne.s32.totalorder %s127, %s128
      %p140 = scmp.eq.s32.totalorder %s34, 1
      %p141 = por %p139, %p140
      %p143 = scmp.ne.s32.totalorder %s128, %s142
      %p144 = scmp.eq.s32.totalorder %s34, 0
      %p145 = por %p143, %p144
      %s147 = sadd.s32 %s146, 1
      %p150 = scmp.eq.s32.totalorder %s28, 1
      %p151 = scmp.ne.s32.totalorder %s146, %s148
      %p152 = scmp.eq.s32.totalorder %s28, 0
      %p153 = por %p151, %p152
      %p154 = scmp.ne.s32.totalorder %s146, %s148
      %p155 = scmp.eq.s32.totalorder %s33, 1
      %p156 = por %p154, %p155
      %p157 = scmp.ne.s32.totalorder %s148, %s149
      %p158 = scmp.eq.s32.totalorder %s33, 0
      %p159 = por %p157, %p158
      %p160 = scmp.ne.s32.totalorder %s148, %s149
      %p161 = scmp.eq.s32.totalorder %s34, 1
      %p162 = por %p160, %p161
      %p164 = scmp.ne.s32.totalorder %s149, %s163
      %p165 = scmp.eq.s32.totalorder %s34, 0
      %p166 = por %p164, %p165
      %s168 = sadd.s32 %s167, 1
      %p171 = scmp.eq.s32.totalorder %s28, 1
      %p172 = scmp.ne.s32.totalorder %s167, %s169
      %p173 = scmp.eq.s32.totalorder %s28, 0
      %p174 = por %p172, %p173
      %p175 = scmp.ne.s32.totalorder %s167, %s169
      %p176 = scmp.eq.s32.totalorder %s33, 1
      %p177 = por %p175, %p176
      %p178 = scmp.ne.s32.totalorder %s169, %s170
      %p179 = scmp.eq.s32.totalorder %s33, 0
      %p180 = por %p178, %p179
      %p181 = scmp.ne.s32.totalorder %s169, %s170
      %p182 = scmp.eq.s32.totalorder %s34, 1
      %p183 = por %p181, %p182
      %p185 = scmp.ne.s32.totalorder %s170, %s184
      %p186 = scmp.eq.s32.totalorder %s34, 0
      %p187 = por %p185, %p186
      %s189 = sadd.s32 %s188, 1
      %p192 = scmp.eq.s32.totalorder %s28, 1
      %p193 = scmp.ne.s32.totalorder %s188, %s190
      %p194 = scmp.eq.s32.totalorder %s28, 0
      %p195 = por %p193, %p194
      %p196 = scmp.ne.s32.totalorder %s188, %s190
      %p197 = scmp.eq.s32.totalorder %s33, 1
      %p198 = por %p196, %p197
      %p199 = scmp.ne.s32.totalorder %s190, %s191
      %p200 = scmp.eq.s32.totalorder %s33, 0
      %p201 = por %p199, %p200
      %p202 = scmp.ne.s32.totalorder %s190, %s191
      %p203 = scmp.eq.s32.totalorder %s34, 1
      %p204 = por %p202, %p203
      %p206 = scmp.ne.s32.totalorder %s191, %s205
      %p207 = scmp.eq.s32.totalorder %s34, 0
      %p208 = por %p206, %p207
      %s210 = sadd.s32 %s209, 1
      %p213 = scmp.eq.s32.totalorder %s28, 1
      %p214 = scmp.ne.s32.totalorder %s209, %s211
      %p215 = scmp.eq.s32.totalorder %s28, 0
      %p216 = por %p214, %p215
      %p217 = scmp.ne.s32.totalorder %s209, %s211
      %p218 = scmp.eq.s32.totalorder %s33, 1
      %p219 = por %p217, %p218
      %p220 = scmp.ne.s32.totalorder %s211, %s212
      %p221 = scmp.eq.s32.totalorder %s33, 0
      %p222 = por %p220, %p221
      %p223 = scmp.ne.s32.totalorder %s211, %s212
      %p224 = scmp.eq.s32.totalorder %s34, 1
      %p225 = por %p223, %p224
      %p227 = scmp.ne.s32.totalorder %s212, %s226
      %p228 = scmp.eq.s32.totalorder %s34, 0
      %p229 = por %p227, %p228
      %s231 = sadd.s32 %s230, 1
      %p234 = scmp.eq.s32.totalorder %s28, 1
      %p235 = scmp.ne.s32.totalorder %s230, %s232
      %p236 = scmp.eq.s32.totalorder %s28, 0
      %p237 = por %p235, %p236
      %p238 = scmp.ne.s32.totalorder %s230, %s232
      %p239 = scmp.eq.s32.totalorder %s33, 1
      %p240 = por %p238, %p239
      %p241 = scmp.ne.s32.totalorder %s232, %s233
      %p242 = scmp.eq.s32.totalorder %s33, 0
      %p243 = por %p241, %p242
      %p244 = scmp.ne.s32.totalorder %s232, %s233
      %p245 = scmp.eq.s32.totalorder %s34, 1
      %p246 = por %p244, %p245
      %p248 = scmp.ne.s32.totalorder %s233, %s247
      %p249 = scmp.eq.s32.totalorder %s34, 0
      %p250 = por %p248, %p249
      %s252 = sadd.s32 %s251, 1
      %p255 = scmp.eq.s32.totalorder %s28, 1
      %p256 = scmp.ne.s32.totalorder %s251, %s253
      %p257 = scmp.eq.s32.totalorder %s28, 0
      %p258 = por %p256, %p257
      %p259 = scmp.ne.s32.totalorder %s251, %s253
      %p260 = scmp.eq.s32.totalorder %s33, 1
      %p261 = por %p259, %p260
      %p262 = scmp.ne.s32.totalorder %s253, %s254
      %p263 = scmp.eq.s32.totalorder %s33, 0
      %p264 = por %p262, %p263
      %p265 = scmp.ne.s32.totalorder %s253, %s254
      %p266 = scmp.eq.s32.totalorder %s34, 1
      %p267 = por %p265, %p266
      %p269 = scmp.ne.s32.totalorder %s254, %s268
      %p270 = scmp.eq.s32.totalorder %s34, 0
      %p271 = por %p269, %p270
      %s273 = sadd.s32 %s272, 1
      %p276 = scmp.eq.s32.totalorder %s28, 1
      %p277 = scmp.ne.s32.totalorder %s272, %s274
      %p278 = scmp.eq.s32.totalorder %s28, 0
      %p279 = por %p277, %p278
      %p280 = scmp.ne.s32.totalorder %s272, %s274
      %p281 = scmp.eq.s32.totalorder %s33, 1
      %p282 = por %p280, %p281
      %p283 = scmp.ne.s32.totalorder %s274, %s275
      %p284 = scmp.eq.s32.totalorder %s33, 0
      %p285 = por %p283, %p284
      %p286 = scmp.ne.s32.totalorder %s274, %s275
      %p287 = scmp.eq.s32.totalorder %s34, 1
      %p288 = por %p286, %p287
      %p290 = scmp.ne.s32.totalorder %s275, %s289
      %p291 = scmp.eq.s32.totalorder %s34, 0
      %p292 = por %p290, %p291
      %s294 = sadd.s32 %s293, 1
      %p297 = scmp.eq.s32.totalorder %s28, 1
      %p298 = scmp.ne.s32.totalorder %s293, %s295
      %p299 = scmp.eq.s32.totalorder %s28, 0
      %p300 = por %p298, %p299
      %p301 = scmp.ne.s32.totalorder %s293, %s295
      %p302 = scmp.eq.s32.totalorder %s33, 1
      %p303 = por %p301, %p302
      %p304 = scmp.ne.s32.totalorder %s295, %s296
      %p305 = scmp.eq.s32.totalorder %s33, 0
      %p306 = por %p304, %p305
      %p307 = scmp.ne.s32.totalorder %s295, %s296
      %p308 = scmp.eq.s32.totalorder %s34, 1
      %p309 = por %p307, %p308
      %p311 = scmp.ne.s32.totalorder %s296, %s310
      %p312 = scmp.eq.s32.totalorder %s34, 0
      %p313 = por %p311, %p312
      %s315 = sadd.s32 %s314, 1
      %p318 = scmp.eq.s32.totalorder %s28, 1
      %p319 = scmp.ne.s32.totalorder %s314, %s316
      %p320 = scmp.eq.s32.totalorder %s28, 0
      %p321 = por %p319, %p320
      %p322 = scmp.ne.s32.totalorder %s314, %s316
      %p323 = scmp.eq.s32.totalorder %s33, 1
      %p324 = por %p322, %p323
      %p325 = scmp.ne.s32.totalorder %s316, %s317
      %p326 = scmp.eq.s32.totalorder %s33, 0
      %p327 = por %p325, %p326
      %p328 = scmp.ne.s32.totalorder %s316, %s317
      %p329 = scmp.eq.s32.totalorder %s34, 1
      %p330 = por %p328, %p329
      %p332 = scmp.ne.s32.totalorder %s317, %s331
      %p333 = scmp.eq.s32.totalorder %s34, 0
      %p334 = por %p332, %p333
      %s336 = sadd.s32 %s335, 1
      %p339 = scmp.eq.s32.totalorder %s28, 1
      %p340 = scmp.ne.s32.totalorder %s335, %s337
      %p341 = scmp.eq.s32.totalorder %s28, 0
      %p342 = por %p340, %p341
      %p343 = scmp.ne.s32.totalorder %s335, %s337
      %p344 = scmp.eq.s32.totalorder %s33, 1
      %p345 = por %p343, %p344
      %p346 = scmp.ne.s32.totalorder %s337, %s338
      %p347 = scmp.eq.s32.totalorder %s33, 0
      %p348 = por %p346, %p347
      %p349 = scmp.ne.s32.totalorder %s337, %s338
      %p350 = scmp.eq.s32.totalorder %s34, 1
      %p351 = por %p349, %p350
      %p353 = scmp.ne.s32.totalorder %s338, %s352
      %p354 = scmp.eq.s32.totalorder %s34, 0
      %p355 = por %p353, %p354
      %s357 = sadd.s32 %s356, 1
      %p360 = scmp.eq.s32.totalorder %s28, 1
      %p361 = scmp.ne.s32.totalorder %s356, %s358
      %p362 = scmp.eq.s32.totalorder %s28, 0
      %p363 = por %p361, %p362
      %p364 = scmp.ne.s32.totalorder %s356, %s358
      %p365 = scmp.eq.s32.totalorder %s33, 1
      %p366 = por %p364, %p365
      %p367 = scmp.ne.s32.totalorder %s358, %s359
      %p368 = scmp.eq.s32.totalorder %s33, 0
      %p369 = por %p367, %p368
      %p370 = scmp.ne.s32.totalorder %s358, %s359
      %p371 = scmp.eq.s32.totalorder %s34, 1
      %p372 = por %p370, %p371
      %p374 = scmp.ne.s32.totalorder %s359, %s373
      %p375 = scmp.eq.s32.totalorder %s34, 0
      %p376 = por %p374, %p375
      %s378 = sadd.s32 %s377, 1
      %p381 = scmp.eq.s32.totalorder %s28, 1
      %p382 = scmp.ne.s32.totalorder %s377, %s379
      %p383 = scmp.eq.s32.totalorder %s28, 0
      %p384 = por %p382, %p383
      %p385 = scmp.ne.s32.totalorder %s377, %s379
      %p386 = scmp.eq.s32.totalorder %s33, 1
      %p387 = por %p385, %p386
      %p388 = scmp.ne.s32.totalorder %s379, %s380
      %p389 = scmp.eq.s32.totalorder %s33, 0
      %p390 = por %p388, %p389
      %p391 = scmp.ne.s32.totalorder %s379, %s380
      %p392 = scmp.eq.s32.totalorder %s34, 1
      %p393 = por %p391, %p392
      %p395 = scmp.ne.s32.totalorder %s380, %s394
      %p396 = scmp.eq.s32.totalorder %s34, 0
      %p397 = por %p395, %p396
      %s398 = ssub.s32 %s28, %s35
      %p399 = scmp.eq.s32.totalorder %s398, 0
      %s401 = sadd.s32 %s400, 1
      %s402 = scalar_select %p399, %s400, %s401
      %p405 = pneg %p399
      %p406 = scmp.eq.s32.totalorder %s28, 1
      %p407 = por %p405, %p406
      %p408 = scmp.ne.s32.totalorder %s400, %s403
      %p409 = scmp.eq.s32.totalorder %s28, 0
      %p410 = por %p408, %p409
      %p411 = scmp.ne.s32.totalorder %s400, %s403
      %p412 = scmp.eq.s32.totalorder %s33, 1
      %p413 = por %p411, %p412
      %p414 = scmp.ne.s32.totalorder %s403, %s404
      %p415 = scmp.eq.s32.totalorder %s33, 0
      %p416 = por %p414, %p415
      %p417 = scmp.ne.s32.totalorder %s403, %s404
      %p418 = scmp.eq.s32.totalorder %s34, 1
      %p419 = por %p417, %p418
      %p421 = scmp.ne.s32.totalorder %s404, %s420
      %p422 = scmp.eq.s32.totalorder %s34, 0
      %p423 = por %p421, %p422
      %p424 = scmp.le.s32.totalorder 1, %s28
      %p425 = scmp.lt.s32.totalorder %s28, 3
      %p426 = pnand %p424, %p425
      %p427 = pneg %p426
      // Predicated region
      $region9: #{_lambda_.6} parent=5 // pred_check
        _
      $region10: #{_lambda_.6} parent=5 // pred_check_branch
        %429 = sbr.rel (%p426) target = $region12
      $region11: #{_lambda_.6} parent=5 // pred_region
        %s430 = ssub.s32 %s28, 1
        // Predicated region
        $region13: #{_lambda_.6} parent=11 // pred_check
          %p431 = pneg %p75
        $region14: #{_lambda_.6} parent=11 // pred_check_branch
          %433 = sbr.rel (%p431) target = $region16
        $region15: #{_lambda_.6} parent=11 // pred_region
          %s435 = ssub.s32 16, 16
          %436 = vsyncadd [#allocation3], %s435
          %s438 = sshll.u32 [#allocation2], 4
          %s439 = int_to_ptr.vmem [resolvable:$true] %s438
          %441 = dma.hbm_to_vmem [thread:$0]  %s1, 16, %s439, [#allocation3]
        $region16: #{_lambda_.6} parent=11 // pred_fallthru
          _
        // Predicated region
        $region17: #{_lambda_.6} parent=11 // pred_check
          %p442 = pneg %p96
        $region18: #{_lambda_.6} parent=11 // pred_check_branch
          %444 = sbr.rel (%p442) target = $region20
        $region19: #{_lambda_.6} parent=11 // pred_region
          %s446 = ssub.s32 16, 16
          %447 = vsyncadd [#allocation5], %s446
          %s449 = sshll.u32 [#allocation4], 4
          %s450 = int_to_ptr.vmem [resolvable:$true] %s449
          %452 = dma.hbm_to_vmem [thread:$0]  %s2, 16, %s450, [#allocation5]
        $region20: #{_lambda_.6} parent=11 // pred_fallthru
          _
        // Predicated region
        $region21: #{_lambda_.6} parent=11 // pred_check
          %p453 = pneg %p117
        $region22: #{_lambda_.6} parent=11 // pred_check_branch
          %455 = sbr.rel (%p453) target = $region24
        $region23: #{_lambda_.6} parent=11 // pred_region
          _
        $region24: #{_lambda_.6} parent=11 // pred_fallthru
          _
        // Predicated region
        $region25: #{_lambda_.6} parent=11 // pred_check
          %p456 = pneg %p138
        $region26: #{_lambda_.6} parent=11 // pred_check_branch
          %458 = sbr.rel (%p456) target = $region28
        $region27: #{_lambda_.6} parent=11 // pred_region
          _
        $region28: #{_lambda_.6} parent=11 // pred_fallthru
          _
        // Predicated region
        $region29: #{_lambda_.6} parent=11 // pred_check
          %p459 = pneg %p159
        $region30: #{_lambda_.6} parent=11 // pred_check_branch
          %461 = sbr.rel (%p459) target = $region32
        $region31: #{_lambda_.6} parent=11 // pred_region
          _
        $region32: #{_lambda_.6} parent=11 // pred_fallthru
          _
        // Predicated region
        $region33: #{_lambda_.6} parent=11 // pred_check
          %p462 = pneg %p180
        $region34: #{_lambda_.6} parent=11 // pred_check_branch
          %464 = sbr.rel (%p462) target = $region36
        $region35: #{_lambda_.6} parent=11 // pred_region
          _
        $region36: #{_lambda_.6} parent=11 // pred_fallthru
          _
        // Predicated region
        $region37: #{_lambda_.6} parent=11 // pred_check
          %p465 = pneg %p201
        $region38: #{_lambda_.6} parent=11 // pred_check_branch
          %467 = sbr.rel (%p465) target = $region40
        $region39: #{_lambda_.6} parent=11 // pred_region
          %s469 = ssub.s32 16, 16
          %470 = vsyncadd [#allocation5], %s469
          %s472 = sshll.u32 [#allocation6], 4
          %s473 = int_to_ptr.vmem [resolvable:$true] %s472
          %475 = dma.hbm_to_vmem [thread:$0]  %s7, 16, %s473, [#allocation5]
        $region40: #{_lambda_.6} parent=11 // pred_fallthru
          _
        // Predicated region
        $region41: #{_lambda_.6} parent=11 // pred_check
          %p476 = pneg %p222
        $region42: #{_lambda_.6} parent=11 // pred_check_branch
          %478 = sbr.rel (%p476) target = $region44
        $region43: #{_lambda_.6} parent=11 // pred_region
          %s480 = ssub.s32 16, 16
          %481 = vsyncadd [#allocation8], %s480
          %s483 = sshll.u32 [#allocation7], 4
          %s484 = int_to_ptr.vmem [resolvable:$true] %s483
          %486 = dma.hbm_to_vmem [thread:$0]  %s8, 16, %s484, [#allocation8]
        $region44: #{_lambda_.6} parent=11 // pred_fallthru
          _
        // Predicated region
        $region45: #{_lambda_.6} parent=11 // pred_check
          %p487 = pneg %p243
        $region46: #{_lambda_.6} parent=11 // pred_check_branch
          %489 = sbr.rel (%p487) target = $region48
        $region47: #{_lambda_.6} parent=11 // pred_region
          _
        $region48: #{_lambda_.6} parent=11 // pred_fallthru
          _
        // Predicated region
        $region49: #{_lambda_.6} parent=11 // pred_check
          %p490 = pneg %p264
        $region50: #{_lambda_.6} parent=11 // pred_check_branch
          %492 = sbr.rel (%p490) target = $region52
        $region51: #{_lambda_.6} parent=11 // pred_region
          %s494 = ssub.s32 128, 128
          %495 = vsyncadd [#allocation8], %s494
          %s497 = sshll.u32 [#allocation9], 4
          %s498 = int_to_ptr.vmem [resolvable:$true] %s497
          %500 = dma.hbm_to_vmem [thread:$0]  %s10, 128, %s498, [#allocation8]
        $region52: #{_lambda_.6} parent=11 // pred_fallthru
          _
        // Predicated region
        $region53: #{_lambda_.6} parent=11 // pred_check
          %p501 = pneg %p285
        $region54: #{_lambda_.6} parent=11 // pred_check_branch
          %503 = sbr.rel (%p501) target = $region56
        $region55: #{_lambda_.6} parent=11 // pred_region
          %s505 = ssub.s32 16, 16
          %506 = vsyncadd [#allocation11], %s505
          %s508 = sshll.u32 [#allocation10], 4
          %s509 = int_to_ptr.vmem [resolvable:$true] %s508
          %511 = dma.hbm_to_vmem [thread:$0]  %s11, 16, %s509, [#allocation11]
        $region56: #{_lambda_.6} parent=11 // pred_fallthru
          _
        // Predicated region
        $region57: #{_lambda_.6} parent=11 // pred_check
          %p512 = pneg %p306
        $region58: #{_lambda_.6} parent=11 // pred_check_branch
          %514 = sbr.rel (%p512) target = $region60
        $region59: #{_lambda_.6} parent=11 // pred_region
          _
        $region60: #{_lambda_.6} parent=11 // pred_fallthru
          _
        // Predicated region
        $region61: #{_lambda_.6} parent=11 // pred_check
          %p515 = pneg %p327
        $region62: #{_lambda_.6} parent=11 // pred_check_branch
          %517 = sbr.rel (%p515) target = $region64
        $region63: #{_lambda_.6} parent=11 // pred_region
          %s519 = ssub.s32 16, 16
          %520 = vsyncadd [#allocation11], %s519
          %s522 = sshll.u32 [#allocation12], 4
          %s523 = int_to_ptr.vmem [resolvable:$true] %s522
          %525 = dma.hbm_to_vmem [thread:$0]  %s13, 16, %s523, [#allocation11]
        $region64: #{_lambda_.6} parent=11 // pred_fallthru
          _
        // Predicated region
        $region65: #{_lambda_.6} parent=11 // pred_check
          %p526 = pneg %p348
        $region66: #{_lambda_.6} parent=11 // pred_check_branch
          %528 = sbr.rel (%p526) target = $region68
        $region67: #{_lambda_.6} parent=11 // pred_region
          _
        $region68: #{_lambda_.6} parent=11 // pred_fallthru
          _
        // Predicated region
        $region69: #{_lambda_.6} parent=11 // pred_check
          %p529 = pneg %p369
        $region70: #{_lambda_.6} parent=11 // pred_check_branch
          %531 = sbr.rel (%p529) target = $region72
        $region71: #{_lambda_.6} parent=11 // pred_region
          _
        $region72: #{_lambda_.6} parent=11 // pred_fallthru
          _
        // Predicated region
        $region73: #{_lambda_.6} parent=11 // pred_check
          %p532 = pneg %p390
        $region74: #{_lambda_.6} parent=11 // pred_check_branch
          %534 = sbr.rel (%p532) target = $region76
        $region75: #{_lambda_.6} parent=11 // pred_region
          %s536 = ssub.s32 16, 16
          %537 = vsyncadd [#allocation14], %s536
          %s539 = sshll.u32 [#allocation13], 4
          %s540 = int_to_ptr.vmem [resolvable:$true] %s539
          %542 = dma.hbm_to_vmem [thread:$0]  %s16, 16, %s540, [#allocation14]
        $region76: #{_lambda_.6} parent=11 // pred_fallthru
          _
      $region12: #{_lambda_.6} parent=5 // pred_fallthru
        _
      %p543 = scmp.lt.s32.totalorder %s28, 2
      // Predicated region
      $region77: #{_lambda_.6} parent=5 // pred_check
        %p544 = pneg %p543
      $region78: #{_lambda_.6} parent=5 // pred_check_branch
        %546 = sbr.rel (%p544) target = $region80
      $region79: #{_lambda_.6} parent=5 // pred_region
        // Predicated region
        $region81: #{_lambda_.6} parent=79 // pred_check
          %p547 = pneg %p48
        $region82: #{_lambda_.6} parent=79 // pred_check_branch
          %549 = sbr.rel (%p547) target = $region84
        $region83: #{_lambda_.6} parent=79 // pred_region
          %p550 = scmp.lt.s32.totalorder %s28, 1
          %s551 = scalar_select %p550, %s28, 1
          %s552 = smul.addr %s551, 8
          %s553 = scalar_lea.vmem %s0, %s552
        $region84: #{_lambda_.6} parent=79 // pred_fallthru
          _
      $region80: #{_lambda_.6} parent=5 // pred_fallthru
        _
      %p554 = scmp.le.s32.totalorder 1, %s28
      %p555 = scmp.lt.s32.totalorder %s28, 3
      %p556 = pnand %p554, %p555
      %p557 = pneg %p556
      // Predicated region
      $region85: #{_lambda_.6} parent=5 // pred_check
        _
      $region86: #{_lambda_.6} parent=5 // pred_check_branch
        %559 = sbr.rel (%p556) target = $region88
      $region87: #{_lambda_.6} parent=5 // pred_region
        %s560 = ssub.s32 %s28, 1
        // Predicated region
        $region89: #{_lambda_.6} parent=87 // pred_check
          %p561 = pneg %p75
        $region90: #{_lambda_.6} parent=87 // pred_check_branch
          %563 = sbr.rel (%p561) target = $region92
        $region91: #{_lambda_.6} parent=87 // pred_region
          %564 = dma.done [#allocation3], 16
        $region92: #{_lambda_.6} parent=87 // pred_fallthru
          _
        // Predicated region
        $region93: #{_lambda_.6} parent=87 // pred_check
          %p565 = pneg %p96
        $region94: #{_lambda_.6} parent=87 // pred_check_branch
          %567 = sbr.rel (%p565) target = $region96
        $region95: #{_lambda_.6} parent=87 // pred_region
          %568 = dma.done [#allocation5], 16
        $region96: #{_lambda_.6} parent=87 // pred_fallthru
          _
        // Predicated region
        $region97: #{_lambda_.6} parent=87 // pred_check
          %p569 = pneg %p201
        $region98: #{_lambda_.6} parent=87 // pred_check_branch
          %571 = sbr.rel (%p569) target = $region100
        $region99: #{_lambda_.6} parent=87 // pred_region
          %572 = dma.done [#allocation5], 16
        $region100: #{_lambda_.6} parent=87 // pred_fallthru
          _
        // Predicated region
        $region101: #{_lambda_.6} parent=87 // pred_check
          %p573 = pneg %p222
        $region102: #{_lambda_.6} parent=87 // pred_check_branch
          %575 = sbr.rel (%p573) target = $region104
        $region103: #{_lambda_.6} parent=87 // pred_region
          %576 = dma.done [#allocation8], 16
        $region104: #{_lambda_.6} parent=87 // pred_fallthru
          _
        // Predicated region
        $region105: #{_lambda_.6} parent=87 // pred_check
          %p577 = pneg %p264
        $region106: #{_lambda_.6} parent=87 // pred_check_branch
          %579 = sbr.rel (%p577) target = $region108
        $region107: #{_lambda_.6} parent=87 // pred_region
          %580 = dma.done [#allocation8], 128
        $region108: #{_lambda_.6} parent=87 // pred_fallthru
          _
        // Predicated region
        $region109: #{_lambda_.6} parent=87 // pred_check
          %p581 = pneg %p285
        $region110: #{_lambda_.6} parent=87 // pred_check_branch
          %583 = sbr.rel (%p581) target = $region112
        $region111: #{_lambda_.6} parent=87 // pred_region
          %584 = dma.done [#allocation11], 16
        $region112: #{_lambda_.6} parent=87 // pred_fallthru
          _
        // Predicated region
        $region113: #{_lambda_.6} parent=87 // pred_check
          %p585 = pneg %p327
        $region114: #{_lambda_.6} parent=87 // pred_check_branch
          %587 = sbr.rel (%p585) target = $region116
        $region115: #{_lambda_.6} parent=87 // pred_region
          %588 = dma.done [#allocation11], 16
        $region116: #{_lambda_.6} parent=87 // pred_fallthru
          _
        // Predicated region
        $region117: #{_lambda_.6} parent=87 // pred_check
          %p589 = pneg %p390
        $region118: #{_lambda_.6} parent=87 // pred_check_branch
          %591 = sbr.rel (%p589) target = $region120
        $region119: #{_lambda_.6} parent=87 // pred_region
          %592 = dma.done [#allocation14], 16
        $region120: #{_lambda_.6} parent=87 // pred_fallthru
          _
        %p593 = scmp.lt.s32.totalorder %s33, 1
        %s594 = scalar_select %p593, %s33, 1
        %s595 = smul.addr %s594, 8
        %s596 = scalar_lea.vmem %s0, %s595
        %p597 = pneg %p54
        %p598 = pneg %p51
        %p599 = pneg %p75
        %p600 = pneg %p72
        %p601 = pneg %p96
        %p602 = pneg %p93
        %p603 = pneg %p117
        %p604 = pneg %p114
        %p605 = pneg %p138
        %p606 = pneg %p135
        %p607 = pneg %p159
        %p608 = pneg %p156
        %p609 = pneg %p180
        %p610 = pneg %p177
        %p611 = pneg %p201
        %p612 = pneg %p198
        %p613 = pneg %p222
        %p614 = pneg %p219
        %p615 = pneg %p243
        %p616 = pneg %p240
        %p617 = pneg %p264
        %p618 = pneg %p261
        %p619 = pneg %p285
        %p620 = pneg %p282
        %p621 = pneg %p306
        %p622 = pneg %p303
        %p623 = pneg %p327
        %p624 = pneg %p324
        %p625 = pneg %p348
        %p626 = pneg %p345
        %p627 = pneg %p369
        %p628 = pneg %p366
        %p629 = pneg %p390
        %p630 = pneg %p387
        %p631 = pneg %p416
        %p632 = pneg %p413
        %p633 = scmp.lt.s32.totalorder %s33, 1
        %s634 = scalar_select %p633, %s33, 1
        %s635 = smul.addr %s634, 8
        %s636 = scalar_lea.vmem %s17, %s635
        %p637 = scmp.lt.s32.totalorder %s33, 1
        %s638 = scalar_select %p637, %s33, 1
        %s639 = smul.addr %s638, 8
        %s640 = scalar_lea.vmem %s0, %s639
        %p641 = scmp.lt.s32.totalorder %s33, 1
        %s642 = scalar_select %p641, %s33, 1
        %s643 = smul.addr %s642, 8
        %s644 = scalar_lea.vmem %s17, %s643
        %v645 = vld [vmem:[%s640] sm:$0xff]
        %v646 = vld [vmem:[#allocation2] sm:$0x1]
        %v647 = vld [vmem:[#allocation4] sm:$0x1]
        %vm648 = vcmask 64512
        %v649 = vsel %vm648, %v645, 0.0
        %650 = vadd.xlane.f32.xlu0 %v649
        %v651 = vpop.xlane.xlu0 %650
        %v652 = vrcp.pop 8.0
        %v653 = vmul.f32 %v651, %v652
        %v654 = vsub.f32 %v645, %v653
        %v655 = vmul.f32 %v654, %v654
        %v656 = vsel %vm648, %v655, 0.0
        %657 = vadd.xlane.f32.xlu0 %v656
        %v658 = vpop.xlane.xlu0 %657
        %v659 = vmul.f32 %v658, %v652
        %v660 = vadd.f32 %v659, 1e-05
        %v661 = vrsqrt.pop %v660
        %v662 = vmul.f32 %v654, %v661
        %v664 = vlaneseq
        %v665 = vshrl.u32 %v664, 7
        %v666 = vsub.s32 0, %v665
        %v667 = vrot.slane %v646, %v666
        %v669 = vmul.f32 %v662, %v667
        %v671 = vlaneseq
        %v672 = vshrl.u32 %v671, 7
        %v673 = vsub.s32 0, %v672
        %v674 = vrot.slane %v647, %v673
        %v676 = vadd.f32 %v669, %v674
        %v677 = vld [vmem:[%s15] sm:$0xff]
        %v678 = vld [vmem:[#allocation13] sm:$0x1]
        %v680 = vlaneseq
        %v681 = vshrl.u32 %v680, 7
        %v682 = vsub.s32 0, %v681
        %v683 = vrot.slane %v678, %v682
        %v686 = vsel %vm648, %v676, 0
        %688 = vmatprep.subr.mxu0 0.0
        %689 = vmatpush1.msra.mxu0 0.0
        %690 = vmatprep.subr.mxu0 0.0
        %691 = vmatpush1.msra.mxu0 0.0
        %692 = vmatprep.subr.mxu0 0.0
        %693 = vmatpush1.msra.mxu0 0.0
        %694 = vmatprep.subr.mxu0 0.0
        %695 = vmatpush1.msra.mxu0 0.0
        %696 = vmatprep.subr.mxu0 0.0
        %697 = vmatpush1.msra.mxu0 0.0
        %698 = vmatprep.subr.mxu0 0.0
        %699 = vmatpush1.msra.mxu0 0.0
        %700 = vmatprep.subr.mxu0 0.0
        %701 = vmatpush1.msra.mxu0 0.0
        %702 = vmatprep.subr.mxu0 0.0
        %703 = vmatpush1.msra.mxu0 0.0
        %704 = vmatprep.subr.mxu0 0.0
        %705 = vmatpush1.msra.mxu0 0.0
        %706 = vmatprep.subr.mxu0 0.0
        %707 = vmatpush1.msra.mxu0 0.0
        %708 = vmatprep.subr.mxu0 0.0
        %709 = vmatpush1.msra.mxu0 0.0
        %710 = vmatprep.subr.mxu0 0.0
        %711 = vmatpush1.msra.mxu0 0.0
        %712 = vmatprep.subr.mxu0 0.0
        %713 = vmatpush1.msra.mxu0 0.0
        %714 = vmatprep.subr.mxu0 0.0
        %715 = vmatpush1.msra.mxu0 0.0
        %716 = vmatprep.subr.mxu0 0.0
        %717 = vmatpush1.msra.mxu0 0.0
        %718 = vmatprep.subr.mxu0 0.0
        %719 = vmatpush1.msra.mxu0 %v677
        %720 = vmatprep.subr.mxu0 0.0
        %721 = vmatpush2.msra.mxu0 0.0
        %722 = vmatprep.subr.mxu0 0.0
        %723 = vmatpush2.msra.mxu0 0.0
        %724 = vmatprep.subr.mxu0 0.0
        %725 = vmatpush2.msra.mxu0 0.0
        %726 = vmatprep.subr.mxu0 0.0
        %727 = vmatpush2.msra.mxu0 0.0
        %728 = vmatprep.subr.mxu0 0.0
        %729 = vmatpush2.msra.mxu0 0.0
        %730 = vmatprep.subr.mxu0 0.0
        %731 = vmatpush2.msra.mxu0 0.0
        %732 = vmatprep.subr.mxu0 0.0
        %733 = vmatpush2.msra.mxu0 0.0
        %734 = vmatprep.subr.mxu0 0.0
        %735 = vmatpush2.msra.mxu0 0.0
        %736 = vmatprep.subr.mxu0 0.0
        %737 = vmatpush2.msra.mxu0 0.0
        %738 = vmatprep.subr.mxu0 0.0
        %739 = vmatpush2.msra.mxu0 0.0
        %740 = vmatprep.subr.mxu0 0.0
        %741 = vmatpush2.msra.mxu0 0.0
        %742 = vmatprep.subr.mxu0 0.0
        %743 = vmatpush2.msra.mxu0 0.0
        %744 = vmatprep.subr.mxu0 0.0
        %745 = vmatpush2.msra.mxu0 0.0
        %746 = vmatprep.subr.mxu0 0.0
        %747 = vmatpush2.msra.mxu0 0.0
        %748 = vmatprep.subr.mxu0 0.0
        %749 = vmatpush2.msra.mxu0 0.0
        %750 = vmatprep.subr.mxu0 0.0
        %751 = vmatpush2.msra.mxu0 0.0
        %752 = vmatprep.mubr.f32.mxu0 0.0
        %753 = vmatmul.mubr.f32.gmra.mxu0 %v686
        %v754 = vpop.f32.mrf.mxu0
        %v755 = vadd.f32 %v683, %v754
        %v756 = vpop.f32.mrf.mxu0
        %757 = vdwg.mxu0
        %v758 = vld [vmem:[%s3] sm:$0xff]
        %v759 = vld [vmem:[%s3 + $0x8] sm:$0xff]
        %v760 = vld [vmem:[%s3 + $0x10] sm:$0xff]
        %v761 = vld [vmem:[%s3 + $0x18] sm:$0xff]
        %v762 = vld [vmem:[%s3 + $0x20] sm:$0xff]
        %v763 = vld [vmem:[%s3 + $0x28] sm:$0xff]
        %v764 = vld [vmem:[%s3 + $0x30] sm:$0xff]
        %v765 = vld [vmem:[%s3 + $0x38] sm:$0xff]
        %v766 = vmul.f32 %v758, %v676
        %v767 = vmul.f32 %v759, %v676
        %v768 = vmul.f32 %v760, %v676
        %v769 = vmul.f32 %v761, %v676
        %v770 = vmul.f32 %v762, %v676
        %v771 = vmul.f32 %v763, %v676
        %v772 = vmul.f32 %v764, %v676
        %v773 = vmul.f32 %v765, %v676
        %v774 = vsel %vm648, %v766, 0.0
        %v775 = vrot.slane %v774, 4
        %v776 = vadd.f32 %v774, %v775
        %v777 = vrot.slane %v776, 2
        %v778 = vadd.f32 %v776, %v777
        %v779 = vrot.slane %v778, 1
        %v780 = vadd.f32 %v778, %v779
        %v781 = vsel %vm648, %v767, 0.0
        %v782 = vrot.slane %v781, 4
        %v783 = vadd.f32 %v781, %v782
        %v784 = vrot.slane %v783, 2
        %v785 = vadd.f32 %v783, %v784
        %v786 = vrot.slane %v785, 1
        %v787 = vadd.f32 %v785, %v786
        %v788 = vsel %vm648, %v768, 0.0
        %v789 = vrot.slane %v788, 4
        %v790 = vadd.f32 %v788, %v789
        %v791 = vrot.slane %v790, 2
        %v792 = vadd.f32 %v790, %v791
        %v793 = vrot.slane %v792, 1
        %v794 = vadd.f32 %v792, %v793
        %v795 = vsel %vm648, %v769, 0.0
        %v796 = vrot.slane %v795, 4
        %v797 = vadd.f32 %v795, %v796
        %v798 = vrot.slane %v797, 2
        %v799 = vadd.f32 %v797, %v798
        %v800 = vrot.slane %v799, 1
        %v801 = vadd.f32 %v799, %v800
        %v802 = vsel %vm648, %v770, 0.0
        %v803 = vrot.slane %v802, 4
        %v804 = vadd.f32 %v802, %v803
        %v805 = vrot.slane %v804, 2
        %v806 = vadd.f32 %v804, %v805
        %v807 = vrot.slane %v806, 1
        %v808 = vadd.f32 %v806, %v807
        %v809 = vsel %vm648, %v771, 0.0
        %v810 = vrot.slane %v809, 4
        %v811 = vadd.f32 %v809, %v810
        %v812 = vrot.slane %v811, 2
        %v813 = vadd.f32 %v811, %v812
        %v814 = vrot.slane %v813, 1
        %v815 = vadd.f32 %v813, %v814
        %v816 = vsel %vm648, %v772, 0.0
        %v817 = vrot.slane %v816, 4
        %v818 = vadd.f32 %v816, %v817
        %v819 = vrot.slane %v818, 2
        %v820 = vadd.f32 %v818, %v819
        %v821 = vrot.slane %v820, 1
        %v822 = vadd.f32 %v820, %v821
        %v823 = vsel %vm648, %v773, 0.0
        %v824 = vrot.slane %v823, 4
        %v825 = vadd.f32 %v823, %v824
        %v826 = vrot.slane %v825, 2
        %v827 = vadd.f32 %v825, %v826
        %v828 = vrot.slane %v827, 1
        %v829 = vadd.f32 %v827, %v828
        %v830 = vld [vmem:[%s4] sm:$0xff]
        %v832 = vrot.slane %v830, 1
        %v833 = vrot.slane %v830, 2
        %v834 = vrot.slane %v830, 3
        %v835 = vrot.slane %v830, 4
        %v836 = vrot.slane %v830, 5
        %v837 = vrot.slane %v830, 6
        %v838 = vrot.slane %v830, 7
        %v847 = vadd.f32 %v780, %v830
        %v848 = vadd.f32 %v787, %v832
        %v849 = vadd.f32 %v794, %v833
        %v850 = vadd.f32 %v801, %v834
        %v851 = vadd.f32 %v808, %v835
        %v852 = vadd.f32 %v815, %v836
        %v853 = vadd.f32 %v822, %v837
        %v854 = vadd.f32 %v829, %v838
        %v855 = vld [vmem:[%s5] sm:$0xff]
        %v856 = vld [vmem:[%s5 + $0x8] sm:$0xff]
        %v857 = vld [vmem:[%s5 + $0x10] sm:$0xff]
        %v858 = vld [vmem:[%s5 + $0x18] sm:$0xff]
        %v859 = vld [vmem:[%s5 + $0x20] sm:$0xff]
        %v860 = vld [vmem:[%s5 + $0x28] sm:$0xff]
        %v861 = vld [vmem:[%s5 + $0x30] sm:$0xff]
        %v862 = vld [vmem:[%s5 + $0x38] sm:$0xff]
        %v863 = vmul.f32 %v855, %v676
        %v864 = vmul.f32 %v856, %v676
        %v865 = vmul.f32 %v857, %v676
        %v866 = vmul.f32 %v858, %v676
        %v867 = vmul.f32 %v859, %v676
        %v868 = vmul.f32 %v860, %v676
        %v869 = vmul.f32 %v861, %v676
        %v870 = vmul.f32 %v862, %v676
        %v871 = vsel %vm648, %v863, 0.0
        %v872 = vrot.slane %v871, 4
        %v873 = vadd.f32 %v871, %v872
        %v874 = vrot.slane %v873, 2
        %v875 = vadd.f32 %v873, %v874
        %v876 = vrot.slane %v875, 1
        %v877 = vadd.f32 %v875, %v876
        %v878 = vsel %vm648, %v864, 0.0
        %v879 = vrot.slane %v878, 4
        %v880 = vadd.f32 %v878, %v879
        %v881 = vrot.slane %v880, 2
        %v882 = vadd.f32 %v880, %v881
        %v883 = vrot.slane %v882, 1
        %v884 = vadd.f32 %v882, %v883
        %v885 = vsel %vm648, %v865, 0.0
        %v886 = vrot.slane %v885, 4
        %v887 = vadd.f32 %v885, %v886
        %v888 = vrot.slane %v887, 2
        %v889 = vadd.f32 %v887, %v888
        %v890 = vrot.slane %v889, 1
        %v891 = vadd.f32 %v889, %v890
        %v892 = vsel %vm648, %v866, 0.0
        %v893 = vrot.slane %v892, 4
        %v894 = vadd.f32 %v892, %v893
        %v895 = vrot.slane %v894, 2
        %v896 = vadd.f32 %v894, %v895
        %v897 = vrot.slane %v896, 1
        %v898 = vadd.f32 %v896, %v897
        %v899 = vsel %vm648, %v867, 0.0
        %v900 = vrot.slane %v899, 4
        %v901 = vadd.f32 %v899, %v900
        %v902 = vrot.slane %v901, 2
        %v903 = vadd.f32 %v901, %v902
        %v904 = vrot.slane %v903, 1
        %v905 = vadd.f32 %v903, %v904
        %v906 = vsel %vm648, %v868, 0.0
        %v907 = vrot.slane %v906, 4
        %v908 = vadd.f32 %v906, %v907
        %v909 = vrot.slane %v908, 2
        %v910 = vadd.f32 %v908, %v909
        %v911 = vrot.slane %v910, 1
        %v912 = vadd.f32 %v910, %v911
        %v913 = vsel %vm648, %v869, 0.0
        %v914 = vrot.slane %v913, 4
        %v915 = vadd.f32 %v913, %v914
        %v916 = vrot.slane %v915, 2
        %v917 = vadd.f32 %v915, %v916
        %v918 = vrot.slane %v917, 1
        %v919 = vadd.f32 %v917, %v918
        %v920 = vsel %vm648, %v870, 0.0
        %v921 = vrot.slane %v920, 4
        %v922 = vadd.f32 %v920, %v921
        %v923 = vrot.slane %v922, 2
        %v924 = vadd.f32 %v922, %v923
        %v925 = vrot.slane %v924, 1
        %v926 = vadd.f32 %v924, %v925
        %v927 = vld [vmem:[%s6] sm:$0xff]
        %v929 = vrot.slane %v927, 1
        %v930 = vrot.slane %v927, 2
        %v931 = vrot.slane %v927, 3
        %v932 = vrot.slane %v927, 4
        %v933 = vrot.slane %v927, 5
        %v934 = vrot.slane %v927, 6
        %v935 = vrot.slane %v927, 7
        %v944 = vadd.f32 %v877, %v927
        %v945 = vadd.f32 %v884, %v929
        %v946 = vadd.f32 %v891, %v930
        %v947 = vadd.f32 %v898, %v931
        %v948 = vadd.f32 %v905, %v932
        %v949 = vadd.f32 %v912, %v933
        %v950 = vadd.f32 %v919, %v934
        %v951 = vadd.f32 %v926, %v935
        %v952 = vld [vmem:[#allocation6] sm:$0x1]
        %v953 = vld [vmem:[#allocation7] sm:$0x1]
        %v962 = vrot.slane %v848, 7
        %vm963 = vcmask 1041409
        %v964 = vsel %vm963, %v962, %v847
        %v965 = vrot.slane %v849, 6
        %vm966 = vcmask 1042434
        %v967 = vsel %vm966, %v965, %v964
        %v968 = vrot.slane %v850, 5
        %vm969 = vcmask 1043459
        %v970 = vsel %vm969, %v968, %v967
        %v971 = vrot.slane %v851, 4
        %vm972 = vcmask 1044484
        %v973 = vsel %vm972, %v971, %v970
        %v974 = vrot.slane %v852, 3
        %vm975 = vcmask 1045509
        %v976 = vsel %vm975, %v974, %v973
        %v977 = vrot.slane %v853, 2
        %vm978 = vcmask 1046534
        %v979 = vsel %vm978, %v977, %v976
        %v980 = vrot.slane %v854, 1
        %vm981 = vcmask 1047559
        %v982 = vsel %vm981, %v980, %v979
        %v984 = vsel %vm648, %v982, 0.0
        %985 = vadd.xlane.f32.xlu0 %v984
        %v986 = vpop.xlane.xlu0 %985
        %v987 = vmul.f32 %v986, %v652
        %v989 = vrot.slane %v987, 1
        %v990 = vrot.slane %v987, 2
        %v991 = vrot.slane %v987, 3
        %v992 = vrot.slane %v987, 4
        %v993 = vrot.slane %v987, 5
        %v994 = vrot.slane %v987, 6
        %v995 = vrot.slane %v987, 7
        %v1004 = vsub.f32 %v847, %v987
        %v1005 = vsub.f32 %v848, %v989
        %v1006 = vsub.f32 %v849, %v990
        %v1007 = vsub.f32 %v850, %v991
        %v1008 = vsub.f32 %v851, %v992
        %v1009 = vsub.f32 %v852, %v993
        %v1010 = vsub.f32 %v853, %v994
        %v1011 = vsub.f32 %v854, %v995
        %v1012 = vmul.f32 %v1004, %v1004
        %v1013 = vmul.f32 %v1005, %v1005
        %v1014 = vmul.f32 %v1006, %v1006
        %v1015 = vmul.f32 %v1007, %v1007
        %v1016 = vmul.f32 %v1008, %v1008
        %v1017 = vmul.f32 %v1009, %v1009
        %v1018 = vmul.f32 %v1010, %v1010
        %v1019 = vmul.f32 %v1011, %v1011
        %v1028 = vrot.slane %v1013, 7
        %v1029 = vsel %vm963, %v1028, %v1012
        %v1030 = vrot.slane %v1014, 6
        %v1031 = vsel %vm966, %v1030, %v1029
        %v1032 = vrot.slane %v1015, 5
        %v1033 = vsel %vm969, %v1032, %v1031
        %v1034 = vrot.slane %v1016, 4
        %v1035 = vsel %vm972, %v1034, %v1033
        %v1036 = vrot.slane %v1017, 3
        %v1037 = vsel %vm975, %v1036, %v1035
        %v1038 = vrot.slane %v1018, 2
        %v1039 = vsel %vm978, %v1038, %v1037
        %v1040 = vrot.slane %v1019, 1
        %v1041 = vsel %vm981, %v1040, %v1039
        %v1043 = vsel %vm648, %v1041, 0.0
        %1044 = vadd.xlane.f32.xlu0 %v1043
        %v1045 = vpop.xlane.xlu0 %1044
        %v1046 = vmul.f32 %v1045, %v652
        %v1047 = vadd.f32 %v1046, 1e-05
        %v1048 = vrsqrt.pop %v1047
        %v1050 = vrot.slane %v1048, 1
        %v1051 = vrot.slane %v1048, 2
        %v1052 = vrot.slane %v1048, 3
        %v1053 = vrot.slane %v1048, 4
        %v1054 = vrot.slane %v1048, 5
        %v1055 = vrot.slane %v1048, 6
        %v1056 = vrot.slane %v1048, 7
        %v1065 = vmul.f32 %v1004, %v1048
        %v1066 = vmul.f32 %v1005, %v1050
        %v1067 = vmul.f32 %v1006, %v1051
        %v1068 = vmul.f32 %v1007, %v1052
        %v1069 = vmul.f32 %v1008, %v1053
        %v1070 = vmul.f32 %v1009, %v1054
        %v1071 = vmul.f32 %v1010, %v1055
        %v1072 = vmul.f32 %v1011, %v1056
        %v1074 = vlaneseq
        %v1075 = vshrl.u32 %v1074, 7
        %v1076 = vsub.s32 0, %v1075
        %v1077 = vrot.slane %v952, %v1076
        %v1079 = vmul.f32 %v1065, %v1077
        %v1080 = vmul.f32 %v1066, %v1077
        %v1081 = vmul.f32 %v1067, %v1077
        %v1082 = vmul.f32 %v1068, %v1077
        %v1083 = vmul.f32 %v1069, %v1077
        %v1084 = vmul.f32 %v1070, %v1077
        %v1085 = vmul.f32 %v1071, %v1077
        %v1086 = vmul.f32 %v1072, %v1077
        %v1088 = vlaneseq
        %v1089 = vshrl.u32 %v1088, 7
        %v1090 = vsub.s32 0, %v1089
        %v1091 = vrot.slane %v953, %v1090
        %v1093 = vadd.f32 %v1079, %v1091
        %v1094 = vadd.f32 %v1080, %v1091
        %v1095 = vadd.f32 %v1081, %v1091
        %v1096 = vadd.f32 %v1082, %v1091
        %v1097 = vadd.f32 %v1083, %v1091
        %v1098 = vadd.f32 %v1084, %v1091
        %v1099 = vadd.f32 %v1085, %v1091
        %v1100 = vadd.f32 %v1086, %v1091
        %v1109 = vrot.slane %v945, 7
        %v1110 = vsel %vm963, %v1109, %v944
        %v1111 = vrot.slane %v946, 6
        %v1112 = vsel %vm966, %v1111, %v1110
        %v1113 = vrot.slane %v947, 5
        %v1114 = vsel %vm969, %v1113, %v1112
        %v1115 = vrot.slane %v948, 4
        %v1116 = vsel %vm972, %v1115, %v1114
        %v1117 = vrot.slane %v949, 3
        %v1118 = vsel %vm975, %v1117, %v1116
        %v1119 = vrot.slane %v950, 2
        %v1120 = vsel %vm978, %v1119, %v1118
        %v1121 = vrot.slane %v951, 1
        %v1122 = vsel %vm981, %v1121, %v1120
        %v1124 = vsel %vm648, %v1122, 0.0
        %1125 = vadd.xlane.f32.xlu0 %v1124
        %v1126 = vpop.xlane.xlu0 %1125
        %v1127 = vmul.f32 %v1126, %v652
        %v1129 = vrot.slane %v1127, 1
        %v1130 = vrot.slane %v1127, 2
        %v1131 = vrot.slane %v1127, 3
        %v1132 = vrot.slane %v1127, 4
        %v1133 = vrot.slane %v1127, 5
        %v1134 = vrot.slane %v1127, 6
        %v1135 = vrot.slane %v1127, 7
        %v1144 = vsub.f32 %v944, %v1127
        %v1145 = vsub.f32 %v945, %v1129
        %v1146 = vsub.f32 %v946, %v1130
        %v1147 = vsub.f32 %v947, %v1131
        %v1148 = vsub.f32 %v948, %v1132
        %v1149 = vsub.f32 %v949, %v1133
        %v1150 = vsub.f32 %v950, %v1134
        %v1151 = vsub.f32 %v951, %v1135
        %v1152 = vmul.f32 %v1144, %v1144
        %v1153 = vmul.f32 %v1145, %v1145
        %v1154 = vmul.f32 %v1146, %v1146
        %v1155 = vmul.f32 %v1147, %v1147
        %v1156 = vmul.f32 %v1148, %v1148
        %v1157 = vmul.f32 %v1149, %v1149
        %v1158 = vmul.f32 %v1150, %v1150
        %v1159 = vmul.f32 %v1151, %v1151
        %v1168 = vrot.slane %v1153, 7
        %v1169 = vsel %vm963, %v1168, %v1152
        %v1170 = vrot.slane %v1154, 6
        %v1171 = vsel %vm966, %v1170, %v1169
        %v1172 = vrot.slane %v1155, 5
        %v1173 = vsel %vm969, %v1172, %v1171
        %v1174 = vrot.slane %v1156, 4
        %v1175 = vsel %vm972, %v1174, %v1173
        %v1176 = vrot.slane %v1157, 3
        %v1177 = vsel %vm975, %v1176, %v1175
        %v1178 = vrot.slane %v1158, 2
        %v1179 = vsel %vm978, %v1178, %v1177
        %v1180 = vrot.slane %v1159, 1
        %v1181 = vsel %vm981, %v1180, %v1179
        %v1183 = vsel %vm648, %v1181, 0.0
        %1184 = vadd.xlane.f32.xlu0 %v1183
        %v1185 = vpop.xlane.xlu0 %1184
        %v1186 = vmul.f32 %v1185, %v652
        %v1187 = vadd.f32 %v1186, 1e-05
        %v1188 = vrsqrt.pop %v1187
        %v1190 = vrot.slane %v1188, 1
        %v1191 = vrot.slane %v1188, 2
        %v1192 = vrot.slane %v1188, 3
        %v1193 = vrot.slane %v1188, 4
        %v1194 = vrot.slane %v1188, 5
        %v1195 = vrot.slane %v1188, 6
        %v1196 = vrot.slane %v1188, 7
        %v1205 = vmul.f32 %v1144, %v1188
        %v1206 = vmul.f32 %v1145, %v1190
        %v1207 = vmul.f32 %v1146, %v1191
        %v1208 = vmul.f32 %v1147, %v1192
        %v1209 = vmul.f32 %v1148, %v1193
        %v1210 = vmul.f32 %v1149, %v1194
        %v1211 = vmul.f32 %v1150, %v1195
        %v1212 = vmul.f32 %v1151, %v1196
        %v1213 = vmul.f32 %v1205, %v1077
        %v1214 = vmul.f32 %v1206, %v1077
        %v1215 = vmul.f32 %v1207, %v1077
        %v1216 = vmul.f32 %v1208, %v1077
        %v1217 = vmul.f32 %v1209, %v1077
        %v1218 = vmul.f32 %v1210, %v1077
        %v1219 = vmul.f32 %v1211, %v1077
        %v1220 = vmul.f32 %v1212, %v1077
        %v1221 = vadd.f32 %v1213, %v1091
        %v1222 = vadd.f32 %v1214, %v1091
        %v1223 = vadd.f32 %v1215, %v1091
        %v1224 = vadd.f32 %v1216, %v1091
        %v1225 = vadd.f32 %v1217, %v1091
        %v1226 = vadd.f32 %v1218, %v1091
        %v1227 = vadd.f32 %v1219, %v1091
        %v1228 = vadd.f32 %v1220, %v1091
        %v1229 = vlaneseq
        %v1230 = vshrl.u32 %v1229, 7
        %v1231 = vsub.s32 0, %v1230
        %v1232 = vrot.slane %v1093, %v1231
        %v1233 = vlaneseq
        %v1234 = vshrl.u32 %v1233, 7
        %v1235 = vsub.s32 0, %v1234
        %v1236 = vrot.slane %v1094, %v1235
        %v1237 = vlaneseq
        %v1238 = vshrl.u32 %v1237, 7
        %v1239 = vsub.s32 0, %v1238
        %v1240 = vrot.slane %v1095, %v1239
        %v1241 = vlaneseq
        %v1242 = vshrl.u32 %v1241, 7
        %v1243 = vsub.s32 0, %v1242
        %v1244 = vrot.slane %v1096, %v1243
        %v1245 = vlaneseq
        %v1246 = vshrl.u32 %v1245, 7
        %v1247 = vsub.s32 0, %v1246
        %v1248 = vrot.slane %v1097, %v1247
        %v1249 = vlaneseq
        %v1250 = vshrl.u32 %v1249, 7
        %v1251 = vsub.s32 0, %v1250
        %v1252 = vrot.slane %v1098, %v1251
        %v1253 = vlaneseq
        %v1254 = vshrl.u32 %v1253, 7
        %v1255 = vsub.s32 0, %v1254
        %v1256 = vrot.slane %v1099, %v1255
        %v1257 = vlaneseq
        %v1258 = vshrl.u32 %v1257, 7
        %v1259 = vsub.s32 0, %v1258
        %v1260 = vrot.slane %v1100, %v1259
        %v1261 = vld [vmem:[%s9] sm:$0xff]
        %v1270 = vrot.slane %v1222, 7
        %v1271 = vsel %vm963, %v1270, %v1221
        %v1272 = vrot.slane %v1223, 6
        %v1273 = vsel %vm966, %v1272, %v1271
        %v1274 = vrot.slane %v1224, 5
        %v1275 = vsel %vm969, %v1274, %v1273
        %v1276 = vrot.slane %v1225, 4
        %v1277 = vsel %vm972, %v1276, %v1275
        %v1278 = vrot.slane %v1226, 3
        %v1279 = vsel %vm975, %v1278, %v1277
        %v1280 = vrot.slane %v1227, 2
        %v1281 = vsel %vm978, %v1280, %v1279
        %v1282 = vrot.slane %v1228, 1
        %v1283 = vsel %vm981, %v1282, %v1281
        %v1284 = vsel %vm648, %v1283, 0
        %1286 = vmatprep.subr.mxu0 0.0
        %1287 = vmatpush1.msra.mxu0 0.0
        %1288 = vmatprep.subr.mxu0 0.0
        %1289 = vmatpush1.msra.mxu0 0.0
        %1290 = vmatprep.subr.mxu0 0.0
        %1291 = vmatpush1.msra.mxu0 0.0
        %1292 = vmatprep.subr.mxu0 0.0
        %1293 = vmatpush1.msra.mxu0 0.0
        %1294 = vmatprep.subr.mxu0 0.0
        %1295 = vmatpush1.msra.mxu0 0.0
        %1296 = vmatprep.subr.mxu0 0.0
        %1297 = vmatpush1.msra.mxu0 0.0
        %1298 = vmatprep.subr.mxu0 0.0
        %1299 = vmatpush1.msra.mxu0 0.0
        %1300 = vmatprep.subr.mxu0 0.0
        %1301 = vmatpush1.msra.mxu0 0.0
        %1302 = vmatprep.subr.mxu0 0.0
        %1303 = vmatpush1.msra.mxu0 0.0
        %1304 = vmatprep.subr.mxu0 0.0
        %1305 = vmatpush1.msra.mxu0 0.0
        %1306 = vmatprep.subr.mxu0 0.0
        %1307 = vmatpush1.msra.mxu0 0.0
        %1308 = vmatprep.subr.mxu0 0.0
        %1309 = vmatpush1.msra.mxu0 0.0
        %1310 = vmatprep.subr.mxu0 0.0
        %1311 = vmatpush1.msra.mxu0 0.0
        %1312 = vmatprep.subr.mxu0 0.0
        %1313 = vmatpush1.msra.mxu0 0.0
        %1314 = vmatprep.subr.mxu0 0.0
        %1315 = vmatpush1.msra.mxu0 0.0
        %1316 = vmatprep.subr.mxu0 0.0
        %1317 = vmatpush1.msra.mxu0 %v1261
        %1318 = vmatprep.subr.mxu0 0.0
        %1319 = vmatpush2.msra.mxu0 0.0
        %1320 = vmatprep.subr.mxu0 0.0
        %1321 = vmatpush2.msra.mxu0 0.0
        %1322 = vmatprep.subr.mxu0 0.0
        %1323 = vmatpush2.msra.mxu0 0.0
        %1324 = vmatprep.subr.mxu0 0.0
        %1325 = vmatpush2.msra.mxu0 0.0
        %1326 = vmatprep.subr.mxu0 0.0
        %1327 = vmatpush2.msra.mxu0 0.0
        %1328 = vmatprep.subr.mxu0 0.0
        %1329 = vmatpush2.msra.mxu0 0.0
        %1330 = vmatprep.subr.mxu0 0.0
        %1331 = vmatpush2.msra.mxu0 0.0
        %1332 = vmatprep.subr.mxu0 0.0
        %1333 = vmatpush2.msra.mxu0 0.0
        %1334 = vmatprep.subr.mxu0 0.0
        %1335 = vmatpush2.msra.mxu0 0.0
        %1336 = vmatprep.subr.mxu0 0.0
        %1337 = vmatpush2.msra.mxu0 0.0
        %1338 = vmatprep.subr.mxu0 0.0
        %1339 = vmatpush2.msra.mxu0 0.0
        %1340 = vmatprep.subr.mxu0 0.0
        %1341 = vmatpush2.msra.mxu0 0.0
        %1342 = vmatprep.subr.mxu0 0.0
        %1343 = vmatpush2.msra.mxu0 0.0
        %1344 = vmatprep.subr.mxu0 0.0
        %1345 = vmatpush2.msra.mxu0 0.0
        %1346 = vmatprep.subr.mxu0 0.0
        %1347 = vmatpush2.msra.mxu0 0.0
        %1348 = vmatprep.subr.mxu0 0.0
        %1349 = vmatpush2.msra.mxu0 0.0
        %1350 = vmatprep.mubr.f32.mxu0 0.0
        %1351 = vmatmul.mubr.f32.gmra.mxu0 %v1284
        %v1352 = vpop.f32.mrf.mxu0
        %v1353 = vadd.f32 0.0, %v1352
        %v1354 = vpop.f32.mrf.mxu0
        %1355 = vmatprep.mubr.f32.mxu0 0.0
        %1356 = vmatmul.mubr.f32.gmra.mxu0 %v1284
        %v1357 = vpop.f32.mrf.mxu0
        %v1358 = vadd.f32 0.0, %v1357
        %v1359 = vpop.f32.mrf.mxu0
        %1360 = vmatprep.mubr.f32.mxu0 0.0
        %1361 = vmatmul.mubr.f32.gmra.mxu0 %v1284
        %v1362 = vpop.f32.mrf.mxu0
        %v1363 = vadd.f32 0.0, %v1362
        %v1364 = vpop.f32.mrf.mxu0
        %1365 = vmatprep.mubr.f32.mxu0 0.0
        %1366 = vmatmul.mubr.f32.gmra.mxu0 %v1284
        %v1367 = vpop.f32.mrf.mxu0
        %v1368 = vadd.f32 0.0, %v1367
        %v1369 = vpop.f32.mrf.mxu0
        %1370 = vmatprep.mubr.f32.mxu0 0.0
        %1371 = vmatmul.mubr.f32.gmra.mxu0 %v1284
        %v1372 = vpop.f32.mrf.mxu0
        %v1373 = vadd.f32 0.0, %v1372
        %v1374 = vpop.f32.mrf.mxu0
        %1375 = vmatprep.mubr.f32.mxu0 0.0
        %1376 = vmatmul.mubr.f32.gmra.mxu0 %v1284
        %v1377 = vpop.f32.mrf.mxu0
        %v1378 = vadd.f32 0.0, %v1377
        %v1379 = vpop.f32.mrf.mxu0
        %1380 = vmatprep.mubr.f32.mxu0 0.0
        %1381 = vmatmul.mubr.f32.gmra.mxu0 %v1284
        %v1382 = vpop.f32.mrf.mxu0
        %v1383 = vadd.f32 0.0, %v1382
        %v1384 = vpop.f32.mrf.mxu0
        %1385 = vmatprep.mubr.f32.mxu0 0.0
        %1386 = vmatmul.mubr.f32.gmra.mxu0 %v1284
        %v1387 = vpop.f32.mrf.mxu0
        %v1388 = vadd.f32 0.0, %v1387
        %v1389 = vpop.f32.mrf.mxu0
        %1390 = vdwg.mxu0
        %1392 = vset.pattern.permute.xlu0 0
        %1393 = vperm.xlu0 %1392, %v1232
        %v1394 = vpop.permute.xlu0 %1393
        %1397 = vset.pattern.permute.xlu0 0
        %1398 = vperm.xlu0 %1397, %v1236
        %v1399 = vpop.permute.xlu0 %1398
        %1402 = vset.pattern.permute.xlu0 0
        %1403 = vperm.xlu0 %1402, %v1240
        %v1404 = vpop.permute.xlu0 %1403
        %1407 = vset.pattern.permute.xlu0 0
        %1408 = vperm.xlu0 %1407, %v1244
        %v1409 = vpop.permute.xlu0 %1408
        %1412 = vset.pattern.permute.xlu0 0
        %1413 = vperm.xlu0 %1412, %v1248
        %v1414 = vpop.permute.xlu0 %1413
        %1417 = vset.pattern.permute.xlu0 0
        %1418 = vperm.xlu0 %1417, %v1252
        %v1419 = vpop.permute.xlu0 %1418
        %1422 = vset.pattern.permute.xlu0 0
        %1423 = vperm.xlu0 %1422, %v1256
        %v1424 = vpop.permute.xlu0 %1423
        %1427 = vset.pattern.permute.xlu0 0
        %1428 = vperm.xlu0 %1427, %v1260
        %v1429 = vpop.permute.xlu0 %1428
        %v1431 = vmul.f32 %v1394, %v1353
        %v1432 = vmul.f32 %v1399, %v1358
        %v1433 = vmul.f32 %v1404, %v1363
        %v1434 = vmul.f32 %v1409, %v1368
        %v1435 = vmul.f32 %v1414, %v1373
        %v1436 = vmul.f32 %v1419, %v1378
        %v1437 = vmul.f32 %v1424, %v1383
        %v1438 = vmul.f32 %v1429, %v1388
        %v1439 = vadd.f32 %v1431, 0.0
        %v1440 = vadd.f32 %v1432, 0.0
        %v1441 = vadd.f32 %v1433, 0.0
        %v1442 = vadd.f32 %v1434, 0.0
        %v1443 = vadd.f32 %v1435, 0.0
        %v1444 = vadd.f32 %v1436, 0.0
        %v1445 = vadd.f32 %v1437, 0.0
        %v1446 = vadd.f32 %v1438, 0.0
        %s1447 = scalar_lea.vmem %s9, 8
        %v1448 = vld [vmem:[%s1447] sm:$0xff]
        %1449 = vmatprep.subr.mxu0 0.0
        %1450 = vmatpush1.msra.mxu0 0.0
        %1451 = vmatprep.subr.mxu0 0.0
        %1452 = vmatpush1.msra.mxu0 0.0
        %1453 = vmatprep.subr.mxu0 0.0
        %1454 = vmatpush1.msra.mxu0 0.0
        %1455 = vmatprep.subr.mxu0 0.0
        %1456 = vmatpush1.msra.mxu0 0.0
        %1457 = vmatprep.subr.mxu0 0.0
        %1458 = vmatpush1.msra.mxu0 0.0
        %1459 = vmatprep.subr.mxu0 0.0
        %1460 = vmatpush1.msra.mxu0 0.0
        %1461 = vmatprep.subr.mxu0 0.0
        %1462 = vmatpush1.msra.mxu0 0.0
        %1463 = vmatprep.subr.mxu0 0.0
        %1464 = vmatpush1.msra.mxu0 0.0
        %1465 = vmatprep.subr.mxu0 0.0
        %1466 = vmatpush1.msra.mxu0 0.0
        %1467 = vmatprep.subr.mxu0 0.0
        %1468 = vmatpush1.msra.mxu0 0.0
        %1469 = vmatprep.subr.mxu0 0.0
        %1470 = vmatpush1.msra.mxu0 0.0
        %1471 = vmatprep.subr.mxu0 0.0
        %1472 = vmatpush1.msra.mxu0 0.0
        %1473 = vmatprep.subr.mxu0 0.0
        %1474 = vmatpush1.msra.mxu0 0.0
        %1475 = vmatprep.subr.mxu0 0.0
        %1476 = vmatpush1.msra.mxu0 0.0
        %1477 = vmatprep.subr.mxu0 0.0
        %1478 = vmatpush1.msra.mxu0 0.0
        %1479 = vmatprep.subr.mxu0 0.0
        %1480 = vmatpush1.msra.mxu0 %v1448
        %1481 = vmatprep.subr.mxu0 0.0
        %1482 = vmatpush2.msra.mxu0 0.0
        %1483 = vmatprep.subr.mxu0 0.0
        %1484 = vmatpush2.msra.mxu0 0.0
        %1485 = vmatprep.subr.mxu0 0.0
        %1486 = vmatpush2.msra.mxu0 0.0
        %1487 = vmatprep.subr.mxu0 0.0
        %1488 = vmatpush2.msra.mxu0 0.0
        %1489 = vmatprep.subr.mxu0 0.0
        %1490 = vmatpush2.msra.mxu0 0.0
        %1491 = vmatprep.subr.mxu0 0.0
        %1492 = vmatpush2.msra.mxu0 0.0
        %1493 = vmatprep.subr.mxu0 0.0
        %1494 = vmatpush2.msra.mxu0 0.0
        %1495 = vmatprep.subr.mxu0 0.0
        %1496 = vmatpush2.msra.mxu0 0.0
        %1497 = vmatprep.subr.mxu0 0.0
        %1498 = vmatpush2.msra.mxu0 0.0
        %1499 = vmatprep.subr.mxu0 0.0
        %1500 = vmatpush2.msra.mxu0 0.0
        %1501 = vmatprep.subr.mxu0 0.0
        %1502 = vmatpush2.msra.mxu0 0.0
        %1503 = vmatprep.subr.mxu0 0.0
        %1504 = vmatpush2.msra.mxu0 0.0
        %1505 = vmatprep.subr.mxu0 0.0
        %1506 = vmatpush2.msra.mxu0 0.0
        %1507 = vmatprep.subr.mxu0 0.0
        %1508 = vmatpush2.msra.mxu0 0.0
        %1509 = vmatprep.subr.mxu0 0.0
        %1510 = vmatpush2.msra.mxu0 0.0
        %1511 = vmatprep.subr.mxu0 0.0
        %1512 = vmatpush2.msra.mxu0 0.0
        %1513 = vmatprep.mubr.f32.mxu0 0.0
        %1514 = vmatmul.mubr.f32.gmra.mxu0 %v1284
        %v1515 = vpop.f32.mrf.mxu0
        %v1516 = vadd.f32 0.0, %v1515
        %v1517 = vpop.f32.mrf.mxu0
        %1518 = vmatprep.mubr.f32.mxu0 0.0
        %1519 = vmatmul.mubr.f32.gmra.mxu0 %v1284
        %v1520 = vpop.f32.mrf.mxu0
        %v1521 = vadd.f32 0.0, %v1520
        %v1522 = vpop.f32.mrf.mxu0
        %1523 = vmatprep.mubr.f32.mxu0 0.0
        %1524 = vmatmul.mubr.f32.gmra.mxu0 %v1284
        %v1525 = vpop.f32.mrf.mxu0
        %v1526 = vadd.f32 0.0, %v1525
        %v1527 = vpop.f32.mrf.mxu0
        %1528 = vmatprep.mubr.f32.mxu0 0.0
        %1529 = vmatmul.mubr.f32.gmra.mxu0 %v1284
        %v1530 = vpop.f32.mrf.mxu0
        %v1531 = vadd.f32 0.0, %v1530
        %v1532 = vpop.f32.mrf.mxu0
        %1533 = vmatprep.mubr.f32.mxu0 0.0
        %1534 = vmatmul.mubr.f32.gmra.mxu0 %v1284
        %v1535 = vpop.f32.mrf.mxu0
        %v1536 = vadd.f32 0.0, %v1535
        %v1537 = vpop.f32.mrf.mxu0
        %1538 = vmatprep.mubr.f32.mxu0 0.0
        %1539 = vmatmul.mubr.f32.gmra.mxu0 %v1284
        %v1540 = vpop.f32.mrf.mxu0
        %v1541 = vadd.f32 0.0, %v1540
        %v1542 = vpop.f32.mrf.mxu0
        %1543 = vmatprep.mubr.f32.mxu0 0.0
        %1544 = vmatmul.mubr.f32.gmra.mxu0 %v1284
        %v1545 = vpop.f32.mrf.mxu0
        %v1546 = vadd.f32 0.0, %v1545
        %v1547 = vpop.f32.mrf.mxu0
        %1548 = vmatprep.mubr.f32.mxu0 0.0
        %1549 = vmatmul.mubr.f32.gmra.mxu0 %v1284
        %v1550 = vpop.f32.mrf.mxu0
        %v1551 = vadd.f32 0.0, %v1550
        %v1552 = vpop.f32.mrf.mxu0
        %1553 = vdwg.mxu0
        %1554 = vset.pattern.permute.xlu0 1
        %1555 = vperm.xlu0 %1554, %v1232
        %v1556 = vpop.permute.xlu0 %1555
        %1558 = vset.pattern.permute.xlu0 1
        %1559 = vperm.xlu0 %1558, %v1236
        %v1560 = vpop.permute.xlu0 %1559
        %1562 = vset.pattern.permute.xlu0 1
        %1563 = vperm.xlu0 %1562, %v1240
        %v1564 = vpop.permute.xlu0 %1563
        %1566 = vset.pattern.permute.xlu0 1
        %1567 = vperm.xlu0 %1566, %v1244
        %v1568 = vpop.permute.xlu0 %1567
        %1570 = vset.pattern.permute.xlu0 1
        %1571 = vperm.xlu0 %1570, %v1248
        %v1572 = vpop.permute.xlu0 %1571
        %1574 = vset.pattern.permute.xlu0 1
        %1575 = vperm.xlu0 %1574, %v1252
        %v1576 = vpop.permute.xlu0 %1575
        %1578 = vset.pattern.permute.xlu0 1
        %1579 = vperm.xlu0 %1578, %v1256
        %v1580 = vpop.permute.xlu0 %1579
        %1582 = vset.pattern.permute.xlu0 1
        %1583 = vperm.xlu0 %1582, %v1260
        %v1584 = vpop.permute.xlu0 %1583
        %v1586 = vmul.f32 %v1556, %v1516
        %v1587 = vmul.f32 %v1560, %v1521
        %v1588 = vmul.f32 %v1564, %v1526
        %v1589 = vmul.f32 %v1568, %v1531
        %v1590 = vmul.f32 %v1572, %v1536
        %v1591 = vmul.f32 %v1576, %v1541
        %v1592 = vmul.f32 %v1580, %v1546
        %v1593 = vmul.f32 %v1584, %v1551
        %v1594 = vadd.f32 %v1439, %v1586
        %v1595 = vadd.f32 %v1440, %v1587
        %v1596 = vadd.f32 %v1441, %v1588
        %v1597 = vadd.f32 %v1442, %v1589
        %v1598 = vadd.f32 %v1443, %v1590
        %v1599 = vadd.f32 %v1444, %v1591
        %v1600 = vadd.f32 %v1445, %v1592
        %v1601 = vadd.f32 %v1446, %v1593
        %s1602 = scalar_lea.vmem %s9, 16
        %v1603 = vld [vmem:[%s1602] sm:$0xff]
        %1604 = vmatprep.subr.mxu0 0.0
        %1605 = vmatpush1.msra.mxu0 0.0
        %1606 = vmatprep.subr.mxu0 0.0
        %1607 = vmatpush1.msra.mxu0 0.0
        %1608 = vmatprep.subr.mxu0 0.0
        %1609 = vmatpush1.msra.mxu0 0.0
        %1610 = vmatprep.subr.mxu0 0.0
        %1611 = vmatpush1.msra.mxu0 0.0
        %1612 = vmatprep.subr.mxu0 0.0
        %1613 = vmatpush1.msra.mxu0 0.0
        %1614 = vmatprep.subr.mxu0 0.0
        %1615 = vmatpush1.msra.mxu0 0.0
        %1616 = vmatprep.subr.mxu0 0.0
        %1617 = vmatpush1.msra.mxu0 0.0
        %1618 = vmatprep.subr.mxu0 0.0
        %1619 = vmatpush1.msra.mxu0 0.0
        %1620 = vmatprep.subr.mxu0 0.0
        %1621 = vmatpush1.msra.mxu0 0.0
        %1622 = vmatprep.subr.mxu0 0.0
        %1623 = vmatpush1.msra.mxu0 0.0
        %1624 = vmatprep.subr.mxu0 0.0
        %1625 = vmatpush1.msra.mxu0 0.0
        %1626 = vmatprep.subr.mxu0 0.0
        %1627 = vmatpush1.msra.mxu0 0.0
        %1628 = vmatprep.subr.mxu0 0.0
        %1629 = vmatpush1.msra.mxu0 0.0
        %1630 = vmatprep.subr.mxu0 0.0
        %1631 = vmatpush1.msra.mxu0 0.0
        %1632 = vmatprep.subr.mxu0 0.0
        %1633 = vmatpush1.msra.mxu0 0.0
        %1634 = vmatprep.subr.mxu0 0.0
        %1635 = vmatpush1.msra.mxu0 %v1603
        %1636 = vmatprep.subr.mxu0 0.0
        %1637 = vmatpush2.msra.mxu0 0.0
        %1638 = vmatprep.subr.mxu0 0.0
        %1639 = vmatpush2.msra.mxu0 0.0
        %1640 = vmatprep.subr.mxu0 0.0
        %1641 = vmatpush2.msra.mxu0 0.0
        %1642 = vmatprep.subr.mxu0 0.0
        %1643 = vmatpush2.msra.mxu0 0.0
        %1644 = vmatprep.subr.mxu0 0.0
        %1645 = vmatpush2.msra.mxu0 0.0
        %1646 = vmatprep.subr.mxu0 0.0
        %1647 = vmatpush2.msra.mxu0 0.0
        %1648 = vmatprep.subr.mxu0 0.0
        %1649 = vmatpush2.msra.mxu0 0.0
        %1650 = vmatprep.subr.mxu0 0.0
        %1651 = vmatpush2.msra.mxu0 0.0
        %1652 = vmatprep.subr.mxu0 0.0
        %1653 = vmatpush2.msra.mxu0 0.0
        %1654 = vmatprep.subr.mxu0 0.0
        %1655 = vmatpush2.msra.mxu0 0.0
        %1656 = vmatprep.subr.mxu0 0.0
        %1657 = vmatpush2.msra.mxu0 0.0
        %1658 = vmatprep.subr.mxu0 0.0
        %1659 = vmatpush2.msra.mxu0 0.0
        %1660 = vmatprep.subr.mxu0 0.0
        %1661 = vmatpush2.msra.mxu0 0.0
        %1662 = vmatprep.subr.mxu0 0.0
        %1663 = vmatpush2.msra.mxu0 0.0
        %1664 = vmatprep.subr.mxu0 0.0
        %1665 = vmatpush2.msra.mxu0 0.0
        %1666 = vmatprep.subr.mxu0 0.0
        %1667 = vmatpush2.msra.mxu0 0.0
        %1668 = vmatprep.mubr.f32.mxu0 0.0
        %1669 = vmatmul.mubr.f32.gmra.mxu0 %v1284
        %v1670 = vpop.f32.mrf.mxu0
        %v1671 = vadd.f32 0.0, %v1670
        %v1672 = vpop.f32.mrf.mxu0
        %1673 = vmatprep.mubr.f32.mxu0 0.0
        %1674 = vmatmul.mubr.f32.gmra.mxu0 %v1284
        %v1675 = vpop.f32.mrf.mxu0
        %v1676 = vadd.f32 0.0, %v1675
        %v1677 = vpop.f32.mrf.mxu0
        %1678 = vmatprep.mubr.f32.mxu0 0.0
        %1679 = vmatmul.mubr.f32.gmra.mxu0 %v1284
        %v1680 = vpop.f32.mrf.mxu0
        %v1681 = vadd.f32 0.0, %v1680
        %v1682 = vpop.f32.mrf.mxu0
        %1683 = vmatprep.mubr.f32.mxu0 0.0
        %1684 = vmatmul.mubr.f32.gmra.mxu0 %v1284
        %v1685 = vpop.f32.mrf.mxu0
        %v1686 = vadd.f32 0.0, %v1685
        %v1687 = vpop.f32.mrf.mxu0
        %1688 = vmatprep.mubr.f32.mxu0 0.0
        %1689 = vmatmul.mubr.f32.gmra.mxu0 %v1284
        %v1690 = vpop.f32.mrf.mxu0
        %v1691 = vadd.f32 0.0, %v1690
        %v1692 = vpop.f32.mrf.mxu0
        %1693 = vmatprep.mubr.f32.mxu0 0.0
        %1694 = vmatmul.mubr.f32.gmra.mxu0 %v1284
        %v1695 = vpop.f32.mrf.mxu0
        %v1696 = vadd.f32 0.0, %v1695
        %v1697 = vpop.f32.mrf.mxu0
        %1698 = vmatprep.mubr.f32.mxu0 0.0
        %1699 = vmatmul.mubr.f32.gmra.mxu0 %v1284
        %v1700 = vpop.f32.mrf.mxu0
        %v1701 = vadd.f32 0.0, %v1700
        %v1702 = vpop.f32.mrf.mxu0
        %1703 = vmatprep.mubr.f32.mxu0 0.0
        %1704 = vmatmul.mubr.f32.gmra.mxu0 %v1284
        %v1705 = vpop.f32.mrf.mxu0
        %v1706 = vadd.f32 0.0, %v1705
        %v1707 = vpop.f32.mrf.mxu0
        %1708 = vdwg.mxu0
        %1709 = vset.pattern.permute.xlu0 2
        %1710 = vperm.xlu0 %1709, %v1232
        %v1711 = vpop.permute.xlu0 %1710
        %1713 = vset.pattern.permute.xlu0 2
        %1714 = vperm.xlu0 %1713, %v1236
        %v1715 = vpop.permute.xlu0 %1714
        %1717 = vset.pattern.permute.xlu0 2
        %1718 = vperm.xlu0 %1717, %v1240
        %v1719 = vpop.permute.xlu0 %1718
        %1721 = vset.pattern.permute.xlu0 2
        %1722 = vperm.xlu0 %1721, %v1244
        %v1723 = vpop.permute.xlu0 %1722
        %1725 = vset.pattern.permute.xlu0 2
        %1726 = vperm.xlu0 %1725, %v1248
        %v1727 = vpop.permute.xlu0 %1726
        %1729 = vset.pattern.permute.xlu0 2
        %1730 = vperm.xlu0 %1729, %v1252
        %v1731 = vpop.permute.xlu0 %1730
        %1733 = vset.pattern.permute.xlu0 2
        %1734 = vperm.xlu0 %1733, %v1256
        %v1735 = vpop.permute.xlu0 %1734
        %1737 = vset.pattern.permute.xlu0 2
        %1738 = vperm.xlu0 %1737, %v1260
        %v1739 = vpop.permute.xlu0 %1738
        %v1741 = vmul.f32 %v1711, %v1671
        %v1742 = vmul.f32 %v1715, %v1676
        %v1743 = vmul.f32 %v1719, %v1681
        %v1744 = vmul.f32 %v1723, %v1686
        %v1745 = vmul.f32 %v1727, %v1691
        %v1746 = vmul.f32 %v1731, %v1696
        %v1747 = vmul.f32 %v1735, %v1701
        %v1748 = vmul.f32 %v1739, %v1706
        %v1749 = vadd.f32 %v1594, %v1741
        %v1750 = vadd.f32 %v1595, %v1742
        %v1751 = vadd.f32 %v1596, %v1743
        %v1752 = vadd.f32 %v1597, %v1744
        %v1753 = vadd.f32 %v1598, %v1745
        %v1754 = vadd.f32 %v1599, %v1746
        %v1755 = vadd.f32 %v1600, %v1747
        %v1756 = vadd.f32 %v1601, %v1748
        %s1757 = scalar_lea.vmem %s9, 24
        %v1758 = vld [vmem:[%s1757] sm:$0xff]
        %1759 = vmatprep.subr.mxu0 0.0
        %1760 = vmatpush1.msra.mxu0 0.0
        %1761 = vmatprep.subr.mxu0 0.0
        %1762 = vmatpush1.msra.mxu0 0.0
        %1763 = vmatprep.subr.mxu0 0.0
        %1764 = vmatpush1.msra.mxu0 0.0
        %1765 = vmatprep.subr.mxu0 0.0
        %1766 = vmatpush1.msra.mxu0 0.0
        %1767 = vmatprep.subr.mxu0 0.0
        %1768 = vmatpush1.msra.mxu0 0.0
        %1769 = vmatprep.subr.mxu0 0.0
        %1770 = vmatpush1.msra.mxu0 0.0
        %1771 = vmatprep.subr.mxu0 0.0
        %1772 = vmatpush1.msra.mxu0 0.0
        %1773 = vmatprep.subr.mxu0 0.0
        %1774 = vmatpush1.msra.mxu0 0.0
        %1775 = vmatprep.subr.mxu0 0.0
        %1776 = vmatpush1.msra.mxu0 0.0
        %1777 = vmatprep.subr.mxu0 0.0
        %1778 = vmatpush1.msra.mxu0 0.0
        %1779 = vmatprep.subr.mxu0 0.0
        %1780 = vmatpush1.msra.mxu0 0.0
        %1781 = vmatprep.subr.mxu0 0.0
        %1782 = vmatpush1.msra.mxu0 0.0
        %1783 = vmatprep.subr.mxu0 0.0
        %1784 = vmatpush1.msra.mxu0 0.0
        %1785 = vmatprep.subr.mxu0 0.0
        %1786 = vmatpush1.msra.mxu0 0.0
        %1787 = vmatprep.subr.mxu0 0.0
        %1788 = vmatpush1.msra.mxu0 0.0
        %1789 = vmatprep.subr.mxu0 0.0
        %1790 = vmatpush1.msra.mxu0 %v1758
        %1791 = vmatprep.subr.mxu0 0.0
        %1792 = vmatpush2.msra.mxu0 0.0
        %1793 = vmatprep.subr.mxu0 0.0
        %1794 = vmatpush2.msra.mxu0 0.0
        %1795 = vmatprep.subr.mxu0 0.0
        %1796 = vmatpush2.msra.mxu0 0.0
        %1797 = vmatprep.subr.mxu0 0.0
        %1798 = vmatpush2.msra.mxu0 0.0
        %1799 = vmatprep.subr.mxu0 0.0
        %1800 = vmatpush2.msra.mxu0 0.0
        %1801 = vmatprep.subr.mxu0 0.0
        %1802 = vmatpush2.msra.mxu0 0.0
        %1803 = vmatprep.subr.mxu0 0.0
        %1804 = vmatpush2.msra.mxu0 0.0
        %1805 = vmatprep.subr.mxu0 0.0
        %1806 = vmatpush2.msra.mxu0 0.0
        %1807 = vmatprep.subr.mxu0 0.0
        %1808 = vmatpush2.msra.mxu0 0.0
        %1809 = vmatprep.subr.mxu0 0.0
        %1810 = vmatpush2.msra.mxu0 0.0
        %1811 = vmatprep.subr.mxu0 0.0
        %1812 = vmatpush2.msra.mxu0 0.0
        %1813 = vmatprep.subr.mxu0 0.0
        %1814 = vmatpush2.msra.mxu0 0.0
        %1815 = vmatprep.subr.mxu0 0.0
        %1816 = vmatpush2.msra.mxu0 0.0
        %1817 = vmatprep.subr.mxu0 0.0
        %1818 = vmatpush2.msra.mxu0 0.0
        %1819 = vmatprep.subr.mxu0 0.0
        %1820 = vmatpush2.msra.mxu0 0.0
        %1821 = vmatprep.subr.mxu0 0.0
        %1822 = vmatpush2.msra.mxu0 0.0
        %1823 = vmatprep.mubr.f32.mxu0 0.0
        %1824 = vmatmul.mubr.f32.gmra.mxu0 %v1284
        %v1825 = vpop.f32.mrf.mxu0
        %v1826 = vadd.f32 0.0, %v1825
        %v1827 = vpop.f32.mrf.mxu0
        %1828 = vmatprep.mubr.f32.mxu0 0.0
        %1829 = vmatmul.mubr.f32.gmra.mxu0 %v1284
        %v1830 = vpop.f32.mrf.mxu0
        %v1831 = vadd.f32 0.0, %v1830
        %v1832 = vpop.f32.mrf.mxu0
        %1833 = vmatprep.mubr.f32.mxu0 0.0
        %1834 = vmatmul.mubr.f32.gmra.mxu0 %v1284
        %v1835 = vpop.f32.mrf.mxu0
        %v1836 = vadd.f32 0.0, %v1835
        %v1837 = vpop.f32.mrf.mxu0
        %1838 = vmatprep.mubr.f32.mxu0 0.0
        %1839 = vmatmul.mubr.f32.gmra.mxu0 %v1284
        %v1840 = vpop.f32.mrf.mxu0
        %v1841 = vadd.f32 0.0, %v1840
        %v1842 = vpop.f32.mrf.mxu0
        %1843 = vmatprep.mubr.f32.mxu0 0.0
        %1844 = vmatmul.mubr.f32.gmra.mxu0 %v1284
        %v1845 = vpop.f32.mrf.mxu0
        %v1846 = vadd.f32 0.0, %v1845
        %v1847 = vpop.f32.mrf.mxu0
        %1848 = vmatprep.mubr.f32.mxu0 0.0
        %1849 = vmatmul.mubr.f32.gmra.mxu0 %v1284
        %v1850 = vpop.f32.mrf.mxu0
        %v1851 = vadd.f32 0.0, %v1850
        %v1852 = vpop.f32.mrf.mxu0
        %1853 = vmatprep.mubr.f32.mxu0 0.0
        %1854 = vmatmul.mubr.f32.gmra.mxu0 %v1284
        %v1855 = vpop.f32.mrf.mxu0
        %v1856 = vadd.f32 0.0, %v1855
        %v1857 = vpop.f32.mrf.mxu0
        %1858 = vmatprep.mubr.f32.mxu0 0.0
        %1859 = vmatmul.mubr.f32.gmra.mxu0 %v1284
        %v1860 = vpop.f32.mrf.mxu0
        %v1861 = vadd.f32 0.0, %v1860
        %v1862 = vpop.f32.mrf.mxu0
        %1863 = vdwg.mxu0
        %1864 = vset.pattern.permute.xlu0 3
        %1865 = vperm.xlu0 %1864, %v1232
        %v1866 = vpop.permute.xlu0 %1865
        %1868 = vset.pattern.permute.xlu0 3
        %1869 = vperm.xlu0 %1868, %v1236
        %v1870 = vpop.permute.xlu0 %1869
        %1872 = vset.pattern.permute.xlu0 3
        %1873 = vperm.xlu0 %1872, %v1240
        %v1874 = vpop.permute.xlu0 %1873
        %1876 = vset.pattern.permute.xlu0 3
        %1877 = vperm.xlu0 %1876, %v1244
        %v1878 = vpop.permute.xlu0 %1877
        %1880 = vset.pattern.permute.xlu0 3
        %1881 = vperm.xlu0 %1880, %v1248
        %v1882 = vpop.permute.xlu0 %1881
        %1884 = vset.pattern.permute.xlu0 3
        %1885 = vperm.xlu0 %1884, %v1252
        %v1886 = vpop.permute.xlu0 %1885
        %1888 = vset.pattern.permute.xlu0 3
        %1889 = vperm.xlu0 %1888, %v1256
        %v1890 = vpop.permute.xlu0 %1889
        %1892 = vset.pattern.permute.xlu0 3
        %1893 = vperm.xlu0 %1892, %v1260
        %v1894 = vpop.permute.xlu0 %1893
        %v1896 = vmul.f32 %v1866, %v1826
        %v1897 = vmul.f32 %v1870, %v1831
        %v1898 = vmul.f32 %v1874, %v1836
        %v1899 = vmul.f32 %v1878, %v1841
        %v1900 = vmul.f32 %v1882, %v1846
        %v1901 = vmul.f32 %v1886, %v1851
        %v1902 = vmul.f32 %v1890, %v1856
        %v1903 = vmul.f32 %v1894, %v1861
        %v1904 = vadd.f32 %v1749, %v1896
        %v1905 = vadd.f32 %v1750, %v1897
        %v1906 = vadd.f32 %v1751, %v1898
        %v1907 = vadd.f32 %v1752, %v1899
        %v1908 = vadd.f32 %v1753, %v1900
        %v1909 = vadd.f32 %v1754, %v1901
        %v1910 = vadd.f32 %v1755, %v1902
        %v1911 = vadd.f32 %v1756, %v1903
        %s1912 = scalar_lea.vmem %s9, 32
        %v1913 = vld [vmem:[%s1912] sm:$0xff]
        %1914 = vmatprep.subr.mxu0 0.0
        %1915 = vmatpush1.msra.mxu0 0.0
        %1916 = vmatprep.subr.mxu0 0.0
        %1917 = vmatpush1.msra.mxu0 0.0
        %1918 = vmatprep.subr.mxu0 0.0
        %1919 = vmatpush1.msra.mxu0 0.0
        %1920 = vmatprep.subr.mxu0 0.0
        %1921 = vmatpush1.msra.mxu0 0.0
        %1922 = vmatprep.subr.mxu0 0.0
        %1923 = vmatpush1.msra.mxu0 0.0
        %1924 = vmatprep.subr.mxu0 0.0
        %1925 = vmatpush1.msra.mxu0 0.0
        %1926 = vmatprep.subr.mxu0 0.0
        %1927 = vmatpush1.msra.mxu0 0.0
        %1928 = vmatprep.subr.mxu0 0.0
        %1929 = vmatpush1.msra.mxu0 0.0
        %1930 = vmatprep.subr.mxu0 0.0
        %1931 = vmatpush1.msra.mxu0 0.0
        %1932 = vmatprep.subr.mxu0 0.0
        %1933 = vmatpush1.msra.mxu0 0.0
        %1934 = vmatprep.subr.mxu0 0.0
        %1935 = vmatpush1.msra.mxu0 0.0
        %1936 = vmatprep.subr.mxu0 0.0
        %1937 = vmatpush1.msra.mxu0 0.0
        %1938 = vmatprep.subr.mxu0 0.0
        %1939 = vmatpush1.msra.mxu0 0.0
        %1940 = vmatprep.subr.mxu0 0.0
        %1941 = vmatpush1.msra.mxu0 0.0
        %1942 = vmatprep.subr.mxu0 0.0
        %1943 = vmatpush1.msra.mxu0 0.0
        %1944 = vmatprep.subr.mxu0 0.0
        %1945 = vmatpush1.msra.mxu0 %v1913
        %1946 = vmatprep.subr.mxu0 0.0
        %1947 = vmatpush2.msra.mxu0 0.0
        %1948 = vmatprep.subr.mxu0 0.0
        %1949 = vmatpush2.msra.mxu0 0.0
        %1950 = vmatprep.subr.mxu0 0.0
        %1951 = vmatpush2.msra.mxu0 0.0
        %1952 = vmatprep.subr.mxu0 0.0
        %1953 = vmatpush2.msra.mxu0 0.0
        %1954 = vmatprep.subr.mxu0 0.0
        %1955 = vmatpush2.msra.mxu0 0.0
        %1956 = vmatprep.subr.mxu0 0.0
        %1957 = vmatpush2.msra.mxu0 0.0
        %1958 = vmatprep.subr.mxu0 0.0
        %1959 = vmatpush2.msra.mxu0 0.0
        %1960 = vmatprep.subr.mxu0 0.0
        %1961 = vmatpush2.msra.mxu0 0.0
        %1962 = vmatprep.subr.mxu0 0.0
        %1963 = vmatpush2.msra.mxu0 0.0
        %1964 = vmatprep.subr.mxu0 0.0
        %1965 = vmatpush2.msra.mxu0 0.0
        %1966 = vmatprep.subr.mxu0 0.0
        %1967 = vmatpush2.msra.mxu0 0.0
        %1968 = vmatprep.subr.mxu0 0.0
        %1969 = vmatpush2.msra.mxu0 0.0
        %1970 = vmatprep.subr.mxu0 0.0
        %1971 = vmatpush2.msra.mxu0 0.0
        %1972 = vmatprep.subr.mxu0 0.0
        %1973 = vmatpush2.msra.mxu0 0.0
        %1974 = vmatprep.subr.mxu0 0.0
        %1975 = vmatpush2.msra.mxu0 0.0
        %1976 = vmatprep.subr.mxu0 0.0
        %1977 = vmatpush2.msra.mxu0 0.0
        %1978 = vmatprep.mubr.f32.mxu0 0.0
        %1979 = vmatmul.mubr.f32.gmra.mxu0 %v1284
        %v1980 = vpop.f32.mrf.mxu0
        %v1981 = vadd.f32 0.0, %v1980
        %v1982 = vpop.f32.mrf.mxu0
        %1983 = vmatprep.mubr.f32.mxu0 0.0
        %1984 = vmatmul.mubr.f32.gmra.mxu0 %v1284
        %v1985 = vpop.f32.mrf.mxu0
        %v1986 = vadd.f32 0.0, %v1985
        %v1987 = vpop.f32.mrf.mxu0
        %1988 = vmatprep.mubr.f32.mxu0 0.0
        %1989 = vmatmul.mubr.f32.gmra.mxu0 %v1284
        %v1990 = vpop.f32.mrf.mxu0
        %v1991 = vadd.f32 0.0, %v1990
        %v1992 = vpop.f32.mrf.mxu0
        %1993 = vmatprep.mubr.f32.mxu0 0.0
        %1994 = vmatmul.mubr.f32.gmra.mxu0 %v1284
        %v1995 = vpop.f32.mrf.mxu0
        %v1996 = vadd.f32 0.0, %v1995
        %v1997 = vpop.f32.mrf.mxu0
        %1998 = vmatprep.mubr.f32.mxu0 0.0
        %1999 = vmatmul.mubr.f32.gmra.mxu0 %v1284
        %v2000 = vpop.f32.mrf.mxu0
        %v2001 = vadd.f32 0.0, %v2000
        %v2002 = vpop.f32.mrf.mxu0
        %2003 = vmatprep.mubr.f32.mxu0 0.0
        %2004 = vmatmul.mubr.f32.gmra.mxu0 %v1284
        %v2005 = vpop.f32.mrf.mxu0
        %v2006 = vadd.f32 0.0, %v2005
        %v2007 = vpop.f32.mrf.mxu0
        %2008 = vmatprep.mubr.f32.mxu0 0.0
        %2009 = vmatmul.mubr.f32.gmra.mxu0 %v1284
        %v2010 = vpop.f32.mrf.mxu0
        %v2011 = vadd.f32 0.0, %v2010
        %v2012 = vpop.f32.mrf.mxu0
        %2013 = vmatprep.mubr.f32.mxu0 0.0
        %2014 = vmatmul.mubr.f32.gmra.mxu0 %v1284
        %v2015 = vpop.f32.mrf.mxu0
        %v2016 = vadd.f32 0.0, %v2015
        %v2017 = vpop.f32.mrf.mxu0
        %2018 = vdwg.mxu0
        %2019 = vset.pattern.permute.xlu0 4
        %2020 = vperm.xlu0 %2019, %v1232
        %v2021 = vpop.permute.xlu0 %2020
        %2023 = vset.pattern.permute.xlu0 4
        %2024 = vperm.xlu0 %2023, %v1236
        %v2025 = vpop.permute.xlu0 %2024
        %2027 = vset.pattern.permute.xlu0 4
        %2028 = vperm.xlu0 %2027, %v1240
        %v2029 = vpop.permute.xlu0 %2028
        %2031 = vset.pattern.permute.xlu0 4
        %2032 = vperm.xlu0 %2031, %v1244
        %v2033 = vpop.permute.xlu0 %2032
        %2035 = vset.pattern.permute.xlu0 4
        %2036 = vperm.xlu0 %2035, %v1248
        %v2037 = vpop.permute.xlu0 %2036
        %2039 = vset.pattern.permute.xlu0 4
        %2040 = vperm.xlu0 %2039, %v1252
        %v2041 = vpop.permute.xlu0 %2040
        %2043 = vset.pattern.permute.xlu0 4
        %2044 = vperm.xlu0 %2043, %v1256
        %v2045 = vpop.permute.xlu0 %2044
        %2047 = vset.pattern.permute.xlu0 4
        %2048 = vperm.xlu0 %2047, %v1260
        %v2049 = vpop.permute.xlu0 %2048
        %v2051 = vmul.f32 %v2021, %v1981
        %v2052 = vmul.f32 %v2025, %v1986
        %v2053 = vmul.f32 %v2029, %v1991
        %v2054 = vmul.f32 %v2033, %v1996
        %v2055 = vmul.f32 %v2037, %v2001
        %v2056 = vmul.f32 %v2041, %v2006
        %v2057 = vmul.f32 %v2045, %v2011
        %v2058 = vmul.f32 %v2049, %v2016
        %v2059 = vadd.f32 %v1904, %v2051
        %v2060 = vadd.f32 %v1905, %v2052
        %v2061 = vadd.f32 %v1906, %v2053
        %v2062 = vadd.f32 %v1907, %v2054
        %v2063 = vadd.f32 %v1908, %v2055
        %v2064 = vadd.f32 %v1909, %v2056
        %v2065 = vadd.f32 %v1910, %v2057
        %v2066 = vadd.f32 %v1911, %v2058
        %s2067 = scalar_lea.vmem %s9, 40
        %v2068 = vld [vmem:[%s2067] sm:$0xff]
        %2069 = vmatprep.subr.mxu0 0.0
        %2070 = vmatpush1.msra.mxu0 0.0
        %2071 = vmatprep.subr.mxu0 0.0
        %2072 = vmatpush1.msra.mxu0 0.0
        %2073 = vmatprep.subr.mxu0 0.0
        %2074 = vmatpush1.msra.mxu0 0.0
        %2075 = vmatprep.subr.mxu0 0.0
        %2076 = vmatpush1.msra.mxu0 0.0
        %2077 = vmatprep.subr.mxu0 0.0
        %2078 = vmatpush1.msra.mxu0 0.0
        %2079 = vmatprep.subr.mxu0 0.0
        %2080 = vmatpush1.msra.mxu0 0.0
        %2081 = vmatprep.subr.mxu0 0.0
        %2082 = vmatpush1.msra.mxu0 0.0
        %2083 = vmatprep.subr.mxu0 0.0
        %2084 = vmatpush1.msra.mxu0 0.0
        %2085 = vmatprep.subr.mxu0 0.0
        %2086 = vmatpush1.msra.mxu0 0.0
        %2087 = vmatprep.subr.mxu0 0.0
        %2088 = vmatpush1.msra.mxu0 0.0
        %2089 = vmatprep.subr.mxu0 0.0
        %2090 = vmatpush1.msra.mxu0 0.0
        %2091 = vmatprep.subr.mxu0 0.0
        %2092 = vmatpush1.msra.mxu0 0.0
        %2093 = vmatprep.subr.mxu0 0.0
        %2094 = vmatpush1.msra.mxu0 0.0
        %2095 = vmatprep.subr.mxu0 0.0
        %2096 = vmatpush1.msra.mxu0 0.0
        %2097 = vmatprep.subr.mxu0 0.0
        %2098 = vmatpush1.msra.mxu0 0.0
        %2099 = vmatprep.subr.mxu0 0.0
        %2100 = vmatpush1.msra.mxu0 %v2068
        %2101 = vmatprep.subr.mxu0 0.0
        %2102 = vmatpush2.msra.mxu0 0.0
        %2103 = vmatprep.subr.mxu0 0.0
        %2104 = vmatpush2.msra.mxu0 0.0
        %2105 = vmatprep.subr.mxu0 0.0
        %2106 = vmatpush2.msra.mxu0 0.0
        %2107 = vmatprep.subr.mxu0 0.0
        %2108 = vmatpush2.msra.mxu0 0.0
        %2109 = vmatprep.subr.mxu0 0.0
        %2110 = vmatpush2.msra.mxu0 0.0
        %2111 = vmatprep.subr.mxu0 0.0
        %2112 = vmatpush2.msra.mxu0 0.0
        %2113 = vmatprep.subr.mxu0 0.0
        %2114 = vmatpush2.msra.mxu0 0.0
        %2115 = vmatprep.subr.mxu0 0.0
        %2116 = vmatpush2.msra.mxu0 0.0
        %2117 = vmatprep.subr.mxu0 0.0
        %2118 = vmatpush2.msra.mxu0 0.0
        %2119 = vmatprep.subr.mxu0 0.0
        %2120 = vmatpush2.msra.mxu0 0.0
        %2121 = vmatprep.subr.mxu0 0.0
        %2122 = vmatpush2.msra.mxu0 0.0
        %2123 = vmatprep.subr.mxu0 0.0
        %2124 = vmatpush2.msra.mxu0 0.0
        %2125 = vmatprep.subr.mxu0 0.0
        %2126 = vmatpush2.msra.mxu0 0.0
        %2127 = vmatprep.subr.mxu0 0.0
        %2128 = vmatpush2.msra.mxu0 0.0
        %2129 = vmatprep.subr.mxu0 0.0
        %2130 = vmatpush2.msra.mxu0 0.0
        %2131 = vmatprep.subr.mxu0 0.0
        %2132 = vmatpush2.msra.mxu0 0.0
        %2133 = vmatprep.mubr.f32.mxu0 0.0
        %2134 = vmatmul.mubr.f32.gmra.mxu0 %v1284
        %v2135 = vpop.f32.mrf.mxu0
        %v2136 = vadd.f32 0.0, %v2135
        %v2137 = vpop.f32.mrf.mxu0
        %2138 = vmatprep.mubr.f32.mxu0 0.0
        %2139 = vmatmul.mubr.f32.gmra.mxu0 %v1284
        %v2140 = vpop.f32.mrf.mxu0
        %v2141 = vadd.f32 0.0, %v2140
        %v2142 = vpop.f32.mrf.mxu0
        %2143 = vmatprep.mubr.f32.mxu0 0.0
        %2144 = vmatmul.mubr.f32.gmra.mxu0 %v1284
        %v2145 = vpop.f32.mrf.mxu0
        %v2146 = vadd.f32 0.0, %v2145
        %v2147 = vpop.f32.mrf.mxu0
        %2148 = vmatprep.mubr.f32.mxu0 0.0
        %2149 = vmatmul.mubr.f32.gmra.mxu0 %v1284
        %v2150 = vpop.f32.mrf.mxu0
        %v2151 = vadd.f32 0.0, %v2150
        %v2152 = vpop.f32.mrf.mxu0
        %2153 = vmatprep.mubr.f32.mxu0 0.0
        %2154 = vmatmul.mubr.f32.gmra.mxu0 %v1284
        %v2155 = vpop.f32.mrf.mxu0
        %v2156 = vadd.f32 0.0, %v2155
        %v2157 = vpop.f32.mrf.mxu0
        %2158 = vmatprep.mubr.f32.mxu0 0.0
        %2159 = vmatmul.mubr.f32.gmra.mxu0 %v1284
        %v2160 = vpop.f32.mrf.mxu0
        %v2161 = vadd.f32 0.0, %v2160
        %v2162 = vpop.f32.mrf.mxu0
        %2163 = vmatprep.mubr.f32.mxu0 0.0
        %2164 = vmatmul.mubr.f32.gmra.mxu0 %v1284
        %v2165 = vpop.f32.mrf.mxu0
        %v2166 = vadd.f32 0.0, %v2165
        %v2167 = vpop.f32.mrf.mxu0
        %2168 = vmatprep.mubr.f32.mxu0 0.0
        %2169 = vmatmul.mubr.f32.gmra.mxu0 %v1284
        %v2170 = vpop.f32.mrf.mxu0
        %v2171 = vadd.f32 0.0, %v2170
        %v2172 = vpop.f32.mrf.mxu0
        %2173 = vdwg.mxu0
        %2174 = vset.pattern.permute.xlu0 5
        %2175 = vperm.xlu0 %2174, %v1232
        %v2176 = vpop.permute.xlu0 %2175
        %2178 = vset.pattern.permute.xlu0 5
        %2179 = vperm.xlu0 %2178, %v1236
        %v2180 = vpop.permute.xlu0 %2179
        %2182 = vset.pattern.permute.xlu0 5
        %2183 = vperm.xlu0 %2182, %v1240
        %v2184 = vpop.permute.xlu0 %2183
        %2186 = vset.pattern.permute.xlu0 5
        %2187 = vperm.xlu0 %2186, %v1244
        %v2188 = vpop.permute.xlu0 %2187
        %2190 = vset.pattern.permute.xlu0 5
        %2191 = vperm.xlu0 %2190, %v1248
        %v2192 = vpop.permute.xlu0 %2191
        %2194 = vset.pattern.permute.xlu0 5
        %2195 = vperm.xlu0 %2194, %v1252
        %v2196 = vpop.permute.xlu0 %2195
        %2198 = vset.pattern.permute.xlu0 5
        %2199 = vperm.xlu0 %2198, %v1256
        %v2200 = vpop.permute.xlu0 %2199
        %2202 = vset.pattern.permute.xlu0 5
        %2203 = vperm.xlu0 %2202, %v1260
        %v2204 = vpop.permute.xlu0 %2203
        %v2206 = vmul.f32 %v2176, %v2136
        %v2207 = vmul.f32 %v2180, %v2141
        %v2208 = vmul.f32 %v2184, %v2146
        %v2209 = vmul.f32 %v2188, %v2151
        %v2210 = vmul.f32 %v2192, %v2156
        %v2211 = vmul.f32 %v2196, %v2161
        %v2212 = vmul.f32 %v2200, %v2166
        %v2213 = vmul.f32 %v2204, %v2171
        %v2214 = vadd.f32 %v2059, %v2206
        %v2215 = vadd.f32 %v2060, %v2207
        %v2216 = vadd.f32 %v2061, %v2208
        %v2217 = vadd.f32 %v2062, %v2209
        %v2218 = vadd.f32 %v2063, %v2210
        %v2219 = vadd.f32 %v2064, %v2211
        %v2220 = vadd.f32 %v2065, %v2212
        %v2221 = vadd.f32 %v2066, %v2213
        %s2222 = scalar_lea.vmem %s9, 48
        %v2223 = vld [vmem:[%s2222] sm:$0xff]
        %2224 = vmatprep.subr.mxu0 0.0
        %2225 = vmatpush1.msra.mxu0 0.0
        %2226 = vmatprep.subr.mxu0 0.0
        %2227 = vmatpush1.msra.mxu0 0.0
        %2228 = vmatprep.subr.mxu0 0.0
        %2229 = vmatpush1.msra.mxu0 0.0
        %2230 = vmatprep.subr.mxu0 0.0
        %2231 = vmatpush1.msra.mxu0 0.0
        %2232 = vmatprep.subr.mxu0 0.0
        %2233 = vmatpush1.msra.mxu0 0.0
        %2234 = vmatprep.subr.mxu0 0.0
        %2235 = vmatpush1.msra.mxu0 0.0
        %2236 = vmatprep.subr.mxu0 0.0
        %2237 = vmatpush1.msra.mxu0 0.0
        %2238 = vmatprep.subr.mxu0 0.0
        %2239 = vmatpush1.msra.mxu0 0.0
        %2240 = vmatprep.subr.mxu0 0.0
        %2241 = vmatpush1.msra.mxu0 0.0
        %2242 = vmatprep.subr.mxu0 0.0
        %2243 = vmatpush1.msra.mxu0 0.0
        %2244 = vmatprep.subr.mxu0 0.0
        %2245 = vmatpush1.msra.mxu0 0.0
        %2246 = vmatprep.subr.mxu0 0.0
        %2247 = vmatpush1.msra.mxu0 0.0
        %2248 = vmatprep.subr.mxu0 0.0
        %2249 = vmatpush1.msra.mxu0 0.0
        %2250 = vmatprep.subr.mxu0 0.0
        %2251 = vmatpush1.msra.mxu0 0.0
        %2252 = vmatprep.subr.mxu0 0.0
        %2253 = vmatpush1.msra.mxu0 0.0
        %2254 = vmatprep.subr.mxu0 0.0
        %2255 = vmatpush1.msra.mxu0 %v2223
        %2256 = vmatprep.subr.mxu0 0.0
        %2257 = vmatpush2.msra.mxu0 0.0
        %2258 = vmatprep.subr.mxu0 0.0
        %2259 = vmatpush2.msra.mxu0 0.0
        %2260 = vmatprep.subr.mxu0 0.0
        %2261 = vmatpush2.msra.mxu0 0.0
        %2262 = vmatprep.subr.mxu0 0.0
        %2263 = vmatpush2.msra.mxu0 0.0
        %2264 = vmatprep.subr.mxu0 0.0
        %2265 = vmatpush2.msra.mxu0 0.0
        %2266 = vmatprep.subr.mxu0 0.0
        %2267 = vmatpush2.msra.mxu0 0.0
        %2268 = vmatprep.subr.mxu0 0.0
        %2269 = vmatpush2.msra.mxu0 0.0
        %2270 = vmatprep.subr.mxu0 0.0
        %2271 = vmatpush2.msra.mxu0 0.0
        %2272 = vmatprep.subr.mxu0 0.0
        %2273 = vmatpush2.msra.mxu0 0.0
        %2274 = vmatprep.subr.mxu0 0.0
        %2275 = vmatpush2.msra.mxu0 0.0
        %2276 = vmatprep.subr.mxu0 0.0
        %2277 = vmatpush2.msra.mxu0 0.0
        %2278 = vmatprep.subr.mxu0 0.0
        %2279 = vmatpush2.msra.mxu0 0.0
        %2280 = vmatprep.subr.mxu0 0.0
        %2281 = vmatpush2.msra.mxu0 0.0
        %2282 = vmatprep.subr.mxu0 0.0
        %2283 = vmatpush2.msra.mxu0 0.0
        %2284 = vmatprep.subr.mxu0 0.0
        %2285 = vmatpush2.msra.mxu0 0.0
        %2286 = vmatprep.subr.mxu0 0.0
        %2287 = vmatpush2.msra.mxu0 0.0
        %2288 = vmatprep.mubr.f32.mxu0 0.0
        %2289 = vmatmul.mubr.f32.gmra.mxu0 %v1284
        %v2290 = vpop.f32.mrf.mxu0
        %v2291 = vadd.f32 0.0, %v2290
        %v2292 = vpop.f32.mrf.mxu0
        %2293 = vmatprep.mubr.f32.mxu0 0.0
        %2294 = vmatmul.mubr.f32.gmra.mxu0 %v1284
        %v2295 = vpop.f32.mrf.mxu0
        %v2296 = vadd.f32 0.0, %v2295
        %v2297 = vpop.f32.mrf.mxu0
        %2298 = vmatprep.mubr.f32.mxu0 0.0
        %2299 = vmatmul.mubr.f32.gmra.mxu0 %v1284
        %v2300 = vpop.f32.mrf.mxu0
        %v2301 = vadd.f32 0.0, %v2300
        %v2302 = vpop.f32.mrf.mxu0
        %2303 = vmatprep.mubr.f32.mxu0 0.0
        %2304 = vmatmul.mubr.f32.gmra.mxu0 %v1284
        %v2305 = vpop.f32.mrf.mxu0
        %v2306 = vadd.f32 0.0, %v2305
        %v2307 = vpop.f32.mrf.mxu0
        %2308 = vmatprep.mubr.f32.mxu0 0.0
        %2309 = vmatmul.mubr.f32.gmra.mxu0 %v1284
        %v2310 = vpop.f32.mrf.mxu0
        %v2311 = vadd.f32 0.0, %v2310
        %v2312 = vpop.f32.mrf.mxu0
        %2313 = vmatprep.mubr.f32.mxu0 0.0
        %2314 = vmatmul.mubr.f32.gmra.mxu0 %v1284
        %v2315 = vpop.f32.mrf.mxu0
        %v2316 = vadd.f32 0.0, %v2315
        %v2317 = vpop.f32.mrf.mxu0
        %2318 = vmatprep.mubr.f32.mxu0 0.0
        %2319 = vmatmul.mubr.f32.gmra.mxu0 %v1284
        %v2320 = vpop.f32.mrf.mxu0
        %v2321 = vadd.f32 0.0, %v2320
        %v2322 = vpop.f32.mrf.mxu0
        %2323 = vmatprep.mubr.f32.mxu0 0.0
        %2324 = vmatmul.mubr.f32.gmra.mxu0 %v1284
        %v2325 = vpop.f32.mrf.mxu0
        %v2326 = vadd.f32 0.0, %v2325
        %v2327 = vpop.f32.mrf.mxu0
        %2328 = vdwg.mxu0
        %2329 = vset.pattern.permute.xlu0 6
        %2330 = vperm.xlu0 %2329, %v1232
        %v2331 = vpop.permute.xlu0 %2330
        %2333 = vset.pattern.permute.xlu0 6
        %2334 = vperm.xlu0 %2333, %v1236
        %v2335 = vpop.permute.xlu0 %2334
        %2337 = vset.pattern.permute.xlu0 6
        %2338 = vperm.xlu0 %2337, %v1240
        %v2339 = vpop.permute.xlu0 %2338
        %2341 = vset.pattern.permute.xlu0 6
        %2342 = vperm.xlu0 %2341, %v1244
        %v2343 = vpop.permute.xlu0 %2342
        %2345 = vset.pattern.permute.xlu0 6
        %2346 = vperm.xlu0 %2345, %v1248
        %v2347 = vpop.permute.xlu0 %2346
        %2349 = vset.pattern.permute.xlu0 6
        %2350 = vperm.xlu0 %2349, %v1252
        %v2351 = vpop.permute.xlu0 %2350
        %2353 = vset.pattern.permute.xlu0 6
        %2354 = vperm.xlu0 %2353, %v1256
        %v2355 = vpop.permute.xlu0 %2354
        %2357 = vset.pattern.permute.xlu0 6
        %2358 = vperm.xlu0 %2357, %v1260
        %v2359 = vpop.permute.xlu0 %2358
        %v2361 = vmul.f32 %v2331, %v2291
        %v2362 = vmul.f32 %v2335, %v2296
        %v2363 = vmul.f32 %v2339, %v2301
        %v2364 = vmul.f32 %v2343, %v2306
        %v2365 = vmul.f32 %v2347, %v2311
        %v2366 = vmul.f32 %v2351, %v2316
        %v2367 = vmul.f32 %v2355, %v2321
        %v2368 = vmul.f32 %v2359, %v2326
        %v2369 = vadd.f32 %v2214, %v2361
        %v2370 = vadd.f32 %v2215, %v2362
        %v2371 = vadd.f32 %v2216, %v2363
        %v2372 = vadd.f32 %v2217, %v2364
        %v2373 = vadd.f32 %v2218, %v2365
        %v2374 = vadd.f32 %v2219, %v2366
        %v2375 = vadd.f32 %v2220, %v2367
        %v2376 = vadd.f32 %v2221, %v2368
        %s2377 = scalar_lea.vmem %s9, 56
        %v2378 = vld [vmem:[%s2377] sm:$0xff]
        %2379 = vmatprep.subr.mxu0 0.0
        %2380 = vmatpush1.msra.mxu0 0.0
        %2381 = vmatprep.subr.mxu0 0.0
        %2382 = vmatpush1.msra.mxu0 0.0
        %2383 = vmatprep.subr.mxu0 0.0
        %2384 = vmatpush1.msra.mxu0 0.0
        %2385 = vmatprep.subr.mxu0 0.0
        %2386 = vmatpush1.msra.mxu0 0.0
        %2387 = vmatprep.subr.mxu0 0.0
        %2388 = vmatpush1.msra.mxu0 0.0
        %2389 = vmatprep.subr.mxu0 0.0
        %2390 = vmatpush1.msra.mxu0 0.0
        %2391 = vmatprep.subr.mxu0 0.0
        %2392 = vmatpush1.msra.mxu0 0.0
        %2393 = vmatprep.subr.mxu0 0.0
        %2394 = vmatpush1.msra.mxu0 0.0
        %2395 = vmatprep.subr.mxu0 0.0
        %2396 = vmatpush1.msra.mxu0 0.0
        %2397 = vmatprep.subr.mxu0 0.0
        %2398 = vmatpush1.msra.mxu0 0.0
        %2399 = vmatprep.subr.mxu0 0.0
        %2400 = vmatpush1.msra.mxu0 0.0
        %2401 = vmatprep.subr.mxu0 0.0
        %2402 = vmatpush1.msra.mxu0 0.0
        %2403 = vmatprep.subr.mxu0 0.0
        %2404 = vmatpush1.msra.mxu0 0.0
        %2405 = vmatprep.subr.mxu0 0.0
        %2406 = vmatpush1.msra.mxu0 0.0
        %2407 = vmatprep.subr.mxu0 0.0
        %2408 = vmatpush1.msra.mxu0 0.0
        %2409 = vmatprep.subr.mxu0 0.0
        %2410 = vmatpush1.msra.mxu0 %v2378
        %2411 = vmatprep.subr.mxu0 0.0
        %2412 = vmatpush2.msra.mxu0 0.0
        %2413 = vmatprep.subr.mxu0 0.0
        %2414 = vmatpush2.msra.mxu0 0.0
        %2415 = vmatprep.subr.mxu0 0.0
        %2416 = vmatpush2.msra.mxu0 0.0
        %2417 = vmatprep.subr.mxu0 0.0
        %2418 = vmatpush2.msra.mxu0 0.0
        %2419 = vmatprep.subr.mxu0 0.0
        %2420 = vmatpush2.msra.mxu0 0.0
        %2421 = vmatprep.subr.mxu0 0.0
        %2422 = vmatpush2.msra.mxu0 0.0
        %2423 = vmatprep.subr.mxu0 0.0
        %2424 = vmatpush2.msra.mxu0 0.0
        %2425 = vmatprep.subr.mxu0 0.0
        %2426 = vmatpush2.msra.mxu0 0.0
        %2427 = vmatprep.subr.mxu0 0.0
        %2428 = vmatpush2.msra.mxu0 0.0
        %2429 = vmatprep.subr.mxu0 0.0
        %2430 = vmatpush2.msra.mxu0 0.0
        %2431 = vmatprep.subr.mxu0 0.0
        %2432 = vmatpush2.msra.mxu0 0.0
        %2433 = vmatprep.subr.mxu0 0.0
        %2434 = vmatpush2.msra.mxu0 0.0
        %2435 = vmatprep.subr.mxu0 0.0
        %2436 = vmatpush2.msra.mxu0 0.0
        %2437 = vmatprep.subr.mxu0 0.0
        %2438 = vmatpush2.msra.mxu0 0.0
        %2439 = vmatprep.subr.mxu0 0.0
        %2440 = vmatpush2.msra.mxu0 0.0
        %2441 = vmatprep.subr.mxu0 0.0
        %2442 = vmatpush2.msra.mxu0 0.0
        %2443 = vmatprep.mubr.f32.mxu0 0.0
        %2444 = vmatmul.mubr.f32.gmra.mxu0 %v1284
        %v2445 = vpop.f32.mrf.mxu0
        %v2446 = vadd.f32 0.0, %v2445
        %v2447 = vpop.f32.mrf.mxu0
        %2448 = vmatprep.mubr.f32.mxu0 0.0
        %2449 = vmatmul.mubr.f32.gmra.mxu0 %v1284
        %v2450 = vpop.f32.mrf.mxu0
        %v2451 = vadd.f32 0.0, %v2450
        %v2452 = vpop.f32.mrf.mxu0
        %2453 = vmatprep.mubr.f32.mxu0 0.0
        %2454 = vmatmul.mubr.f32.gmra.mxu0 %v1284
        %v2455 = vpop.f32.mrf.mxu0
        %v2456 = vadd.f32 0.0, %v2455
        %v2457 = vpop.f32.mrf.mxu0
        %2458 = vmatprep.mubr.f32.mxu0 0.0
        %2459 = vmatmul.mubr.f32.gmra.mxu0 %v1284
        %v2460 = vpop.f32.mrf.mxu0
        %v2461 = vadd.f32 0.0, %v2460
        %v2462 = vpop.f32.mrf.mxu0
        %2463 = vmatprep.mubr.f32.mxu0 0.0
        %2464 = vmatmul.mubr.f32.gmra.mxu0 %v1284
        %v2465 = vpop.f32.mrf.mxu0
        %v2466 = vadd.f32 0.0, %v2465
        %v2467 = vpop.f32.mrf.mxu0
        %2468 = vmatprep.mubr.f32.mxu0 0.0
        %2469 = vmatmul.mubr.f32.gmra.mxu0 %v1284
        %v2470 = vpop.f32.mrf.mxu0
        %v2471 = vadd.f32 0.0, %v2470
        %v2472 = vpop.f32.mrf.mxu0
        %2473 = vmatprep.mubr.f32.mxu0 0.0
        %2474 = vmatmul.mubr.f32.gmra.mxu0 %v1284
        %v2475 = vpop.f32.mrf.mxu0
        %v2476 = vadd.f32 0.0, %v2475
        %v2477 = vpop.f32.mrf.mxu0
        %2478 = vmatprep.mubr.f32.mxu0 0.0
        %2479 = vmatmul.mubr.f32.gmra.mxu0 %v1284
        %v2480 = vpop.f32.mrf.mxu0
        %v2481 = vadd.f32 0.0, %v2480
        %v2482 = vpop.f32.mrf.mxu0
        %2483 = vdwg.mxu0
        %2484 = vset.pattern.permute.xlu0 7
        %2485 = vperm.xlu0 %2484, %v1232
        %v2486 = vpop.permute.xlu0 %2485
        %2488 = vset.pattern.permute.xlu0 7
        %2489 = vperm.xlu0 %2488, %v1236
        %v2490 = vpop.permute.xlu0 %2489
        %2492 = vset.pattern.permute.xlu0 7
        %2493 = vperm.xlu0 %2492, %v1240
        %v2494 = vpop.permute.xlu0 %2493
        %2496 = vset.pattern.permute.xlu0 7
        %2497 = vperm.xlu0 %2496, %v1244
        %v2498 = vpop.permute.xlu0 %2497
        %2500 = vset.pattern.permute.xlu0 7
        %2501 = vperm.xlu0 %2500, %v1248
        %v2502 = vpop.permute.xlu0 %2501
        %2504 = vset.pattern.permute.xlu0 7
        %2505 = vperm.xlu0 %2504, %v1252
        %v2506 = vpop.permute.xlu0 %2505
        %2508 = vset.pattern.permute.xlu0 7
        %2509 = vperm.xlu0 %2508, %v1256
        %v2510 = vpop.permute.xlu0 %2509
        %2512 = vset.pattern.permute.xlu0 7
        %2513 = vperm.xlu0 %2512, %v1260
        %v2514 = vpop.permute.xlu0 %2513
        %v2516 = vmul.f32 %v2486, %v2446
        %v2517 = vmul.f32 %v2490, %v2451
        %v2518 = vmul.f32 %v2494, %v2456
        %v2519 = vmul.f32 %v2498, %v2461
        %v2520 = vmul.f32 %v2502, %v2466
        %v2521 = vmul.f32 %v2506, %v2471
        %v2522 = vmul.f32 %v2510, %v2476
        %v2523 = vmul.f32 %v2514, %v2481
        %v2524 = vadd.f32 %v2369, %v2516
        %v2525 = vadd.f32 %v2370, %v2517
        %v2526 = vadd.f32 %v2371, %v2518
        %v2527 = vadd.f32 %v2372, %v2519
        %v2528 = vadd.f32 %v2373, %v2520
        %v2529 = vadd.f32 %v2374, %v2521
        %v2530 = vadd.f32 %v2375, %v2522
        %v2531 = vadd.f32 %v2376, %v2523
        %v2532 = vld [vmem:[#allocation9] sm:$0xff]
        %v2533 = vld [vmem:[#allocation10] sm:$0x1]
        %v2535 = vlaneseq
        %v2536 = vshrl.u32 %v2535, 7
        %v2537 = vsub.s32 0, %v2536
        %v2538 = vrot.slane %v2533, %v2537
        %v2541 = vsel %vm648, %v2524, 0
        %v2544 = vsel %vm648, %v2525, 0
        %v2547 = vsel %vm648, %v2526, 0
        %v2550 = vsel %vm648, %v2527, 0
        %v2553 = vsel %vm648, %v2528, 0
        %v2556 = vsel %vm648, %v2529, 0
        %v2559 = vsel %vm648, %v2530, 0
        %v2562 = vsel %vm648, %v2531, 0
        %2564 = vmatprep.subr.mxu0 0.0
        %2565 = vmatpush1.msra.mxu0 0.0
        %2566 = vmatprep.subr.mxu0 0.0
        %2567 = vmatpush1.msra.mxu0 0.0
        %2568 = vmatprep.subr.mxu0 0.0
        %2569 = vmatpush1.msra.mxu0 0.0
        %2570 = vmatprep.subr.mxu0 0.0
        %2571 = vmatpush1.msra.mxu0 0.0
        %2572 = vmatprep.subr.mxu0 0.0
        %2573 = vmatpush1.msra.mxu0 0.0
        %2574 = vmatprep.subr.mxu0 0.0
        %2575 = vmatpush1.msra.mxu0 0.0
        %2576 = vmatprep.subr.mxu0 0.0
        %2577 = vmatpush1.msra.mxu0 0.0
        %2578 = vmatprep.subr.mxu0 0.0
        %2579 = vmatpush1.msra.mxu0 0.0
        %2580 = vmatprep.subr.mxu0 0.0
        %2581 = vmatpush1.msra.mxu0 0.0
        %2582 = vmatprep.subr.mxu0 0.0
        %2583 = vmatpush1.msra.mxu0 0.0
        %2584 = vmatprep.subr.mxu0 0.0
        %2585 = vmatpush1.msra.mxu0 0.0
        %2586 = vmatprep.subr.mxu0 0.0
        %2587 = vmatpush1.msra.mxu0 0.0
        %2588 = vmatprep.subr.mxu0 0.0
        %2589 = vmatpush1.msra.mxu0 0.0
        %2590 = vmatprep.subr.mxu0 0.0
        %2591 = vmatpush1.msra.mxu0 0.0
        %2592 = vmatprep.subr.mxu0 0.0
        %2593 = vmatpush1.msra.mxu0 0.0
        %2594 = vmatprep.subr.mxu0 0.0
        %2595 = vmatpush1.msra.mxu0 %v2532
        %2596 = vmatprep.subr.mxu0 0.0
        %2597 = vmatpush2.msra.mxu0 0.0
        %2598 = vmatprep.subr.mxu0 0.0
        %2599 = vmatpush2.msra.mxu0 0.0
        %2600 = vmatprep.subr.mxu0 0.0
        %2601 = vmatpush2.msra.mxu0 0.0
        %2602 = vmatprep.subr.mxu0 0.0
        %2603 = vmatpush2.msra.mxu0 0.0
        %2604 = vmatprep.subr.mxu0 0.0
        %2605 = vmatpush2.msra.mxu0 0.0
        %2606 = vmatprep.subr.mxu0 0.0
        %2607 = vmatpush2.msra.mxu0 0.0
        %2608 = vmatprep.subr.mxu0 0.0
        %2609 = vmatpush2.msra.mxu0 0.0
        %2610 = vmatprep.subr.mxu0 0.0
        %2611 = vmatpush2.msra.mxu0 0.0
        %2612 = vmatprep.subr.mxu0 0.0
        %2613 = vmatpush2.msra.mxu0 0.0
        %2614 = vmatprep.subr.mxu0 0.0
        %2615 = vmatpush2.msra.mxu0 0.0
        %2616 = vmatprep.subr.mxu0 0.0
        %2617 = vmatpush2.msra.mxu0 0.0
        %2618 = vmatprep.subr.mxu0 0.0
        %2619 = vmatpush2.msra.mxu0 0.0
        %2620 = vmatprep.subr.mxu0 0.0
        %2621 = vmatpush2.msra.mxu0 0.0
        %2622 = vmatprep.subr.mxu0 0.0
        %2623 = vmatpush2.msra.mxu0 0.0
        %2624 = vmatprep.subr.mxu0 0.0
        %2625 = vmatpush2.msra.mxu0 0.0
        %2626 = vmatprep.subr.mxu0 0.0
        %2627 = vmatpush2.msra.mxu0 0.0
        %2628 = vmatprep.mubr.f32.mxu0 0.0
        %2629 = vmatmul.mubr.f32.gmra.mxu0 %v2541
        %v2630 = vpop.f32.mrf.mxu0
        %v2631 = vadd.f32 %v2538, %v2630
        %v2632 = vpop.f32.mrf.mxu0
        %2633 = vmatprep.mubr.f32.mxu0 0.0
        %2634 = vmatmul.mubr.f32.gmra.mxu0 %v2544
        %v2635 = vpop.f32.mrf.mxu0
        %v2636 = vadd.f32 %v2538, %v2635
        %v2637 = vpop.f32.mrf.mxu0
        %2638 = vmatprep.mubr.f32.mxu0 0.0
        %2639 = vmatmul.mubr.f32.gmra.mxu0 %v2547
        %v2640 = vpop.f32.mrf.mxu0
        %v2641 = vadd.f32 %v2538, %v2640
        %v2642 = vpop.f32.mrf.mxu0
        %2643 = vmatprep.mubr.f32.mxu0 0.0
        %2644 = vmatmul.mubr.f32.gmra.mxu0 %v2550
        %v2645 = vpop.f32.mrf.mxu0
        %v2646 = vadd.f32 %v2538, %v2645
        %v2647 = vpop.f32.mrf.mxu0
        %2648 = vmatprep.mubr.f32.mxu0 0.0
        %2649 = vmatmul.mubr.f32.gmra.mxu0 %v2553
        %v2650 = vpop.f32.mrf.mxu0
        %v2651 = vadd.f32 %v2538, %v2650
        %v2652 = vpop.f32.mrf.mxu0
        %2653 = vmatprep.mubr.f32.mxu0 0.0
        %2654 = vmatmul.mubr.f32.gmra.mxu0 %v2556
        %v2655 = vpop.f32.mrf.mxu0
        %v2656 = vadd.f32 %v2538, %v2655
        %v2657 = vpop.f32.mrf.mxu0
        %2658 = vmatprep.mubr.f32.mxu0 0.0
        %2659 = vmatmul.mubr.f32.gmra.mxu0 %v2559
        %v2660 = vpop.f32.mrf.mxu0
        %v2661 = vadd.f32 %v2538, %v2660
        %v2662 = vpop.f32.mrf.mxu0
        %2663 = vmatprep.mubr.f32.mxu0 0.0
        %2664 = vmatmul.mubr.f32.gmra.mxu0 %v2562
        %v2665 = vpop.f32.mrf.mxu0
        %v2666 = vadd.f32 %v2538, %v2665
        %v2667 = vpop.f32.mrf.mxu0
        %2668 = vdwg.mxu0
        %v2669 = vmax.f32 %v2631, 0.0
        %v2670 = vmax.f32 %v2636, 0.0
        %v2671 = vmax.f32 %v2641, 0.0
        %v2672 = vmax.f32 %v2646, 0.0
        %v2673 = vmax.f32 %v2651, 0.0
        %v2674 = vmax.f32 %v2656, 0.0
        %v2675 = vmax.f32 %v2661, 0.0
        %v2676 = vmax.f32 %v2666, 0.0
        %v2677 = vld [vmem:[%s12] sm:$0xff]
        %v2678 = vld [vmem:[%s12 + $0x8] sm:$0xff]
        %v2679 = vld [vmem:[%s12 + $0x10] sm:$0xff]
        %v2680 = vld [vmem:[%s12 + $0x18] sm:$0xff]
        %v2681 = vld [vmem:[#allocation12] sm:$0x1]
        %v2683 = vlaneseq
        %v2684 = vshrl.u32 %v2683, 7
        %v2685 = vsub.s32 0, %v2684
        %v2686 = vrot.slane %v2681, %v2685
        %vm2688 = vcmask 261120
        %v2690 = vsel %vm2688, %v2669, 0
        %v2693 = vsel %vm2688, %v2670, 0
        %v2696 = vsel %vm2688, %v2671, 0
        %v2699 = vsel %vm2688, %v2672, 0
        %v2702 = vsel %vm2688, %v2673, 0
        %v2705 = vsel %vm2688, %v2674, 0
        %v2708 = vsel %vm2688, %v2675, 0
        %v2711 = vsel %vm2688, %v2676, 0
        %2713 = vmatprep.subr.mxu0 0.0
        %2714 = vmatpush1.msra.mxu0 0.0
        %2715 = vmatprep.subr.mxu0 0.0
        %2716 = vmatpush1.msra.mxu0 0.0
        %2717 = vmatprep.subr.mxu0 0.0
        %2718 = vmatpush1.msra.mxu0 0.0
        %2719 = vmatprep.subr.mxu0 0.0
        %2720 = vmatpush1.msra.mxu0 0.0
        %2721 = vmatprep.subr.mxu0 0.0
        %2722 = vmatpush1.msra.mxu0 0.0
        %2723 = vmatprep.subr.mxu0 0.0
        %2724 = vmatpush1.msra.mxu0 0.0
        %2725 = vmatprep.subr.mxu0 0.0
        %2726 = vmatpush1.msra.mxu0 0.0
        %2727 = vmatprep.subr.mxu0 0.0
        %2728 = vmatpush1.msra.mxu0 0.0
        %2729 = vmatprep.subr.mxu0 0.0
        %2730 = vmatpush1.msra.mxu0 0.0
        %2731 = vmatprep.subr.mxu0 0.0
        %2732 = vmatpush1.msra.mxu0 0.0
        %2733 = vmatprep.subr.mxu0 0.0
        %2734 = vmatpush1.msra.mxu0 0.0
        %2735 = vmatprep.subr.mxu0 0.0
        %2736 = vmatpush1.msra.mxu0 0.0
        %2737 = vmatprep.subr.mxu0 0.0
        %2738 = vmatpush1.msra.mxu0 %v2680
        %2739 = vmatprep.subr.mxu0 0.0
        %2740 = vmatpush1.msra.mxu0 %v2679
        %2741 = vmatprep.subr.mxu0 0.0
        %2742 = vmatpush1.msra.mxu0 %v2678
        %2743 = vmatprep.subr.mxu0 0.0
        %2744 = vmatpush1.msra.mxu0 %v2677
        %2745 = vmatprep.subr.mxu0 0.0
        %2746 = vmatpush2.msra.mxu0 0.0
        %2747 = vmatprep.subr.mxu0 0.0
        %2748 = vmatpush2.msra.mxu0 0.0
        %2749 = vmatprep.subr.mxu0 0.0
        %2750 = vmatpush2.msra.mxu0 0.0
        %2751 = vmatprep.subr.mxu0 0.0
        %2752 = vmatpush2.msra.mxu0 0.0
        %2753 = vmatprep.subr.mxu0 0.0
        %2754 = vmatpush2.msra.mxu0 0.0
        %2755 = vmatprep.subr.mxu0 0.0
        %2756 = vmatpush2.msra.mxu0 0.0
        %2757 = vmatprep.subr.mxu0 0.0
        %2758 = vmatpush2.msra.mxu0 0.0
        %2759 = vmatprep.subr.mxu0 0.0
        %2760 = vmatpush2.msra.mxu0 0.0
        %2761 = vmatprep.subr.mxu0 0.0
        %2762 = vmatpush2.msra.mxu0 0.0
        %2763 = vmatprep.subr.mxu0 0.0
        %2764 = vmatpush2.msra.mxu0 0.0
        %2765 = vmatprep.subr.mxu0 0.0
        %2766 = vmatpush2.msra.mxu0 0.0
        %2767 = vmatprep.subr.mxu0 0.0
        %2768 = vmatpush2.msra.mxu0 0.0
        %2769 = vmatprep.subr.mxu0 0.0
        %2770 = vmatpush2.msra.mxu0 0.0
        %2771 = vmatprep.subr.mxu0 0.0
        %2772 = vmatpush2.msra.mxu0 0.0
        %2773 = vmatprep.subr.mxu0 0.0
        %2774 = vmatpush2.msra.mxu0 0.0
        %2775 = vmatprep.subr.mxu0 0.0
        %2776 = vmatpush2.msra.mxu0 0.0
        %2777 = vmatprep.mubr.f32.mxu0 0.0
        %2778 = vmatmul.mubr.f32.gmra.mxu0 %v2690
        %v2779 = vpop.f32.mrf.mxu0
        %v2780 = vadd.f32 %v2686, %v2779
        %v2781 = vpop.f32.mrf.mxu0
        %2782 = vmatprep.mubr.f32.mxu0 0.0
        %2783 = vmatmul.mubr.f32.gmra.mxu0 %v2693
        %v2784 = vpop.f32.mrf.mxu0
        %v2785 = vadd.f32 %v2686, %v2784
        %v2786 = vpop.f32.mrf.mxu0
        %2787 = vmatprep.mubr.f32.mxu0 0.0
        %2788 = vmatmul.mubr.f32.gmra.mxu0 %v2696
        %v2789 = vpop.f32.mrf.mxu0
        %v2790 = vadd.f32 %v2686, %v2789
        %v2791 = vpop.f32.mrf.mxu0
        %2792 = vmatprep.mubr.f32.mxu0 0.0
        %2793 = vmatmul.mubr.f32.gmra.mxu0 %v2699
        %v2794 = vpop.f32.mrf.mxu0
        %v2795 = vadd.f32 %v2686, %v2794
        %v2796 = vpop.f32.mrf.mxu0
        %2797 = vmatprep.mubr.f32.mxu0 0.0
        %2798 = vmatmul.mubr.f32.gmra.mxu0 %v2702
        %v2799 = vpop.f32.mrf.mxu0
        %v2800 = vadd.f32 %v2686, %v2799
        %v2801 = vpop.f32.mrf.mxu0
        %2802 = vmatprep.mubr.f32.mxu0 0.0
        %2803 = vmatmul.mubr.f32.gmra.mxu0 %v2705
        %v2804 = vpop.f32.mrf.mxu0
        %v2805 = vadd.f32 %v2686, %v2804
        %v2806 = vpop.f32.mrf.mxu0
        %2807 = vmatprep.mubr.f32.mxu0 0.0
        %2808 = vmatmul.mubr.f32.gmra.mxu0 %v2708
        %v2809 = vpop.f32.mrf.mxu0
        %v2810 = vadd.f32 %v2686, %v2809
        %v2811 = vpop.f32.mrf.mxu0
        %2812 = vmatprep.mubr.f32.mxu0 0.0
        %2813 = vmatmul.mubr.f32.gmra.mxu0 %v2711
        %v2814 = vpop.f32.mrf.mxu0
        %v2815 = vadd.f32 %v2686, %v2814
        %v2816 = vpop.f32.mrf.mxu0
        %2817 = vdwg.mxu0
        %v2818 = vmax.f32 %v2780, 0.0
        %v2819 = vmax.f32 %v2785, 0.0
        %v2820 = vmax.f32 %v2790, 0.0
        %v2821 = vmax.f32 %v2795, 0.0
        %v2822 = vmax.f32 %v2800, 0.0
        %v2823 = vmax.f32 %v2805, 0.0
        %v2824 = vmax.f32 %v2810, 0.0
        %v2825 = vmax.f32 %v2815, 0.0
        %v2826 = vld [vmem:[%s14] sm:$0x1]
        %v2828 = vlaneseq
        %v2829 = vshrl.u32 %v2828, 7
        %v2830 = vsub.s32 0, %v2829
        %v2831 = vrot.slane %v2826, %v2830
        %v2833 = vmul.f32 %v2818, %v2831
        %v2834 = vmul.f32 %v2819, %v2831
        %v2835 = vmul.f32 %v2820, %v2831
        %v2836 = vmul.f32 %v2821, %v2831
        %v2837 = vmul.f32 %v2822, %v2831
        %v2838 = vmul.f32 %v2823, %v2831
        %v2839 = vmul.f32 %v2824, %v2831
        %v2840 = vmul.f32 %v2825, %v2831
        %v2841 = vsel %vm2688, %v2833, 0.0
        %2842 = vadd.xlane.f32.xlu0 %v2841
        %v2843 = vpop.xlane.xlu0 %2842
        %v2844 = vsel %vm2688, %v2834, 0.0
        %2845 = vadd.xlane.f32.xlu0 %v2844
        %v2846 = vpop.xlane.xlu0 %2845
        %v2847 = vsel %vm2688, %v2835, 0.0
        %2848 = vadd.xlane.f32.xlu0 %v2847
        %v2849 = vpop.xlane.xlu0 %2848
        %v2850 = vsel %vm2688, %v2836, 0.0
        %2851 = vadd.xlane.f32.xlu0 %v2850
        %v2852 = vpop.xlane.xlu0 %2851
        %v2853 = vsel %vm2688, %v2837, 0.0
        %2854 = vadd.xlane.f32.xlu0 %v2853
        %v2855 = vpop.xlane.xlu0 %2854
        %v2856 = vsel %vm2688, %v2838, 0.0
        %2857 = vadd.xlane.f32.xlu0 %v2856
        %v2858 = vpop.xlane.xlu0 %2857
        %v2859 = vsel %vm2688, %v2839, 0.0
        %2860 = vadd.xlane.f32.xlu0 %v2859
        %v2861 = vpop.xlane.xlu0 %2860
        %v2862 = vsel %vm2688, %v2840, 0.0
        %2863 = vadd.xlane.f32.xlu0 %v2862
        %v2864 = vpop.xlane.xlu0 %2863
        %v2873 = vlaneseq
        %v2874 = vand.u32 %v2873, 127
        %v2875 = vlaneseq
        %v2876 = vshrl.u32 %v2875, 7
        %v2877 = vsub.s32 %v2874, %v2876
        %v2878 = vrot.slane %v2843, %v2877
        %v2879 = vlaneseq
        %v2880 = vshrl.u32 %v2879, 7
        %v2881 = vsub.s32 %v2874, %v2880
        %v2882 = vrot.slane %v2846, %v2881
        %v2883 = vlaneseq
        %v2884 = vshrl.u32 %v2883, 7
        %v2885 = vsub.s32 %v2874, %v2884
        %v2886 = vrot.slane %v2849, %v2885
        %v2887 = vlaneseq
        %v2888 = vshrl.u32 %v2887, 7
        %v2889 = vsub.s32 %v2874, %v2888
        %v2890 = vrot.slane %v2852, %v2889
        %v2891 = vlaneseq
        %v2892 = vshrl.u32 %v2891, 7
        %v2893 = vsub.s32 %v2874, %v2892
        %v2894 = vrot.slane %v2855, %v2893
        %v2895 = vlaneseq
        %v2896 = vshrl.u32 %v2895, 7
        %v2897 = vsub.s32 %v2874, %v2896
        %v2898 = vrot.slane %v2858, %v2897
        %v2899 = vlaneseq
        %v2900 = vshrl.u32 %v2899, 7
        %v2901 = vsub.s32 %v2874, %v2900
        %v2902 = vrot.slane %v2861, %v2901
        %v2903 = vlaneseq
        %v2904 = vshrl.u32 %v2903, 7
        %v2905 = vsub.s32 %v2874, %v2904
        %v2906 = vrot.slane %v2864, %v2905
        %v2907 = vsel %vm963, %v2882, %v2878
        %v2908 = vsel %vm966, %v2886, %v2907
        %v2909 = vsel %vm969, %v2890, %v2908
        %v2910 = vsel %vm972, %v2894, %v2909
        %v2911 = vsel %vm975, %v2898, %v2910
        %v2912 = vsel %vm978, %v2902, %v2911
        %v2913 = vsel %vm981, %v2906, %v2912
        %v2915 = vsel %vm648, %v2913, -inf
        %2916 = vmax.xlane.f32.xlu0 %v2915
        %v2917 = vpop.xlane.xlu0 %2916
        %v2919 = vlaneseq
        %v2920 = vshrl.u32 %v2919, 7
        %v2921 = vsub.s32 0, %v2920
        %v2922 = vrot.slane %v2917, %v2921
        %v2923 = vlaneseq
        %v2924 = vshrl.u32 %v2923, 7
        %v2925 = vsub.s32 1, %v2924
        %v2926 = vrot.slane %v2917, %v2925
        %v2927 = vlaneseq
        %v2928 = vshrl.u32 %v2927, 7
        %v2929 = vsub.s32 2, %v2928
        %v2930 = vrot.slane %v2917, %v2929
        %v2931 = vlaneseq
        %v2932 = vshrl.u32 %v2931, 7
        %v2933 = vsub.s32 3, %v2932
        %v2934 = vrot.slane %v2917, %v2933
        %v2935 = vlaneseq
        %v2936 = vshrl.u32 %v2935, 7
        %v2937 = vsub.s32 4, %v2936
        %v2938 = vrot.slane %v2917, %v2937
        %v2939 = vlaneseq
        %v2940 = vshrl.u32 %v2939, 7
        %v2941 = vsub.s32 5, %v2940
        %v2942 = vrot.slane %v2917, %v2941
        %v2943 = vlaneseq
        %v2944 = vshrl.u32 %v2943, 7
        %v2945 = vsub.s32 6, %v2944
        %v2946 = vrot.slane %v2917, %v2945
        %v2947 = vlaneseq
        %v2948 = vshrl.u32 %v2947, 7
        %v2949 = vsub.s32 7, %v2948
        %v2950 = vrot.slane %v2917, %v2949
        %v2959 = vsub.f32 %v2843, %v2922
        %v2960 = vsub.f32 %v2846, %v2926
        %v2961 = vsub.f32 %v2849, %v2930
        %v2962 = vsub.f32 %v2852, %v2934
        %v2963 = vsub.f32 %v2855, %v2938
        %v2964 = vsub.f32 %v2858, %v2942
        %v2965 = vsub.f32 %v2861, %v2946
        %v2966 = vsub.f32 %v2864, %v2950
        %v2967 = vmul.f32 %v2959, 1.442695
        %v2968 = vpow.pop %v2967
        %v2969 = vmul.f32 %v2960, 1.442695
        %v2970 = vpow.pop %v2969
        %v2971 = vmul.f32 %v2961, 1.442695
        %v2972 = vpow.pop %v2971
        %v2973 = vmul.f32 %v2962, 1.442695
        %v2974 = vpow.pop %v2973
        %v2975 = vmul.f32 %v2963, 1.442695
        %v2976 = vpow.pop %v2975
        %v2977 = vmul.f32 %v2964, 1.442695
        %v2978 = vpow.pop %v2977
        %v2979 = vmul.f32 %v2965, 1.442695
        %v2980 = vpow.pop %v2979
        %v2981 = vmul.f32 %v2966, 1.442695
        %v2982 = vpow.pop %v2981
        %2991 = vset.pattern.permute.xlu0 0
        %2992 = vperm.xlu0 %2991, %v2968
        %v2993 = vpop.permute.xlu0 %2992
        %2994 = vset.pattern.permute.xlu0 0
        %2995 = vperm.xlu0 %2994, %v2970
        %v2996 = vpop.permute.xlu0 %2995
        %2997 = vset.pattern.permute.xlu0 0
        %2998 = vperm.xlu0 %2997, %v2972
        %v2999 = vpop.permute.xlu0 %2998
        %3000 = vset.pattern.permute.xlu0 0
        %3001 = vperm.xlu0 %3000, %v2974
        %v3002 = vpop.permute.xlu0 %3001
        %3003 = vset.pattern.permute.xlu0 0
        %3004 = vperm.xlu0 %3003, %v2976
        %v3005 = vpop.permute.xlu0 %3004
        %3006 = vset.pattern.permute.xlu0 0
        %3007 = vperm.xlu0 %3006, %v2978
        %v3008 = vpop.permute.xlu0 %3007
        %3009 = vset.pattern.permute.xlu0 0
        %3010 = vperm.xlu0 %3009, %v2980
        %v3011 = vpop.permute.xlu0 %3010
        %3012 = vset.pattern.permute.xlu0 0
        %3013 = vperm.xlu0 %3012, %v2982
        %v3014 = vpop.permute.xlu0 %3013
        %v3015 = vlaneseq
        %v3016 = vshrl.u32 %v3015, 7
        %v3017 = vsub.s32 %v2874, %v3016
        %v3018 = vrot.slane %v2993, %v3017
        %v3019 = vlaneseq
        %v3020 = vshrl.u32 %v3019, 7
        %v3021 = vsub.s32 %v2874, %v3020
        %v3022 = vrot.slane %v2996, %v3021
        %v3023 = vlaneseq
        %v3024 = vshrl.u32 %v3023, 7
        %v3025 = vsub.s32 %v2874, %v3024
        %v3026 = vrot.slane %v2999, %v3025
        %v3027 = vlaneseq
        %v3028 = vshrl.u32 %v3027, 7
        %v3029 = vsub.s32 %v2874, %v3028
        %v3030 = vrot.slane %v3002, %v3029
        %v3031 = vlaneseq
        %v3032 = vshrl.u32 %v3031, 7
        %v3033 = vsub.s32 %v2874, %v3032
        %v3034 = vrot.slane %v3005, %v3033
        %v3035 = vlaneseq
        %v3036 = vshrl.u32 %v3035, 7
        %v3037 = vsub.s32 %v2874, %v3036
        %v3038 = vrot.slane %v3008, %v3037
        %v3039 = vlaneseq
        %v3040 = vshrl.u32 %v3039, 7
        %v3041 = vsub.s32 %v2874, %v3040
        %v3042 = vrot.slane %v3011, %v3041
        %v3043 = vlaneseq
        %v3044 = vshrl.u32 %v3043, 7
        %v3045 = vsub.s32 %v2874, %v3044
        %v3046 = vrot.slane %v3014, %v3045
        %v3047 = vsel %vm963, %v3022, %v3018
        %v3048 = vsel %vm966, %v3026, %v3047
        %v3049 = vsel %vm969, %v3030, %v3048
        %v3050 = vsel %vm972, %v3034, %v3049
        %v3051 = vsel %vm975, %v3038, %v3050
        %v3052 = vsel %vm978, %v3042, %v3051
        %v3053 = vsel %vm981, %v3046, %v3052
        %v3055 = vsel %vm648, %v3053, 0.0
        %3056 = vadd.xlane.f32.xlu0 %v3055
        %v3057 = vpop.xlane.xlu0 %3056
        %v3059 = vlaneseq
        %v3060 = vshrl.u32 %v3059, 7
        %v3061 = vsub.s32 0, %v3060
        %v3062 = vrot.slane %v3057, %v3061
        %v3063 = vlaneseq
        %v3064 = vshrl.u32 %v3063, 7
        %v3065 = vsub.s32 1, %v3064
        %v3066 = vrot.slane %v3057, %v3065
        %v3067 = vlaneseq
        %v3068 = vshrl.u32 %v3067, 7
        %v3069 = vsub.s32 2, %v3068
        %v3070 = vrot.slane %v3057, %v3069
        %v3071 = vlaneseq
        %v3072 = vshrl.u32 %v3071, 7
        %v3073 = vsub.s32 3, %v3072
        %v3074 = vrot.slane %v3057, %v3073
        %v3075 = vlaneseq
        %v3076 = vshrl.u32 %v3075, 7
        %v3077 = vsub.s32 4, %v3076
        %v3078 = vrot.slane %v3057, %v3077
        %v3079 = vlaneseq
        %v3080 = vshrl.u32 %v3079, 7
        %v3081 = vsub.s32 5, %v3080
        %v3082 = vrot.slane %v3057, %v3081
        %v3083 = vlaneseq
        %v3084 = vshrl.u32 %v3083, 7
        %v3085 = vsub.s32 6, %v3084
        %v3086 = vrot.slane %v3057, %v3085
        %v3087 = vlaneseq
        %v3088 = vshrl.u32 %v3087, 7
        %v3089 = vsub.s32 7, %v3088
        %v3090 = vrot.slane %v3057, %v3089
        %v3099 = vrcp.pop %v3062
        %v3100 = vmul.f32 %v2968, %v3099
        %v3101 = vrcp.pop %v3066
        %v3102 = vmul.f32 %v2970, %v3101
        %v3103 = vrcp.pop %v3070
        %v3104 = vmul.f32 %v2972, %v3103
        %v3105 = vrcp.pop %v3074
        %v3106 = vmul.f32 %v2974, %v3105
        %v3107 = vrcp.pop %v3078
        %v3108 = vmul.f32 %v2976, %v3107
        %v3109 = vrcp.pop %v3082
        %v3110 = vmul.f32 %v2978, %v3109
        %v3111 = vrcp.pop %v3086
        %v3112 = vmul.f32 %v2980, %v3111
        %v3113 = vrcp.pop %v3090
        %v3114 = vmul.f32 %v2982, %v3113
        %3123 = vset.pattern.permute.xlu0 0
        %3124 = vperm.xlu0 %3123, %v3100
        %v3125 = vpop.permute.xlu0 %3124
        %3126 = vset.pattern.permute.xlu0 0
        %3127 = vperm.xlu0 %3126, %v3102
        %v3128 = vpop.permute.xlu0 %3127
        %3129 = vset.pattern.permute.xlu0 0
        %3130 = vperm.xlu0 %3129, %v3104
        %v3131 = vpop.permute.xlu0 %3130
        %3132 = vset.pattern.permute.xlu0 0
        %3133 = vperm.xlu0 %3132, %v3106
        %v3134 = vpop.permute.xlu0 %3133
        %3135 = vset.pattern.permute.xlu0 0
        %3136 = vperm.xlu0 %3135, %v3108
        %v3137 = vpop.permute.xlu0 %3136
        %3138 = vset.pattern.permute.xlu0 0
        %3139 = vperm.xlu0 %3138, %v3110
        %v3140 = vpop.permute.xlu0 %3139
        %3141 = vset.pattern.permute.xlu0 0
        %3142 = vperm.xlu0 %3141, %v3112
        %v3143 = vpop.permute.xlu0 %3142
        %3144 = vset.pattern.permute.xlu0 0
        %3145 = vperm.xlu0 %3144, %v3114
        %v3146 = vpop.permute.xlu0 %3145
        %v3147 = vlaneseq
        %v3148 = vshrl.u32 %v3147, 7
        %v3149 = vsub.s32 %v2874, %v3148
        %v3150 = vrot.slane %v3125, %v3149
        %v3151 = vlaneseq
        %v3152 = vshrl.u32 %v3151, 7
        %v3153 = vsub.s32 %v2874, %v3152
        %v3154 = vrot.slane %v3128, %v3153
        %v3155 = vlaneseq
        %v3156 = vshrl.u32 %v3155, 7
        %v3157 = vsub.s32 %v2874, %v3156
        %v3158 = vrot.slane %v3131, %v3157
        %v3159 = vlaneseq
        %v3160 = vshrl.u32 %v3159, 7
        %v3161 = vsub.s32 %v2874, %v3160
        %v3162 = vrot.slane %v3134, %v3161
        %v3163 = vlaneseq
        %v3164 = vshrl.u32 %v3163, 7
        %v3165 = vsub.s32 %v2874, %v3164
        %v3166 = vrot.slane %v3137, %v3165
        %v3167 = vlaneseq
        %v3168 = vshrl.u32 %v3167, 7
        %v3169 = vsub.s32 %v2874, %v3168
        %v3170 = vrot.slane %v3140, %v3169
        %v3171 = vlaneseq
        %v3172 = vshrl.u32 %v3171, 7
        %v3173 = vsub.s32 %v2874, %v3172
        %v3174 = vrot.slane %v3143, %v3173
        %v3175 = vlaneseq
        %v3176 = vshrl.u32 %v3175, 7
        %v3177 = vsub.s32 %v2874, %v3176
        %v3178 = vrot.slane %v3146, %v3177
        %v3179 = vsel %vm963, %v3154, %v3150
        %v3180 = vsel %vm966, %v3158, %v3179
        %v3181 = vsel %vm969, %v3162, %v3180
        %v3182 = vsel %vm972, %v3166, %v3181
        %v3183 = vsel %vm975, %v3170, %v3182
        %v3184 = vsel %vm978, %v3174, %v3183
        %v3185 = vsel %vm981, %v3178, %v3184
        %v3186 = vsel %vm648, %v3185, 0
        %3188 = vmatprep.subr.mxu0 0.0
        %3189 = vmatpush1.msra.mxu0 0.0
        %3190 = vmatprep.subr.mxu0 0.0
        %3191 = vmatpush1.msra.mxu0 0.0
        %3192 = vmatprep.subr.mxu0 0.0
        %3193 = vmatpush1.msra.mxu0 0.0
        %3194 = vmatprep.subr.mxu0 0.0
        %3195 = vmatpush1.msra.mxu0 0.0
        %3196 = vmatprep.subr.mxu0 0.0
        %3197 = vmatpush1.msra.mxu0 0.0
        %3198 = vmatprep.subr.mxu0 0.0
        %3199 = vmatpush1.msra.mxu0 0.0
        %3200 = vmatprep.subr.mxu0 0.0
        %3201 = vmatpush1.msra.mxu0 0.0
        %3202 = vmatprep.subr.mxu0 0.0
        %3203 = vmatpush1.msra.mxu0 0.0
        %3204 = vmatprep.subr.mxu0 0.0
        %3205 = vmatpush1.msra.mxu0 0.0
        %3206 = vmatprep.subr.mxu0 0.0
        %3207 = vmatpush1.msra.mxu0 0.0
        %3208 = vmatprep.subr.mxu0 0.0
        %3209 = vmatpush1.msra.mxu0 0.0
        %3210 = vmatprep.subr.mxu0 0.0
        %3211 = vmatpush1.msra.mxu0 0.0
        %3212 = vmatprep.subr.mxu0 0.0
        %3213 = vmatpush1.msra.mxu0 0.0
        %3214 = vmatprep.subr.mxu0 0.0
        %3215 = vmatpush1.msra.mxu0 0.0
        %3216 = vmatprep.subr.mxu0 0.0
        %3217 = vmatpush1.msra.mxu0 0.0
        %3218 = vmatprep.subr.mxu0 0.0
        %3219 = vmatpush1.msra.mxu0 %v755
        %3220 = vmatprep.subr.mxu0 0.0
        %3221 = vmatpush2.msra.mxu0 0.0
        %3222 = vmatprep.subr.mxu0 0.0
        %3223 = vmatpush2.msra.mxu0 0.0
        %3224 = vmatprep.subr.mxu0 0.0
        %3225 = vmatpush2.msra.mxu0 0.0
        %3226 = vmatprep.subr.mxu0 0.0
        %3227 = vmatpush2.msra.mxu0 0.0
        %3228 = vmatprep.subr.mxu0 0.0
        %3229 = vmatpush2.msra.mxu0 0.0
        %3230 = vmatprep.subr.mxu0 0.0
        %3231 = vmatpush2.msra.mxu0 0.0
        %3232 = vmatprep.subr.mxu0 0.0
        %3233 = vmatpush2.msra.mxu0 0.0
        %3234 = vmatprep.subr.mxu0 0.0
        %3235 = vmatpush2.msra.mxu0 0.0
        %3236 = vmatprep.subr.mxu0 0.0
        %3237 = vmatpush2.msra.mxu0 0.0
        %3238 = vmatprep.subr.mxu0 0.0
        %3239 = vmatpush2.msra.mxu0 0.0
        %3240 = vmatprep.subr.mxu0 0.0
        %3241 = vmatpush2.msra.mxu0 0.0
        %3242 = vmatprep.subr.mxu0 0.0
        %3243 = vmatpush2.msra.mxu0 0.0
        %3244 = vmatprep.subr.mxu0 0.0
        %3245 = vmatpush2.msra.mxu0 0.0
        %3246 = vmatprep.subr.mxu0 0.0
        %3247 = vmatpush2.msra.mxu0 0.0
        %3248 = vmatprep.subr.mxu0 0.0
        %3249 = vmatpush2.msra.mxu0 0.0
        %3250 = vmatprep.subr.mxu0 0.0
        %3251 = vmatpush2.msra.mxu0 0.0
        %3252 = vmatprep.mubr.f32.mxu0 0.0
        %3253 = vmatmul.mubr.f32.gmra.mxu0 %v3186
        %v3254 = vpop.f32.mrf.mxu0
        %v3255 = vadd.f32 0.0, %v3254
        %v3256 = vpop.f32.mrf.mxu0
        %3257 = vdwg.mxu0
        %v3258 = vadd.f32 %v645, %v3255
        %3259 = vst.msk [vmem:[%s644] sm:$0xff] %vm648, %v3258
        %p3260 = scmp.lt.s32.totalorder %s33, 1
        %s3261 = scalar_select %p3260, %s33, 1
        %s3262 = smul.addr %s3261, 8
        %s3263 = scalar_lea.vmem %s17, %s3262
        // Predicated region
        $region121: #{_lambda_.6} parent=87 // pred_check
          %p3264 = pneg %p413
        $region122: #{_lambda_.6} parent=87 // pred_check_branch
          %3266 = sbr.rel (%p3264) target = $region124
        $region123: #{_lambda_.6} parent=87 // pred_region
          _
        $region124: #{_lambda_.6} parent=87 // pred_fallthru
          _
      $region88: #{_lambda_.6} parent=5 // pred_fallthru
        _
      %p3267 = scmp.le.s32.totalorder 2, %s28
      // Predicated region
      $region125: #{_lambda_.6} parent=5 // pred_check
        %p3268 = pneg %p3267
      $region126: #{_lambda_.6} parent=5 // pred_check_branch
        %3270 = sbr.rel (%p3268) target = $region128
      $region127: #{_lambda_.6} parent=5 // pred_region
        %s3271 = ssub.s32 %s28, 2
        // Predicated region
        $region129: #{_lambda_.6} parent=127 // pred_check
          %p3272 = pneg %p419
        $region130: #{_lambda_.6} parent=127 // pred_check_branch
          %3274 = sbr.rel (%p3272) target = $region132
        $region131: #{_lambda_.6} parent=127 // pred_region
          %p3275 = scmp.lt.s32.totalorder %s34, 1
          %s3276 = scalar_select %p3275, %s34, 1
          %s3277 = smul.addr %s3276, 8
          %s3278 = scalar_lea.vmem %s17, %s3277
        $region132: #{_lambda_.6} parent=127 // pred_fallthru
          _
      $region128: #{_lambda_.6} parent=5 // pred_fallthru
        _
    $region6: #{_lambda_.6} parent=1 // loop_footer
      %s32 = sadd.s32 1, %s28
    $region7: #{_lambda_.6} parent=1 // loop_footer_branch
      %27 = sbr.rel target = $region3
    $region8: #{_lambda_.6} parent=1 // loop_exit
      _
    %3279 = vsyncpa [#allocation3], 1
    %s3280 = scalar_lea.sflag [#allocation3], 1
    %3281 = vsyncpa %s3280, 1
    %3282 = vsyncpa [#allocation5], 1
    %3283 = vsyncpa [#allocation8], 1
    %3284 = vsyncpa [#allocation11], 1
    %3285 = vsyncpa [#allocation14], 1

</llo_original>
